<compile_context>
chip_gen: v6e
topology: v6e:2x2x1
jax: 0.10.0
libtpu: 0.0.40
codegen_flags: <defaults>
</compile_context>

<pallas_src>
import functools
import math

import numpy as np
import jax
import jax.numpy as jnp
from jax.experimental import pallas as pl
from jax.experimental.pallas import tpu as pltpu


_MXU_DTYPE = jnp.bfloat16          # matmul operand dtype; accumulation stays f32
_LN_EPS = 1e-5


# --------------------------- in-kernel helpers ------------------------------


def _mm(a16, b16):
    """MXU matmul: bf16 operands (pre-cast), f32 accumulation."""
    return jnp.dot(a16, b16, preferred_element_type=jnp.float32)


def _mm_nt(a16, b16):
    """a @ b.T (contract last dims of both) without materializing a transpose."""
    return jax.lax.dot_general(a16, b16, (((1,), (1,)), ((), ())),
                               preferred_element_type=jnp.float32)


def _layernorm(x, g, b):
    mu = jnp.mean(x, axis=-1, keepdims=True)
    var = jnp.mean(jnp.square(x - mu), axis=-1, keepdims=True)
    return (x - mu) * jax.lax.rsqrt(var + _LN_EPS) * g + b


def _softmax_rows(s):
    m = jnp.max(s, axis=-1, keepdims=True)
    p = jnp.exp(s - m)
    l = jnp.sum(p, axis=-1, keepdims=True)
    return p * pl.reciprocal(l, approx=True)


def _attn_core(q_all, k_all, v_all, wo16, bo, *, H, dk, dv, scale, neg):
    """Per-head scores/softmax/PV on lane-sliced heads + fused Wo projection."""
    q16 = q_all.astype(_MXU_DTYPE)
    k16 = k_all.astype(_MXU_DTYPE)
    v16 = v_all.astype(_MXU_DTYPE)
    outs = []
    for h in range(H):                                    # static unroll (H small)
        q = q16[:, h * dk:(h + 1) * dk]
        k = k16[:, h * dk:(h + 1) * dk]
        v = v16[:, h * dv:(h + 1) * dv]
        s = _mm_nt(q, k) * scale                          # (Sq, Sk) f32
        if neg is not None:
            s = s + neg                                   # causal mask add, f32
        p = _softmax_rows(s)
        outs.append(_mm(p.astype(_MXU_DTYPE), v))         # (Sq, dv)
    o16 = jnp.concatenate(outs, axis=-1).astype(_MXU_DTYPE)   # (Sq, H*dv)
    return _mm(o16, wo16) + bo                            # (Sq, D)


def _self_attn(x16, wqkv16, bqkv, wo16, bo, *, H, dk, dv, scale, neg):
    """One fused QKV matmul, then per-head attention."""
    nq = H * dk
    qkv = _mm(x16, wqkv16) + bqkv                         # (S, 2*H*dk + H*dv) f32
    return _attn_core(qkv[:, :nq], qkv[:, nq:2 * nq], qkv[:, 2 * nq:],
                      wo16, bo, H=H, dk=dk, dv=dv, scale=scale, neg=neg)


def _cross_attn(xq16, xkv16, wq16, bq, wkv16, bkv, wo16, bo, *, H, dk, dv, scale):
    """Q from decoder stream, fused KV matmul from encoder stream."""
    nq = H * dk
    q_all = _mm(xq16, wq16) + bq                          # (Sq, H*dk)
    kv = _mm(xkv16, wkv16) + bkv                          # (Sk, H*dk + H*dv)
    return _attn_core(q_all, kv[:, :nq], kv[:, nq:],
                      wo16, bo, H=H, dk=dk, dv=dv, scale=scale, neg=None)


def _ffn(x, w1_16, b1, w2_16, b2):
    h = jnp.maximum(_mm(x.astype(_MXU_DTYPE), w1_16) + b1, 0.0)
    return _mm(h.astype(_MXU_DTYPE), w2_16) + b2


# ------------------------------ fused kernel --------------------------------


def _get_kernel(*refs, L, H, dk, dv, N, scale):
    """Whole GET forward for one batch element: encoder stack -> decoder stack
    -> vocab projection + log_softmax."""
    (v_ref, emb_ref, in_w, in_b,
     e_wqkv, e_bqkv, e_wo, e_bo, e_ln, e_w1, e_b1, e_w2, e_b2,
     s_wqkv, s_bqkv, s_wo, s_bo,
     c_wq, c_bq, c_wkv, c_bkv, c_wo, c_bo,
     g_wc, g_wg, g_b, gp_w, gp_b,
     d_ln, d_w1, d_b1, d_w2, d_b2,
     o_w, o_b, out_ref) = refs

    BF = _MXU_DTYPE

    # ------------------------------- encoder --------------------------------
    x = v_ref[0]                                              # (Se, Df) f32
    h = _mm(x.astype(BF), in_w[...]) + in_b[...]              # (Se, D)
    for l in range(L):                                        # static unroll
        ln = e_ln[l]                                          # (4, D)
        a = _self_attn(h.astype(BF), e_wqkv[l], e_bqkv[l], e_wo[l], e_bo[l],
                       H=H, dk=dk, dv=dv, scale=scale, neg=None)
        h = _layernorm(h + a, ln[0:1], ln[1:2])
        f = _ffn(h, e_w1[l], e_b1[l], e_w2[l], e_b2[l])
        h = _layernorm(h + f, ln[2:3], ln[3:4])
    enc16 = h[:N].astype(BF)                                  # region features (N, D)
    g16 = h[N:N + 1].astype(BF)                               # global token    (1, D)

    # ------------------------------- decoder --------------------------------
    y = emb_ref[0]                                            # (S, D) f32
    S = y.shape[0]
    row = jax.lax.broadcasted_iota(jnp.int32, (S, S), 0)
    col = jax.lax.broadcasted_iota(jnp.int32, (S, S), 1)
    neg = jnp.where(col <= row, 0.0, -1e9).astype(jnp.float32)

    for l in range(L):                                        # static unroll
        ln = d_ln[l]                                          # (6, D)
        a = _self_attn(y.astype(BF), s_wqkv[l], s_bqkv[l], s_wo[l], s_bo[l],
                       H=H, dk=dk, dv=dv, scale=scale, neg=neg)
        y = _layernorm(y + a, ln[0:1], ln[1:2])

        c = _cross_attn(y.astype(BF), enc16, c_wq[l], c_bq[l], c_wkv[l],
                        c_bkv[l], c_wo[l], c_bo[l],
                        H=H, dk=dk, dv=dv, scale=scale)

        # Global adaptive controller: gate = sigmoid([c ; g] @ Wg + bg), Wg
        # pre-split into its (D, D) halves (no concat, no in-kernel slicing).
        gate = jax.nn.sigmoid(_mm(c.astype(BF), g_wc[l]) + _mm(g16, g_wg[l])
                              + g_b[l])
        gp = _mm(g16, gp_w[l]) + gp_b[l]                      # (1, D) broadcast
        fused = gate * c + (1.0 - gate) * gp

        y = _layernorm(y + fused, ln[2:3], ln[3:4])
        f = _ffn(y, d_w1[l], d_b1[l], d_w2[l], d_b2[l])
        y = _layernorm(y + f, ln[4:5], ln[5:6])

    # ------------------- vocab projection + log_softmax ---------------------
    logits = _mm(y.astype(BF), o_w[...]) + o_b[...]           # (S, V) f32
    m = jnp.max(logits, axis=-1, keepdims=True)
    lse = jnp.log(jnp.sum(jnp.exp(logits - m), axis=-1, keepdims=True)) + m
    out_ref[0] = logits - lse


# ------------------------------ kernel wrapper -------------------------------


def _full_spec(arr):
    """Whole-array block, same block every grid step (DMA'd once)."""
    zeros = (0,) * arr.ndim
    return pl.BlockSpec(arr.shape, lambda i, _z=zeros: _z)


def sinusoidal_pe(seq_len, d_model):
    pos = np.arange(seq_len)[:, None].astype(np.float64)
    i = np.arange(d_model)[None, :]
    angle = pos / np.power(10000.0, (2 * (i // 2)) / float(d_model))
    pe = np.where(i % 2 == 0, np.sin(angle), np.cos(angle))
    return jnp.asarray(pe, jnp.float32)


def get_forward(params, img, seq, *, d_model, d_k, d_v, num_heads, num_layers):
    B, N, Df = img.shape
    S = seq.shape[1]
    Se = N + 1
    V = params["out"]["w"].shape[1]

    # ---- GlobalEnhancedTransformer.forward (exact top-level semantics) ----
    x = jnp.sum(img, axis=1)                                   # torch.sum(img, dim=1)
    nnz = jnp.count_nonzero(x)                                 # len(torch.nonzero(x))
    num_padding = x.shape[0] - nnz                             # len(x) - nnz
    g = x / (x.shape[0] - num_padding).astype(jnp.float32)     # x / (len(x) - num_padding)
    v = jnp.concatenate([img, g[:, None, :]], axis=-2)         # (B, N+1, Df)

    # Decoder input: embedding + scale + sinusoidal positional encoding.
    emb = (params["embed"][seq] * jnp.sqrt(float(d_model))
           + sinusoidal_pe(S, d_model)[None])                  # (B, S, D)

    bf = lambda a: a.astype(_MXU_DTYPE)
    e, d = params["enc"], params["dec"]
    weights = [
        bf(params["in_proj"]["w"]), params["in_proj"]["b"],
        bf(e["wqkv"]), e["bqkv"], bf(e["wo"]), e["bo"], e["ln"],
        bf(e["w1"]), e["b1"], bf(e["w2"]), e["b2"],
        bf(d["s_wqkv"]), d["s_bqkv"], bf(d["s_wo"]), d["s_bo"],
        bf(d["c_wq"]), d["c_bq"], bf(d["c_wkv"]), d["c_bkv"],
        bf(d["c_wo"]), d["c_bo"],
        bf(d["g_wc"]), bf(d["g_wg"]), d["g_b"], bf(d["gp_w"]), d["gp_b"],
        d["ln"],
        bf(d["w1"]), d["b1"], bf(d["w2"]), d["b2"],
        bf(params["out"]["w"]), params["out"]["b"],
    ]

    kernel = functools.partial(_get_kernel, L=num_layers, H=num_heads,
                               dk=d_k, dv=d_v, N=N,
                               scale=1.0 / math.sqrt(d_k))

    out = pl.pallas_call(
        kernel,
        out_shape=jax.ShapeDtypeStruct((B, S, V), jnp.float32),
        grid=(B,),
        in_specs=[pl.BlockSpec((1, Se, Df), lambda i: (i, 0, 0)),
                  pl.BlockSpec((1, S, d_model), lambda i: (i, 0, 0))]
                 + [_full_spec(a) for a in weights],
        out_specs=pl.BlockSpec((1, S, V), lambda i: (i, 0, 0)),
        compiler_params=pltpu.CompilerParams(
            dimension_semantics=("parallel",),          # v7x: one batch element per TC
            vmem_limit_bytes=32 * 1024 * 1024),
    )(v, emb, *weights)
    return out


# ------------------------------ parameter init -------------------------------


def init_params(seed, vocab_size, feature_size, d_model, d_k, d_v, num_heads,
                num_layers, d_ff):
    keys = iter(jax.random.split(jax.random.PRNGKey(seed), 64))

    def dense(shape):
        return jax.random.normal(next(keys), shape, jnp.float32) * 0.02

    L, H = num_layers, num_heads
    nqk, nv = H * d_k, H * d_v

    def ln_slab(n_pairs):                      # rows: [gamma, beta] * n_pairs
        pat = jnp.array([1.0, 0.0] * n_pairs, jnp.float32)
        return jnp.tile(pat[None, :, None], (L, 1, d_model))

    enc = {
        "wqkv": dense((L, d_model, 2 * nqk + nv)),
        "bqkv": jnp.zeros((L, 1, 2 * nqk + nv), jnp.float32),
        "wo": dense((L, nv, d_model)),
        "bo": jnp.zeros((L, 1, d_model), jnp.float32),
        "ln": ln_slab(2),
        "w1": dense((L, d_model, d_ff)),
        "b1": jnp.zeros((L, 1, d_ff), jnp.float32),
        "w2": dense((L, d_ff, d_model)),
        "b2": jnp.zeros((L, 1, d_model), jnp.float32),
    }
    dec = {
        "s_wqkv": dense((L, d_model, 2 * nqk + nv)),
        "s_bqkv": jnp.zeros((L, 1, 2 * nqk + nv), jnp.float32),
        "s_wo": dense((L, nv, d_model)),
        "s_bo": jnp.zeros((L, 1, d_model), jnp.float32),
        "c_wq": dense((L, d_model, nqk)),
        "c_bq": jnp.zeros((L, 1, nqk), jnp.float32),
        "c_wkv": dense((L, d_model, nqk + nv)),
        "c_bkv": jnp.zeros((L, 1, nqk + nv), jnp.float32),
        "c_wo": dense((L, nv, d_model)),
        "c_bo": jnp.zeros((L, 1, d_model), jnp.float32),
        "g_wc": dense((L, d_model, d_model)),       # gate weight, half acting on c
        "g_wg": dense((L, d_model, d_model)),       # gate weight, half acting on g
        "g_b": jnp.zeros((L, 1, d_model), jnp.float32),
        "gp_w": dense((L, d_model, d_model)),
        "gp_b": jnp.zeros((L, 1, d_model), jnp.float32),
        "ln": ln_slab(3),
        "w1": dense((L, d_model, d_ff)),
        "b1": jnp.zeros((L, 1, d_ff), jnp.float32),
        "w2": dense((L, d_ff, d_model)),
        "b2": jnp.zeros((L, 1, d_model), jnp.float32),
    }
    return {
        "in_proj": {"w": dense((feature_size, d_model)),
                    "b": jnp.zeros((1, d_model), jnp.float32)},
        "enc": enc,
        "embed": dense((vocab_size, d_model)),
        "dec": dec,
        "out": {"w": dense((d_model, vocab_size)),
                "b": jnp.zeros((1, vocab_size), jnp.float32)},
    }


# ----------------------------------- main ------------------------------------

if __name__ == "__main__":
    vocab_size = 50
    feature_size = 32
    d_model = 32
    d_k = d_v = 8
    num_heads = 4
    num_layers = 2
    d_ff = 4 * d_model
    drop = 0.0                         # dropout is a no-op at inference

    batch = 2
    num_regions = 8
    seq_len = 6

    key = jax.random.PRNGKey(0)
    k_img, k_seq = jax.random.split(key)
    img = jax.random.normal(k_img, (batch, num_regions, feature_size), jnp.float32)
    seq = jax.random.randint(k_seq, (batch, seq_len), 1, vocab_size).astype(jnp.int32)

    params = init_params(0, vocab_size, feature_size, d_model, d_k, d_v,
                         num_heads, num_layers, d_ff)

    fwd = jax.jit(functools.partial(get_forward, d_model=d_model, d_k=d_k,
                                    d_v=d_v, num_heads=num_heads,
                                    num_layers=num_layers))
    out = jax.block_until_ready(fwd(params, img, seq))
    assert out.shape == (batch, seq_len, vocab_size)
    assert bool(jnp.all(jnp.isfinite(out)))
    print("KERNEL_OK")
</pallas_src>

<mosaic_0001>
module attributes {stable_mosaic.version = 11 : i64} {
  func.func @_get_kernel(%arg0: i32, %arg1: memref<1x9x32xf32, #tpu.memory_space<vmem>>, %arg2: memref<1x6x32xf32, #tpu.memory_space<vmem>>, %arg3: memref<32x32xbf16, #tpu.memory_space<vmem>>, %arg4: memref<1x32xf32, #tpu.memory_space<vmem>>, %arg5: memref<2x32x96xbf16, #tpu.memory_space<vmem>>, %arg6: memref<2x1x96xf32, #tpu.memory_space<vmem>>, %arg7: memref<2x32x32xbf16, #tpu.memory_space<vmem>>, %arg8: memref<2x1x32xf32, #tpu.memory_space<vmem>>, %arg9: memref<2x4x32xf32, #tpu.memory_space<vmem>>, %arg10: memref<2x32x128xbf16, #tpu.memory_space<vmem>>, %arg11: memref<2x1x128xf32, #tpu.memory_space<vmem>>, %arg12: memref<2x128x32xbf16, #tpu.memory_space<vmem>>, %arg13: memref<2x1x32xf32, #tpu.memory_space<vmem>>, %arg14: memref<2x32x96xbf16, #tpu.memory_space<vmem>>, %arg15: memref<2x1x96xf32, #tpu.memory_space<vmem>>, %arg16: memref<2x32x32xbf16, #tpu.memory_space<vmem>>, %arg17: memref<2x1x32xf32, #tpu.memory_space<vmem>>, %arg18: memref<2x32x32xbf16, #tpu.memory_space<vmem>>, %arg19: memref<2x1x32xf32, #tpu.memory_space<vmem>>, %arg20: memref<2x32x64xbf16, #tpu.memory_space<vmem>>, %arg21: memref<2x1x64xf32, #tpu.memory_space<vmem>>, %arg22: memref<2x32x32xbf16, #tpu.memory_space<vmem>>, %arg23: memref<2x1x32xf32, #tpu.memory_space<vmem>>, %arg24: memref<2x32x32xbf16, #tpu.memory_space<vmem>>, %arg25: memref<2x32x32xbf16, #tpu.memory_space<vmem>>, %arg26: memref<2x1x32xf32, #tpu.memory_space<vmem>>, %arg27: memref<2x32x32xbf16, #tpu.memory_space<vmem>>, %arg28: memref<2x1x32xf32, #tpu.memory_space<vmem>>, %arg29: memref<2x6x32xf32, #tpu.memory_space<vmem>>, %arg30: memref<2x32x128xbf16, #tpu.memory_space<vmem>>, %arg31: memref<2x1x128xf32, #tpu.memory_space<vmem>>, %arg32: memref<2x128x32xbf16, #tpu.memory_space<vmem>>, %arg33: memref<2x1x32xf32, #tpu.memory_space<vmem>>, %arg34: memref<32x50xbf16, #tpu.memory_space<vmem>>, %arg35: memref<1x50xf32, #tpu.memory_space<vmem>>, %arg36: memref<1x6x50xf32, #tpu.memory_space<vmem>>) attributes {dimension_semantics = [#tpu.dimension_semantics<parallel>], iteration_bounds = array<i64: 2>, scalar_prefetch = 0 : i64, scratch_operands = 0 : i64, tpu.core_type = #tpu.core_type<tc>, window_params = [{transform_indices = @transform_0, window_bounds = array<i64: 1, 9, 32>}, {transform_indices = @transform_1, window_bounds = array<i64: 1, 6, 32>}, {pipeline_mode = #tpu.pipeline_mode<synchronous>, transform_indices = @transform_2, window_bounds = array<i64: 32, 32>}, {pipeline_mode = #tpu.pipeline_mode<synchronous>, transform_indices = @transform_3, window_bounds = array<i64: 1, 32>}, {pipeline_mode = #tpu.pipeline_mode<synchronous>, transform_indices = @transform_4, window_bounds = array<i64: 2, 32, 96>}, {pipeline_mode = #tpu.pipeline_mode<synchronous>, transform_indices = @transform_5, window_bounds = array<i64: 2, 1, 96>}, {pipeline_mode = #tpu.pipeline_mode<synchronous>, transform_indices = @transform_6, window_bounds = array<i64: 2, 32, 32>}, {pipeline_mode = #tpu.pipeline_mode<synchronous>, transform_indices = @transform_7, window_bounds = array<i64: 2, 1, 32>}, {pipeline_mode = #tpu.pipeline_mode<synchronous>, transform_indices = @transform_8, window_bounds = array<i64: 2, 4, 32>}, {pipeline_mode = #tpu.pipeline_mode<synchronous>, transform_indices = @transform_9, window_bounds = array<i64: 2, 32, 128>}, {pipeline_mode = #tpu.pipeline_mode<synchronous>, transform_indices = @transform_10, window_bounds = array<i64: 2, 1, 128>}, {pipeline_mode = #tpu.pipeline_mode<synchronous>, transform_indices = @transform_11, window_bounds = array<i64: 2, 128, 32>}, {pipeline_mode = #tpu.pipeline_mode<synchronous>, transform_indices = @transform_12, window_bounds = array<i64: 2, 1, 32>}, {pipeline_mode = #tpu.pipeline_mode<synchronous>, transform_indices = @transform_13, window_bounds = array<i64: 2, 32, 96>}, {pipeline_mode = #tpu.pipeline_mode<synchronous>, transform_indices = @transform_14, window_bounds = array<i64: 2, 1, 96>}, {pipeline_mode = #tpu.pipeline_mode<synchronous>, transform_indices = @transform_15, window_bounds = array<i64: 2, 32, 32>}, {pipeline_mode = #tpu.pipeline_mode<synchronous>, transform_indices = @transform_16, window_bounds = array<i64: 2, 1, 32>}, {pipeline_mode = #tpu.pipeline_mode<synchronous>, transform_indices = @transform_17, window_bounds = array<i64: 2, 32, 32>}, {pipeline_mode = #tpu.pipeline_mode<synchronous>, transform_indices = @transform_18, window_bounds = array<i64: 2, 1, 32>}, {pipeline_mode = #tpu.pipeline_mode<synchronous>, transform_indices = @transform_19, window_bounds = array<i64: 2, 32, 64>}, {pipeline_mode = #tpu.pipeline_mode<synchronous>, transform_indices = @transform_20, window_bounds = array<i64: 2, 1, 64>}, {pipeline_mode = #tpu.pipeline_mode<synchronous>, transform_indices = @transform_21, window_bounds = array<i64: 2, 32, 32>}, {pipeline_mode = #tpu.pipeline_mode<synchronous>, transform_indices = @transform_22, window_bounds = array<i64: 2, 1, 32>}, {pipeline_mode = #tpu.pipeline_mode<synchronous>, transform_indices = @transform_23, window_bounds = array<i64: 2, 32, 32>}, {pipeline_mode = #tpu.pipeline_mode<synchronous>, transform_indices = @transform_24, window_bounds = array<i64: 2, 32, 32>}, {pipeline_mode = #tpu.pipeline_mode<synchronous>, transform_indices = @transform_25, window_bounds = array<i64: 2, 1, 32>}, {pipeline_mode = #tpu.pipeline_mode<synchronous>, transform_indices = @transform_26, window_bounds = array<i64: 2, 32, 32>}, {pipeline_mode = #tpu.pipeline_mode<synchronous>, transform_indices = @transform_27, window_bounds = array<i64: 2, 1, 32>}, {pipeline_mode = #tpu.pipeline_mode<synchronous>, transform_indices = @transform_28, window_bounds = array<i64: 2, 6, 32>}, {pipeline_mode = #tpu.pipeline_mode<synchronous>, transform_indices = @transform_29, window_bounds = array<i64: 2, 32, 128>}, {pipeline_mode = #tpu.pipeline_mode<synchronous>, transform_indices = @transform_30, window_bounds = array<i64: 2, 1, 128>}, {pipeline_mode = #tpu.pipeline_mode<synchronous>, transform_indices = @transform_31, window_bounds = array<i64: 2, 128, 32>}, {pipeline_mode = #tpu.pipeline_mode<synchronous>, transform_indices = @transform_32, window_bounds = array<i64: 2, 1, 32>}, {pipeline_mode = #tpu.pipeline_mode<synchronous>, transform_indices = @transform_33, window_bounds = array<i64: 32, 50>}, {pipeline_mode = #tpu.pipeline_mode<synchronous>, transform_indices = @transform_34, window_bounds = array<i64: 1, 50>}, {transform_indices = @transform_35, window_bounds = array<i64: 1, 6, 50>}]} {
    %c0 = arith.constant 0 : index
    %c0_0 = arith.constant 0 : index
    %c0_1 = arith.constant 0 : index
    %0 = vector.load %arg1[%c0, %c0_0, %c0_1] : memref<1x9x32xf32, #tpu.memory_space<vmem>>, vector<1x9x32xf32>
    %1 = vector.shape_cast %0 : vector<1x9x32xf32> to vector<9x32xf32>
    %2 = arith.truncf %1 : vector<9x32xf32> to vector<9x32xbf16>
    %c0_2 = arith.constant 0 : index
    %c0_3 = arith.constant 0 : index
    %3 = vector.load %arg3[%c0_2, %c0_3] : memref<32x32xbf16, #tpu.memory_space<vmem>>, vector<32x32xbf16>
    %cst = arith.constant dense<0.000000e+00> : vector<9x32xf32>
    %4 = tpu.matmul %2, %3, %cst {dimension_numbers = #tpu.dot_dimension_numbers<[1], [0], [0], [1], [0, 0, 1, 1], [], []>} : vector<9x32xbf16>, vector<32x32xbf16>, vector<9x32xf32> -> vector<9x32xf32>
    %c0_4 = arith.constant 0 : index
    %c0_5 = arith.constant 0 : index
    %5 = vector.load %arg4[%c0_4, %c0_5] : memref<1x32xf32, #tpu.memory_space<vmem>>, vector<1x32xf32>
    %6 = vector.broadcast %5 : vector<1x32xf32> to vector<9x32xf32>
    %7 = arith.addf %4, %6 : vector<9x32xf32>
    %c0_6 = arith.constant 0 : index
    %c0_7 = arith.constant 0 : index
    %c0_8 = arith.constant 0 : index
    %8 = vector.load %arg9[%c0_6, %c0_7, %c0_8] : memref<2x4x32xf32, #tpu.memory_space<vmem>>, vector<1x4x32xf32>
    %9 = vector.shape_cast %8 : vector<1x4x32xf32> to vector<4x32xf32>
    %10 = arith.truncf %7 : vector<9x32xf32> to vector<9x32xbf16>
    %c0_9 = arith.constant 0 : index
    %c0_10 = arith.constant 0 : index
    %c0_11 = arith.constant 0 : index
    %11 = vector.load %arg5[%c0_9, %c0_10, %c0_11] : memref<2x32x96xbf16, #tpu.memory_space<vmem>>, vector<1x32x96xbf16>
    %12 = vector.shape_cast %11 : vector<1x32x96xbf16> to vector<32x96xbf16>
    %c0_12 = arith.constant 0 : index
    %c0_13 = arith.constant 0 : index
    %c0_14 = arith.constant 0 : index
    %13 = vector.load %arg6[%c0_12, %c0_13, %c0_14] : memref<2x1x96xf32, #tpu.memory_space<vmem>>, vector<1x1x96xf32>
    %14 = vector.shape_cast %13 : vector<1x1x96xf32> to vector<1x96xf32>
    %c0_15 = arith.constant 0 : index
    %c0_16 = arith.constant 0 : index
    %c0_17 = arith.constant 0 : index
    %15 = vector.load %arg7[%c0_15, %c0_16, %c0_17] : memref<2x32x32xbf16, #tpu.memory_space<vmem>>, vector<1x32x32xbf16>
    %16 = vector.shape_cast %15 : vector<1x32x32xbf16> to vector<32x32xbf16>
    %c0_18 = arith.constant 0 : index
    %c0_19 = arith.constant 0 : index
    %c0_20 = arith.constant 0 : index
    %17 = vector.load %arg8[%c0_18, %c0_19, %c0_20] : memref<2x1x32xf32, #tpu.memory_space<vmem>>, vector<1x1x32xf32>
    %18 = vector.shape_cast %17 : vector<1x1x32xf32> to vector<1x32xf32>
    %cst_21 = arith.constant dense<0.000000e+00> : vector<9x96xf32>
    %19 = tpu.matmul %10, %12, %cst_21 {dimension_numbers = #tpu.dot_dimension_numbers<[1], [0], [0], [1], [0, 0, 1, 1], [], []>} : vector<9x32xbf16>, vector<32x96xbf16>, vector<9x96xf32> -> vector<9x96xf32>
    %20 = vector.broadcast %14 : vector<1x96xf32> to vector<9x96xf32>
    %21 = arith.addf %19, %20 : vector<9x96xf32>
    %22 = vector.extract_strided_slice %21 {offsets = [0, 0], sizes = [9, 32], strides = [1, 1]} : vector<9x96xf32> to vector<9x32xf32>
    %23 = vector.extract_strided_slice %21 {offsets = [0, 32], sizes = [9, 32], strides = [1, 1]} : vector<9x96xf32> to vector<9x32xf32>
    %24 = vector.extract_strided_slice %21 {offsets = [0, 64], sizes = [9, 32], strides = [1, 1]} : vector<9x96xf32> to vector<9x32xf32>
    %25 = arith.truncf %22 : vector<9x32xf32> to vector<9x32xbf16>
    %26 = arith.truncf %23 : vector<9x32xf32> to vector<9x32xbf16>
    %27 = arith.truncf %24 : vector<9x32xf32> to vector<9x32xbf16>
    %28 = vector.extract_strided_slice %25 {offsets = [0, 0], sizes = [9, 8], strides = [1, 1]} : vector<9x32xbf16> to vector<9x8xbf16>
    %29 = vector.extract_strided_slice %26 {offsets = [0, 0], sizes = [9, 8], strides = [1, 1]} : vector<9x32xbf16> to vector<9x8xbf16>
    %30 = vector.extract_strided_slice %27 {offsets = [0, 0], sizes = [9, 8], strides = [1, 1]} : vector<9x32xbf16> to vector<9x8xbf16>
    %cst_22 = arith.constant dense<0.000000e+00> : vector<9x9xf32>
    %31 = tpu.matmul %28, %29, %cst_22 {dimension_numbers = #tpu.dot_dimension_numbers<[1], [1], [0], [0], [0, 0, 1, 0], [], []>} : vector<9x8xbf16>, vector<9x8xbf16>, vector<9x9xf32> -> vector<9x9xf32>
    %cst_23 = arith.constant 0.353553385 : f32
    %32 = vector.broadcast %cst_23 : f32 to vector<9x9xf32>
    %33 = arith.mulf %31, %32 : vector<9x9xf32>
    %cst_24 = arith.constant dense<0xFF800000> : vector<9xf32>
    %34 = vector.multi_reduction <maximumf>, %33, %cst_24 [1] : vector<9x9xf32> to vector<9xf32>
    %35 = vector.shape_cast %34 : vector<9xf32> to vector<9x1xf32>
    %36 = vector.broadcast %35 : vector<9x1xf32> to vector<9x9xf32>
    %37 = arith.subf %33, %36 : vector<9x9xf32>
    %38 = math.exp %37 : vector<9x9xf32>
    %cst_25 = arith.constant dense<0.000000e+00> : vector<9xf32>
    %39 = vector.multi_reduction <add>, %38, %cst_25 [1] : vector<9x9xf32> to vector<9xf32>
    %40 = vector.shape_cast %39 : vector<9xf32> to vector<9x1xf32>
    %41 = tpu.reciprocal %40 {approx = true} : vector<9x1xf32> -> vector<9x1xf32>
    %42 = vector.broadcast %41 : vector<9x1xf32> to vector<9x9xf32>
    %43 = arith.mulf %38, %42 : vector<9x9xf32>
    %44 = arith.truncf %43 : vector<9x9xf32> to vector<9x9xbf16>
    %cst_26 = arith.constant dense<0.000000e+00> : vector<9x8xf32>
    %45 = tpu.matmul %44, %30, %cst_26 {dimension_numbers = #tpu.dot_dimension_numbers<[1], [0], [0], [1], [0, 0, 1, 1], [], []>} : vector<9x9xbf16>, vector<9x8xbf16>, vector<9x8xf32> -> vector<9x8xf32>
    %46 = vector.extract_strided_slice %25 {offsets = [0, 8], sizes = [9, 8], strides = [1, 1]} : vector<9x32xbf16> to vector<9x8xbf16>
    %47 = vector.extract_strided_slice %26 {offsets = [0, 8], sizes = [9, 8], strides = [1, 1]} : vector<9x32xbf16> to vector<9x8xbf16>
    %48 = vector.extract_strided_slice %27 {offsets = [0, 8], sizes = [9, 8], strides = [1, 1]} : vector<9x32xbf16> to vector<9x8xbf16>
    %cst_27 = arith.constant dense<0.000000e+00> : vector<9x9xf32>
    %49 = tpu.matmul %46, %47, %cst_27 {dimension_numbers = #tpu.dot_dimension_numbers<[1], [1], [0], [0], [0, 0, 1, 0], [], []>} : vector<9x8xbf16>, vector<9x8xbf16>, vector<9x9xf32> -> vector<9x9xf32>
    %cst_28 = arith.constant 0.353553385 : f32
    %50 = vector.broadcast %cst_28 : f32 to vector<9x9xf32>
    %51 = arith.mulf %49, %50 : vector<9x9xf32>
    %cst_29 = arith.constant dense<0xFF800000> : vector<9xf32>
    %52 = vector.multi_reduction <maximumf>, %51, %cst_29 [1] : vector<9x9xf32> to vector<9xf32>
    %53 = vector.shape_cast %52 : vector<9xf32> to vector<9x1xf32>
    %54 = vector.broadcast %53 : vector<9x1xf32> to vector<9x9xf32>
    %55 = arith.subf %51, %54 : vector<9x9xf32>
    %56 = math.exp %55 : vector<9x9xf32>
    %cst_30 = arith.constant dense<0.000000e+00> : vector<9xf32>
    %57 = vector.multi_reduction <add>, %56, %cst_30 [1] : vector<9x9xf32> to vector<9xf32>
    %58 = vector.shape_cast %57 : vector<9xf32> to vector<9x1xf32>
    %59 = tpu.reciprocal %58 {approx = true} : vector<9x1xf32> -> vector<9x1xf32>
    %60 = vector.broadcast %59 : vector<9x1xf32> to vector<9x9xf32>
    %61 = arith.mulf %56, %60 : vector<9x9xf32>
    %62 = arith.truncf %61 : vector<9x9xf32> to vector<9x9xbf16>
    %cst_31 = arith.constant dense<0.000000e+00> : vector<9x8xf32>
    %63 = tpu.matmul %62, %48, %cst_31 {dimension_numbers = #tpu.dot_dimension_numbers<[1], [0], [0], [1], [0, 0, 1, 1], [], []>} : vector<9x9xbf16>, vector<9x8xbf16>, vector<9x8xf32> -> vector<9x8xf32>
    %64 = vector.extract_strided_slice %25 {offsets = [0, 16], sizes = [9, 8], strides = [1, 1]} : vector<9x32xbf16> to vector<9x8xbf16>
    %65 = vector.extract_strided_slice %26 {offsets = [0, 16], sizes = [9, 8], strides = [1, 1]} : vector<9x32xbf16> to vector<9x8xbf16>
    %66 = vector.extract_strided_slice %27 {offsets = [0, 16], sizes = [9, 8], strides = [1, 1]} : vector<9x32xbf16> to vector<9x8xbf16>
    %cst_32 = arith.constant dense<0.000000e+00> : vector<9x9xf32>
    %67 = tpu.matmul %64, %65, %cst_32 {dimension_numbers = #tpu.dot_dimension_numbers<[1], [1], [0], [0], [0, 0, 1, 0], [], []>} : vector<9x8xbf16>, vector<9x8xbf16>, vector<9x9xf32> -> vector<9x9xf32>
    %cst_33 = arith.constant 0.353553385 : f32
    %68 = vector.broadcast %cst_33 : f32 to vector<9x9xf32>
    %69 = arith.mulf %67, %68 : vector<9x9xf32>
    %cst_34 = arith.constant dense<0xFF800000> : vector<9xf32>
    %70 = vector.multi_reduction <maximumf>, %69, %cst_34 [1] : vector<9x9xf32> to vector<9xf32>
    %71 = vector.shape_cast %70 : vector<9xf32> to vector<9x1xf32>
    %72 = vector.broadcast %71 : vector<9x1xf32> to vector<9x9xf32>
    %73 = arith.subf %69, %72 : vector<9x9xf32>
    %74 = math.exp %73 : vector<9x9xf32>
    %cst_35 = arith.constant dense<0.000000e+00> : vector<9xf32>
    %75 = vector.multi_reduction <add>, %74, %cst_35 [1] : vector<9x9xf32> to vector<9xf32>
    %76 = vector.shape_cast %75 : vector<9xf32> to vector<9x1xf32>
    %77 = tpu.reciprocal %76 {approx = true} : vector<9x1xf32> -> vector<9x1xf32>
    %78 = vector.broadcast %77 : vector<9x1xf32> to vector<9x9xf32>
    %79 = arith.mulf %74, %78 : vector<9x9xf32>
    %80 = arith.truncf %79 : vector<9x9xf32> to vector<9x9xbf16>
    %cst_36 = arith.constant dense<0.000000e+00> : vector<9x8xf32>
    %81 = tpu.matmul %80, %66, %cst_36 {dimension_numbers = #tpu.dot_dimension_numbers<[1], [0], [0], [1], [0, 0, 1, 1], [], []>} : vector<9x9xbf16>, vector<9x8xbf16>, vector<9x8xf32> -> vector<9x8xf32>
    %82 = vector.extract_strided_slice %25 {offsets = [0, 24], sizes = [9, 8], strides = [1, 1]} : vector<9x32xbf16> to vector<9x8xbf16>
    %83 = vector.extract_strided_slice %26 {offsets = [0, 24], sizes = [9, 8], strides = [1, 1]} : vector<9x32xbf16> to vector<9x8xbf16>
    %84 = vector.extract_strided_slice %27 {offsets = [0, 24], sizes = [9, 8], strides = [1, 1]} : vector<9x32xbf16> to vector<9x8xbf16>
    %cst_37 = arith.constant dense<0.000000e+00> : vector<9x9xf32>
    %85 = tpu.matmul %82, %83, %cst_37 {dimension_numbers = #tpu.dot_dimension_numbers<[1], [1], [0], [0], [0, 0, 1, 0], [], []>} : vector<9x8xbf16>, vector<9x8xbf16>, vector<9x9xf32> -> vector<9x9xf32>
    %cst_38 = arith.constant 0.353553385 : f32
    %86 = vector.broadcast %cst_38 : f32 to vector<9x9xf32>
    %87 = arith.mulf %85, %86 : vector<9x9xf32>
    %cst_39 = arith.constant dense<0xFF800000> : vector<9xf32>
    %88 = vector.multi_reduction <maximumf>, %87, %cst_39 [1] : vector<9x9xf32> to vector<9xf32>
    %89 = vector.shape_cast %88 : vector<9xf32> to vector<9x1xf32>
    %90 = vector.broadcast %89 : vector<9x1xf32> to vector<9x9xf32>
    %91 = arith.subf %87, %90 : vector<9x9xf32>
    %92 = math.exp %91 : vector<9x9xf32>
    %cst_40 = arith.constant dense<0.000000e+00> : vector<9xf32>
    %93 = vector.multi_reduction <add>, %92, %cst_40 [1] : vector<9x9xf32> to vector<9xf32>
    %94 = vector.shape_cast %93 : vector<9xf32> to vector<9x1xf32>
    %95 = tpu.reciprocal %94 {approx = true} : vector<9x1xf32> -> vector<9x1xf32>
    %96 = vector.broadcast %95 : vector<9x1xf32> to vector<9x9xf32>
    %97 = arith.mulf %92, %96 : vector<9x9xf32>
    %98 = arith.truncf %97 : vector<9x9xf32> to vector<9x9xbf16>
    %cst_41 = arith.constant dense<0.000000e+00> : vector<9x8xf32>
    %99 = tpu.matmul %98, %84, %cst_41 {dimension_numbers = #tpu.dot_dimension_numbers<[1], [0], [0], [1], [0, 0, 1, 1], [], []>} : vector<9x9xbf16>, vector<9x8xbf16>, vector<9x8xf32> -> vector<9x8xf32>
    %100 = tpu.concatenate %45, %63, %81, %99 in 1 : vector<9x8xf32>, vector<9x8xf32>, vector<9x8xf32>, vector<9x8xf32> -> vector<9x32xf32>
    %101 = arith.truncf %100 : vector<9x32xf32> to vector<9x32xbf16>
    %cst_42 = arith.constant dense<0.000000e+00> : vector<9x32xf32>
    %102 = tpu.matmul %101, %16, %cst_42 {dimension_numbers = #tpu.dot_dimension_numbers<[1], [0], [0], [1], [0, 0, 1, 1], [], []>} : vector<9x32xbf16>, vector<32x32xbf16>, vector<9x32xf32> -> vector<9x32xf32>
    %103 = vector.broadcast %18 : vector<1x32xf32> to vector<9x32xf32>
    %104 = arith.addf %102, %103 : vector<9x32xf32>
    %105 = arith.addf %7, %104 : vector<9x32xf32>
    %106 = vector.extract_strided_slice %9 {offsets = [0, 0], sizes = [1, 32], strides = [1, 1]} : vector<4x32xf32> to vector<1x32xf32>
    %107 = vector.extract_strided_slice %9 {offsets = [1, 0], sizes = [1, 32], strides = [1, 1]} : vector<4x32xf32> to vector<1x32xf32>
    %cst_43 = arith.constant dense<0.000000e+00> : vector<9xf32>
    %108 = vector.multi_reduction <add>, %105, %cst_43 [1] : vector<9x32xf32> to vector<9xf32>
    %109 = vector.shape_cast %108 : vector<9xf32> to vector<9x1xf32>
    %cst_44 = arith.constant 3.200000e+01 : f32
    %110 = vector.broadcast %cst_44 : f32 to vector<9x1xf32>
    %111 = arith.divf %109, %110 : vector<9x1xf32>
    %112 = vector.broadcast %111 : vector<9x1xf32> to vector<9x32xf32>
    %113 = arith.subf %105, %112 : vector<9x32xf32>
    %114 = arith.mulf %113, %113 : vector<9x32xf32>
    %cst_45 = arith.constant dense<0.000000e+00> : vector<9xf32>
    %115 = vector.multi_reduction <add>, %114, %cst_45 [1] : vector<9x32xf32> to vector<9xf32>
    %116 = vector.shape_cast %115 : vector<9xf32> to vector<9x1xf32>
    %cst_46 = arith.constant 3.200000e+01 : f32
    %117 = vector.broadcast %cst_46 : f32 to vector<9x1xf32>
    %118 = arith.divf %116, %117 : vector<9x1xf32>
    %119 = vector.broadcast %111 : vector<9x1xf32> to vector<9x32xf32>
    %120 = arith.subf %105, %119 : vector<9x32xf32>
    %cst_47 = arith.constant 9.99999974E-6 : f32
    %121 = vector.broadcast %cst_47 : f32 to vector<9x1xf32>
    %122 = arith.addf %118, %121 : vector<9x1xf32>
    %123 = math.rsqrt %122 : vector<9x1xf32>
    %124 = vector.broadcast %123 : vector<9x1xf32> to vector<9x32xf32>
    %125 = arith.mulf %120, %124 : vector<9x32xf32>
    %126 = vector.broadcast %106 : vector<1x32xf32> to vector<9x32xf32>
    %127 = arith.mulf %125, %126 : vector<9x32xf32>
    %128 = vector.broadcast %107 : vector<1x32xf32> to vector<9x32xf32>
    %129 = arith.addf %127, %128 : vector<9x32xf32>
    %c0_48 = arith.constant 0 : index
    %c0_49 = arith.constant 0 : index
    %c0_50 = arith.constant 0 : index
    %130 = vector.load %arg10[%c0_48, %c0_49, %c0_50] : memref<2x32x128xbf16, #tpu.memory_space<vmem>>, vector<1x32x128xbf16>
    %131 = vector.shape_cast %130 : vector<1x32x128xbf16> to vector<32x128xbf16>
    %c0_51 = arith.constant 0 : index
    %c0_52 = arith.constant 0 : index
    %c0_53 = arith.constant 0 : index
    %132 = vector.load %arg11[%c0_51, %c0_52, %c0_53] : memref<2x1x128xf32, #tpu.memory_space<vmem>>, vector<1x1x128xf32>
    %133 = vector.shape_cast %132 : vector<1x1x128xf32> to vector<1x128xf32>
    %c0_54 = arith.constant 0 : index
    %c0_55 = arith.constant 0 : index
    %c0_56 = arith.constant 0 : index
    %134 = vector.load %arg12[%c0_54, %c0_55, %c0_56] : memref<2x128x32xbf16, #tpu.memory_space<vmem>>, vector<1x128x32xbf16>
    %135 = vector.shape_cast %134 : vector<1x128x32xbf16> to vector<128x32xbf16>
    %c0_57 = arith.constant 0 : index
    %c0_58 = arith.constant 0 : index
    %c0_59 = arith.constant 0 : index
    %136 = vector.load %arg13[%c0_57, %c0_58, %c0_59] : memref<2x1x32xf32, #tpu.memory_space<vmem>>, vector<1x1x32xf32>
    %137 = vector.shape_cast %136 : vector<1x1x32xf32> to vector<1x32xf32>
    %138 = arith.truncf %129 : vector<9x32xf32> to vector<9x32xbf16>
    %cst_60 = arith.constant dense<0.000000e+00> : vector<9x128xf32>
    %139 = tpu.matmul %138, %131, %cst_60 {dimension_numbers = #tpu.dot_dimension_numbers<[1], [0], [0], [1], [0, 0, 1, 1], [], []>} : vector<9x32xbf16>, vector<32x128xbf16>, vector<9x128xf32> -> vector<9x128xf32>
    %140 = vector.broadcast %133 : vector<1x128xf32> to vector<9x128xf32>
    %141 = arith.addf %139, %140 : vector<9x128xf32>
    %cst_61 = arith.constant 0.000000e+00 : f32
    %142 = vector.broadcast %cst_61 : f32 to vector<9x128xf32>
    %143 = arith.maximumf %141, %142 : vector<9x128xf32>
    %144 = arith.truncf %143 : vector<9x128xf32> to vector<9x128xbf16>
    %cst_62 = arith.constant dense<0.000000e+00> : vector<9x32xf32>
    %145 = tpu.matmul %144, %135, %cst_62 {dimension_numbers = #tpu.dot_dimension_numbers<[1], [0], [0], [1], [0, 0, 1, 1], [], []>} : vector<9x128xbf16>, vector<128x32xbf16>, vector<9x32xf32> -> vector<9x32xf32>
    %146 = vector.broadcast %137 : vector<1x32xf32> to vector<9x32xf32>
    %147 = arith.addf %145, %146 : vector<9x32xf32>
    %148 = arith.addf %129, %147 : vector<9x32xf32>
    %149 = vector.extract_strided_slice %9 {offsets = [2, 0], sizes = [1, 32], strides = [1, 1]} : vector<4x32xf32> to vector<1x32xf32>
    %150 = vector.extract_strided_slice %9 {offsets = [3, 0], sizes = [1, 32], strides = [1, 1]} : vector<4x32xf32> to vector<1x32xf32>
    %cst_63 = arith.constant dense<0.000000e+00> : vector<9xf32>
    %151 = vector.multi_reduction <add>, %148, %cst_63 [1] : vector<9x32xf32> to vector<9xf32>
    %152 = vector.shape_cast %151 : vector<9xf32> to vector<9x1xf32>
    %cst_64 = arith.constant 3.200000e+01 : f32
    %153 = vector.broadcast %cst_64 : f32 to vector<9x1xf32>
    %154 = arith.divf %152, %153 : vector<9x1xf32>
    %155 = vector.broadcast %154 : vector<9x1xf32> to vector<9x32xf32>
    %156 = arith.subf %148, %155 : vector<9x32xf32>
    %157 = arith.mulf %156, %156 : vector<9x32xf32>
    %cst_65 = arith.constant dense<0.000000e+00> : vector<9xf32>
    %158 = vector.multi_reduction <add>, %157, %cst_65 [1] : vector<9x32xf32> to vector<9xf32>
    %159 = vector.shape_cast %158 : vector<9xf32> to vector<9x1xf32>
    %cst_66 = arith.constant 3.200000e+01 : f32
    %160 = vector.broadcast %cst_66 : f32 to vector<9x1xf32>
    %161 = arith.divf %159, %160 : vector<9x1xf32>
    %162 = vector.broadcast %154 : vector<9x1xf32> to vector<9x32xf32>
    %163 = arith.subf %148, %162 : vector<9x32xf32>
    %cst_67 = arith.constant 9.99999974E-6 : f32
    %164 = vector.broadcast %cst_67 : f32 to vector<9x1xf32>
    %165 = arith.addf %161, %164 : vector<9x1xf32>
    %166 = math.rsqrt %165 : vector<9x1xf32>
    %167 = vector.broadcast %166 : vector<9x1xf32> to vector<9x32xf32>
    %168 = arith.mulf %163, %167 : vector<9x32xf32>
    %169 = vector.broadcast %149 : vector<1x32xf32> to vector<9x32xf32>
    %170 = arith.mulf %168, %169 : vector<9x32xf32>
    %171 = vector.broadcast %150 : vector<1x32xf32> to vector<9x32xf32>
    %172 = arith.addf %170, %171 : vector<9x32xf32>
    %c1 = arith.constant 1 : index
    %c0_68 = arith.constant 0 : index
    %c0_69 = arith.constant 0 : index
    %173 = vector.load %arg9[%c1, %c0_68, %c0_69] : memref<2x4x32xf32, #tpu.memory_space<vmem>>, vector<1x4x32xf32>
    %174 = vector.shape_cast %173 : vector<1x4x32xf32> to vector<4x32xf32>
    %175 = arith.truncf %172 : vector<9x32xf32> to vector<9x32xbf16>
    %c1_70 = arith.constant 1 : index
    %c0_71 = arith.constant 0 : index
    %c0_72 = arith.constant 0 : index
    %176 = vector.load %arg5[%c1_70, %c0_71, %c0_72] : memref<2x32x96xbf16, #tpu.memory_space<vmem>>, vector<1x32x96xbf16>
    %177 = vector.shape_cast %176 : vector<1x32x96xbf16> to vector<32x96xbf16>
    %c1_73 = arith.constant 1 : index
    %c0_74 = arith.constant 0 : index
    %c0_75 = arith.constant 0 : index
    %178 = vector.load %arg6[%c1_73, %c0_74, %c0_75] : memref<2x1x96xf32, #tpu.memory_space<vmem>>, vector<1x1x96xf32>
    %179 = vector.shape_cast %178 : vector<1x1x96xf32> to vector<1x96xf32>
    %c1_76 = arith.constant 1 : index
    %c0_77 = arith.constant 0 : index
    %c0_78 = arith.constant 0 : index
    %180 = vector.load %arg7[%c1_76, %c0_77, %c0_78] : memref<2x32x32xbf16, #tpu.memory_space<vmem>>, vector<1x32x32xbf16>
    %181 = vector.shape_cast %180 : vector<1x32x32xbf16> to vector<32x32xbf16>
    %c1_79 = arith.constant 1 : index
    %c0_80 = arith.constant 0 : index
    %c0_81 = arith.constant 0 : index
    %182 = vector.load %arg8[%c1_79, %c0_80, %c0_81] : memref<2x1x32xf32, #tpu.memory_space<vmem>>, vector<1x1x32xf32>
    %183 = vector.shape_cast %182 : vector<1x1x32xf32> to vector<1x32xf32>
    %cst_82 = arith.constant dense<0.000000e+00> : vector<9x96xf32>
    %184 = tpu.matmul %175, %177, %cst_82 {dimension_numbers = #tpu.dot_dimension_numbers<[1], [0], [0], [1], [0, 0, 1, 1], [], []>} : vector<9x32xbf16>, vector<32x96xbf16>, vector<9x96xf32> -> vector<9x96xf32>
    %185 = vector.broadcast %179 : vector<1x96xf32> to vector<9x96xf32>
    %186 = arith.addf %184, %185 : vector<9x96xf32>
    %187 = vector.extract_strided_slice %186 {offsets = [0, 0], sizes = [9, 32], strides = [1, 1]} : vector<9x96xf32> to vector<9x32xf32>
    %188 = vector.extract_strided_slice %186 {offsets = [0, 32], sizes = [9, 32], strides = [1, 1]} : vector<9x96xf32> to vector<9x32xf32>
    %189 = vector.extract_strided_slice %186 {offsets = [0, 64], sizes = [9, 32], strides = [1, 1]} : vector<9x96xf32> to vector<9x32xf32>
    %190 = arith.truncf %187 : vector<9x32xf32> to vector<9x32xbf16>
    %191 = arith.truncf %188 : vector<9x32xf32> to vector<9x32xbf16>
    %192 = arith.truncf %189 : vector<9x32xf32> to vector<9x32xbf16>
    %193 = vector.extract_strided_slice %190 {offsets = [0, 0], sizes = [9, 8], strides = [1, 1]} : vector<9x32xbf16> to vector<9x8xbf16>
    %194 = vector.extract_strided_slice %191 {offsets = [0, 0], sizes = [9, 8], strides = [1, 1]} : vector<9x32xbf16> to vector<9x8xbf16>
    %195 = vector.extract_strided_slice %192 {offsets = [0, 0], sizes = [9, 8], strides = [1, 1]} : vector<9x32xbf16> to vector<9x8xbf16>
    %cst_83 = arith.constant dense<0.000000e+00> : vector<9x9xf32>
    %196 = tpu.matmul %193, %194, %cst_83 {dimension_numbers = #tpu.dot_dimension_numbers<[1], [1], [0], [0], [0, 0, 1, 0], [], []>} : vector<9x8xbf16>, vector<9x8xbf16>, vector<9x9xf32> -> vector<9x9xf32>
    %cst_84 = arith.constant 0.353553385 : f32
    %197 = vector.broadcast %cst_84 : f32 to vector<9x9xf32>
    %198 = arith.mulf %196, %197 : vector<9x9xf32>
    %cst_85 = arith.constant dense<0xFF800000> : vector<9xf32>
    %199 = vector.multi_reduction <maximumf>, %198, %cst_85 [1] : vector<9x9xf32> to vector<9xf32>
    %200 = vector.shape_cast %199 : vector<9xf32> to vector<9x1xf32>
    %201 = vector.broadcast %200 : vector<9x1xf32> to vector<9x9xf32>
    %202 = arith.subf %198, %201 : vector<9x9xf32>
    %203 = math.exp %202 : vector<9x9xf32>
    %cst_86 = arith.constant dense<0.000000e+00> : vector<9xf32>
    %204 = vector.multi_reduction <add>, %203, %cst_86 [1] : vector<9x9xf32> to vector<9xf32>
    %205 = vector.shape_cast %204 : vector<9xf32> to vector<9x1xf32>
    %206 = tpu.reciprocal %205 {approx = true} : vector<9x1xf32> -> vector<9x1xf32>
    %207 = vector.broadcast %206 : vector<9x1xf32> to vector<9x9xf32>
    %208 = arith.mulf %203, %207 : vector<9x9xf32>
    %209 = arith.truncf %208 : vector<9x9xf32> to vector<9x9xbf16>
    %cst_87 = arith.constant dense<0.000000e+00> : vector<9x8xf32>
    %210 = tpu.matmul %209, %195, %cst_87 {dimension_numbers = #tpu.dot_dimension_numbers<[1], [0], [0], [1], [0, 0, 1, 1], [], []>} : vector<9x9xbf16>, vector<9x8xbf16>, vector<9x8xf32> -> vector<9x8xf32>
    %211 = vector.extract_strided_slice %190 {offsets = [0, 8], sizes = [9, 8], strides = [1, 1]} : vector<9x32xbf16> to vector<9x8xbf16>
    %212 = vector.extract_strided_slice %191 {offsets = [0, 8], sizes = [9, 8], strides = [1, 1]} : vector<9x32xbf16> to vector<9x8xbf16>
    %213 = vector.extract_strided_slice %192 {offsets = [0, 8], sizes = [9, 8], strides = [1, 1]} : vector<9x32xbf16> to vector<9x8xbf16>
    %cst_88 = arith.constant dense<0.000000e+00> : vector<9x9xf32>
    %214 = tpu.matmul %211, %212, %cst_88 {dimension_numbers = #tpu.dot_dimension_numbers<[1], [1], [0], [0], [0, 0, 1, 0], [], []>} : vector<9x8xbf16>, vector<9x8xbf16>, vector<9x9xf32> -> vector<9x9xf32>
    %cst_89 = arith.constant 0.353553385 : f32
    %215 = vector.broadcast %cst_89 : f32 to vector<9x9xf32>
    %216 = arith.mulf %214, %215 : vector<9x9xf32>
    %cst_90 = arith.constant dense<0xFF800000> : vector<9xf32>
    %217 = vector.multi_reduction <maximumf>, %216, %cst_90 [1] : vector<9x9xf32> to vector<9xf32>
    %218 = vector.shape_cast %217 : vector<9xf32> to vector<9x1xf32>
    %219 = vector.broadcast %218 : vector<9x1xf32> to vector<9x9xf32>
    %220 = arith.subf %216, %219 : vector<9x9xf32>
    %221 = math.exp %220 : vector<9x9xf32>
    %cst_91 = arith.constant dense<0.000000e+00> : vector<9xf32>
    %222 = vector.multi_reduction <add>, %221, %cst_91 [1] : vector<9x9xf32> to vector<9xf32>
    %223 = vector.shape_cast %222 : vector<9xf32> to vector<9x1xf32>
    %224 = tpu.reciprocal %223 {approx = true} : vector<9x1xf32> -> vector<9x1xf32>
    %225 = vector.broadcast %224 : vector<9x1xf32> to vector<9x9xf32>
    %226 = arith.mulf %221, %225 : vector<9x9xf32>
    %227 = arith.truncf %226 : vector<9x9xf32> to vector<9x9xbf16>
    %cst_92 = arith.constant dense<0.000000e+00> : vector<9x8xf32>
    %228 = tpu.matmul %227, %213, %cst_92 {dimension_numbers = #tpu.dot_dimension_numbers<[1], [0], [0], [1], [0, 0, 1, 1], [], []>} : vector<9x9xbf16>, vector<9x8xbf16>, vector<9x8xf32> -> vector<9x8xf32>
    %229 = vector.extract_strided_slice %190 {offsets = [0, 16], sizes = [9, 8], strides = [1, 1]} : vector<9x32xbf16> to vector<9x8xbf16>
    %230 = vector.extract_strided_slice %191 {offsets = [0, 16], sizes = [9, 8], strides = [1, 1]} : vector<9x32xbf16> to vector<9x8xbf16>
    %231 = vector.extract_strided_slice %192 {offsets = [0, 16], sizes = [9, 8], strides = [1, 1]} : vector<9x32xbf16> to vector<9x8xbf16>
    %cst_93 = arith.constant dense<0.000000e+00> : vector<9x9xf32>
    %232 = tpu.matmul %229, %230, %cst_93 {dimension_numbers = #tpu.dot_dimension_numbers<[1], [1], [0], [0], [0, 0, 1, 0], [], []>} : vector<9x8xbf16>, vector<9x8xbf16>, vector<9x9xf32> -> vector<9x9xf32>
    %cst_94 = arith.constant 0.353553385 : f32
    %233 = vector.broadcast %cst_94 : f32 to vector<9x9xf32>
    %234 = arith.mulf %232, %233 : vector<9x9xf32>
    %cst_95 = arith.constant dense<0xFF800000> : vector<9xf32>
    %235 = vector.multi_reduction <maximumf>, %234, %cst_95 [1] : vector<9x9xf32> to vector<9xf32>
    %236 = vector.shape_cast %235 : vector<9xf32> to vector<9x1xf32>
    %237 = vector.broadcast %236 : vector<9x1xf32> to vector<9x9xf32>
    %238 = arith.subf %234, %237 : vector<9x9xf32>
    %239 = math.exp %238 : vector<9x9xf32>
    %cst_96 = arith.constant dense<0.000000e+00> : vector<9xf32>
    %240 = vector.multi_reduction <add>, %239, %cst_96 [1] : vector<9x9xf32> to vector<9xf32>
    %241 = vector.shape_cast %240 : vector<9xf32> to vector<9x1xf32>
    %242 = tpu.reciprocal %241 {approx = true} : vector<9x1xf32> -> vector<9x1xf32>
    %243 = vector.broadcast %242 : vector<9x1xf32> to vector<9x9xf32>
    %244 = arith.mulf %239, %243 : vector<9x9xf32>
    %245 = arith.truncf %244 : vector<9x9xf32> to vector<9x9xbf16>
    %cst_97 = arith.constant dense<0.000000e+00> : vector<9x8xf32>
    %246 = tpu.matmul %245, %231, %cst_97 {dimension_numbers = #tpu.dot_dimension_numbers<[1], [0], [0], [1], [0, 0, 1, 1], [], []>} : vector<9x9xbf16>, vector<9x8xbf16>, vector<9x8xf32> -> vector<9x8xf32>
    %247 = vector.extract_strided_slice %190 {offsets = [0, 24], sizes = [9, 8], strides = [1, 1]} : vector<9x32xbf16> to vector<9x8xbf16>
    %248 = vector.extract_strided_slice %191 {offsets = [0, 24], sizes = [9, 8], strides = [1, 1]} : vector<9x32xbf16> to vector<9x8xbf16>
    %249 = vector.extract_strided_slice %192 {offsets = [0, 24], sizes = [9, 8], strides = [1, 1]} : vector<9x32xbf16> to vector<9x8xbf16>
    %cst_98 = arith.constant dense<0.000000e+00> : vector<9x9xf32>
    %250 = tpu.matmul %247, %248, %cst_98 {dimension_numbers = #tpu.dot_dimension_numbers<[1], [1], [0], [0], [0, 0, 1, 0], [], []>} : vector<9x8xbf16>, vector<9x8xbf16>, vector<9x9xf32> -> vector<9x9xf32>
    %cst_99 = arith.constant 0.353553385 : f32
    %251 = vector.broadcast %cst_99 : f32 to vector<9x9xf32>
    %252 = arith.mulf %250, %251 : vector<9x9xf32>
    %cst_100 = arith.constant dense<0xFF800000> : vector<9xf32>
    %253 = vector.multi_reduction <maximumf>, %252, %cst_100 [1] : vector<9x9xf32> to vector<9xf32>
    %254 = vector.shape_cast %253 : vector<9xf32> to vector<9x1xf32>
    %255 = vector.broadcast %254 : vector<9x1xf32> to vector<9x9xf32>
    %256 = arith.subf %252, %255 : vector<9x9xf32>
    %257 = math.exp %256 : vector<9x9xf32>
    %cst_101 = arith.constant dense<0.000000e+00> : vector<9xf32>
    %258 = vector.multi_reduction <add>, %257, %cst_101 [1] : vector<9x9xf32> to vector<9xf32>
    %259 = vector.shape_cast %258 : vector<9xf32> to vector<9x1xf32>
    %260 = tpu.reciprocal %259 {approx = true} : vector<9x1xf32> -> vector<9x1xf32>
    %261 = vector.broadcast %260 : vector<9x1xf32> to vector<9x9xf32>
    %262 = arith.mulf %257, %261 : vector<9x9xf32>
    %263 = arith.truncf %262 : vector<9x9xf32> to vector<9x9xbf16>
    %cst_102 = arith.constant dense<0.000000e+00> : vector<9x8xf32>
    %264 = tpu.matmul %263, %249, %cst_102 {dimension_numbers = #tpu.dot_dimension_numbers<[1], [0], [0], [1], [0, 0, 1, 1], [], []>} : vector<9x9xbf16>, vector<9x8xbf16>, vector<9x8xf32> -> vector<9x8xf32>
    %265 = tpu.concatenate %210, %228, %246, %264 in 1 : vector<9x8xf32>, vector<9x8xf32>, vector<9x8xf32>, vector<9x8xf32> -> vector<9x32xf32>
    %266 = arith.truncf %265 : vector<9x32xf32> to vector<9x32xbf16>
    %cst_103 = arith.constant dense<0.000000e+00> : vector<9x32xf32>
    %267 = tpu.matmul %266, %181, %cst_103 {dimension_numbers = #tpu.dot_dimension_numbers<[1], [0], [0], [1], [0, 0, 1, 1], [], []>} : vector<9x32xbf16>, vector<32x32xbf16>, vector<9x32xf32> -> vector<9x32xf32>
    %268 = vector.broadcast %183 : vector<1x32xf32> to vector<9x32xf32>
    %269 = arith.addf %267, %268 : vector<9x32xf32>
    %270 = arith.addf %172, %269 : vector<9x32xf32>
    %271 = vector.extract_strided_slice %174 {offsets = [0, 0], sizes = [1, 32], strides = [1, 1]} : vector<4x32xf32> to vector<1x32xf32>
    %272 = vector.extract_strided_slice %174 {offsets = [1, 0], sizes = [1, 32], strides = [1, 1]} : vector<4x32xf32> to vector<1x32xf32>
    %cst_104 = arith.constant dense<0.000000e+00> : vector<9xf32>
    %273 = vector.multi_reduction <add>, %270, %cst_104 [1] : vector<9x32xf32> to vector<9xf32>
    %274 = vector.shape_cast %273 : vector<9xf32> to vector<9x1xf32>
    %cst_105 = arith.constant 3.200000e+01 : f32
    %275 = vector.broadcast %cst_105 : f32 to vector<9x1xf32>
    %276 = arith.divf %274, %275 : vector<9x1xf32>
    %277 = vector.broadcast %276 : vector<9x1xf32> to vector<9x32xf32>
    %278 = arith.subf %270, %277 : vector<9x32xf32>
    %279 = arith.mulf %278, %278 : vector<9x32xf32>
    %cst_106 = arith.constant dense<0.000000e+00> : vector<9xf32>
    %280 = vector.multi_reduction <add>, %279, %cst_106 [1] : vector<9x32xf32> to vector<9xf32>
    %281 = vector.shape_cast %280 : vector<9xf32> to vector<9x1xf32>
    %cst_107 = arith.constant 3.200000e+01 : f32
    %282 = vector.broadcast %cst_107 : f32 to vector<9x1xf32>
    %283 = arith.divf %281, %282 : vector<9x1xf32>
    %284 = vector.broadcast %276 : vector<9x1xf32> to vector<9x32xf32>
    %285 = arith.subf %270, %284 : vector<9x32xf32>
    %cst_108 = arith.constant 9.99999974E-6 : f32
    %286 = vector.broadcast %cst_108 : f32 to vector<9x1xf32>
    %287 = arith.addf %283, %286 : vector<9x1xf32>
    %288 = math.rsqrt %287 : vector<9x1xf32>
    %289 = vector.broadcast %288 : vector<9x1xf32> to vector<9x32xf32>
    %290 = arith.mulf %285, %289 : vector<9x32xf32>
    %291 = vector.broadcast %271 : vector<1x32xf32> to vector<9x32xf32>
    %292 = arith.mulf %290, %291 : vector<9x32xf32>
    %293 = vector.broadcast %272 : vector<1x32xf32> to vector<9x32xf32>
    %294 = arith.addf %292, %293 : vector<9x32xf32>
    %c1_109 = arith.constant 1 : index
    %c0_110 = arith.constant 0 : index
    %c0_111 = arith.constant 0 : index
    %295 = vector.load %arg10[%c1_109, %c0_110, %c0_111] : memref<2x32x128xbf16, #tpu.memory_space<vmem>>, vector<1x32x128xbf16>
    %296 = vector.shape_cast %295 : vector<1x32x128xbf16> to vector<32x128xbf16>
    %c1_112 = arith.constant 1 : index
    %c0_113 = arith.constant 0 : index
    %c0_114 = arith.constant 0 : index
    %297 = vector.load %arg11[%c1_112, %c0_113, %c0_114] : memref<2x1x128xf32, #tpu.memory_space<vmem>>, vector<1x1x128xf32>
    %298 = vector.shape_cast %297 : vector<1x1x128xf32> to vector<1x128xf32>
    %c1_115 = arith.constant 1 : index
    %c0_116 = arith.constant 0 : index
    %c0_117 = arith.constant 0 : index
    %299 = vector.load %arg12[%c1_115, %c0_116, %c0_117] : memref<2x128x32xbf16, #tpu.memory_space<vmem>>, vector<1x128x32xbf16>
    %300 = vector.shape_cast %299 : vector<1x128x32xbf16> to vector<128x32xbf16>
    %c1_118 = arith.constant 1 : index
    %c0_119 = arith.constant 0 : index
    %c0_120 = arith.constant 0 : index
    %301 = vector.load %arg13[%c1_118, %c0_119, %c0_120] : memref<2x1x32xf32, #tpu.memory_space<vmem>>, vector<1x1x32xf32>
    %302 = vector.shape_cast %301 : vector<1x1x32xf32> to vector<1x32xf32>
    %303 = arith.truncf %294 : vector<9x32xf32> to vector<9x32xbf16>
    %cst_121 = arith.constant dense<0.000000e+00> : vector<9x128xf32>
    %304 = tpu.matmul %303, %296, %cst_121 {dimension_numbers = #tpu.dot_dimension_numbers<[1], [0], [0], [1], [0, 0, 1, 1], [], []>} : vector<9x32xbf16>, vector<32x128xbf16>, vector<9x128xf32> -> vector<9x128xf32>
    %305 = vector.broadcast %298 : vector<1x128xf32> to vector<9x128xf32>
    %306 = arith.addf %304, %305 : vector<9x128xf32>
    %cst_122 = arith.constant 0.000000e+00 : f32
    %307 = vector.broadcast %cst_122 : f32 to vector<9x128xf32>
    %308 = arith.maximumf %306, %307 : vector<9x128xf32>
    %309 = arith.truncf %308 : vector<9x128xf32> to vector<9x128xbf16>
    %cst_123 = arith.constant dense<0.000000e+00> : vector<9x32xf32>
    %310 = tpu.matmul %309, %300, %cst_123 {dimension_numbers = #tpu.dot_dimension_numbers<[1], [0], [0], [1], [0, 0, 1, 1], [], []>} : vector<9x128xbf16>, vector<128x32xbf16>, vector<9x32xf32> -> vector<9x32xf32>
    %311 = vector.broadcast %302 : vector<1x32xf32> to vector<9x32xf32>
    %312 = arith.addf %310, %311 : vector<9x32xf32>
    %313 = arith.addf %294, %312 : vector<9x32xf32>
    %314 = vector.extract_strided_slice %174 {offsets = [2, 0], sizes = [1, 32], strides = [1, 1]} : vector<4x32xf32> to vector<1x32xf32>
    %315 = vector.extract_strided_slice %174 {offsets = [3, 0], sizes = [1, 32], strides = [1, 1]} : vector<4x32xf32> to vector<1x32xf32>
    %cst_124 = arith.constant dense<0.000000e+00> : vector<9xf32>
    %316 = vector.multi_reduction <add>, %313, %cst_124 [1] : vector<9x32xf32> to vector<9xf32>
    %317 = vector.shape_cast %316 : vector<9xf32> to vector<9x1xf32>
    %cst_125 = arith.constant 3.200000e+01 : f32
    %318 = vector.broadcast %cst_125 : f32 to vector<9x1xf32>
    %319 = arith.divf %317, %318 : vector<9x1xf32>
    %320 = vector.broadcast %319 : vector<9x1xf32> to vector<9x32xf32>
    %321 = arith.subf %313, %320 : vector<9x32xf32>
    %322 = arith.mulf %321, %321 : vector<9x32xf32>
    %cst_126 = arith.constant dense<0.000000e+00> : vector<9xf32>
    %323 = vector.multi_reduction <add>, %322, %cst_126 [1] : vector<9x32xf32> to vector<9xf32>
    %324 = vector.shape_cast %323 : vector<9xf32> to vector<9x1xf32>
    %cst_127 = arith.constant 3.200000e+01 : f32
    %325 = vector.broadcast %cst_127 : f32 to vector<9x1xf32>
    %326 = arith.divf %324, %325 : vector<9x1xf32>
    %327 = vector.broadcast %319 : vector<9x1xf32> to vector<9x32xf32>
    %328 = arith.subf %313, %327 : vector<9x32xf32>
    %cst_128 = arith.constant 9.99999974E-6 : f32
    %329 = vector.broadcast %cst_128 : f32 to vector<9x1xf32>
    %330 = arith.addf %326, %329 : vector<9x1xf32>
    %331 = math.rsqrt %330 : vector<9x1xf32>
    %332 = vector.broadcast %331 : vector<9x1xf32> to vector<9x32xf32>
    %333 = arith.mulf %328, %332 : vector<9x32xf32>
    %334 = vector.broadcast %314 : vector<1x32xf32> to vector<9x32xf32>
    %335 = arith.mulf %333, %334 : vector<9x32xf32>
    %336 = vector.broadcast %315 : vector<1x32xf32> to vector<9x32xf32>
    %337 = arith.addf %335, %336 : vector<9x32xf32>
    %338 = vector.extract_strided_slice %337 {offsets = [0, 0], sizes = [8, 32], strides = [1, 1]} : vector<9x32xf32> to vector<8x32xf32>
    %339 = arith.truncf %338 : vector<8x32xf32> to vector<8x32xbf16>
    %340 = vector.extract_strided_slice %337 {offsets = [8, 0], sizes = [1, 32], strides = [1, 1]} : vector<9x32xf32> to vector<1x32xf32>
    %341 = arith.truncf %340 : vector<1x32xf32> to vector<1x32xbf16>
    %c0_129 = arith.constant 0 : index
    %c0_130 = arith.constant 0 : index
    %c0_131 = arith.constant 0 : index
    %342 = vector.load %arg2[%c0_129, %c0_130, %c0_131] : memref<1x6x32xf32, #tpu.memory_space<vmem>>, vector<1x6x32xf32>
    %343 = vector.shape_cast %342 : vector<1x6x32xf32> to vector<6x32xf32>
    %344 = tpu.iota {dimensions = array<i32: 0>} : vector<6x6xi32>
    %345 = tpu.iota {dimensions = array<i32: 1>} : vector<6x6xi32>
    %346 = arith.cmpi sle, %345, %344 : vector<6x6xi32>
    %cst_132 = arith.constant 0.000000e+00 : f32
    %cst_133 = arith.constant -1.000000e+09 : f32
    %347 = vector.broadcast %cst_132 : f32 to vector<6x6xf32>
    %348 = vector.broadcast %cst_133 : f32 to vector<6x6xf32>
    %349 = arith.select %346, %347, %348 : vector<6x6xi1>, vector<6x6xf32>
    %c0_134 = arith.constant 0 : index
    %c0_135 = arith.constant 0 : index
    %c0_136 = arith.constant 0 : index
    %350 = vector.load %arg29[%c0_134, %c0_135, %c0_136] : memref<2x6x32xf32, #tpu.memory_space<vmem>>, vector<1x6x32xf32>
    %351 = vector.shape_cast %350 : vector<1x6x32xf32> to vector<6x32xf32>
    %352 = arith.truncf %343 : vector<6x32xf32> to vector<6x32xbf16>
    %c0_137 = arith.constant 0 : index
    %c0_138 = arith.constant 0 : index
    %c0_139 = arith.constant 0 : index
    %353 = vector.load %arg14[%c0_137, %c0_138, %c0_139] : memref<2x32x96xbf16, #tpu.memory_space<vmem>>, vector<1x32x96xbf16>
    %354 = vector.shape_cast %353 : vector<1x32x96xbf16> to vector<32x96xbf16>
    %c0_140 = arith.constant 0 : index
    %c0_141 = arith.constant 0 : index
    %c0_142 = arith.constant 0 : index
    %355 = vector.load %arg15[%c0_140, %c0_141, %c0_142] : memref<2x1x96xf32, #tpu.memory_space<vmem>>, vector<1x1x96xf32>
    %356 = vector.shape_cast %355 : vector<1x1x96xf32> to vector<1x96xf32>
    %c0_143 = arith.constant 0 : index
    %c0_144 = arith.constant 0 : index
    %c0_145 = arith.constant 0 : index
    %357 = vector.load %arg16[%c0_143, %c0_144, %c0_145] : memref<2x32x32xbf16, #tpu.memory_space<vmem>>, vector<1x32x32xbf16>
    %358 = vector.shape_cast %357 : vector<1x32x32xbf16> to vector<32x32xbf16>
    %c0_146 = arith.constant 0 : index
    %c0_147 = arith.constant 0 : index
    %c0_148 = arith.constant 0 : index
    %359 = vector.load %arg17[%c0_146, %c0_147, %c0_148] : memref<2x1x32xf32, #tpu.memory_space<vmem>>, vector<1x1x32xf32>
    %360 = vector.shape_cast %359 : vector<1x1x32xf32> to vector<1x32xf32>
    %cst_149 = arith.constant dense<0.000000e+00> : vector<6x96xf32>
    %361 = tpu.matmul %352, %354, %cst_149 {dimension_numbers = #tpu.dot_dimension_numbers<[1], [0], [0], [1], [0, 0, 1, 1], [], []>} : vector<6x32xbf16>, vector<32x96xbf16>, vector<6x96xf32> -> vector<6x96xf32>
    %362 = vector.broadcast %356 : vector<1x96xf32> to vector<6x96xf32>
    %363 = arith.addf %361, %362 : vector<6x96xf32>
    %364 = vector.extract_strided_slice %363 {offsets = [0, 0], sizes = [6, 32], strides = [1, 1]} : vector<6x96xf32> to vector<6x32xf32>
    %365 = vector.extract_strided_slice %363 {offsets = [0, 32], sizes = [6, 32], strides = [1, 1]} : vector<6x96xf32> to vector<6x32xf32>
    %366 = vector.extract_strided_slice %363 {offsets = [0, 64], sizes = [6, 32], strides = [1, 1]} : vector<6x96xf32> to vector<6x32xf32>
    %367 = arith.truncf %364 : vector<6x32xf32> to vector<6x32xbf16>
    %368 = arith.truncf %365 : vector<6x32xf32> to vector<6x32xbf16>
    %369 = arith.truncf %366 : vector<6x32xf32> to vector<6x32xbf16>
    %370 = vector.extract_strided_slice %367 {offsets = [0, 0], sizes = [6, 8], strides = [1, 1]} : vector<6x32xbf16> to vector<6x8xbf16>
    %371 = vector.extract_strided_slice %368 {offsets = [0, 0], sizes = [6, 8], strides = [1, 1]} : vector<6x32xbf16> to vector<6x8xbf16>
    %372 = vector.extract_strided_slice %369 {offsets = [0, 0], sizes = [6, 8], strides = [1, 1]} : vector<6x32xbf16> to vector<6x8xbf16>
    %cst_150 = arith.constant dense<0.000000e+00> : vector<6x6xf32>
    %373 = tpu.matmul %370, %371, %cst_150 {dimension_numbers = #tpu.dot_dimension_numbers<[1], [1], [0], [0], [0, 0, 1, 0], [], []>} : vector<6x8xbf16>, vector<6x8xbf16>, vector<6x6xf32> -> vector<6x6xf32>
    %cst_151 = arith.constant 0.353553385 : f32
    %374 = vector.broadcast %cst_151 : f32 to vector<6x6xf32>
    %375 = arith.mulf %373, %374 : vector<6x6xf32>
    %376 = arith.addf %375, %349 : vector<6x6xf32>
    %cst_152 = arith.constant dense<0xFF800000> : vector<6xf32>
    %377 = vector.multi_reduction <maximumf>, %376, %cst_152 [1] : vector<6x6xf32> to vector<6xf32>
    %378 = vector.shape_cast %377 : vector<6xf32> to vector<6x1xf32>
    %379 = vector.broadcast %378 : vector<6x1xf32> to vector<6x6xf32>
    %380 = arith.subf %376, %379 : vector<6x6xf32>
    %381 = math.exp %380 : vector<6x6xf32>
    %cst_153 = arith.constant dense<0.000000e+00> : vector<6xf32>
    %382 = vector.multi_reduction <add>, %381, %cst_153 [1] : vector<6x6xf32> to vector<6xf32>
    %383 = vector.shape_cast %382 : vector<6xf32> to vector<6x1xf32>
    %384 = tpu.reciprocal %383 {approx = true} : vector<6x1xf32> -> vector<6x1xf32>
    %385 = vector.broadcast %384 : vector<6x1xf32> to vector<6x6xf32>
    %386 = arith.mulf %381, %385 : vector<6x6xf32>
    %387 = arith.truncf %386 : vector<6x6xf32> to vector<6x6xbf16>
    %cst_154 = arith.constant dense<0.000000e+00> : vector<6x8xf32>
    %388 = tpu.matmul %387, %372, %cst_154 {dimension_numbers = #tpu.dot_dimension_numbers<[1], [0], [0], [1], [0, 0, 1, 1], [], []>} : vector<6x6xbf16>, vector<6x8xbf16>, vector<6x8xf32> -> vector<6x8xf32>
    %389 = vector.extract_strided_slice %367 {offsets = [0, 8], sizes = [6, 8], strides = [1, 1]} : vector<6x32xbf16> to vector<6x8xbf16>
    %390 = vector.extract_strided_slice %368 {offsets = [0, 8], sizes = [6, 8], strides = [1, 1]} : vector<6x32xbf16> to vector<6x8xbf16>
    %391 = vector.extract_strided_slice %369 {offsets = [0, 8], sizes = [6, 8], strides = [1, 1]} : vector<6x32xbf16> to vector<6x8xbf16>
    %cst_155 = arith.constant dense<0.000000e+00> : vector<6x6xf32>
    %392 = tpu.matmul %389, %390, %cst_155 {dimension_numbers = #tpu.dot_dimension_numbers<[1], [1], [0], [0], [0, 0, 1, 0], [], []>} : vector<6x8xbf16>, vector<6x8xbf16>, vector<6x6xf32> -> vector<6x6xf32>
    %cst_156 = arith.constant 0.353553385 : f32
    %393 = vector.broadcast %cst_156 : f32 to vector<6x6xf32>
    %394 = arith.mulf %392, %393 : vector<6x6xf32>
    %395 = arith.addf %394, %349 : vector<6x6xf32>
    %cst_157 = arith.constant dense<0xFF800000> : vector<6xf32>
    %396 = vector.multi_reduction <maximumf>, %395, %cst_157 [1] : vector<6x6xf32> to vector<6xf32>
    %397 = vector.shape_cast %396 : vector<6xf32> to vector<6x1xf32>
    %398 = vector.broadcast %397 : vector<6x1xf32> to vector<6x6xf32>
    %399 = arith.subf %395, %398 : vector<6x6xf32>
    %400 = math.exp %399 : vector<6x6xf32>
    %cst_158 = arith.constant dense<0.000000e+00> : vector<6xf32>
    %401 = vector.multi_reduction <add>, %400, %cst_158 [1] : vector<6x6xf32> to vector<6xf32>
    %402 = vector.shape_cast %401 : vector<6xf32> to vector<6x1xf32>
    %403 = tpu.reciprocal %402 {approx = true} : vector<6x1xf32> -> vector<6x1xf32>
    %404 = vector.broadcast %403 : vector<6x1xf32> to vector<6x6xf32>
    %405 = arith.mulf %400, %404 : vector<6x6xf32>
    %406 = arith.truncf %405 : vector<6x6xf32> to vector<6x6xbf16>
    %cst_159 = arith.constant dense<0.000000e+00> : vector<6x8xf32>
    %407 = tpu.matmul %406, %391, %cst_159 {dimension_numbers = #tpu.dot_dimension_numbers<[1], [0], [0], [1], [0, 0, 1, 1], [], []>} : vector<6x6xbf16>, vector<6x8xbf16>, vector<6x8xf32> -> vector<6x8xf32>
    %408 = vector.extract_strided_slice %367 {offsets = [0, 16], sizes = [6, 8], strides = [1, 1]} : vector<6x32xbf16> to vector<6x8xbf16>
    %409 = vector.extract_strided_slice %368 {offsets = [0, 16], sizes = [6, 8], strides = [1, 1]} : vector<6x32xbf16> to vector<6x8xbf16>
    %410 = vector.extract_strided_slice %369 {offsets = [0, 16], sizes = [6, 8], strides = [1, 1]} : vector<6x32xbf16> to vector<6x8xbf16>
    %cst_160 = arith.constant dense<0.000000e+00> : vector<6x6xf32>
    %411 = tpu.matmul %408, %409, %cst_160 {dimension_numbers = #tpu.dot_dimension_numbers<[1], [1], [0], [0], [0, 0, 1, 0], [], []>} : vector<6x8xbf16>, vector<6x8xbf16>, vector<6x6xf32> -> vector<6x6xf32>
    %cst_161 = arith.constant 0.353553385 : f32
    %412 = vector.broadcast %cst_161 : f32 to vector<6x6xf32>
    %413 = arith.mulf %411, %412 : vector<6x6xf32>
    %414 = arith.addf %413, %349 : vector<6x6xf32>
    %cst_162 = arith.constant dense<0xFF800000> : vector<6xf32>
    %415 = vector.multi_reduction <maximumf>, %414, %cst_162 [1] : vector<6x6xf32> to vector<6xf32>
    %416 = vector.shape_cast %415 : vector<6xf32> to vector<6x1xf32>
    %417 = vector.broadcast %416 : vector<6x1xf32> to vector<6x6xf32>
    %418 = arith.subf %414, %417 : vector<6x6xf32>
    %419 = math.exp %418 : vector<6x6xf32>
    %cst_163 = arith.constant dense<0.000000e+00> : vector<6xf32>
    %420 = vector.multi_reduction <add>, %419, %cst_163 [1] : vector<6x6xf32> to vector<6xf32>
    %421 = vector.shape_cast %420 : vector<6xf32> to vector<6x1xf32>
    %422 = tpu.reciprocal %421 {approx = true} : vector<6x1xf32> -> vector<6x1xf32>
    %423 = vector.broadcast %422 : vector<6x1xf32> to vector<6x6xf32>
    %424 = arith.mulf %419, %423 : vector<6x6xf32>
    %425 = arith.truncf %424 : vector<6x6xf32> to vector<6x6xbf16>
    %cst_164 = arith.constant dense<0.000000e+00> : vector<6x8xf32>
    %426 = tpu.matmul %425, %410, %cst_164 {dimension_numbers = #tpu.dot_dimension_numbers<[1], [0], [0], [1], [0, 0, 1, 1], [], []>} : vector<6x6xbf16>, vector<6x8xbf16>, vector<6x8xf32> -> vector<6x8xf32>
    %427 = vector.extract_strided_slice %367 {offsets = [0, 24], sizes = [6, 8], strides = [1, 1]} : vector<6x32xbf16> to vector<6x8xbf16>
    %428 = vector.extract_strided_slice %368 {offsets = [0, 24], sizes = [6, 8], strides = [1, 1]} : vector<6x32xbf16> to vector<6x8xbf16>
    %429 = vector.extract_strided_slice %369 {offsets = [0, 24], sizes = [6, 8], strides = [1, 1]} : vector<6x32xbf16> to vector<6x8xbf16>
    %cst_165 = arith.constant dense<0.000000e+00> : vector<6x6xf32>
    %430 = tpu.matmul %427, %428, %cst_165 {dimension_numbers = #tpu.dot_dimension_numbers<[1], [1], [0], [0], [0, 0, 1, 0], [], []>} : vector<6x8xbf16>, vector<6x8xbf16>, vector<6x6xf32> -> vector<6x6xf32>
    %cst_166 = arith.constant 0.353553385 : f32
    %431 = vector.broadcast %cst_166 : f32 to vector<6x6xf32>
    %432 = arith.mulf %430, %431 : vector<6x6xf32>
    %433 = arith.addf %432, %349 : vector<6x6xf32>
    %cst_167 = arith.constant dense<0xFF800000> : vector<6xf32>
    %434 = vector.multi_reduction <maximumf>, %433, %cst_167 [1] : vector<6x6xf32> to vector<6xf32>
    %435 = vector.shape_cast %434 : vector<6xf32> to vector<6x1xf32>
    %436 = vector.broadcast %435 : vector<6x1xf32> to vector<6x6xf32>
    %437 = arith.subf %433, %436 : vector<6x6xf32>
    %438 = math.exp %437 : vector<6x6xf32>
    %cst_168 = arith.constant dense<0.000000e+00> : vector<6xf32>
    %439 = vector.multi_reduction <add>, %438, %cst_168 [1] : vector<6x6xf32> to vector<6xf32>
    %440 = vector.shape_cast %439 : vector<6xf32> to vector<6x1xf32>
    %441 = tpu.reciprocal %440 {approx = true} : vector<6x1xf32> -> vector<6x1xf32>
    %442 = vector.broadcast %441 : vector<6x1xf32> to vector<6x6xf32>
    %443 = arith.mulf %438, %442 : vector<6x6xf32>
    %444 = arith.truncf %443 : vector<6x6xf32> to vector<6x6xbf16>
    %cst_169 = arith.constant dense<0.000000e+00> : vector<6x8xf32>
    %445 = tpu.matmul %444, %429, %cst_169 {dimension_numbers = #tpu.dot_dimension_numbers<[1], [0], [0], [1], [0, 0, 1, 1], [], []>} : vector<6x6xbf16>, vector<6x8xbf16>, vector<6x8xf32> -> vector<6x8xf32>
    %446 = tpu.concatenate %388, %407, %426, %445 in 1 : vector<6x8xf32>, vector<6x8xf32>, vector<6x8xf32>, vector<6x8xf32> -> vector<6x32xf32>
    %447 = arith.truncf %446 : vector<6x32xf32> to vector<6x32xbf16>
    %cst_170 = arith.constant dense<0.000000e+00> : vector<6x32xf32>
    %448 = tpu.matmul %447, %358, %cst_170 {dimension_numbers = #tpu.dot_dimension_numbers<[1], [0], [0], [1], [0, 0, 1, 1], [], []>} : vector<6x32xbf16>, vector<32x32xbf16>, vector<6x32xf32> -> vector<6x32xf32>
    %449 = vector.broadcast %360 : vector<1x32xf32> to vector<6x32xf32>
    %450 = arith.addf %448, %449 : vector<6x32xf32>
    %451 = arith.addf %343, %450 : vector<6x32xf32>
    %452 = vector.extract_strided_slice %351 {offsets = [0, 0], sizes = [1, 32], strides = [1, 1]} : vector<6x32xf32> to vector<1x32xf32>
    %453 = vector.extract_strided_slice %351 {offsets = [1, 0], sizes = [1, 32], strides = [1, 1]} : vector<6x32xf32> to vector<1x32xf32>
    %cst_171 = arith.constant dense<0.000000e+00> : vector<6xf32>
    %454 = vector.multi_reduction <add>, %451, %cst_171 [1] : vector<6x32xf32> to vector<6xf32>
    %455 = vector.shape_cast %454 : vector<6xf32> to vector<6x1xf32>
    %cst_172 = arith.constant 3.200000e+01 : f32
    %456 = vector.broadcast %cst_172 : f32 to vector<6x1xf32>
    %457 = arith.divf %455, %456 : vector<6x1xf32>
    %458 = vector.broadcast %457 : vector<6x1xf32> to vector<6x32xf32>
    %459 = arith.subf %451, %458 : vector<6x32xf32>
    %460 = arith.mulf %459, %459 : vector<6x32xf32>
    %cst_173 = arith.constant dense<0.000000e+00> : vector<6xf32>
    %461 = vector.multi_reduction <add>, %460, %cst_173 [1] : vector<6x32xf32> to vector<6xf32>
    %462 = vector.shape_cast %461 : vector<6xf32> to vector<6x1xf32>
    %cst_174 = arith.constant 3.200000e+01 : f32
    %463 = vector.broadcast %cst_174 : f32 to vector<6x1xf32>
    %464 = arith.divf %462, %463 : vector<6x1xf32>
    %465 = vector.broadcast %457 : vector<6x1xf32> to vector<6x32xf32>
    %466 = arith.subf %451, %465 : vector<6x32xf32>
    %cst_175 = arith.constant 9.99999974E-6 : f32
    %467 = vector.broadcast %cst_175 : f32 to vector<6x1xf32>
    %468 = arith.addf %464, %467 : vector<6x1xf32>
    %469 = math.rsqrt %468 : vector<6x1xf32>
    %470 = vector.broadcast %469 : vector<6x1xf32> to vector<6x32xf32>
    %471 = arith.mulf %466, %470 : vector<6x32xf32>
    %472 = vector.broadcast %452 : vector<1x32xf32> to vector<6x32xf32>
    %473 = arith.mulf %471, %472 : vector<6x32xf32>
    %474 = vector.broadcast %453 : vector<1x32xf32> to vector<6x32xf32>
    %475 = arith.addf %473, %474 : vector<6x32xf32>
    %476 = arith.truncf %475 : vector<6x32xf32> to vector<6x32xbf16>
    %c0_176 = arith.constant 0 : index
    %c0_177 = arith.constant 0 : index
    %c0_178 = arith.constant 0 : index
    %477 = vector.load %arg18[%c0_176, %c0_177, %c0_178] : memref<2x32x32xbf16, #tpu.memory_space<vmem>>, vector<1x32x32xbf16>
    %478 = vector.shape_cast %477 : vector<1x32x32xbf16> to vector<32x32xbf16>
    %c0_179 = arith.constant 0 : index
    %c0_180 = arith.constant 0 : index
    %c0_181 = arith.constant 0 : index
    %479 = vector.load %arg19[%c0_179, %c0_180, %c0_181] : memref<2x1x32xf32, #tpu.memory_space<vmem>>, vector<1x1x32xf32>
    %480 = vector.shape_cast %479 : vector<1x1x32xf32> to vector<1x32xf32>
    %c0_182 = arith.constant 0 : index
    %c0_183 = arith.constant 0 : index
    %c0_184 = arith.constant 0 : index
    %481 = vector.load %arg20[%c0_182, %c0_183, %c0_184] : memref<2x32x64xbf16, #tpu.memory_space<vmem>>, vector<1x32x64xbf16>
    %482 = vector.shape_cast %481 : vector<1x32x64xbf16> to vector<32x64xbf16>
    %c0_185 = arith.constant 0 : index
    %c0_186 = arith.constant 0 : index
    %c0_187 = arith.constant 0 : index
    %483 = vector.load %arg21[%c0_185, %c0_186, %c0_187] : memref<2x1x64xf32, #tpu.memory_space<vmem>>, vector<1x1x64xf32>
    %484 = vector.shape_cast %483 : vector<1x1x64xf32> to vector<1x64xf32>
    %c0_188 = arith.constant 0 : index
    %c0_189 = arith.constant 0 : index
    %c0_190 = arith.constant 0 : index
    %485 = vector.load %arg22[%c0_188, %c0_189, %c0_190] : memref<2x32x32xbf16, #tpu.memory_space<vmem>>, vector<1x32x32xbf16>
    %486 = vector.shape_cast %485 : vector<1x32x32xbf16> to vector<32x32xbf16>
    %c0_191 = arith.constant 0 : index
    %c0_192 = arith.constant 0 : index
    %c0_193 = arith.constant 0 : index
    %487 = vector.load %arg23[%c0_191, %c0_192, %c0_193] : memref<2x1x32xf32, #tpu.memory_space<vmem>>, vector<1x1x32xf32>
    %488 = vector.shape_cast %487 : vector<1x1x32xf32> to vector<1x32xf32>
    %cst_194 = arith.constant dense<0.000000e+00> : vector<6x32xf32>
    %489 = tpu.matmul %476, %478, %cst_194 {dimension_numbers = #tpu.dot_dimension_numbers<[1], [0], [0], [1], [0, 0, 1, 1], [], []>} : vector<6x32xbf16>, vector<32x32xbf16>, vector<6x32xf32> -> vector<6x32xf32>
    %490 = vector.broadcast %480 : vector<1x32xf32> to vector<6x32xf32>
    %491 = arith.addf %489, %490 : vector<6x32xf32>
    %cst_195 = arith.constant dense<0.000000e+00> : vector<8x64xf32>
    %492 = tpu.matmul %339, %482, %cst_195 {dimension_numbers = #tpu.dot_dimension_numbers<[1], [0], [0], [1], [0, 0, 1, 1], [], []>} : vector<8x32xbf16>, vector<32x64xbf16>, vector<8x64xf32> -> vector<8x64xf32>
    %493 = vector.broadcast %484 : vector<1x64xf32> to vector<8x64xf32>
    %494 = arith.addf %492, %493 : vector<8x64xf32>
    %495 = vector.extract_strided_slice %494 {offsets = [0, 0], sizes = [8, 32], strides = [1, 1]} : vector<8x64xf32> to vector<8x32xf32>
    %496 = vector.extract_strided_slice %494 {offsets = [0, 32], sizes = [8, 32], strides = [1, 1]} : vector<8x64xf32> to vector<8x32xf32>
    %497 = arith.truncf %491 : vector<6x32xf32> to vector<6x32xbf16>
    %498 = arith.truncf %495 : vector<8x32xf32> to vector<8x32xbf16>
    %499 = arith.truncf %496 : vector<8x32xf32> to vector<8x32xbf16>
    %500 = vector.extract_strided_slice %497 {offsets = [0, 0], sizes = [6, 8], strides = [1, 1]} : vector<6x32xbf16> to vector<6x8xbf16>
    %501 = vector.extract_strided_slice %498 {offsets = [0, 0], sizes = [8, 8], strides = [1, 1]} : vector<8x32xbf16> to vector<8x8xbf16>
    %502 = vector.extract_strided_slice %499 {offsets = [0, 0], sizes = [8, 8], strides = [1, 1]} : vector<8x32xbf16> to vector<8x8xbf16>
    %cst_196 = arith.constant dense<0.000000e+00> : vector<6x8xf32>
    %503 = tpu.matmul %500, %501, %cst_196 {dimension_numbers = #tpu.dot_dimension_numbers<[1], [1], [0], [0], [0, 0, 1, 0], [], []>} : vector<6x8xbf16>, vector<8x8xbf16>, vector<6x8xf32> -> vector<6x8xf32>
    %cst_197 = arith.constant 0.353553385 : f32
    %504 = vector.broadcast %cst_197 : f32 to vector<6x8xf32>
    %505 = arith.mulf %503, %504 : vector<6x8xf32>
    %cst_198 = arith.constant dense<0xFF800000> : vector<6xf32>
    %506 = vector.multi_reduction <maximumf>, %505, %cst_198 [1] : vector<6x8xf32> to vector<6xf32>
    %507 = vector.shape_cast %506 : vector<6xf32> to vector<6x1xf32>
    %508 = vector.broadcast %507 : vector<6x1xf32> to vector<6x8xf32>
    %509 = arith.subf %505, %508 : vector<6x8xf32>
    %510 = math.exp %509 : vector<6x8xf32>
    %cst_199 = arith.constant dense<0.000000e+00> : vector<6xf32>
    %511 = vector.multi_reduction <add>, %510, %cst_199 [1] : vector<6x8xf32> to vector<6xf32>
    %512 = vector.shape_cast %511 : vector<6xf32> to vector<6x1xf32>
    %513 = tpu.reciprocal %512 {approx = true} : vector<6x1xf32> -> vector<6x1xf32>
    %514 = vector.broadcast %513 : vector<6x1xf32> to vector<6x8xf32>
    %515 = arith.mulf %510, %514 : vector<6x8xf32>
    %516 = arith.truncf %515 : vector<6x8xf32> to vector<6x8xbf16>
    %cst_200 = arith.constant dense<0.000000e+00> : vector<6x8xf32>
    %517 = tpu.matmul %516, %502, %cst_200 {dimension_numbers = #tpu.dot_dimension_numbers<[1], [0], [0], [1], [0, 0, 1, 1], [], []>} : vector<6x8xbf16>, vector<8x8xbf16>, vector<6x8xf32> -> vector<6x8xf32>
    %518 = vector.extract_strided_slice %497 {offsets = [0, 8], sizes = [6, 8], strides = [1, 1]} : vector<6x32xbf16> to vector<6x8xbf16>
    %519 = vector.extract_strided_slice %498 {offsets = [0, 8], sizes = [8, 8], strides = [1, 1]} : vector<8x32xbf16> to vector<8x8xbf16>
    %520 = vector.extract_strided_slice %499 {offsets = [0, 8], sizes = [8, 8], strides = [1, 1]} : vector<8x32xbf16> to vector<8x8xbf16>
    %cst_201 = arith.constant dense<0.000000e+00> : vector<6x8xf32>
    %521 = tpu.matmul %518, %519, %cst_201 {dimension_numbers = #tpu.dot_dimension_numbers<[1], [1], [0], [0], [0, 0, 1, 0], [], []>} : vector<6x8xbf16>, vector<8x8xbf16>, vector<6x8xf32> -> vector<6x8xf32>
    %cst_202 = arith.constant 0.353553385 : f32
    %522 = vector.broadcast %cst_202 : f32 to vector<6x8xf32>
    %523 = arith.mulf %521, %522 : vector<6x8xf32>
    %cst_203 = arith.constant dense<0xFF800000> : vector<6xf32>
    %524 = vector.multi_reduction <maximumf>, %523, %cst_203 [1] : vector<6x8xf32> to vector<6xf32>
    %525 = vector.shape_cast %524 : vector<6xf32> to vector<6x1xf32>
    %526 = vector.broadcast %525 : vector<6x1xf32> to vector<6x8xf32>
    %527 = arith.subf %523, %526 : vector<6x8xf32>
    %528 = math.exp %527 : vector<6x8xf32>
    %cst_204 = arith.constant dense<0.000000e+00> : vector<6xf32>
    %529 = vector.multi_reduction <add>, %528, %cst_204 [1] : vector<6x8xf32> to vector<6xf32>
    %530 = vector.shape_cast %529 : vector<6xf32> to vector<6x1xf32>
    %531 = tpu.reciprocal %530 {approx = true} : vector<6x1xf32> -> vector<6x1xf32>
    %532 = vector.broadcast %531 : vector<6x1xf32> to vector<6x8xf32>
    %533 = arith.mulf %528, %532 : vector<6x8xf32>
    %534 = arith.truncf %533 : vector<6x8xf32> to vector<6x8xbf16>
    %cst_205 = arith.constant dense<0.000000e+00> : vector<6x8xf32>
    %535 = tpu.matmul %534, %520, %cst_205 {dimension_numbers = #tpu.dot_dimension_numbers<[1], [0], [0], [1], [0, 0, 1, 1], [], []>} : vector<6x8xbf16>, vector<8x8xbf16>, vector<6x8xf32> -> vector<6x8xf32>
    %536 = vector.extract_strided_slice %497 {offsets = [0, 16], sizes = [6, 8], strides = [1, 1]} : vector<6x32xbf16> to vector<6x8xbf16>
    %537 = vector.extract_strided_slice %498 {offsets = [0, 16], sizes = [8, 8], strides = [1, 1]} : vector<8x32xbf16> to vector<8x8xbf16>
    %538 = vector.extract_strided_slice %499 {offsets = [0, 16], sizes = [8, 8], strides = [1, 1]} : vector<8x32xbf16> to vector<8x8xbf16>
    %cst_206 = arith.constant dense<0.000000e+00> : vector<6x8xf32>
    %539 = tpu.matmul %536, %537, %cst_206 {dimension_numbers = #tpu.dot_dimension_numbers<[1], [1], [0], [0], [0, 0, 1, 0], [], []>} : vector<6x8xbf16>, vector<8x8xbf16>, vector<6x8xf32> -> vector<6x8xf32>
    %cst_207 = arith.constant 0.353553385 : f32
    %540 = vector.broadcast %cst_207 : f32 to vector<6x8xf32>
    %541 = arith.mulf %539, %540 : vector<6x8xf32>
    %cst_208 = arith.constant dense<0xFF800000> : vector<6xf32>
    %542 = vector.multi_reduction <maximumf>, %541, %cst_208 [1] : vector<6x8xf32> to vector<6xf32>
    %543 = vector.shape_cast %542 : vector<6xf32> to vector<6x1xf32>
    %544 = vector.broadcast %543 : vector<6x1xf32> to vector<6x8xf32>
    %545 = arith.subf %541, %544 : vector<6x8xf32>
    %546 = math.exp %545 : vector<6x8xf32>
    %cst_209 = arith.constant dense<0.000000e+00> : vector<6xf32>
    %547 = vector.multi_reduction <add>, %546, %cst_209 [1] : vector<6x8xf32> to vector<6xf32>
    %548 = vector.shape_cast %547 : vector<6xf32> to vector<6x1xf32>
    %549 = tpu.reciprocal %548 {approx = true} : vector<6x1xf32> -> vector<6x1xf32>
    %550 = vector.broadcast %549 : vector<6x1xf32> to vector<6x8xf32>
    %551 = arith.mulf %546, %550 : vector<6x8xf32>
    %552 = arith.truncf %551 : vector<6x8xf32> to vector<6x8xbf16>
    %cst_210 = arith.constant dense<0.000000e+00> : vector<6x8xf32>
    %553 = tpu.matmul %552, %538, %cst_210 {dimension_numbers = #tpu.dot_dimension_numbers<[1], [0], [0], [1], [0, 0, 1, 1], [], []>} : vector<6x8xbf16>, vector<8x8xbf16>, vector<6x8xf32> -> vector<6x8xf32>
    %554 = vector.extract_strided_slice %497 {offsets = [0, 24], sizes = [6, 8], strides = [1, 1]} : vector<6x32xbf16> to vector<6x8xbf16>
    %555 = vector.extract_strided_slice %498 {offsets = [0, 24], sizes = [8, 8], strides = [1, 1]} : vector<8x32xbf16> to vector<8x8xbf16>
    %556 = vector.extract_strided_slice %499 {offsets = [0, 24], sizes = [8, 8], strides = [1, 1]} : vector<8x32xbf16> to vector<8x8xbf16>
    %cst_211 = arith.constant dense<0.000000e+00> : vector<6x8xf32>
    %557 = tpu.matmul %554, %555, %cst_211 {dimension_numbers = #tpu.dot_dimension_numbers<[1], [1], [0], [0], [0, 0, 1, 0], [], []>} : vector<6x8xbf16>, vector<8x8xbf16>, vector<6x8xf32> -> vector<6x8xf32>
    %cst_212 = arith.constant 0.353553385 : f32
    %558 = vector.broadcast %cst_212 : f32 to vector<6x8xf32>
    %559 = arith.mulf %557, %558 : vector<6x8xf32>
    %cst_213 = arith.constant dense<0xFF800000> : vector<6xf32>
    %560 = vector.multi_reduction <maximumf>, %559, %cst_213 [1] : vector<6x8xf32> to vector<6xf32>
    %561 = vector.shape_cast %560 : vector<6xf32> to vector<6x1xf32>
    %562 = vector.broadcast %561 : vector<6x1xf32> to vector<6x8xf32>
    %563 = arith.subf %559, %562 : vector<6x8xf32>
    %564 = math.exp %563 : vector<6x8xf32>
    %cst_214 = arith.constant dense<0.000000e+00> : vector<6xf32>
    %565 = vector.multi_reduction <add>, %564, %cst_214 [1] : vector<6x8xf32> to vector<6xf32>
    %566 = vector.shape_cast %565 : vector<6xf32> to vector<6x1xf32>
    %567 = tpu.reciprocal %566 {approx = true} : vector<6x1xf32> -> vector<6x1xf32>
    %568 = vector.broadcast %567 : vector<6x1xf32> to vector<6x8xf32>
    %569 = arith.mulf %564, %568 : vector<6x8xf32>
    %570 = arith.truncf %569 : vector<6x8xf32> to vector<6x8xbf16>
    %cst_215 = arith.constant dense<0.000000e+00> : vector<6x8xf32>
    %571 = tpu.matmul %570, %556, %cst_215 {dimension_numbers = #tpu.dot_dimension_numbers<[1], [0], [0], [1], [0, 0, 1, 1], [], []>} : vector<6x8xbf16>, vector<8x8xbf16>, vector<6x8xf32> -> vector<6x8xf32>
    %572 = tpu.concatenate %517, %535, %553, %571 in 1 : vector<6x8xf32>, vector<6x8xf32>, vector<6x8xf32>, vector<6x8xf32> -> vector<6x32xf32>
    %573 = arith.truncf %572 : vector<6x32xf32> to vector<6x32xbf16>
    %cst_216 = arith.constant dense<0.000000e+00> : vector<6x32xf32>
    %574 = tpu.matmul %573, %486, %cst_216 {dimension_numbers = #tpu.dot_dimension_numbers<[1], [0], [0], [1], [0, 0, 1, 1], [], []>} : vector<6x32xbf16>, vector<32x32xbf16>, vector<6x32xf32> -> vector<6x32xf32>
    %575 = vector.broadcast %488 : vector<1x32xf32> to vector<6x32xf32>
    %576 = arith.addf %574, %575 : vector<6x32xf32>
    %577 = arith.truncf %576 : vector<6x32xf32> to vector<6x32xbf16>
    %c0_217 = arith.constant 0 : index
    %c0_218 = arith.constant 0 : index
    %c0_219 = arith.constant 0 : index
    %578 = vector.load %arg24[%c0_217, %c0_218, %c0_219] : memref<2x32x32xbf16, #tpu.memory_space<vmem>>, vector<1x32x32xbf16>
    %579 = vector.shape_cast %578 : vector<1x32x32xbf16> to vector<32x32xbf16>
    %cst_220 = arith.constant dense<0.000000e+00> : vector<6x32xf32>
    %580 = tpu.matmul %577, %579, %cst_220 {dimension_numbers = #tpu.dot_dimension_numbers<[1], [0], [0], [1], [0, 0, 1, 1], [], []>} : vector<6x32xbf16>, vector<32x32xbf16>, vector<6x32xf32> -> vector<6x32xf32>
    %c0_221 = arith.constant 0 : index
    %c0_222 = arith.constant 0 : index
    %c0_223 = arith.constant 0 : index
    %581 = vector.load %arg25[%c0_221, %c0_222, %c0_223] : memref<2x32x32xbf16, #tpu.memory_space<vmem>>, vector<1x32x32xbf16>
    %582 = vector.shape_cast %581 : vector<1x32x32xbf16> to vector<32x32xbf16>
    %cst_224 = arith.constant dense<0.000000e+00> : vector<1x32xf32>
    %583 = tpu.matmul %341, %582, %cst_224 {dimension_numbers = #tpu.dot_dimension_numbers<[1], [0], [0], [1], [0, 0, 1, 1], [], []>} : vector<1x32xbf16>, vector<32x32xbf16>, vector<1x32xf32> -> vector<1x32xf32>
    %584 = vector.broadcast %583 : vector<1x32xf32> to vector<6x32xf32>
    %585 = arith.addf %580, %584 : vector<6x32xf32>
    %c0_225 = arith.constant 0 : index
    %c0_226 = arith.constant 0 : index
    %c0_227 = arith.constant 0 : index
    %586 = vector.load %arg26[%c0_225, %c0_226, %c0_227] : memref<2x1x32xf32, #tpu.memory_space<vmem>>, vector<1x1x32xf32>
    %587 = vector.shape_cast %586 : vector<1x1x32xf32> to vector<1x32xf32>
    %588 = vector.broadcast %587 : vector<1x32xf32> to vector<6x32xf32>
    %589 = arith.addf %585, %588 : vector<6x32xf32>
    %590 = arith.negf %589 : vector<6x32xf32>
    %591 = math.exp %590 : vector<6x32xf32>
    %cst_228 = arith.constant 1.000000e+00 : f32
    %592 = vector.broadcast %cst_228 : f32 to vector<6x32xf32>
    %593 = arith.addf %592, %591 : vector<6x32xf32>
    %594 = arith.divf %592, %593 : vector<6x32xf32>
    %c0_229 = arith.constant 0 : index
    %c0_230 = arith.constant 0 : index
    %c0_231 = arith.constant 0 : index
    %595 = vector.load %arg27[%c0_229, %c0_230, %c0_231] : memref<2x32x32xbf16, #tpu.memory_space<vmem>>, vector<1x32x32xbf16>
    %596 = vector.shape_cast %595 : vector<1x32x32xbf16> to vector<32x32xbf16>
    %cst_232 = arith.constant dense<0.000000e+00> : vector<1x32xf32>
    %597 = tpu.matmul %341, %596, %cst_232 {dimension_numbers = #tpu.dot_dimension_numbers<[1], [0], [0], [1], [0, 0, 1, 1], [], []>} : vector<1x32xbf16>, vector<32x32xbf16>, vector<1x32xf32> -> vector<1x32xf32>
    %c0_233 = arith.constant 0 : index
    %c0_234 = arith.constant 0 : index
    %c0_235 = arith.constant 0 : index
    %598 = vector.load %arg28[%c0_233, %c0_234, %c0_235] : memref<2x1x32xf32, #tpu.memory_space<vmem>>, vector<1x1x32xf32>
    %599 = vector.shape_cast %598 : vector<1x1x32xf32> to vector<1x32xf32>
    %600 = arith.addf %597, %599 : vector<1x32xf32>
    %601 = arith.mulf %594, %576 : vector<6x32xf32>
    %cst_236 = arith.constant 1.000000e+00 : f32
    %602 = vector.broadcast %cst_236 : f32 to vector<6x32xf32>
    %603 = arith.subf %602, %594 : vector<6x32xf32>
    %604 = vector.broadcast %600 : vector<1x32xf32> to vector<6x32xf32>
    %605 = arith.mulf %603, %604 : vector<6x32xf32>
    %606 = arith.addf %601, %605 : vector<6x32xf32>
    %607 = arith.addf %475, %606 : vector<6x32xf32>
    %608 = vector.extract_strided_slice %351 {offsets = [2, 0], sizes = [1, 32], strides = [1, 1]} : vector<6x32xf32> to vector<1x32xf32>
    %609 = vector.extract_strided_slice %351 {offsets = [3, 0], sizes = [1, 32], strides = [1, 1]} : vector<6x32xf32> to vector<1x32xf32>
    %cst_237 = arith.constant dense<0.000000e+00> : vector<6xf32>
    %610 = vector.multi_reduction <add>, %607, %cst_237 [1] : vector<6x32xf32> to vector<6xf32>
    %611 = vector.shape_cast %610 : vector<6xf32> to vector<6x1xf32>
    %cst_238 = arith.constant 3.200000e+01 : f32
    %612 = vector.broadcast %cst_238 : f32 to vector<6x1xf32>
    %613 = arith.divf %611, %612 : vector<6x1xf32>
    %614 = vector.broadcast %613 : vector<6x1xf32> to vector<6x32xf32>
    %615 = arith.subf %607, %614 : vector<6x32xf32>
    %616 = arith.mulf %615, %615 : vector<6x32xf32>
    %cst_239 = arith.constant dense<0.000000e+00> : vector<6xf32>
    %617 = vector.multi_reduction <add>, %616, %cst_239 [1] : vector<6x32xf32> to vector<6xf32>
    %618 = vector.shape_cast %617 : vector<6xf32> to vector<6x1xf32>
    %cst_240 = arith.constant 3.200000e+01 : f32
    %619 = vector.broadcast %cst_240 : f32 to vector<6x1xf32>
    %620 = arith.divf %618, %619 : vector<6x1xf32>
    %621 = vector.broadcast %613 : vector<6x1xf32> to vector<6x32xf32>
    %622 = arith.subf %607, %621 : vector<6x32xf32>
    %cst_241 = arith.constant 9.99999974E-6 : f32
    %623 = vector.broadcast %cst_241 : f32 to vector<6x1xf32>
    %624 = arith.addf %620, %623 : vector<6x1xf32>
    %625 = math.rsqrt %624 : vector<6x1xf32>
    %626 = vector.broadcast %625 : vector<6x1xf32> to vector<6x32xf32>
    %627 = arith.mulf %622, %626 : vector<6x32xf32>
    %628 = vector.broadcast %608 : vector<1x32xf32> to vector<6x32xf32>
    %629 = arith.mulf %627, %628 : vector<6x32xf32>
    %630 = vector.broadcast %609 : vector<1x32xf32> to vector<6x32xf32>
    %631 = arith.addf %629, %630 : vector<6x32xf32>
    %c0_242 = arith.constant 0 : index
    %c0_243 = arith.constant 0 : index
    %c0_244 = arith.constant 0 : index
    %632 = vector.load %arg30[%c0_242, %c0_243, %c0_244] : memref<2x32x128xbf16, #tpu.memory_space<vmem>>, vector<1x32x128xbf16>
    %633 = vector.shape_cast %632 : vector<1x32x128xbf16> to vector<32x128xbf16>
    %c0_245 = arith.constant 0 : index
    %c0_246 = arith.constant 0 : index
    %c0_247 = arith.constant 0 : index
    %634 = vector.load %arg31[%c0_245, %c0_246, %c0_247] : memref<2x1x128xf32, #tpu.memory_space<vmem>>, vector<1x1x128xf32>
    %635 = vector.shape_cast %634 : vector<1x1x128xf32> to vector<1x128xf32>
    %c0_248 = arith.constant 0 : index
    %c0_249 = arith.constant 0 : index
    %c0_250 = arith.constant 0 : index
    %636 = vector.load %arg32[%c0_248, %c0_249, %c0_250] : memref<2x128x32xbf16, #tpu.memory_space<vmem>>, vector<1x128x32xbf16>
    %637 = vector.shape_cast %636 : vector<1x128x32xbf16> to vector<128x32xbf16>
    %c0_251 = arith.constant 0 : index
    %c0_252 = arith.constant 0 : index
    %c0_253 = arith.constant 0 : index
    %638 = vector.load %arg33[%c0_251, %c0_252, %c0_253] : memref<2x1x32xf32, #tpu.memory_space<vmem>>, vector<1x1x32xf32>
    %639 = vector.shape_cast %638 : vector<1x1x32xf32> to vector<1x32xf32>
    %640 = arith.truncf %631 : vector<6x32xf32> to vector<6x32xbf16>
    %cst_254 = arith.constant dense<0.000000e+00> : vector<6x128xf32>
    %641 = tpu.matmul %640, %633, %cst_254 {dimension_numbers = #tpu.dot_dimension_numbers<[1], [0], [0], [1], [0, 0, 1, 1], [], []>} : vector<6x32xbf16>, vector<32x128xbf16>, vector<6x128xf32> -> vector<6x128xf32>
    %642 = vector.broadcast %635 : vector<1x128xf32> to vector<6x128xf32>
    %643 = arith.addf %641, %642 : vector<6x128xf32>
    %cst_255 = arith.constant 0.000000e+00 : f32
    %644 = vector.broadcast %cst_255 : f32 to vector<6x128xf32>
    %645 = arith.maximumf %643, %644 : vector<6x128xf32>
    %646 = arith.truncf %645 : vector<6x128xf32> to vector<6x128xbf16>
    %cst_256 = arith.constant dense<0.000000e+00> : vector<6x32xf32>
    %647 = tpu.matmul %646, %637, %cst_256 {dimension_numbers = #tpu.dot_dimension_numbers<[1], [0], [0], [1], [0, 0, 1, 1], [], []>} : vector<6x128xbf16>, vector<128x32xbf16>, vector<6x32xf32> -> vector<6x32xf32>
    %648 = vector.broadcast %639 : vector<1x32xf32> to vector<6x32xf32>
    %649 = arith.addf %647, %648 : vector<6x32xf32>
    %650 = arith.addf %631, %649 : vector<6x32xf32>
    %651 = vector.extract_strided_slice %351 {offsets = [4, 0], sizes = [1, 32], strides = [1, 1]} : vector<6x32xf32> to vector<1x32xf32>
    %652 = vector.extract_strided_slice %351 {offsets = [5, 0], sizes = [1, 32], strides = [1, 1]} : vector<6x32xf32> to vector<1x32xf32>
    %cst_257 = arith.constant dense<0.000000e+00> : vector<6xf32>
    %653 = vector.multi_reduction <add>, %650, %cst_257 [1] : vector<6x32xf32> to vector<6xf32>
    %654 = vector.shape_cast %653 : vector<6xf32> to vector<6x1xf32>
    %cst_258 = arith.constant 3.200000e+01 : f32
    %655 = vector.broadcast %cst_258 : f32 to vector<6x1xf32>
    %656 = arith.divf %654, %655 : vector<6x1xf32>
    %657 = vector.broadcast %656 : vector<6x1xf32> to vector<6x32xf32>
    %658 = arith.subf %650, %657 : vector<6x32xf32>
    %659 = arith.mulf %658, %658 : vector<6x32xf32>
    %cst_259 = arith.constant dense<0.000000e+00> : vector<6xf32>
    %660 = vector.multi_reduction <add>, %659, %cst_259 [1] : vector<6x32xf32> to vector<6xf32>
    %661 = vector.shape_cast %660 : vector<6xf32> to vector<6x1xf32>
    %cst_260 = arith.constant 3.200000e+01 : f32
    %662 = vector.broadcast %cst_260 : f32 to vector<6x1xf32>
    %663 = arith.divf %661, %662 : vector<6x1xf32>
    %664 = vector.broadcast %656 : vector<6x1xf32> to vector<6x32xf32>
    %665 = arith.subf %650, %664 : vector<6x32xf32>
    %cst_261 = arith.constant 9.99999974E-6 : f32
    %666 = vector.broadcast %cst_261 : f32 to vector<6x1xf32>
    %667 = arith.addf %663, %666 : vector<6x1xf32>
    %668 = math.rsqrt %667 : vector<6x1xf32>
    %669 = vector.broadcast %668 : vector<6x1xf32> to vector<6x32xf32>
    %670 = arith.mulf %665, %669 : vector<6x32xf32>
    %671 = vector.broadcast %651 : vector<1x32xf32> to vector<6x32xf32>
    %672 = arith.mulf %670, %671 : vector<6x32xf32>
    %673 = vector.broadcast %652 : vector<1x32xf32> to vector<6x32xf32>
    %674 = arith.addf %672, %673 : vector<6x32xf32>
    %c1_262 = arith.constant 1 : index
    %c0_263 = arith.constant 0 : index
    %c0_264 = arith.constant 0 : index
    %675 = vector.load %arg29[%c1_262, %c0_263, %c0_264] : memref<2x6x32xf32, #tpu.memory_space<vmem>>, vector<1x6x32xf32>
    %676 = vector.shape_cast %675 : vector<1x6x32xf32> to vector<6x32xf32>
    %677 = arith.truncf %674 : vector<6x32xf32> to vector<6x32xbf16>
    %c1_265 = arith.constant 1 : index
    %c0_266 = arith.constant 0 : index
    %c0_267 = arith.constant 0 : index
    %678 = vector.load %arg14[%c1_265, %c0_266, %c0_267] : memref<2x32x96xbf16, #tpu.memory_space<vmem>>, vector<1x32x96xbf16>
    %679 = vector.shape_cast %678 : vector<1x32x96xbf16> to vector<32x96xbf16>
    %c1_268 = arith.constant 1 : index
    %c0_269 = arith.constant 0 : index
    %c0_270 = arith.constant 0 : index
    %680 = vector.load %arg15[%c1_268, %c0_269, %c0_270] : memref<2x1x96xf32, #tpu.memory_space<vmem>>, vector<1x1x96xf32>
    %681 = vector.shape_cast %680 : vector<1x1x96xf32> to vector<1x96xf32>
    %c1_271 = arith.constant 1 : index
    %c0_272 = arith.constant 0 : index
    %c0_273 = arith.constant 0 : index
    %682 = vector.load %arg16[%c1_271, %c0_272, %c0_273] : memref<2x32x32xbf16, #tpu.memory_space<vmem>>, vector<1x32x32xbf16>
    %683 = vector.shape_cast %682 : vector<1x32x32xbf16> to vector<32x32xbf16>
    %c1_274 = arith.constant 1 : index
    %c0_275 = arith.constant 0 : index
    %c0_276 = arith.constant 0 : index
    %684 = vector.load %arg17[%c1_274, %c0_275, %c0_276] : memref<2x1x32xf32, #tpu.memory_space<vmem>>, vector<1x1x32xf32>
    %685 = vector.shape_cast %684 : vector<1x1x32xf32> to vector<1x32xf32>
    %cst_277 = arith.constant dense<0.000000e+00> : vector<6x96xf32>
    %686 = tpu.matmul %677, %679, %cst_277 {dimension_numbers = #tpu.dot_dimension_numbers<[1], [0], [0], [1], [0, 0, 1, 1], [], []>} : vector<6x32xbf16>, vector<32x96xbf16>, vector<6x96xf32> -> vector<6x96xf32>
    %687 = vector.broadcast %681 : vector<1x96xf32> to vector<6x96xf32>
    %688 = arith.addf %686, %687 : vector<6x96xf32>
    %689 = vector.extract_strided_slice %688 {offsets = [0, 0], sizes = [6, 32], strides = [1, 1]} : vector<6x96xf32> to vector<6x32xf32>
    %690 = vector.extract_strided_slice %688 {offsets = [0, 32], sizes = [6, 32], strides = [1, 1]} : vector<6x96xf32> to vector<6x32xf32>
    %691 = vector.extract_strided_slice %688 {offsets = [0, 64], sizes = [6, 32], strides = [1, 1]} : vector<6x96xf32> to vector<6x32xf32>
    %692 = arith.truncf %689 : vector<6x32xf32> to vector<6x32xbf16>
    %693 = arith.truncf %690 : vector<6x32xf32> to vector<6x32xbf16>
    %694 = arith.truncf %691 : vector<6x32xf32> to vector<6x32xbf16>
    %695 = vector.extract_strided_slice %692 {offsets = [0, 0], sizes = [6, 8], strides = [1, 1]} : vector<6x32xbf16> to vector<6x8xbf16>
    %696 = vector.extract_strided_slice %693 {offsets = [0, 0], sizes = [6, 8], strides = [1, 1]} : vector<6x32xbf16> to vector<6x8xbf16>
    %697 = vector.extract_strided_slice %694 {offsets = [0, 0], sizes = [6, 8], strides = [1, 1]} : vector<6x32xbf16> to vector<6x8xbf16>
    %cst_278 = arith.constant dense<0.000000e+00> : vector<6x6xf32>
    %698 = tpu.matmul %695, %696, %cst_278 {dimension_numbers = #tpu.dot_dimension_numbers<[1], [1], [0], [0], [0, 0, 1, 0], [], []>} : vector<6x8xbf16>, vector<6x8xbf16>, vector<6x6xf32> -> vector<6x6xf32>
    %cst_279 = arith.constant 0.353553385 : f32
    %699 = vector.broadcast %cst_279 : f32 to vector<6x6xf32>
    %700 = arith.mulf %698, %699 : vector<6x6xf32>
    %701 = arith.addf %700, %349 : vector<6x6xf32>
    %cst_280 = arith.constant dense<0xFF800000> : vector<6xf32>
    %702 = vector.multi_reduction <maximumf>, %701, %cst_280 [1] : vector<6x6xf32> to vector<6xf32>
    %703 = vector.shape_cast %702 : vector<6xf32> to vector<6x1xf32>
    %704 = vector.broadcast %703 : vector<6x1xf32> to vector<6x6xf32>
    %705 = arith.subf %701, %704 : vector<6x6xf32>
    %706 = math.exp %705 : vector<6x6xf32>
    %cst_281 = arith.constant dense<0.000000e+00> : vector<6xf32>
    %707 = vector.multi_reduction <add>, %706, %cst_281 [1] : vector<6x6xf32> to vector<6xf32>
    %708 = vector.shape_cast %707 : vector<6xf32> to vector<6x1xf32>
    %709 = tpu.reciprocal %708 {approx = true} : vector<6x1xf32> -> vector<6x1xf32>
    %710 = vector.broadcast %709 : vector<6x1xf32> to vector<6x6xf32>
    %711 = arith.mulf %706, %710 : vector<6x6xf32>
    %712 = arith.truncf %711 : vector<6x6xf32> to vector<6x6xbf16>
    %cst_282 = arith.constant dense<0.000000e+00> : vector<6x8xf32>
    %713 = tpu.matmul %712, %697, %cst_282 {dimension_numbers = #tpu.dot_dimension_numbers<[1], [0], [0], [1], [0, 0, 1, 1], [], []>} : vector<6x6xbf16>, vector<6x8xbf16>, vector<6x8xf32> -> vector<6x8xf32>
    %714 = vector.extract_strided_slice %692 {offsets = [0, 8], sizes = [6, 8], strides = [1, 1]} : vector<6x32xbf16> to vector<6x8xbf16>
    %715 = vector.extract_strided_slice %693 {offsets = [0, 8], sizes = [6, 8], strides = [1, 1]} : vector<6x32xbf16> to vector<6x8xbf16>
    %716 = vector.extract_strided_slice %694 {offsets = [0, 8], sizes = [6, 8], strides = [1, 1]} : vector<6x32xbf16> to vector<6x8xbf16>
    %cst_283 = arith.constant dense<0.000000e+00> : vector<6x6xf32>
    %717 = tpu.matmul %714, %715, %cst_283 {dimension_numbers = #tpu.dot_dimension_numbers<[1], [1], [0], [0], [0, 0, 1, 0], [], []>} : vector<6x8xbf16>, vector<6x8xbf16>, vector<6x6xf32> -> vector<6x6xf32>
    %cst_284 = arith.constant 0.353553385 : f32
    %718 = vector.broadcast %cst_284 : f32 to vector<6x6xf32>
    %719 = arith.mulf %717, %718 : vector<6x6xf32>
    %720 = arith.addf %719, %349 : vector<6x6xf32>
    %cst_285 = arith.constant dense<0xFF800000> : vector<6xf32>
    %721 = vector.multi_reduction <maximumf>, %720, %cst_285 [1] : vector<6x6xf32> to vector<6xf32>
    %722 = vector.shape_cast %721 : vector<6xf32> to vector<6x1xf32>
    %723 = vector.broadcast %722 : vector<6x1xf32> to vector<6x6xf32>
    %724 = arith.subf %720, %723 : vector<6x6xf32>
    %725 = math.exp %724 : vector<6x6xf32>
    %cst_286 = arith.constant dense<0.000000e+00> : vector<6xf32>
    %726 = vector.multi_reduction <add>, %725, %cst_286 [1] : vector<6x6xf32> to vector<6xf32>
    %727 = vector.shape_cast %726 : vector<6xf32> to vector<6x1xf32>
    %728 = tpu.reciprocal %727 {approx = true} : vector<6x1xf32> -> vector<6x1xf32>
    %729 = vector.broadcast %728 : vector<6x1xf32> to vector<6x6xf32>
    %730 = arith.mulf %725, %729 : vector<6x6xf32>
    %731 = arith.truncf %730 : vector<6x6xf32> to vector<6x6xbf16>
    %cst_287 = arith.constant dense<0.000000e+00> : vector<6x8xf32>
    %732 = tpu.matmul %731, %716, %cst_287 {dimension_numbers = #tpu.dot_dimension_numbers<[1], [0], [0], [1], [0, 0, 1, 1], [], []>} : vector<6x6xbf16>, vector<6x8xbf16>, vector<6x8xf32> -> vector<6x8xf32>
    %733 = vector.extract_strided_slice %692 {offsets = [0, 16], sizes = [6, 8], strides = [1, 1]} : vector<6x32xbf16> to vector<6x8xbf16>
    %734 = vector.extract_strided_slice %693 {offsets = [0, 16], sizes = [6, 8], strides = [1, 1]} : vector<6x32xbf16> to vector<6x8xbf16>
    %735 = vector.extract_strided_slice %694 {offsets = [0, 16], sizes = [6, 8], strides = [1, 1]} : vector<6x32xbf16> to vector<6x8xbf16>
    %cst_288 = arith.constant dense<0.000000e+00> : vector<6x6xf32>
    %736 = tpu.matmul %733, %734, %cst_288 {dimension_numbers = #tpu.dot_dimension_numbers<[1], [1], [0], [0], [0, 0, 1, 0], [], []>} : vector<6x8xbf16>, vector<6x8xbf16>, vector<6x6xf32> -> vector<6x6xf32>
    %cst_289 = arith.constant 0.353553385 : f32
    %737 = vector.broadcast %cst_289 : f32 to vector<6x6xf32>
    %738 = arith.mulf %736, %737 : vector<6x6xf32>
    %739 = arith.addf %738, %349 : vector<6x6xf32>
    %cst_290 = arith.constant dense<0xFF800000> : vector<6xf32>
    %740 = vector.multi_reduction <maximumf>, %739, %cst_290 [1] : vector<6x6xf32> to vector<6xf32>
    %741 = vector.shape_cast %740 : vector<6xf32> to vector<6x1xf32>
    %742 = vector.broadcast %741 : vector<6x1xf32> to vector<6x6xf32>
    %743 = arith.subf %739, %742 : vector<6x6xf32>
    %744 = math.exp %743 : vector<6x6xf32>
    %cst_291 = arith.constant dense<0.000000e+00> : vector<6xf32>
    %745 = vector.multi_reduction <add>, %744, %cst_291 [1] : vector<6x6xf32> to vector<6xf32>
    %746 = vector.shape_cast %745 : vector<6xf32> to vector<6x1xf32>
    %747 = tpu.reciprocal %746 {approx = true} : vector<6x1xf32> -> vector<6x1xf32>
    %748 = vector.broadcast %747 : vector<6x1xf32> to vector<6x6xf32>
    %749 = arith.mulf %744, %748 : vector<6x6xf32>
    %750 = arith.truncf %749 : vector<6x6xf32> to vector<6x6xbf16>
    %cst_292 = arith.constant dense<0.000000e+00> : vector<6x8xf32>
    %751 = tpu.matmul %750, %735, %cst_292 {dimension_numbers = #tpu.dot_dimension_numbers<[1], [0], [0], [1], [0, 0, 1, 1], [], []>} : vector<6x6xbf16>, vector<6x8xbf16>, vector<6x8xf32> -> vector<6x8xf32>
    %752 = vector.extract_strided_slice %692 {offsets = [0, 24], sizes = [6, 8], strides = [1, 1]} : vector<6x32xbf16> to vector<6x8xbf16>
    %753 = vector.extract_strided_slice %693 {offsets = [0, 24], sizes = [6, 8], strides = [1, 1]} : vector<6x32xbf16> to vector<6x8xbf16>
    %754 = vector.extract_strided_slice %694 {offsets = [0, 24], sizes = [6, 8], strides = [1, 1]} : vector<6x32xbf16> to vector<6x8xbf16>
    %cst_293 = arith.constant dense<0.000000e+00> : vector<6x6xf32>
    %755 = tpu.matmul %752, %753, %cst_293 {dimension_numbers = #tpu.dot_dimension_numbers<[1], [1], [0], [0], [0, 0, 1, 0], [], []>} : vector<6x8xbf16>, vector<6x8xbf16>, vector<6x6xf32> -> vector<6x6xf32>
    %cst_294 = arith.constant 0.353553385 : f32
    %756 = vector.broadcast %cst_294 : f32 to vector<6x6xf32>
    %757 = arith.mulf %755, %756 : vector<6x6xf32>
    %758 = arith.addf %757, %349 : vector<6x6xf32>
    %cst_295 = arith.constant dense<0xFF800000> : vector<6xf32>
    %759 = vector.multi_reduction <maximumf>, %758, %cst_295 [1] : vector<6x6xf32> to vector<6xf32>
    %760 = vector.shape_cast %759 : vector<6xf32> to vector<6x1xf32>
    %761 = vector.broadcast %760 : vector<6x1xf32> to vector<6x6xf32>
    %762 = arith.subf %758, %761 : vector<6x6xf32>
    %763 = math.exp %762 : vector<6x6xf32>
    %cst_296 = arith.constant dense<0.000000e+00> : vector<6xf32>
    %764 = vector.multi_reduction <add>, %763, %cst_296 [1] : vector<6x6xf32> to vector<6xf32>
    %765 = vector.shape_cast %764 : vector<6xf32> to vector<6x1xf32>
    %766 = tpu.reciprocal %765 {approx = true} : vector<6x1xf32> -> vector<6x1xf32>
    %767 = vector.broadcast %766 : vector<6x1xf32> to vector<6x6xf32>
    %768 = arith.mulf %763, %767 : vector<6x6xf32>
    %769 = arith.truncf %768 : vector<6x6xf32> to vector<6x6xbf16>
    %cst_297 = arith.constant dense<0.000000e+00> : vector<6x8xf32>
    %770 = tpu.matmul %769, %754, %cst_297 {dimension_numbers = #tpu.dot_dimension_numbers<[1], [0], [0], [1], [0, 0, 1, 1], [], []>} : vector<6x6xbf16>, vector<6x8xbf16>, vector<6x8xf32> -> vector<6x8xf32>
    %771 = tpu.concatenate %713, %732, %751, %770 in 1 : vector<6x8xf32>, vector<6x8xf32>, vector<6x8xf32>, vector<6x8xf32> -> vector<6x32xf32>
    %772 = arith.truncf %771 : vector<6x32xf32> to vector<6x32xbf16>
    %cst_298 = arith.constant dense<0.000000e+00> : vector<6x32xf32>
    %773 = tpu.matmul %772, %683, %cst_298 {dimension_numbers = #tpu.dot_dimension_numbers<[1], [0], [0], [1], [0, 0, 1, 1], [], []>} : vector<6x32xbf16>, vector<32x32xbf16>, vector<6x32xf32> -> vector<6x32xf32>
    %774 = vector.broadcast %685 : vector<1x32xf32> to vector<6x32xf32>
    %775 = arith.addf %773, %774 : vector<6x32xf32>
    %776 = arith.addf %674, %775 : vector<6x32xf32>
    %777 = vector.extract_strided_slice %676 {offsets = [0, 0], sizes = [1, 32], strides = [1, 1]} : vector<6x32xf32> to vector<1x32xf32>
    %778 = vector.extract_strided_slice %676 {offsets = [1, 0], sizes = [1, 32], strides = [1, 1]} : vector<6x32xf32> to vector<1x32xf32>
    %cst_299 = arith.constant dense<0.000000e+00> : vector<6xf32>
    %779 = vector.multi_reduction <add>, %776, %cst_299 [1] : vector<6x32xf32> to vector<6xf32>
    %780 = vector.shape_cast %779 : vector<6xf32> to vector<6x1xf32>
    %cst_300 = arith.constant 3.200000e+01 : f32
    %781 = vector.broadcast %cst_300 : f32 to vector<6x1xf32>
    %782 = arith.divf %780, %781 : vector<6x1xf32>
    %783 = vector.broadcast %782 : vector<6x1xf32> to vector<6x32xf32>
    %784 = arith.subf %776, %783 : vector<6x32xf32>
    %785 = arith.mulf %784, %784 : vector<6x32xf32>
    %cst_301 = arith.constant dense<0.000000e+00> : vector<6xf32>
    %786 = vector.multi_reduction <add>, %785, %cst_301 [1] : vector<6x32xf32> to vector<6xf32>
    %787 = vector.shape_cast %786 : vector<6xf32> to vector<6x1xf32>
    %cst_302 = arith.constant 3.200000e+01 : f32
    %788 = vector.broadcast %cst_302 : f32 to vector<6x1xf32>
    %789 = arith.divf %787, %788 : vector<6x1xf32>
    %790 = vector.broadcast %782 : vector<6x1xf32> to vector<6x32xf32>
    %791 = arith.subf %776, %790 : vector<6x32xf32>
    %cst_303 = arith.constant 9.99999974E-6 : f32
    %792 = vector.broadcast %cst_303 : f32 to vector<6x1xf32>
    %793 = arith.addf %789, %792 : vector<6x1xf32>
    %794 = math.rsqrt %793 : vector<6x1xf32>
    %795 = vector.broadcast %794 : vector<6x1xf32> to vector<6x32xf32>
    %796 = arith.mulf %791, %795 : vector<6x32xf32>
    %797 = vector.broadcast %777 : vector<1x32xf32> to vector<6x32xf32>
    %798 = arith.mulf %796, %797 : vector<6x32xf32>
    %799 = vector.broadcast %778 : vector<1x32xf32> to vector<6x32xf32>
    %800 = arith.addf %798, %799 : vector<6x32xf32>
    %801 = arith.truncf %800 : vector<6x32xf32> to vector<6x32xbf16>
    %c1_304 = arith.constant 1 : index
    %c0_305 = arith.constant 0 : index
    %c0_306 = arith.constant 0 : index
    %802 = vector.load %arg18[%c1_304, %c0_305, %c0_306] : memref<2x32x32xbf16, #tpu.memory_space<vmem>>, vector<1x32x32xbf16>
    %803 = vector.shape_cast %802 : vector<1x32x32xbf16> to vector<32x32xbf16>
    %c1_307 = arith.constant 1 : index
    %c0_308 = arith.constant 0 : index
    %c0_309 = arith.constant 0 : index
    %804 = vector.load %arg19[%c1_307, %c0_308, %c0_309] : memref<2x1x32xf32, #tpu.memory_space<vmem>>, vector<1x1x32xf32>
    %805 = vector.shape_cast %804 : vector<1x1x32xf32> to vector<1x32xf32>
    %c1_310 = arith.constant 1 : index
    %c0_311 = arith.constant 0 : index
    %c0_312 = arith.constant 0 : index
    %806 = vector.load %arg20[%c1_310, %c0_311, %c0_312] : memref<2x32x64xbf16, #tpu.memory_space<vmem>>, vector<1x32x64xbf16>
    %807 = vector.shape_cast %806 : vector<1x32x64xbf16> to vector<32x64xbf16>
    %c1_313 = arith.constant 1 : index
    %c0_314 = arith.constant 0 : index
    %c0_315 = arith.constant 0 : index
    %808 = vector.load %arg21[%c1_313, %c0_314, %c0_315] : memref<2x1x64xf32, #tpu.memory_space<vmem>>, vector<1x1x64xf32>
    %809 = vector.shape_cast %808 : vector<1x1x64xf32> to vector<1x64xf32>
    %c1_316 = arith.constant 1 : index
    %c0_317 = arith.constant 0 : index
    %c0_318 = arith.constant 0 : index
    %810 = vector.load %arg22[%c1_316, %c0_317, %c0_318] : memref<2x32x32xbf16, #tpu.memory_space<vmem>>, vector<1x32x32xbf16>
    %811 = vector.shape_cast %810 : vector<1x32x32xbf16> to vector<32x32xbf16>
    %c1_319 = arith.constant 1 : index
    %c0_320 = arith.constant 0 : index
    %c0_321 = arith.constant 0 : index
    %812 = vector.load %arg23[%c1_319, %c0_320, %c0_321] : memref<2x1x32xf32, #tpu.memory_space<vmem>>, vector<1x1x32xf32>
    %813 = vector.shape_cast %812 : vector<1x1x32xf32> to vector<1x32xf32>
    %cst_322 = arith.constant dense<0.000000e+00> : vector<6x32xf32>
    %814 = tpu.matmul %801, %803, %cst_322 {dimension_numbers = #tpu.dot_dimension_numbers<[1], [0], [0], [1], [0, 0, 1, 1], [], []>} : vector<6x32xbf16>, vector<32x32xbf16>, vector<6x32xf32> -> vector<6x32xf32>
    %815 = vector.broadcast %805 : vector<1x32xf32> to vector<6x32xf32>
    %816 = arith.addf %814, %815 : vector<6x32xf32>
    %cst_323 = arith.constant dense<0.000000e+00> : vector<8x64xf32>
    %817 = tpu.matmul %339, %807, %cst_323 {dimension_numbers = #tpu.dot_dimension_numbers<[1], [0], [0], [1], [0, 0, 1, 1], [], []>} : vector<8x32xbf16>, vector<32x64xbf16>, vector<8x64xf32> -> vector<8x64xf32>
    %818 = vector.broadcast %809 : vector<1x64xf32> to vector<8x64xf32>
    %819 = arith.addf %817, %818 : vector<8x64xf32>
    %820 = vector.extract_strided_slice %819 {offsets = [0, 0], sizes = [8, 32], strides = [1, 1]} : vector<8x64xf32> to vector<8x32xf32>
    %821 = vector.extract_strided_slice %819 {offsets = [0, 32], sizes = [8, 32], strides = [1, 1]} : vector<8x64xf32> to vector<8x32xf32>
    %822 = arith.truncf %816 : vector<6x32xf32> to vector<6x32xbf16>
    %823 = arith.truncf %820 : vector<8x32xf32> to vector<8x32xbf16>
    %824 = arith.truncf %821 : vector<8x32xf32> to vector<8x32xbf16>
    %825 = vector.extract_strided_slice %822 {offsets = [0, 0], sizes = [6, 8], strides = [1, 1]} : vector<6x32xbf16> to vector<6x8xbf16>
    %826 = vector.extract_strided_slice %823 {offsets = [0, 0], sizes = [8, 8], strides = [1, 1]} : vector<8x32xbf16> to vector<8x8xbf16>
    %827 = vector.extract_strided_slice %824 {offsets = [0, 0], sizes = [8, 8], strides = [1, 1]} : vector<8x32xbf16> to vector<8x8xbf16>
    %cst_324 = arith.constant dense<0.000000e+00> : vector<6x8xf32>
    %828 = tpu.matmul %825, %826, %cst_324 {dimension_numbers = #tpu.dot_dimension_numbers<[1], [1], [0], [0], [0, 0, 1, 0], [], []>} : vector<6x8xbf16>, vector<8x8xbf16>, vector<6x8xf32> -> vector<6x8xf32>
    %cst_325 = arith.constant 0.353553385 : f32
    %829 = vector.broadcast %cst_325 : f32 to vector<6x8xf32>
    %830 = arith.mulf %828, %829 : vector<6x8xf32>
    %cst_326 = arith.constant dense<0xFF800000> : vector<6xf32>
    %831 = vector.multi_reduction <maximumf>, %830, %cst_326 [1] : vector<6x8xf32> to vector<6xf32>
    %832 = vector.shape_cast %831 : vector<6xf32> to vector<6x1xf32>
    %833 = vector.broadcast %832 : vector<6x1xf32> to vector<6x8xf32>
    %834 = arith.subf %830, %833 : vector<6x8xf32>
    %835 = math.exp %834 : vector<6x8xf32>
    %cst_327 = arith.constant dense<0.000000e+00> : vector<6xf32>
    %836 = vector.multi_reduction <add>, %835, %cst_327 [1] : vector<6x8xf32> to vector<6xf32>
    %837 = vector.shape_cast %836 : vector<6xf32> to vector<6x1xf32>
    %838 = tpu.reciprocal %837 {approx = true} : vector<6x1xf32> -> vector<6x1xf32>
    %839 = vector.broadcast %838 : vector<6x1xf32> to vector<6x8xf32>
    %840 = arith.mulf %835, %839 : vector<6x8xf32>
    %841 = arith.truncf %840 : vector<6x8xf32> to vector<6x8xbf16>
    %cst_328 = arith.constant dense<0.000000e+00> : vector<6x8xf32>
    %842 = tpu.matmul %841, %827, %cst_328 {dimension_numbers = #tpu.dot_dimension_numbers<[1], [0], [0], [1], [0, 0, 1, 1], [], []>} : vector<6x8xbf16>, vector<8x8xbf16>, vector<6x8xf32> -> vector<6x8xf32>
    %843 = vector.extract_strided_slice %822 {offsets = [0, 8], sizes = [6, 8], strides = [1, 1]} : vector<6x32xbf16> to vector<6x8xbf16>
    %844 = vector.extract_strided_slice %823 {offsets = [0, 8], sizes = [8, 8], strides = [1, 1]} : vector<8x32xbf16> to vector<8x8xbf16>
    %845 = vector.extract_strided_slice %824 {offsets = [0, 8], sizes = [8, 8], strides = [1, 1]} : vector<8x32xbf16> to vector<8x8xbf16>
    %cst_329 = arith.constant dense<0.000000e+00> : vector<6x8xf32>
    %846 = tpu.matmul %843, %844, %cst_329 {dimension_numbers = #tpu.dot_dimension_numbers<[1], [1], [0], [0], [0, 0, 1, 0], [], []>} : vector<6x8xbf16>, vector<8x8xbf16>, vector<6x8xf32> -> vector<6x8xf32>
    %cst_330 = arith.constant 0.353553385 : f32
    %847 = vector.broadcast %cst_330 : f32 to vector<6x8xf32>
    %848 = arith.mulf %846, %847 : vector<6x8xf32>
    %cst_331 = arith.constant dense<0xFF800000> : vector<6xf32>
    %849 = vector.multi_reduction <maximumf>, %848, %cst_331 [1] : vector<6x8xf32> to vector<6xf32>
    %850 = vector.shape_cast %849 : vector<6xf32> to vector<6x1xf32>
    %851 = vector.broadcast %850 : vector<6x1xf32> to vector<6x8xf32>
    %852 = arith.subf %848, %851 : vector<6x8xf32>
    %853 = math.exp %852 : vector<6x8xf32>
    %cst_332 = arith.constant dense<0.000000e+00> : vector<6xf32>
    %854 = vector.multi_reduction <add>, %853, %cst_332 [1] : vector<6x8xf32> to vector<6xf32>
    %855 = vector.shape_cast %854 : vector<6xf32> to vector<6x1xf32>
    %856 = tpu.reciprocal %855 {approx = true} : vector<6x1xf32> -> vector<6x1xf32>
    %857 = vector.broadcast %856 : vector<6x1xf32> to vector<6x8xf32>
    %858 = arith.mulf %853, %857 : vector<6x8xf32>
    %859 = arith.truncf %858 : vector<6x8xf32> to vector<6x8xbf16>
    %cst_333 = arith.constant dense<0.000000e+00> : vector<6x8xf32>
    %860 = tpu.matmul %859, %845, %cst_333 {dimension_numbers = #tpu.dot_dimension_numbers<[1], [0], [0], [1], [0, 0, 1, 1], [], []>} : vector<6x8xbf16>, vector<8x8xbf16>, vector<6x8xf32> -> vector<6x8xf32>
    %861 = vector.extract_strided_slice %822 {offsets = [0, 16], sizes = [6, 8], strides = [1, 1]} : vector<6x32xbf16> to vector<6x8xbf16>
    %862 = vector.extract_strided_slice %823 {offsets = [0, 16], sizes = [8, 8], strides = [1, 1]} : vector<8x32xbf16> to vector<8x8xbf16>
    %863 = vector.extract_strided_slice %824 {offsets = [0, 16], sizes = [8, 8], strides = [1, 1]} : vector<8x32xbf16> to vector<8x8xbf16>
    %cst_334 = arith.constant dense<0.000000e+00> : vector<6x8xf32>
    %864 = tpu.matmul %861, %862, %cst_334 {dimension_numbers = #tpu.dot_dimension_numbers<[1], [1], [0], [0], [0, 0, 1, 0], [], []>} : vector<6x8xbf16>, vector<8x8xbf16>, vector<6x8xf32> -> vector<6x8xf32>
    %cst_335 = arith.constant 0.353553385 : f32
    %865 = vector.broadcast %cst_335 : f32 to vector<6x8xf32>
    %866 = arith.mulf %864, %865 : vector<6x8xf32>
    %cst_336 = arith.constant dense<0xFF800000> : vector<6xf32>
    %867 = vector.multi_reduction <maximumf>, %866, %cst_336 [1] : vector<6x8xf32> to vector<6xf32>
    %868 = vector.shape_cast %867 : vector<6xf32> to vector<6x1xf32>
    %869 = vector.broadcast %868 : vector<6x1xf32> to vector<6x8xf32>
    %870 = arith.subf %866, %869 : vector<6x8xf32>
    %871 = math.exp %870 : vector<6x8xf32>
    %cst_337 = arith.constant dense<0.000000e+00> : vector<6xf32>
    %872 = vector.multi_reduction <add>, %871, %cst_337 [1] : vector<6x8xf32> to vector<6xf32>
    %873 = vector.shape_cast %872 : vector<6xf32> to vector<6x1xf32>
    %874 = tpu.reciprocal %873 {approx = true} : vector<6x1xf32> -> vector<6x1xf32>
    %875 = vector.broadcast %874 : vector<6x1xf32> to vector<6x8xf32>
    %876 = arith.mulf %871, %875 : vector<6x8xf32>
    %877 = arith.truncf %876 : vector<6x8xf32> to vector<6x8xbf16>
    %cst_338 = arith.constant dense<0.000000e+00> : vector<6x8xf32>
    %878 = tpu.matmul %877, %863, %cst_338 {dimension_numbers = #tpu.dot_dimension_numbers<[1], [0], [0], [1], [0, 0, 1, 1], [], []>} : vector<6x8xbf16>, vector<8x8xbf16>, vector<6x8xf32> -> vector<6x8xf32>
    %879 = vector.extract_strided_slice %822 {offsets = [0, 24], sizes = [6, 8], strides = [1, 1]} : vector<6x32xbf16> to vector<6x8xbf16>
    %880 = vector.extract_strided_slice %823 {offsets = [0, 24], sizes = [8, 8], strides = [1, 1]} : vector<8x32xbf16> to vector<8x8xbf16>
    %881 = vector.extract_strided_slice %824 {offsets = [0, 24], sizes = [8, 8], strides = [1, 1]} : vector<8x32xbf16> to vector<8x8xbf16>
    %cst_339 = arith.constant dense<0.000000e+00> : vector<6x8xf32>
    %882 = tpu.matmul %879, %880, %cst_339 {dimension_numbers = #tpu.dot_dimension_numbers<[1], [1], [0], [0], [0, 0, 1, 0], [], []>} : vector<6x8xbf16>, vector<8x8xbf16>, vector<6x8xf32> -> vector<6x8xf32>
    %cst_340 = arith.constant 0.353553385 : f32
    %883 = vector.broadcast %cst_340 : f32 to vector<6x8xf32>
    %884 = arith.mulf %882, %883 : vector<6x8xf32>
    %cst_341 = arith.constant dense<0xFF800000> : vector<6xf32>
    %885 = vector.multi_reduction <maximumf>, %884, %cst_341 [1] : vector<6x8xf32> to vector<6xf32>
    %886 = vector.shape_cast %885 : vector<6xf32> to vector<6x1xf32>
    %887 = vector.broadcast %886 : vector<6x1xf32> to vector<6x8xf32>
    %888 = arith.subf %884, %887 : vector<6x8xf32>
    %889 = math.exp %888 : vector<6x8xf32>
    %cst_342 = arith.constant dense<0.000000e+00> : vector<6xf32>
    %890 = vector.multi_reduction <add>, %889, %cst_342 [1] : vector<6x8xf32> to vector<6xf32>
    %891 = vector.shape_cast %890 : vector<6xf32> to vector<6x1xf32>
    %892 = tpu.reciprocal %891 {approx = true} : vector<6x1xf32> -> vector<6x1xf32>
    %893 = vector.broadcast %892 : vector<6x1xf32> to vector<6x8xf32>
    %894 = arith.mulf %889, %893 : vector<6x8xf32>
    %895 = arith.truncf %894 : vector<6x8xf32> to vector<6x8xbf16>
    %cst_343 = arith.constant dense<0.000000e+00> : vector<6x8xf32>
    %896 = tpu.matmul %895, %881, %cst_343 {dimension_numbers = #tpu.dot_dimension_numbers<[1], [0], [0], [1], [0, 0, 1, 1], [], []>} : vector<6x8xbf16>, vector<8x8xbf16>, vector<6x8xf32> -> vector<6x8xf32>
    %897 = tpu.concatenate %842, %860, %878, %896 in 1 : vector<6x8xf32>, vector<6x8xf32>, vector<6x8xf32>, vector<6x8xf32> -> vector<6x32xf32>
    %898 = arith.truncf %897 : vector<6x32xf32> to vector<6x32xbf16>
    %cst_344 = arith.constant dense<0.000000e+00> : vector<6x32xf32>
    %899 = tpu.matmul %898, %811, %cst_344 {dimension_numbers = #tpu.dot_dimension_numbers<[1], [0], [0], [1], [0, 0, 1, 1], [], []>} : vector<6x32xbf16>, vector<32x32xbf16>, vector<6x32xf32> -> vector<6x32xf32>
    %900 = vector.broadcast %813 : vector<1x32xf32> to vector<6x32xf32>
    %901 = arith.addf %899, %900 : vector<6x32xf32>
    %902 = arith.truncf %901 : vector<6x32xf32> to vector<6x32xbf16>
    %c1_345 = arith.constant 1 : index
    %c0_346 = arith.constant 0 : index
    %c0_347 = arith.constant 0 : index
    %903 = vector.load %arg24[%c1_345, %c0_346, %c0_347] : memref<2x32x32xbf16, #tpu.memory_space<vmem>>, vector<1x32x32xbf16>
    %904 = vector.shape_cast %903 : vector<1x32x32xbf16> to vector<32x32xbf16>
    %cst_348 = arith.constant dense<0.000000e+00> : vector<6x32xf32>
    %905 = tpu.matmul %902, %904, %cst_348 {dimension_numbers = #tpu.dot_dimension_numbers<[1], [0], [0], [1], [0, 0, 1, 1], [], []>} : vector<6x32xbf16>, vector<32x32xbf16>, vector<6x32xf32> -> vector<6x32xf32>
    %c1_349 = arith.constant 1 : index
    %c0_350 = arith.constant 0 : index
    %c0_351 = arith.constant 0 : index
    %906 = vector.load %arg25[%c1_349, %c0_350, %c0_351] : memref<2x32x32xbf16, #tpu.memory_space<vmem>>, vector<1x32x32xbf16>
    %907 = vector.shape_cast %906 : vector<1x32x32xbf16> to vector<32x32xbf16>
    %cst_352 = arith.constant dense<0.000000e+00> : vector<1x32xf32>
    %908 = tpu.matmul %341, %907, %cst_352 {dimension_numbers = #tpu.dot_dimension_numbers<[1], [0], [0], [1], [0, 0, 1, 1], [], []>} : vector<1x32xbf16>, vector<32x32xbf16>, vector<1x32xf32> -> vector<1x32xf32>
    %909 = vector.broadcast %908 : vector<1x32xf32> to vector<6x32xf32>
    %910 = arith.addf %905, %909 : vector<6x32xf32>
    %c1_353 = arith.constant 1 : index
    %c0_354 = arith.constant 0 : index
    %c0_355 = arith.constant 0 : index
    %911 = vector.load %arg26[%c1_353, %c0_354, %c0_355] : memref<2x1x32xf32, #tpu.memory_space<vmem>>, vector<1x1x32xf32>
    %912 = vector.shape_cast %911 : vector<1x1x32xf32> to vector<1x32xf32>
    %913 = vector.broadcast %912 : vector<1x32xf32> to vector<6x32xf32>
    %914 = arith.addf %910, %913 : vector<6x32xf32>
    %915 = arith.negf %914 : vector<6x32xf32>
    %916 = math.exp %915 : vector<6x32xf32>
    %cst_356 = arith.constant 1.000000e+00 : f32
    %917 = vector.broadcast %cst_356 : f32 to vector<6x32xf32>
    %918 = arith.addf %917, %916 : vector<6x32xf32>
    %919 = arith.divf %917, %918 : vector<6x32xf32>
    %c1_357 = arith.constant 1 : index
    %c0_358 = arith.constant 0 : index
    %c0_359 = arith.constant 0 : index
    %920 = vector.load %arg27[%c1_357, %c0_358, %c0_359] : memref<2x32x32xbf16, #tpu.memory_space<vmem>>, vector<1x32x32xbf16>
    %921 = vector.shape_cast %920 : vector<1x32x32xbf16> to vector<32x32xbf16>
    %cst_360 = arith.constant dense<0.000000e+00> : vector<1x32xf32>
    %922 = tpu.matmul %341, %921, %cst_360 {dimension_numbers = #tpu.dot_dimension_numbers<[1], [0], [0], [1], [0, 0, 1, 1], [], []>} : vector<1x32xbf16>, vector<32x32xbf16>, vector<1x32xf32> -> vector<1x32xf32>
    %c1_361 = arith.constant 1 : index
    %c0_362 = arith.constant 0 : index
    %c0_363 = arith.constant 0 : index
    %923 = vector.load %arg28[%c1_361, %c0_362, %c0_363] : memref<2x1x32xf32, #tpu.memory_space<vmem>>, vector<1x1x32xf32>
    %924 = vector.shape_cast %923 : vector<1x1x32xf32> to vector<1x32xf32>
    %925 = arith.addf %922, %924 : vector<1x32xf32>
    %926 = arith.mulf %919, %901 : vector<6x32xf32>
    %cst_364 = arith.constant 1.000000e+00 : f32
    %927 = vector.broadcast %cst_364 : f32 to vector<6x32xf32>
    %928 = arith.subf %927, %919 : vector<6x32xf32>
    %929 = vector.broadcast %925 : vector<1x32xf32> to vector<6x32xf32>
    %930 = arith.mulf %928, %929 : vector<6x32xf32>
    %931 = arith.addf %926, %930 : vector<6x32xf32>
    %932 = arith.addf %800, %931 : vector<6x32xf32>
    %933 = vector.extract_strided_slice %676 {offsets = [2, 0], sizes = [1, 32], strides = [1, 1]} : vector<6x32xf32> to vector<1x32xf32>
    %934 = vector.extract_strided_slice %676 {offsets = [3, 0], sizes = [1, 32], strides = [1, 1]} : vector<6x32xf32> to vector<1x32xf32>
    %cst_365 = arith.constant dense<0.000000e+00> : vector<6xf32>
    %935 = vector.multi_reduction <add>, %932, %cst_365 [1] : vector<6x32xf32> to vector<6xf32>
    %936 = vector.shape_cast %935 : vector<6xf32> to vector<6x1xf32>
    %cst_366 = arith.constant 3.200000e+01 : f32
    %937 = vector.broadcast %cst_366 : f32 to vector<6x1xf32>
    %938 = arith.divf %936, %937 : vector<6x1xf32>
    %939 = vector.broadcast %938 : vector<6x1xf32> to vector<6x32xf32>
    %940 = arith.subf %932, %939 : vector<6x32xf32>
    %941 = arith.mulf %940, %940 : vector<6x32xf32>
    %cst_367 = arith.constant dense<0.000000e+00> : vector<6xf32>
    %942 = vector.multi_reduction <add>, %941, %cst_367 [1] : vector<6x32xf32> to vector<6xf32>
    %943 = vector.shape_cast %942 : vector<6xf32> to vector<6x1xf32>
    %cst_368 = arith.constant 3.200000e+01 : f32
    %944 = vector.broadcast %cst_368 : f32 to vector<6x1xf32>
    %945 = arith.divf %943, %944 : vector<6x1xf32>
    %946 = vector.broadcast %938 : vector<6x1xf32> to vector<6x32xf32>
    %947 = arith.subf %932, %946 : vector<6x32xf32>
    %cst_369 = arith.constant 9.99999974E-6 : f32
    %948 = vector.broadcast %cst_369 : f32 to vector<6x1xf32>
    %949 = arith.addf %945, %948 : vector<6x1xf32>
    %950 = math.rsqrt %949 : vector<6x1xf32>
    %951 = vector.broadcast %950 : vector<6x1xf32> to vector<6x32xf32>
    %952 = arith.mulf %947, %951 : vector<6x32xf32>
    %953 = vector.broadcast %933 : vector<1x32xf32> to vector<6x32xf32>
    %954 = arith.mulf %952, %953 : vector<6x32xf32>
    %955 = vector.broadcast %934 : vector<1x32xf32> to vector<6x32xf32>
    %956 = arith.addf %954, %955 : vector<6x32xf32>
    %c1_370 = arith.constant 1 : index
    %c0_371 = arith.constant 0 : index
    %c0_372 = arith.constant 0 : index
    %957 = vector.load %arg30[%c1_370, %c0_371, %c0_372] : memref<2x32x128xbf16, #tpu.memory_space<vmem>>, vector<1x32x128xbf16>
    %958 = vector.shape_cast %957 : vector<1x32x128xbf16> to vector<32x128xbf16>
    %c1_373 = arith.constant 1 : index
    %c0_374 = arith.constant 0 : index
    %c0_375 = arith.constant 0 : index
    %959 = vector.load %arg31[%c1_373, %c0_374, %c0_375] : memref<2x1x128xf32, #tpu.memory_space<vmem>>, vector<1x1x128xf32>
    %960 = vector.shape_cast %959 : vector<1x1x128xf32> to vector<1x128xf32>
    %c1_376 = arith.constant 1 : index
    %c0_377 = arith.constant 0 : index
    %c0_378 = arith.constant 0 : index
    %961 = vector.load %arg32[%c1_376, %c0_377, %c0_378] : memref<2x128x32xbf16, #tpu.memory_space<vmem>>, vector<1x128x32xbf16>
    %962 = vector.shape_cast %961 : vector<1x128x32xbf16> to vector<128x32xbf16>
    %c1_379 = arith.constant 1 : index
    %c0_380 = arith.constant 0 : index
    %c0_381 = arith.constant 0 : index
    %963 = vector.load %arg33[%c1_379, %c0_380, %c0_381] : memref<2x1x32xf32, #tpu.memory_space<vmem>>, vector<1x1x32xf32>
    %964 = vector.shape_cast %963 : vector<1x1x32xf32> to vector<1x32xf32>
    %965 = arith.truncf %956 : vector<6x32xf32> to vector<6x32xbf16>
    %cst_382 = arith.constant dense<0.000000e+00> : vector<6x128xf32>
    %966 = tpu.matmul %965, %958, %cst_382 {dimension_numbers = #tpu.dot_dimension_numbers<[1], [0], [0], [1], [0, 0, 1, 1], [], []>} : vector<6x32xbf16>, vector<32x128xbf16>, vector<6x128xf32> -> vector<6x128xf32>
    %967 = vector.broadcast %960 : vector<1x128xf32> to vector<6x128xf32>
    %968 = arith.addf %966, %967 : vector<6x128xf32>
    %cst_383 = arith.constant 0.000000e+00 : f32
    %969 = vector.broadcast %cst_383 : f32 to vector<6x128xf32>
    %970 = arith.maximumf %968, %969 : vector<6x128xf32>
    %971 = arith.truncf %970 : vector<6x128xf32> to vector<6x128xbf16>
    %cst_384 = arith.constant dense<0.000000e+00> : vector<6x32xf32>
    %972 = tpu.matmul %971, %962, %cst_384 {dimension_numbers = #tpu.dot_dimension_numbers<[1], [0], [0], [1], [0, 0, 1, 1], [], []>} : vector<6x128xbf16>, vector<128x32xbf16>, vector<6x32xf32> -> vector<6x32xf32>
    %973 = vector.broadcast %964 : vector<1x32xf32> to vector<6x32xf32>
    %974 = arith.addf %972, %973 : vector<6x32xf32>
    %975 = arith.addf %956, %974 : vector<6x32xf32>
    %976 = vector.extract_strided_slice %676 {offsets = [4, 0], sizes = [1, 32], strides = [1, 1]} : vector<6x32xf32> to vector<1x32xf32>
    %977 = vector.extract_strided_slice %676 {offsets = [5, 0], sizes = [1, 32], strides = [1, 1]} : vector<6x32xf32> to vector<1x32xf32>
    %cst_385 = arith.constant dense<0.000000e+00> : vector<6xf32>
    %978 = vector.multi_reduction <add>, %975, %cst_385 [1] : vector<6x32xf32> to vector<6xf32>
    %979 = vector.shape_cast %978 : vector<6xf32> to vector<6x1xf32>
    %cst_386 = arith.constant 3.200000e+01 : f32
    %980 = vector.broadcast %cst_386 : f32 to vector<6x1xf32>
    %981 = arith.divf %979, %980 : vector<6x1xf32>
    %982 = vector.broadcast %981 : vector<6x1xf32> to vector<6x32xf32>
    %983 = arith.subf %975, %982 : vector<6x32xf32>
    %984 = arith.mulf %983, %983 : vector<6x32xf32>
    %cst_387 = arith.constant dense<0.000000e+00> : vector<6xf32>
    %985 = vector.multi_reduction <add>, %984, %cst_387 [1] : vector<6x32xf32> to vector<6xf32>
    %986 = vector.shape_cast %985 : vector<6xf32> to vector<6x1xf32>
    %cst_388 = arith.constant 3.200000e+01 : f32
    %987 = vector.broadcast %cst_388 : f32 to vector<6x1xf32>
    %988 = arith.divf %986, %987 : vector<6x1xf32>
    %989 = vector.broadcast %981 : vector<6x1xf32> to vector<6x32xf32>
    %990 = arith.subf %975, %989 : vector<6x32xf32>
    %cst_389 = arith.constant 9.99999974E-6 : f32
    %991 = vector.broadcast %cst_389 : f32 to vector<6x1xf32>
    %992 = arith.addf %988, %991 : vector<6x1xf32>
    %993 = math.rsqrt %992 : vector<6x1xf32>
    %994 = vector.broadcast %993 : vector<6x1xf32> to vector<6x32xf32>
    %995 = arith.mulf %990, %994 : vector<6x32xf32>
    %996 = vector.broadcast %976 : vector<1x32xf32> to vector<6x32xf32>
    %997 = arith.mulf %995, %996 : vector<6x32xf32>
    %998 = vector.broadcast %977 : vector<1x32xf32> to vector<6x32xf32>
    %999 = arith.addf %997, %998 : vector<6x32xf32>
    %1000 = arith.truncf %999 : vector<6x32xf32> to vector<6x32xbf16>
    %c0_390 = arith.constant 0 : index
    %c0_391 = arith.constant 0 : index
    %1001 = vector.load %arg34[%c0_390, %c0_391] : memref<32x50xbf16, #tpu.memory_space<vmem>>, vector<32x50xbf16>
    %cst_392 = arith.constant dense<0.000000e+00> : vector<6x50xf32>
    %1002 = tpu.matmul %1000, %1001, %cst_392 {dimension_numbers = #tpu.dot_dimension_numbers<[1], [0], [0], [1], [0, 0, 1, 1], [], []>} : vector<6x32xbf16>, vector<32x50xbf16>, vector<6x50xf32> -> vector<6x50xf32>
    %c0_393 = arith.constant 0 : index
    %c0_394 = arith.constant 0 : index
    %1003 = vector.load %arg35[%c0_393, %c0_394] : memref<1x50xf32, #tpu.memory_space<vmem>>, vector<1x50xf32>
    %1004 = vector.broadcast %1003 : vector<1x50xf32> to vector<6x50xf32>
    %1005 = arith.addf %1002, %1004 : vector<6x50xf32>
    %cst_395 = arith.constant dense<0xFF800000> : vector<6xf32>
    %1006 = vector.multi_reduction <maximumf>, %1005, %cst_395 [1] : vector<6x50xf32> to vector<6xf32>
    %1007 = vector.shape_cast %1006 : vector<6xf32> to vector<6x1xf32>
    %1008 = vector.broadcast %1007 : vector<6x1xf32> to vector<6x50xf32>
    %1009 = arith.subf %1005, %1008 : vector<6x50xf32>
    %1010 = math.exp %1009 : vector<6x50xf32>
    %cst_396 = arith.constant dense<0.000000e+00> : vector<6xf32>
    %1011 = vector.multi_reduction <add>, %1010, %cst_396 [1] : vector<6x50xf32> to vector<6xf32>
    %1012 = vector.shape_cast %1011 : vector<6xf32> to vector<6x1xf32>
    %1013 = math.log %1012 : vector<6x1xf32>
    %1014 = arith.addf %1013, %1007 : vector<6x1xf32>
    %1015 = vector.broadcast %1014 : vector<6x1xf32> to vector<6x50xf32>
    %1016 = arith.subf %1005, %1015 : vector<6x50xf32>
    %c0_397 = arith.constant 0 : index
    %c0_398 = arith.constant 0 : index
    %c0_399 = arith.constant 0 : index
    %1017 = vector.load %arg36[%c0_397, %c0_398, %c0_399] : memref<1x6x50xf32, #tpu.memory_space<vmem>>, vector<1x6x50xf32>
    %1018 = vector.shape_cast %1017 : vector<1x6x50xf32> to vector<6x50xf32>
    %1019 = vector.shape_cast %1016 : vector<6x50xf32> to vector<1x6x50xf32>
    tpu.vector_store %arg36[%c0_397, %c0_398, %c0_399], %1019 {strides = array<i32>} : memref<1x6x50xf32, #tpu.memory_space<vmem>>, vector<1x6x50xf32>,
    return
  }
  func.func @transform_0(%arg0: i32) -> (i32, i32, i32) {
    %c0_i32 = arith.constant 0 : i32
    %c0_i32_0 = arith.constant 0 : i32
    %c0_i32_1 = arith.constant 0 : i32
    return %arg0, %c0_i32, %c0_i32_0 : i32, i32, i32
  }
  func.func @transform_1(%arg0: i32) -> (i32, i32, i32) {
    %c0_i32 = arith.constant 0 : i32
    %c0_i32_0 = arith.constant 0 : i32
    %c0_i32_1 = arith.constant 0 : i32
    return %arg0, %c0_i32, %c0_i32_0 : i32, i32, i32
  }
  func.func @transform_2(%arg0: i32) -> (i32, i32) {
    %c0_i32 = arith.constant 0 : i32
    %c0_i32_0 = arith.constant 0 : i32
    %c0_i32_1 = arith.constant 0 : i32
    return %c0_i32, %c0_i32_0 : i32, i32
  }
  func.func @transform_3(%arg0: i32) -> (i32, i32) {
    %c0_i32 = arith.constant 0 : i32
    %c0_i32_0 = arith.constant 0 : i32
    %c0_i32_1 = arith.constant 0 : i32
    return %c0_i32, %c0_i32_0 : i32, i32
  }
  func.func @transform_4(%arg0: i32) -> (i32, i32, i32) {
    %c0_i32 = arith.constant 0 : i32
    %c0_i32_0 = arith.constant 0 : i32
    %c0_i32_1 = arith.constant 0 : i32
    %c0_i32_2 = arith.constant 0 : i32
    return %c0_i32, %c0_i32_0, %c0_i32_1 : i32, i32, i32
  }
  func.func @transform_5(%arg0: i32) -> (i32, i32, i32) {
    %c0_i32 = arith.constant 0 : i32
    %c0_i32_0 = arith.constant 0 : i32
    %c0_i32_1 = arith.constant 0 : i32
    %c0_i32_2 = arith.constant 0 : i32
    return %c0_i32, %c0_i32_0, %c0_i32_1 : i32, i32, i32
  }
  func.func @transform_6(%arg0: i32) -> (i32, i32, i32) {
    %c0_i32 = arith.constant 0 : i32
    %c0_i32_0 = arith.constant 0 : i32
    %c0_i32_1 = arith.constant 0 : i32
    %c0_i32_2 = arith.constant 0 : i32
    return %c0_i32, %c0_i32_0, %c0_i32_1 : i32, i32, i32
  }
  func.func @transform_7(%arg0: i32) -> (i32, i32, i32) {
    %c0_i32 = arith.constant 0 : i32
    %c0_i32_0 = arith.constant 0 : i32
    %c0_i32_1 = arith.constant 0 : i32
    %c0_i32_2 = arith.constant 0 : i32
    return %c0_i32, %c0_i32_0, %c0_i32_1 : i32, i32, i32
  }
  func.func @transform_8(%arg0: i32) -> (i32, i32, i32) {
    %c0_i32 = arith.constant 0 : i32
    %c0_i32_0 = arith.constant 0 : i32
    %c0_i32_1 = arith.constant 0 : i32
    %c0_i32_2 = arith.constant 0 : i32
    return %c0_i32, %c0_i32_0, %c0_i32_1 : i32, i32, i32
  }
  func.func @transform_9(%arg0: i32) -> (i32, i32, i32) {
    %c0_i32 = arith.constant 0 : i32
    %c0_i32_0 = arith.constant 0 : i32
    %c0_i32_1 = arith.constant 0 : i32
    %c0_i32_2 = arith.constant 0 : i32
    return %c0_i32, %c0_i32_0, %c0_i32_1 : i32, i32, i32
  }
  func.func @transform_10(%arg0: i32) -> (i32, i32, i32) {
    %c0_i32 = arith.constant 0 : i32
    %c0_i32_0 = arith.constant 0 : i32
    %c0_i32_1 = arith.constant 0 : i32
    %c0_i32_2 = arith.constant 0 : i32
    return %c0_i32, %c0_i32_0, %c0_i32_1 : i32, i32, i32
  }
  func.func @transform_11(%arg0: i32) -> (i32, i32, i32) {
    %c0_i32 = arith.constant 0 : i32
    %c0_i32_0 = arith.constant 0 : i32
    %c0_i32_1 = arith.constant 0 : i32
    %c0_i32_2 = arith.constant 0 : i32
    return %c0_i32, %c0_i32_0, %c0_i32_1 : i32, i32, i32
  }
  func.func @transform_12(%arg0: i32) -> (i32, i32, i32) {
    %c0_i32 = arith.constant 0 : i32
    %c0_i32_0 = arith.constant 0 : i32
    %c0_i32_1 = arith.constant 0 : i32
    %c0_i32_2 = arith.constant 0 : i32
    return %c0_i32, %c0_i32_0, %c0_i32_1 : i32, i32, i32
  }
  func.func @transform_13(%arg0: i32) -> (i32, i32, i32) {
    %c0_i32 = arith.constant 0 : i32
    %c0_i32_0 = arith.constant 0 : i32
    %c0_i32_1 = arith.constant 0 : i32
    %c0_i32_2 = arith.constant 0 : i32
    return %c0_i32, %c0_i32_0, %c0_i32_1 : i32, i32, i32
  }
  func.func @transform_14(%arg0: i32) -> (i32, i32, i32) {
    %c0_i32 = arith.constant 0 : i32
    %c0_i32_0 = arith.constant 0 : i32
    %c0_i32_1 = arith.constant 0 : i32
    %c0_i32_2 = arith.constant 0 : i32
    return %c0_i32, %c0_i32_0, %c0_i32_1 : i32, i32, i32
  }
  func.func @transform_15(%arg0: i32) -> (i32, i32, i32) {
    %c0_i32 = arith.constant 0 : i32
    %c0_i32_0 = arith.constant 0 : i32
    %c0_i32_1 = arith.constant 0 : i32
    %c0_i32_2 = arith.constant 0 : i32
    return %c0_i32, %c0_i32_0, %c0_i32_1 : i32, i32, i32
  }
  func.func @transform_16(%arg0: i32) -> (i32, i32, i32) {
    %c0_i32 = arith.constant 0 : i32
    %c0_i32_0 = arith.constant 0 : i32
    %c0_i32_1 = arith.constant 0 : i32
    %c0_i32_2 = arith.constant 0 : i32
    return %c0_i32, %c0_i32_0, %c0_i32_1 : i32, i32, i32
  }
  func.func @transform_17(%arg0: i32) -> (i32, i32, i32) {
    %c0_i32 = arith.constant 0 : i32
    %c0_i32_0 = arith.constant 0 : i32
    %c0_i32_1 = arith.constant 0 : i32
    %c0_i32_2 = arith.constant 0 : i32
    return %c0_i32, %c0_i32_0, %c0_i32_1 : i32, i32, i32
  }
  func.func @transform_18(%arg0: i32) -> (i32, i32, i32) {
    %c0_i32 = arith.constant 0 : i32
    %c0_i32_0 = arith.constant 0 : i32
    %c0_i32_1 = arith.constant 0 : i32
    %c0_i32_2 = arith.constant 0 : i32
    return %c0_i32, %c0_i32_0, %c0_i32_1 : i32, i32, i32
  }
  func.func @transform_19(%arg0: i32) -> (i32, i32, i32) {
    %c0_i32 = arith.constant 0 : i32
    %c0_i32_0 = arith.constant 0 : i32
    %c0_i32_1 = arith.constant 0 : i32
    %c0_i32_2 = arith.constant 0 : i32
    return %c0_i32, %c0_i32_0, %c0_i32_1 : i32, i32, i32
  }
  func.func @transform_20(%arg0: i32) -> (i32, i32, i32) {
    %c0_i32 = arith.constant 0 : i32
    %c0_i32_0 = arith.constant 0 : i32
    %c0_i32_1 = arith.constant 0 : i32
    %c0_i32_2 = arith.constant 0 : i32
    return %c0_i32, %c0_i32_0, %c0_i32_1 : i32, i32, i32
  }
  func.func @transform_21(%arg0: i32) -> (i32, i32, i32) {
    %c0_i32 = arith.constant 0 : i32
    %c0_i32_0 = arith.constant 0 : i32
    %c0_i32_1 = arith.constant 0 : i32
    %c0_i32_2 = arith.constant 0 : i32
    return %c0_i32, %c0_i32_0, %c0_i32_1 : i32, i32, i32
  }
  func.func @transform_22(%arg0: i32) -> (i32, i32, i32) {
    %c0_i32 = arith.constant 0 : i32
    %c0_i32_0 = arith.constant 0 : i32
    %c0_i32_1 = arith.constant 0 : i32
    %c0_i32_2 = arith.constant 0 : i32
    return %c0_i32, %c0_i32_0, %c0_i32_1 : i32, i32, i32
  }
  func.func @transform_23(%arg0: i32) -> (i32, i32, i32) {
    %c0_i32 = arith.constant 0 : i32
    %c0_i32_0 = arith.constant 0 : i32
    %c0_i32_1 = arith.constant 0 : i32
    %c0_i32_2 = arith.constant 0 : i32
    return %c0_i32, %c0_i32_0, %c0_i32_1 : i32, i32, i32
  }
  func.func @transform_24(%arg0: i32) -> (i32, i32, i32) {
    %c0_i32 = arith.constant 0 : i32
    %c0_i32_0 = arith.constant 0 : i32
    %c0_i32_1 = arith.constant 0 : i32
    %c0_i32_2 = arith.constant 0 : i32
    return %c0_i32, %c0_i32_0, %c0_i32_1 : i32, i32, i32
  }
  func.func @transform_25(%arg0: i32) -> (i32, i32, i32) {
    %c0_i32 = arith.constant 0 : i32
    %c0_i32_0 = arith.constant 0 : i32
    %c0_i32_1 = arith.constant 0 : i32
    %c0_i32_2 = arith.constant 0 : i32
    return %c0_i32, %c0_i32_0, %c0_i32_1 : i32, i32, i32
  }
  func.func @transform_26(%arg0: i32) -> (i32, i32, i32) {
    %c0_i32 = arith.constant 0 : i32
    %c0_i32_0 = arith.constant 0 : i32
    %c0_i32_1 = arith.constant 0 : i32
    %c0_i32_2 = arith.constant 0 : i32
    return %c0_i32, %c0_i32_0, %c0_i32_1 : i32, i32, i32
  }
  func.func @transform_27(%arg0: i32) -> (i32, i32, i32) {
    %c0_i32 = arith.constant 0 : i32
    %c0_i32_0 = arith.constant 0 : i32
    %c0_i32_1 = arith.constant 0 : i32
    %c0_i32_2 = arith.constant 0 : i32
    return %c0_i32, %c0_i32_0, %c0_i32_1 : i32, i32, i32
  }
  func.func @transform_28(%arg0: i32) -> (i32, i32, i32) {
    %c0_i32 = arith.constant 0 : i32
    %c0_i32_0 = arith.constant 0 : i32
    %c0_i32_1 = arith.constant 0 : i32
    %c0_i32_2 = arith.constant 0 : i32
    return %c0_i32, %c0_i32_0, %c0_i32_1 : i32, i32, i32
  }
  func.func @transform_29(%arg0: i32) -> (i32, i32, i32) {
    %c0_i32 = arith.constant 0 : i32
    %c0_i32_0 = arith.constant 0 : i32
    %c0_i32_1 = arith.constant 0 : i32
    %c0_i32_2 = arith.constant 0 : i32
    return %c0_i32, %c0_i32_0, %c0_i32_1 : i32, i32, i32
  }
  func.func @transform_30(%arg0: i32) -> (i32, i32, i32) {
    %c0_i32 = arith.constant 0 : i32
    %c0_i32_0 = arith.constant 0 : i32
    %c0_i32_1 = arith.constant 0 : i32
    %c0_i32_2 = arith.constant 0 : i32
    return %c0_i32, %c0_i32_0, %c0_i32_1 : i32, i32, i32
  }
  func.func @transform_31(%arg0: i32) -> (i32, i32, i32) {
    %c0_i32 = arith.constant 0 : i32
    %c0_i32_0 = arith.constant 0 : i32
    %c0_i32_1 = arith.constant 0 : i32
    %c0_i32_2 = arith.constant 0 : i32
    return %c0_i32, %c0_i32_0, %c0_i32_1 : i32, i32, i32
  }
  func.func @transform_32(%arg0: i32) -> (i32, i32, i32) {
    %c0_i32 = arith.constant 0 : i32
    %c0_i32_0 = arith.constant 0 : i32
    %c0_i32_1 = arith.constant 0 : i32
    %c0_i32_2 = arith.constant 0 : i32
    return %c0_i32, %c0_i32_0, %c0_i32_1 : i32, i32, i32
  }
  func.func @transform_33(%arg0: i32) -> (i32, i32) {
    %c0_i32 = arith.constant 0 : i32
    %c0_i32_0 = arith.constant 0 : i32
    %c0_i32_1 = arith.constant 0 : i32
    return %c0_i32, %c0_i32_0 : i32, i32
  }
  func.func @transform_34(%arg0: i32) -> (i32, i32) {
    %c0_i32 = arith.constant 0 : i32
    %c0_i32_0 = arith.constant 0 : i32
    %c0_i32_1 = arith.constant 0 : i32
    return %c0_i32, %c0_i32_0 : i32, i32
  }
  func.func @transform_35(%arg0: i32) -> (i32, i32, i32) {
    %c0_i32 = arith.constant 0 : i32
    %c0_i32_0 = arith.constant 0 : i32
    %c0_i32_1 = arith.constant 0 : i32
    return %arg0, %c0_i32, %c0_i32_0 : i32, i32, i32
  }
}

</mosaic_0001>

<llo_original>
// kernel: get_forward.1
$region0: #{get_forward.1}
  #allocation0 [shape = 'u32[]', space=smem, size = 0x4, offset = 0x4, fixed_abs, tag = 'smem constant byte address 0x4 - core index']
  #allocation1 [shape = 'u32[144,128]{1,0:T(1,128)}', space=vmem, size = 0x12000, scoped, tag = 'internal scratch']
  %s0 = inlined_call_operand.smem [shape: u32[36], index: -1, kind: input, shape index: {}]
  %s1 = sld [smem:[%s0]]
  %s2 = scalar_lea.smem %s0, 1
  %s3 = sld [smem:[%s2]]
  %s4 = scalar_lea.smem %s0, 2
  %s5 = sld [smem:[%s4]]
  %s6 = scalar_lea.smem %s0, 3
  %s7 = sld [smem:[%s6]]
  %s8 = scalar_lea.smem %s0, 4
  %s9 = sld [smem:[%s8]]
  %s10 = scalar_lea.smem %s0, 5
  %s11 = sld [smem:[%s10]]
  %s12 = scalar_lea.smem %s0, 6
  %s13 = sld [smem:[%s12]]
  %s14 = scalar_lea.smem %s0, 7
  %s15 = sld [smem:[%s14]]
  %s16 = scalar_lea.smem %s0, 8
  %s17 = sld [smem:[%s16]]
  %s18 = scalar_lea.smem %s0, 9
  %s19 = sld [smem:[%s18]]
  %s20 = scalar_lea.smem %s0, 10
  %s21 = sld [smem:[%s20]]
  %s22 = scalar_lea.smem %s0, 11
  %s23 = sld [smem:[%s22]]
  %s24 = scalar_lea.smem %s0, 12
  %s25 = sld [smem:[%s24]]
  %s26 = scalar_lea.smem %s0, 13
  %s27 = sld [smem:[%s26]]
  %s28 = scalar_lea.smem %s0, 14
  %s29 = sld [smem:[%s28]]
  %s30 = scalar_lea.smem %s0, 15
  %s31 = sld [smem:[%s30]]
  %s32 = scalar_lea.smem %s0, 16
  %s33 = sld [smem:[%s32]]
  %s34 = scalar_lea.smem %s0, 17
  %s35 = sld [smem:[%s34]]
  %s36 = scalar_lea.smem %s0, 18
  %s37 = sld [smem:[%s36]]
  %s38 = scalar_lea.smem %s0, 19
  %s39 = sld [smem:[%s38]]
  %s40 = scalar_lea.smem %s0, 20
  %s41 = sld [smem:[%s40]]
  %s42 = scalar_lea.smem %s0, 21
  %s43 = sld [smem:[%s42]]
  %s44 = scalar_lea.smem %s0, 22
  %s45 = sld [smem:[%s44]]
  %s46 = scalar_lea.smem %s0, 23
  %s47 = sld [smem:[%s46]]
  %s48 = scalar_lea.smem %s0, 24
  %s49 = sld [smem:[%s48]]
  %s50 = scalar_lea.smem %s0, 25
  %s51 = sld [smem:[%s50]]
  %s52 = scalar_lea.smem %s0, 26
  %s53 = sld [smem:[%s52]]
  %s54 = scalar_lea.smem %s0, 27
  %s55 = sld [smem:[%s54]]
  %s56 = scalar_lea.smem %s0, 28
  %s57 = sld [smem:[%s56]]
  %s58 = scalar_lea.smem %s0, 29
  %s59 = sld [smem:[%s58]]
  %s60 = scalar_lea.smem %s0, 30
  %s61 = sld [smem:[%s60]]
  %s62 = scalar_lea.smem %s0, 31
  %s63 = sld [smem:[%s62]]
  %s64 = scalar_lea.smem %s0, 32
  %s65 = sld [smem:[%s64]]
  %s66 = scalar_lea.smem %s0, 33
  %s67 = sld [smem:[%s66]]
  %s68 = scalar_lea.smem %s0, 34
  %s69 = sld [smem:[%s68]]
  %s70 = scalar_lea.smem %s0, 35
  %s71 = sld [smem:[%s70]]
  %s72 = sld [smem:[#allocation0]]
  $region173: #{get_forward.1} parent=0
    _
  %s74 = ssub.s32 1, %s72
  %s75 = scalar_select 0, %s74, %s72
  loop: start=0, step=1, limit=4
  $region2: #{get_forward.1} parent=0 // loop_pre_header
    _
  $region3: #{get_forward.1} parent=0 // loop_header
    %s77 = sphi 0, %s81
    %p78 = scmp.ge.s32.totalorder %s77, 4
    %s87 = sphi 0, %s89
    %s90 = sphi 0, %s87
    %s91 = sphi 0, %s90
    %s107 = sphi 0, %s91
    %s113 = sphi 0, %s115
    %s116 = sphi 0, %s113
    %s117 = sphi 0, %s116
    %s133 = sphi 0, %s117
    %s137 = sphi 0, %s137
    %s139 = sphi 0, %s137
    %s140 = sphi 0, %s139
    %s154 = sphi 0, %s140
    %s158 = sphi 0, %s158
    %s160 = sphi 0, %s158
    %s161 = sphi 0, %s160
    %s175 = sphi 0, %s161
    %s179 = sphi 0, %s179
    %s181 = sphi 0, %s179
    %s182 = sphi 0, %s181
    %s196 = sphi 0, %s182
    %s200 = sphi 0, %s200
    %s202 = sphi 0, %s200
    %s203 = sphi 0, %s202
    %s217 = sphi 0, %s203
    %s221 = sphi 0, %s221
    %s223 = sphi 0, %s221
    %s224 = sphi 0, %s223
    %s238 = sphi 0, %s224
    %s242 = sphi 0, %s242
    %s244 = sphi 0, %s242
    %s245 = sphi 0, %s244
    %s259 = sphi 0, %s245
    %s263 = sphi 0, %s263
    %s265 = sphi 0, %s263
    %s266 = sphi 0, %s265
    %s280 = sphi 0, %s266
    %s284 = sphi 0, %s284
    %s286 = sphi 0, %s284
    %s287 = sphi 0, %s286
    %s301 = sphi 0, %s287
    %s305 = sphi 0, %s305
    %s307 = sphi 0, %s305
    %s308 = sphi 0, %s307
    %s322 = sphi 0, %s308
    %s326 = sphi 0, %s326
    %s328 = sphi 0, %s326
    %s329 = sphi 0, %s328
    %s343 = sphi 0, %s329
    %s347 = sphi 0, %s347
    %s349 = sphi 0, %s347
    %s350 = sphi 0, %s349
    %s364 = sphi 0, %s350
    %s368 = sphi 0, %s368
    %s370 = sphi 0, %s368
    %s371 = sphi 0, %s370
    %s385 = sphi 0, %s371
    %s389 = sphi 0, %s389
    %s391 = sphi 0, %s389
    %s392 = sphi 0, %s391
    %s406 = sphi 0, %s392
    %s410 = sphi 0, %s410
    %s412 = sphi 0, %s410
    %s413 = sphi 0, %s412
    %s427 = sphi 0, %s413
    %s431 = sphi 0, %s431
    %s433 = sphi 0, %s431
    %s434 = sphi 0, %s433
    %s448 = sphi 0, %s434
    %s452 = sphi 0, %s452
    %s454 = sphi 0, %s452
    %s455 = sphi 0, %s454
    %s469 = sphi 0, %s455
    %s473 = sphi 0, %s473
    %s475 = sphi 0, %s473
    %s476 = sphi 0, %s475
    %s490 = sphi 0, %s476
    %s494 = sphi 0, %s494
    %s496 = sphi 0, %s494
    %s497 = sphi 0, %s496
    %s511 = sphi 0, %s497
    %s515 = sphi 0, %s515
    %s517 = sphi 0, %s515
    %s518 = sphi 0, %s517
    %s532 = sphi 0, %s518
    %s536 = sphi 0, %s536
    %s538 = sphi 0, %s536
    %s539 = sphi 0, %s538
    %s553 = sphi 0, %s539
    %s557 = sphi 0, %s557
    %s559 = sphi 0, %s557
    %s560 = sphi 0, %s559
    %s574 = sphi 0, %s560
    %s578 = sphi 0, %s578
    %s580 = sphi 0, %s578
    %s581 = sphi 0, %s580
    %s595 = sphi 0, %s581
    %s599 = sphi 0, %s599
    %s601 = sphi 0, %s599
    %s602 = sphi 0, %s601
    %s616 = sphi 0, %s602
    %s620 = sphi 0, %s620
    %s622 = sphi 0, %s620
    %s623 = sphi 0, %s622
    %s637 = sphi 0, %s623
    %s641 = sphi 0, %s641
    %s643 = sphi 0, %s641
    %s644 = sphi 0, %s643
    %s658 = sphi 0, %s644
    %s662 = sphi 0, %s662
    %s664 = sphi 0, %s662
    %s665 = sphi 0, %s664
    %s679 = sphi 0, %s665
    %s683 = sphi 0, %s683
    %s685 = sphi 0, %s683
    %s686 = sphi 0, %s685
    %s700 = sphi 0, %s686
    %s704 = sphi 0, %s704
    %s706 = sphi 0, %s704
    %s707 = sphi 0, %s706
    %s721 = sphi 0, %s707
    %s725 = sphi 0, %s725
    %s727 = sphi 0, %s725
    %s728 = sphi 0, %s727
    %s742 = sphi 0, %s728
    %s746 = sphi 0, %s746
    %s748 = sphi 0, %s746
    %s749 = sphi 0, %s748
    %s763 = sphi 0, %s749
    %s767 = sphi 0, %s767
    %s769 = sphi 0, %s767
    %s770 = sphi 0, %s769
    %s784 = sphi 0, %s770
    %s788 = sphi 0, %s788
    %s790 = sphi 0, %s788
    %s791 = sphi 0, %s790
    %s805 = sphi 0, %s791
    %s809 = sphi 0, %s809
    %s811 = sphi 0, %s809
    %s812 = sphi 0, %s811
    %s826 = sphi 0, %s812
    %s832 = sphi 0, %s834
    %s835 = sphi 0, %s832
    %s836 = sphi 0, %s835
    %s852 = sphi 0, %s836
  $region4: #{get_forward.1} parent=0 // loop_header_branch
    %80 = sbr.rel (%p78) target = $region8
  $region5: #{get_forward.1} parent=0 // loop_body
    %s82 = ssub.s32 %s77, 1
    %s83 = ssub.s32 %s77, 2
    %s84 = sadd.s32 %s77, 1
    %s85 = ssub.s32 %s77, %s84
    %p86 = scmp.eq.s32.totalorder %s85, 0
    %s88 = sadd.s32 %s87, 1
    %s89 = scalar_select %p86, %s87, %s88
    %p92 = pneg %p86
    %p93 = scmp.eq.s32.totalorder %s77, 1
    %p94 = por %p92, %p93
    %p95 = scmp.ne.s32.totalorder %s87, %s90
    %p96 = scmp.eq.s32.totalorder %s77, 0
    %p97 = por %p95, %p96
    %p98 = scmp.ne.s32.totalorder %s87, %s90
    %p99 = scmp.eq.s32.totalorder %s82, 1
    %p100 = por %p98, %p99
    %p101 = scmp.ne.s32.totalorder %s90, %s91
    %p102 = scmp.eq.s32.totalorder %s82, 0
    %p103 = por %p101, %p102
    %p104 = scmp.ne.s32.totalorder %s90, %s91
    %p105 = scmp.eq.s32.totalorder %s83, 1
    %p106 = por %p104, %p105
    %p108 = scmp.ne.s32.totalorder %s91, %s107
    %p109 = scmp.eq.s32.totalorder %s83, 0
    %p110 = por %p108, %p109
    %s111 = ssub.s32 %s77, %s84
    %p112 = scmp.eq.s32.totalorder %s111, 0
    %s114 = sadd.s32 %s113, 1
    %s115 = scalar_select %p112, %s113, %s114
    %p118 = pneg %p112
    %p119 = scmp.eq.s32.totalorder %s77, 1
    %p120 = por %p118, %p119
    %p121 = scmp.ne.s32.totalorder %s113, %s116
    %p122 = scmp.eq.s32.totalorder %s77, 0
    %p123 = por %p121, %p122
    %p124 = scmp.ne.s32.totalorder %s113, %s116
    %p125 = scmp.eq.s32.totalorder %s82, 1
    %p126 = por %p124, %p125
    %p127 = scmp.ne.s32.totalorder %s116, %s117
    %p128 = scmp.eq.s32.totalorder %s82, 0
    %p129 = por %p127, %p128
    %p130 = scmp.ne.s32.totalorder %s116, %s117
    %p131 = scmp.eq.s32.totalorder %s83, 1
    %p132 = por %p130, %p131
    %p134 = scmp.ne.s32.totalorder %s117, %s133
    %p135 = scmp.eq.s32.totalorder %s83, 0
    %p136 = por %p134, %p135
    %s138 = sadd.s32 %s137, 1
    %p141 = scmp.eq.s32.totalorder %s77, 1
    %p142 = scmp.ne.s32.totalorder %s137, %s139
    %p143 = scmp.eq.s32.totalorder %s77, 0
    %p144 = por %p142, %p143
    %p145 = scmp.ne.s32.totalorder %s137, %s139
    %p146 = scmp.eq.s32.totalorder %s82, 1
    %p147 = por %p145, %p146
    %p148 = scmp.ne.s32.totalorder %s139, %s140
    %p149 = scmp.eq.s32.totalorder %s82, 0
    %p150 = por %p148, %p149
    %p151 = scmp.ne.s32.totalorder %s139, %s140
    %p152 = scmp.eq.s32.totalorder %s83, 1
    %p153 = por %p151, %p152
    %p155 = scmp.ne.s32.totalorder %s140, %s154
    %p156 = scmp.eq.s32.totalorder %s83, 0
    %p157 = por %p155, %p156
    %s159 = sadd.s32 %s158, 1
    %p162 = scmp.eq.s32.totalorder %s77, 1
    %p163 = scmp.ne.s32.totalorder %s158, %s160
    %p164 = scmp.eq.s32.totalorder %s77, 0
    %p165 = por %p163, %p164
    %p166 = scmp.ne.s32.totalorder %s158, %s160
    %p167 = scmp.eq.s32.totalorder %s82, 1
    %p168 = por %p166, %p167
    %p169 = scmp.ne.s32.totalorder %s160, %s161
    %p170 = scmp.eq.s32.totalorder %s82, 0
    %p171 = por %p169, %p170
    %p172 = scmp.ne.s32.totalorder %s160, %s161
    %p173 = scmp.eq.s32.totalorder %s83, 1
    %p174 = por %p172, %p173
    %p176 = scmp.ne.s32.totalorder %s161, %s175
    %p177 = scmp.eq.s32.totalorder %s83, 0
    %p178 = por %p176, %p177
    %s180 = sadd.s32 %s179, 1
    %p183 = scmp.eq.s32.totalorder %s77, 1
    %p184 = scmp.ne.s32.totalorder %s179, %s181
    %p185 = scmp.eq.s32.totalorder %s77, 0
    %p186 = por %p184, %p185
    %p187 = scmp.ne.s32.totalorder %s179, %s181
    %p188 = scmp.eq.s32.totalorder %s82, 1
    %p189 = por %p187, %p188
    %p190 = scmp.ne.s32.totalorder %s181, %s182
    %p191 = scmp.eq.s32.totalorder %s82, 0
    %p192 = por %p190, %p191
    %p193 = scmp.ne.s32.totalorder %s181, %s182
    %p194 = scmp.eq.s32.totalorder %s83, 1
    %p195 = por %p193, %p194
    %p197 = scmp.ne.s32.totalorder %s182, %s196
    %p198 = scmp.eq.s32.totalorder %s83, 0
    %p199 = por %p197, %p198
    %s201 = sadd.s32 %s200, 1
    %p204 = scmp.eq.s32.totalorder %s77, 1
    %p205 = scmp.ne.s32.totalorder %s200, %s202
    %p206 = scmp.eq.s32.totalorder %s77, 0
    %p207 = por %p205, %p206
    %p208 = scmp.ne.s32.totalorder %s200, %s202
    %p209 = scmp.eq.s32.totalorder %s82, 1
    %p210 = por %p208, %p209
    %p211 = scmp.ne.s32.totalorder %s202, %s203
    %p212 = scmp.eq.s32.totalorder %s82, 0
    %p213 = por %p211, %p212
    %p214 = scmp.ne.s32.totalorder %s202, %s203
    %p215 = scmp.eq.s32.totalorder %s83, 1
    %p216 = por %p214, %p215
    %p218 = scmp.ne.s32.totalorder %s203, %s217
    %p219 = scmp.eq.s32.totalorder %s83, 0
    %p220 = por %p218, %p219
    %s222 = sadd.s32 %s221, 1
    %p225 = scmp.eq.s32.totalorder %s77, 1
    %p226 = scmp.ne.s32.totalorder %s221, %s223
    %p227 = scmp.eq.s32.totalorder %s77, 0
    %p228 = por %p226, %p227
    %p229 = scmp.ne.s32.totalorder %s221, %s223
    %p230 = scmp.eq.s32.totalorder %s82, 1
    %p231 = por %p229, %p230
    %p232 = scmp.ne.s32.totalorder %s223, %s224
    %p233 = scmp.eq.s32.totalorder %s82, 0
    %p234 = por %p232, %p233
    %p235 = scmp.ne.s32.totalorder %s223, %s224
    %p236 = scmp.eq.s32.totalorder %s83, 1
    %p237 = por %p235, %p236
    %p239 = scmp.ne.s32.totalorder %s224, %s238
    %p240 = scmp.eq.s32.totalorder %s83, 0
    %p241 = por %p239, %p240
    %s243 = sadd.s32 %s242, 1
    %p246 = scmp.eq.s32.totalorder %s77, 1
    %p247 = scmp.ne.s32.totalorder %s242, %s244
    %p248 = scmp.eq.s32.totalorder %s77, 0
    %p249 = por %p247, %p248
    %p250 = scmp.ne.s32.totalorder %s242, %s244
    %p251 = scmp.eq.s32.totalorder %s82, 1
    %p252 = por %p250, %p251
    %p253 = scmp.ne.s32.totalorder %s244, %s245
    %p254 = scmp.eq.s32.totalorder %s82, 0
    %p255 = por %p253, %p254
    %p256 = scmp.ne.s32.totalorder %s244, %s245
    %p257 = scmp.eq.s32.totalorder %s83, 1
    %p258 = por %p256, %p257
    %p260 = scmp.ne.s32.totalorder %s245, %s259
    %p261 = scmp.eq.s32.totalorder %s83, 0
    %p262 = por %p260, %p261
    %s264 = sadd.s32 %s263, 1
    %p267 = scmp.eq.s32.totalorder %s77, 1
    %p268 = scmp.ne.s32.totalorder %s263, %s265
    %p269 = scmp.eq.s32.totalorder %s77, 0
    %p270 = por %p268, %p269
    %p271 = scmp.ne.s32.totalorder %s263, %s265
    %p272 = scmp.eq.s32.totalorder %s82, 1
    %p273 = por %p271, %p272
    %p274 = scmp.ne.s32.totalorder %s265, %s266
    %p275 = scmp.eq.s32.totalorder %s82, 0
    %p276 = por %p274, %p275
    %p277 = scmp.ne.s32.totalorder %s265, %s266
    %p278 = scmp.eq.s32.totalorder %s83, 1
    %p279 = por %p277, %p278
    %p281 = scmp.ne.s32.totalorder %s266, %s280
    %p282 = scmp.eq.s32.totalorder %s83, 0
    %p283 = por %p281, %p282
    %s285 = sadd.s32 %s284, 1
    %p288 = scmp.eq.s32.totalorder %s77, 1
    %p289 = scmp.ne.s32.totalorder %s284, %s286
    %p290 = scmp.eq.s32.totalorder %s77, 0
    %p291 = por %p289, %p290
    %p292 = scmp.ne.s32.totalorder %s284, %s286
    %p293 = scmp.eq.s32.totalorder %s82, 1
    %p294 = por %p292, %p293
    %p295 = scmp.ne.s32.totalorder %s286, %s287
    %p296 = scmp.eq.s32.totalorder %s82, 0
    %p297 = por %p295, %p296
    %p298 = scmp.ne.s32.totalorder %s286, %s287
    %p299 = scmp.eq.s32.totalorder %s83, 1
    %p300 = por %p298, %p299
    %p302 = scmp.ne.s32.totalorder %s287, %s301
    %p303 = scmp.eq.s32.totalorder %s83, 0
    %p304 = por %p302, %p303
    %s306 = sadd.s32 %s305, 1
    %p309 = scmp.eq.s32.totalorder %s77, 1
    %p310 = scmp.ne.s32.totalorder %s305, %s307
    %p311 = scmp.eq.s32.totalorder %s77, 0
    %p312 = por %p310, %p311
    %p313 = scmp.ne.s32.totalorder %s305, %s307
    %p314 = scmp.eq.s32.totalorder %s82, 1
    %p315 = por %p313, %p314
    %p316 = scmp.ne.s32.totalorder %s307, %s308
    %p317 = scmp.eq.s32.totalorder %s82, 0
    %p318 = por %p316, %p317
    %p319 = scmp.ne.s32.totalorder %s307, %s308
    %p320 = scmp.eq.s32.totalorder %s83, 1
    %p321 = por %p319, %p320
    %p323 = scmp.ne.s32.totalorder %s308, %s322
    %p324 = scmp.eq.s32.totalorder %s83, 0
    %p325 = por %p323, %p324
    %s327 = sadd.s32 %s326, 1
    %p330 = scmp.eq.s32.totalorder %s77, 1
    %p331 = scmp.ne.s32.totalorder %s326, %s328
    %p332 = scmp.eq.s32.totalorder %s77, 0
    %p333 = por %p331, %p332
    %p334 = scmp.ne.s32.totalorder %s326, %s328
    %p335 = scmp.eq.s32.totalorder %s82, 1
    %p336 = por %p334, %p335
    %p337 = scmp.ne.s32.totalorder %s328, %s329
    %p338 = scmp.eq.s32.totalorder %s82, 0
    %p339 = por %p337, %p338
    %p340 = scmp.ne.s32.totalorder %s328, %s329
    %p341 = scmp.eq.s32.totalorder %s83, 1
    %p342 = por %p340, %p341
    %p344 = scmp.ne.s32.totalorder %s329, %s343
    %p345 = scmp.eq.s32.totalorder %s83, 0
    %p346 = por %p344, %p345
    %s348 = sadd.s32 %s347, 1
    %p351 = scmp.eq.s32.totalorder %s77, 1
    %p352 = scmp.ne.s32.totalorder %s347, %s349
    %p353 = scmp.eq.s32.totalorder %s77, 0
    %p354 = por %p352, %p353
    %p355 = scmp.ne.s32.totalorder %s347, %s349
    %p356 = scmp.eq.s32.totalorder %s82, 1
    %p357 = por %p355, %p356
    %p358 = scmp.ne.s32.totalorder %s349, %s350
    %p359 = scmp.eq.s32.totalorder %s82, 0
    %p360 = por %p358, %p359
    %p361 = scmp.ne.s32.totalorder %s349, %s350
    %p362 = scmp.eq.s32.totalorder %s83, 1
    %p363 = por %p361, %p362
    %p365 = scmp.ne.s32.totalorder %s350, %s364
    %p366 = scmp.eq.s32.totalorder %s83, 0
    %p367 = por %p365, %p366
    %s369 = sadd.s32 %s368, 1
    %p372 = scmp.eq.s32.totalorder %s77, 1
    %p373 = scmp.ne.s32.totalorder %s368, %s370
    %p374 = scmp.eq.s32.totalorder %s77, 0
    %p375 = por %p373, %p374
    %p376 = scmp.ne.s32.totalorder %s368, %s370
    %p377 = scmp.eq.s32.totalorder %s82, 1
    %p378 = por %p376, %p377
    %p379 = scmp.ne.s32.totalorder %s370, %s371
    %p380 = scmp.eq.s32.totalorder %s82, 0
    %p381 = por %p379, %p380
    %p382 = scmp.ne.s32.totalorder %s370, %s371
    %p383 = scmp.eq.s32.totalorder %s83, 1
    %p384 = por %p382, %p383
    %p386 = scmp.ne.s32.totalorder %s371, %s385
    %p387 = scmp.eq.s32.totalorder %s83, 0
    %p388 = por %p386, %p387
    %s390 = sadd.s32 %s389, 1
    %p393 = scmp.eq.s32.totalorder %s77, 1
    %p394 = scmp.ne.s32.totalorder %s389, %s391
    %p395 = scmp.eq.s32.totalorder %s77, 0
    %p396 = por %p394, %p395
    %p397 = scmp.ne.s32.totalorder %s389, %s391
    %p398 = scmp.eq.s32.totalorder %s82, 1
    %p399 = por %p397, %p398
    %p400 = scmp.ne.s32.totalorder %s391, %s392
    %p401 = scmp.eq.s32.totalorder %s82, 0
    %p402 = por %p400, %p401
    %p403 = scmp.ne.s32.totalorder %s391, %s392
    %p404 = scmp.eq.s32.totalorder %s83, 1
    %p405 = por %p403, %p404
    %p407 = scmp.ne.s32.totalorder %s392, %s406
    %p408 = scmp.eq.s32.totalorder %s83, 0
    %p409 = por %p407, %p408
    %s411 = sadd.s32 %s410, 1
    %p414 = scmp.eq.s32.totalorder %s77, 1
    %p415 = scmp.ne.s32.totalorder %s410, %s412
    %p416 = scmp.eq.s32.totalorder %s77, 0
    %p417 = por %p415, %p416
    %p418 = scmp.ne.s32.totalorder %s410, %s412
    %p419 = scmp.eq.s32.totalorder %s82, 1
    %p420 = por %p418, %p419
    %p421 = scmp.ne.s32.totalorder %s412, %s413
    %p422 = scmp.eq.s32.totalorder %s82, 0
    %p423 = por %p421, %p422
    %p424 = scmp.ne.s32.totalorder %s412, %s413
    %p425 = scmp.eq.s32.totalorder %s83, 1
    %p426 = por %p424, %p425
    %p428 = scmp.ne.s32.totalorder %s413, %s427
    %p429 = scmp.eq.s32.totalorder %s83, 0
    %p430 = por %p428, %p429
    %s432 = sadd.s32 %s431, 1
    %p435 = scmp.eq.s32.totalorder %s77, 1
    %p436 = scmp.ne.s32.totalorder %s431, %s433
    %p437 = scmp.eq.s32.totalorder %s77, 0
    %p438 = por %p436, %p437
    %p439 = scmp.ne.s32.totalorder %s431, %s433
    %p440 = scmp.eq.s32.totalorder %s82, 1
    %p441 = por %p439, %p440
    %p442 = scmp.ne.s32.totalorder %s433, %s434
    %p443 = scmp.eq.s32.totalorder %s82, 0
    %p444 = por %p442, %p443
    %p445 = scmp.ne.s32.totalorder %s433, %s434
    %p446 = scmp.eq.s32.totalorder %s83, 1
    %p447 = por %p445, %p446
    %p449 = scmp.ne.s32.totalorder %s434, %s448
    %p450 = scmp.eq.s32.totalorder %s83, 0
    %p451 = por %p449, %p450
    %s453 = sadd.s32 %s452, 1
    %p456 = scmp.eq.s32.totalorder %s77, 1
    %p457 = scmp.ne.s32.totalorder %s452, %s454
    %p458 = scmp.eq.s32.totalorder %s77, 0
    %p459 = por %p457, %p458
    %p460 = scmp.ne.s32.totalorder %s452, %s454
    %p461 = scmp.eq.s32.totalorder %s82, 1
    %p462 = por %p460, %p461
    %p463 = scmp.ne.s32.totalorder %s454, %s455
    %p464 = scmp.eq.s32.totalorder %s82, 0
    %p465 = por %p463, %p464
    %p466 = scmp.ne.s32.totalorder %s454, %s455
    %p467 = scmp.eq.s32.totalorder %s83, 1
    %p468 = por %p466, %p467
    %p470 = scmp.ne.s32.totalorder %s455, %s469
    %p471 = scmp.eq.s32.totalorder %s83, 0
    %p472 = por %p470, %p471
    %s474 = sadd.s32 %s473, 1
    %p477 = scmp.eq.s32.totalorder %s77, 1
    %p478 = scmp.ne.s32.totalorder %s473, %s475
    %p479 = scmp.eq.s32.totalorder %s77, 0
    %p480 = por %p478, %p479
    %p481 = scmp.ne.s32.totalorder %s473, %s475
    %p482 = scmp.eq.s32.totalorder %s82, 1
    %p483 = por %p481, %p482
    %p484 = scmp.ne.s32.totalorder %s475, %s476
    %p485 = scmp.eq.s32.totalorder %s82, 0
    %p486 = por %p484, %p485
    %p487 = scmp.ne.s32.totalorder %s475, %s476
    %p488 = scmp.eq.s32.totalorder %s83, 1
    %p489 = por %p487, %p488
    %p491 = scmp.ne.s32.totalorder %s476, %s490
    %p492 = scmp.eq.s32.totalorder %s83, 0
    %p493 = por %p491, %p492
    %s495 = sadd.s32 %s494, 1
    %p498 = scmp.eq.s32.totalorder %s77, 1
    %p499 = scmp.ne.s32.totalorder %s494, %s496
    %p500 = scmp.eq.s32.totalorder %s77, 0
    %p501 = por %p499, %p500
    %p502 = scmp.ne.s32.totalorder %s494, %s496
    %p503 = scmp.eq.s32.totalorder %s82, 1
    %p504 = por %p502, %p503
    %p505 = scmp.ne.s32.totalorder %s496, %s497
    %p506 = scmp.eq.s32.totalorder %s82, 0
    %p507 = por %p505, %p506
    %p508 = scmp.ne.s32.totalorder %s496, %s497
    %p509 = scmp.eq.s32.totalorder %s83, 1
    %p510 = por %p508, %p509
    %p512 = scmp.ne.s32.totalorder %s497, %s511
    %p513 = scmp.eq.s32.totalorder %s83, 0
    %p514 = por %p512, %p513
    %s516 = sadd.s32 %s515, 1
    %p519 = scmp.eq.s32.totalorder %s77, 1
    %p520 = scmp.ne.s32.totalorder %s515, %s517
    %p521 = scmp.eq.s32.totalorder %s77, 0
    %p522 = por %p520, %p521
    %p523 = scmp.ne.s32.totalorder %s515, %s517
    %p524 = scmp.eq.s32.totalorder %s82, 1
    %p525 = por %p523, %p524
    %p526 = scmp.ne.s32.totalorder %s517, %s518
    %p527 = scmp.eq.s32.totalorder %s82, 0
    %p528 = por %p526, %p527
    %p529 = scmp.ne.s32.totalorder %s517, %s518
    %p530 = scmp.eq.s32.totalorder %s83, 1
    %p531 = por %p529, %p530
    %p533 = scmp.ne.s32.totalorder %s518, %s532
    %p534 = scmp.eq.s32.totalorder %s83, 0
    %p535 = por %p533, %p534
    %s537 = sadd.s32 %s536, 1
    %p540 = scmp.eq.s32.totalorder %s77, 1
    %p541 = scmp.ne.s32.totalorder %s536, %s538
    %p542 = scmp.eq.s32.totalorder %s77, 0
    %p543 = por %p541, %p542
    %p544 = scmp.ne.s32.totalorder %s536, %s538
    %p545 = scmp.eq.s32.totalorder %s82, 1
    %p546 = por %p544, %p545
    %p547 = scmp.ne.s32.totalorder %s538, %s539
    %p548 = scmp.eq.s32.totalorder %s82, 0
    %p549 = por %p547, %p548
    %p550 = scmp.ne.s32.totalorder %s538, %s539
    %p551 = scmp.eq.s32.totalorder %s83, 1
    %p552 = por %p550, %p551
    %p554 = scmp.ne.s32.totalorder %s539, %s553
    %p555 = scmp.eq.s32.totalorder %s83, 0
    %p556 = por %p554, %p555
    %s558 = sadd.s32 %s557, 1
    %p561 = scmp.eq.s32.totalorder %s77, 1
    %p562 = scmp.ne.s32.totalorder %s557, %s559
    %p563 = scmp.eq.s32.totalorder %s77, 0
    %p564 = por %p562, %p563
    %p565 = scmp.ne.s32.totalorder %s557, %s559
    %p566 = scmp.eq.s32.totalorder %s82, 1
    %p567 = por %p565, %p566
    %p568 = scmp.ne.s32.totalorder %s559, %s560
    %p569 = scmp.eq.s32.totalorder %s82, 0
    %p570 = por %p568, %p569
    %p571 = scmp.ne.s32.totalorder %s559, %s560
    %p572 = scmp.eq.s32.totalorder %s83, 1
    %p573 = por %p571, %p572
    %p575 = scmp.ne.s32.totalorder %s560, %s574
    %p576 = scmp.eq.s32.totalorder %s83, 0
    %p577 = por %p575, %p576
    %s579 = sadd.s32 %s578, 1
    %p582 = scmp.eq.s32.totalorder %s77, 1
    %p583 = scmp.ne.s32.totalorder %s578, %s580
    %p584 = scmp.eq.s32.totalorder %s77, 0
    %p585 = por %p583, %p584
    %p586 = scmp.ne.s32.totalorder %s578, %s580
    %p587 = scmp.eq.s32.totalorder %s82, 1
    %p588 = por %p586, %p587
    %p589 = scmp.ne.s32.totalorder %s580, %s581
    %p590 = scmp.eq.s32.totalorder %s82, 0
    %p591 = por %p589, %p590
    %p592 = scmp.ne.s32.totalorder %s580, %s581
    %p593 = scmp.eq.s32.totalorder %s83, 1
    %p594 = por %p592, %p593
    %p596 = scmp.ne.s32.totalorder %s581, %s595
    %p597 = scmp.eq.s32.totalorder %s83, 0
    %p598 = por %p596, %p597
    %s600 = sadd.s32 %s599, 1
    %p603 = scmp.eq.s32.totalorder %s77, 1
    %p604 = scmp.ne.s32.totalorder %s599, %s601
    %p605 = scmp.eq.s32.totalorder %s77, 0
    %p606 = por %p604, %p605
    %p607 = scmp.ne.s32.totalorder %s599, %s601
    %p608 = scmp.eq.s32.totalorder %s82, 1
    %p609 = por %p607, %p608
    %p610 = scmp.ne.s32.totalorder %s601, %s602
    %p611 = scmp.eq.s32.totalorder %s82, 0
    %p612 = por %p610, %p611
    %p613 = scmp.ne.s32.totalorder %s601, %s602
    %p614 = scmp.eq.s32.totalorder %s83, 1
    %p615 = por %p613, %p614
    %p617 = scmp.ne.s32.totalorder %s602, %s616
    %p618 = scmp.eq.s32.totalorder %s83, 0
    %p619 = por %p617, %p618
    %s621 = sadd.s32 %s620, 1
    %p624 = scmp.eq.s32.totalorder %s77, 1
    %p625 = scmp.ne.s32.totalorder %s620, %s622
    %p626 = scmp.eq.s32.totalorder %s77, 0
    %p627 = por %p625, %p626
    %p628 = scmp.ne.s32.totalorder %s620, %s622
    %p629 = scmp.eq.s32.totalorder %s82, 1
    %p630 = por %p628, %p629
    %p631 = scmp.ne.s32.totalorder %s622, %s623
    %p632 = scmp.eq.s32.totalorder %s82, 0
    %p633 = por %p631, %p632
    %p634 = scmp.ne.s32.totalorder %s622, %s623
    %p635 = scmp.eq.s32.totalorder %s83, 1
    %p636 = por %p634, %p635
    %p638 = scmp.ne.s32.totalorder %s623, %s637
    %p639 = scmp.eq.s32.totalorder %s83, 0
    %p640 = por %p638, %p639
    %s642 = sadd.s32 %s641, 1
    %p645 = scmp.eq.s32.totalorder %s77, 1
    %p646 = scmp.ne.s32.totalorder %s641, %s643
    %p647 = scmp.eq.s32.totalorder %s77, 0
    %p648 = por %p646, %p647
    %p649 = scmp.ne.s32.totalorder %s641, %s643
    %p650 = scmp.eq.s32.totalorder %s82, 1
    %p651 = por %p649, %p650
    %p652 = scmp.ne.s32.totalorder %s643, %s644
    %p653 = scmp.eq.s32.totalorder %s82, 0
    %p654 = por %p652, %p653
    %p655 = scmp.ne.s32.totalorder %s643, %s644
    %p656 = scmp.eq.s32.totalorder %s83, 1
    %p657 = por %p655, %p656
    %p659 = scmp.ne.s32.totalorder %s644, %s658
    %p660 = scmp.eq.s32.totalorder %s83, 0
    %p661 = por %p659, %p660
    %s663 = sadd.s32 %s662, 1
    %p666 = scmp.eq.s32.totalorder %s77, 1
    %p667 = scmp.ne.s32.totalorder %s662, %s664
    %p668 = scmp.eq.s32.totalorder %s77, 0
    %p669 = por %p667, %p668
    %p670 = scmp.ne.s32.totalorder %s662, %s664
    %p671 = scmp.eq.s32.totalorder %s82, 1
    %p672 = por %p670, %p671
    %p673 = scmp.ne.s32.totalorder %s664, %s665
    %p674 = scmp.eq.s32.totalorder %s82, 0
    %p675 = por %p673, %p674
    %p676 = scmp.ne.s32.totalorder %s664, %s665
    %p677 = scmp.eq.s32.totalorder %s83, 1
    %p678 = por %p676, %p677
    %p680 = scmp.ne.s32.totalorder %s665, %s679
    %p681 = scmp.eq.s32.totalorder %s83, 0
    %p682 = por %p680, %p681
    %s684 = sadd.s32 %s683, 1
    %p687 = scmp.eq.s32.totalorder %s77, 1
    %p688 = scmp.ne.s32.totalorder %s683, %s685
    %p689 = scmp.eq.s32.totalorder %s77, 0
    %p690 = por %p688, %p689
    %p691 = scmp.ne.s32.totalorder %s683, %s685
    %p692 = scmp.eq.s32.totalorder %s82, 1
    %p693 = por %p691, %p692
    %p694 = scmp.ne.s32.totalorder %s685, %s686
    %p695 = scmp.eq.s32.totalorder %s82, 0
    %p696 = por %p694, %p695
    %p697 = scmp.ne.s32.totalorder %s685, %s686
    %p698 = scmp.eq.s32.totalorder %s83, 1
    %p699 = por %p697, %p698
    %p701 = scmp.ne.s32.totalorder %s686, %s700
    %p702 = scmp.eq.s32.totalorder %s83, 0
    %p703 = por %p701, %p702
    %s705 = sadd.s32 %s704, 1
    %p708 = scmp.eq.s32.totalorder %s77, 1
    %p709 = scmp.ne.s32.totalorder %s704, %s706
    %p710 = scmp.eq.s32.totalorder %s77, 0
    %p711 = por %p709, %p710
    %p712 = scmp.ne.s32.totalorder %s704, %s706
    %p713 = scmp.eq.s32.totalorder %s82, 1
    %p714 = por %p712, %p713
    %p715 = scmp.ne.s32.totalorder %s706, %s707
    %p716 = scmp.eq.s32.totalorder %s82, 0
    %p717 = por %p715, %p716
    %p718 = scmp.ne.s32.totalorder %s706, %s707
    %p719 = scmp.eq.s32.totalorder %s83, 1
    %p720 = por %p718, %p719
    %p722 = scmp.ne.s32.totalorder %s707, %s721
    %p723 = scmp.eq.s32.totalorder %s83, 0
    %p724 = por %p722, %p723
    %s726 = sadd.s32 %s725, 1
    %p729 = scmp.eq.s32.totalorder %s77, 1
    %p730 = scmp.ne.s32.totalorder %s725, %s727
    %p731 = scmp.eq.s32.totalorder %s77, 0
    %p732 = por %p730, %p731
    %p733 = scmp.ne.s32.totalorder %s725, %s727
    %p734 = scmp.eq.s32.totalorder %s82, 1
    %p735 = por %p733, %p734
    %p736 = scmp.ne.s32.totalorder %s727, %s728
    %p737 = scmp.eq.s32.totalorder %s82, 0
    %p738 = por %p736, %p737
    %p739 = scmp.ne.s32.totalorder %s727, %s728
    %p740 = scmp.eq.s32.totalorder %s83, 1
    %p741 = por %p739, %p740
    %p743 = scmp.ne.s32.totalorder %s728, %s742
    %p744 = scmp.eq.s32.totalorder %s83, 0
    %p745 = por %p743, %p744
    %s747 = sadd.s32 %s746, 1
    %p750 = scmp.eq.s32.totalorder %s77, 1
    %p751 = scmp.ne.s32.totalorder %s746, %s748
    %p752 = scmp.eq.s32.totalorder %s77, 0
    %p753 = por %p751, %p752
    %p754 = scmp.ne.s32.totalorder %s746, %s748
    %p755 = scmp.eq.s32.totalorder %s82, 1
    %p756 = por %p754, %p755
    %p757 = scmp.ne.s32.totalorder %s748, %s749
    %p758 = scmp.eq.s32.totalorder %s82, 0
    %p759 = por %p757, %p758
    %p760 = scmp.ne.s32.totalorder %s748, %s749
    %p761 = scmp.eq.s32.totalorder %s83, 1
    %p762 = por %p760, %p761
    %p764 = scmp.ne.s32.totalorder %s749, %s763
    %p765 = scmp.eq.s32.totalorder %s83, 0
    %p766 = por %p764, %p765
    %s768 = sadd.s32 %s767, 1
    %p771 = scmp.eq.s32.totalorder %s77, 1
    %p772 = scmp.ne.s32.totalorder %s767, %s769
    %p773 = scmp.eq.s32.totalorder %s77, 0
    %p774 = por %p772, %p773
    %p775 = scmp.ne.s32.totalorder %s767, %s769
    %p776 = scmp.eq.s32.totalorder %s82, 1
    %p777 = por %p775, %p776
    %p778 = scmp.ne.s32.totalorder %s769, %s770
    %p779 = scmp.eq.s32.totalorder %s82, 0
    %p780 = por %p778, %p779
    %p781 = scmp.ne.s32.totalorder %s769, %s770
    %p782 = scmp.eq.s32.totalorder %s83, 1
    %p783 = por %p781, %p782
    %p785 = scmp.ne.s32.totalorder %s770, %s784
    %p786 = scmp.eq.s32.totalorder %s83, 0
    %p787 = por %p785, %p786
    %s789 = sadd.s32 %s788, 1
    %p792 = scmp.eq.s32.totalorder %s77, 1
    %p793 = scmp.ne.s32.totalorder %s788, %s790
    %p794 = scmp.eq.s32.totalorder %s77, 0
    %p795 = por %p793, %p794
    %p796 = scmp.ne.s32.totalorder %s788, %s790
    %p797 = scmp.eq.s32.totalorder %s82, 1
    %p798 = por %p796, %p797
    %p799 = scmp.ne.s32.totalorder %s790, %s791
    %p800 = scmp.eq.s32.totalorder %s82, 0
    %p801 = por %p799, %p800
    %p802 = scmp.ne.s32.totalorder %s790, %s791
    %p803 = scmp.eq.s32.totalorder %s83, 1
    %p804 = por %p802, %p803
    %p806 = scmp.ne.s32.totalorder %s791, %s805
    %p807 = scmp.eq.s32.totalorder %s83, 0
    %p808 = por %p806, %p807
    %s810 = sadd.s32 %s809, 1
    %p813 = scmp.eq.s32.totalorder %s77, 1
    %p814 = scmp.ne.s32.totalorder %s809, %s811
    %p815 = scmp.eq.s32.totalorder %s77, 0
    %p816 = por %p814, %p815
    %p817 = scmp.ne.s32.totalorder %s809, %s811
    %p818 = scmp.eq.s32.totalorder %s82, 1
    %p819 = por %p817, %p818
    %p820 = scmp.ne.s32.totalorder %s811, %s812
    %p821 = scmp.eq.s32.totalorder %s82, 0
    %p822 = por %p820, %p821
    %p823 = scmp.ne.s32.totalorder %s811, %s812
    %p824 = scmp.eq.s32.totalorder %s83, 1
    %p825 = por %p823, %p824
    %p827 = scmp.ne.s32.totalorder %s812, %s826
    %p828 = scmp.eq.s32.totalorder %s83, 0
    %p829 = por %p827, %p828
    %s830 = ssub.s32 %s77, %s84
    %p831 = scmp.eq.s32.totalorder %s830, 0
    %s833 = sadd.s32 %s832, 1
    %s834 = scalar_select %p831, %s832, %s833
    %p837 = pneg %p831
    %p838 = scmp.eq.s32.totalorder %s77, 1
    %p839 = por %p837, %p838
    %p840 = scmp.ne.s32.totalorder %s832, %s835
    %p841 = scmp.eq.s32.totalorder %s77, 0
    %p842 = por %p840, %p841
    %p843 = scmp.ne.s32.totalorder %s832, %s835
    %p844 = scmp.eq.s32.totalorder %s82, 1
    %p845 = por %p843, %p844
    %p846 = scmp.ne.s32.totalorder %s835, %s836
    %p847 = scmp.eq.s32.totalorder %s82, 0
    %p848 = por %p846, %p847
    %p849 = scmp.ne.s32.totalorder %s835, %s836
    %p850 = scmp.eq.s32.totalorder %s83, 1
    %p851 = por %p849, %p850
    %p853 = scmp.ne.s32.totalorder %s836, %s852
    %p854 = scmp.eq.s32.totalorder %s83, 0
    %p855 = por %p853, %p854
    %p856 = scmp.le.s32.totalorder 1, %s77
    %p857 = scmp.lt.s32.totalorder %s77, 3
    %p858 = pnand %p856, %p857
    %p859 = pneg %p858
    // Predicated region
    $region9: #{get_forward.1} parent=5 // pred_check
      _
    $region10: #{get_forward.1} parent=5 // pred_check_branch
      %861 = sbr.rel (%p858) target = $region12
    $region11: #{get_forward.1} parent=5 // pred_region
      %s862 = ssub.s32 %s77, 1
      // Predicated region
      $region13: #{get_forward.1} parent=11 // pred_check
        %p863 = pneg %p150
      $region14: #{get_forward.1} parent=11 // pred_check_branch
        %865 = sbr.rel (%p863) target = $region16
      $region15: #{get_forward.1} parent=11 // pred_region
        _
      $region16: #{get_forward.1} parent=11 // pred_fallthru
        _
      // Predicated region
      $region17: #{get_forward.1} parent=11 // pred_check
        %p866 = pneg %p171
      $region18: #{get_forward.1} parent=11 // pred_check_branch
        %868 = sbr.rel (%p866) target = $region20
      $region19: #{get_forward.1} parent=11 // pred_region
        _
      $region20: #{get_forward.1} parent=11 // pred_fallthru
        _
      // Predicated region
      $region21: #{get_forward.1} parent=11 // pred_check
        %p869 = pneg %p192
      $region22: #{get_forward.1} parent=11 // pred_check_branch
        %871 = sbr.rel (%p869) target = $region24
      $region23: #{get_forward.1} parent=11 // pred_region
        _
      $region24: #{get_forward.1} parent=11 // pred_fallthru
        _
      // Predicated region
      $region25: #{get_forward.1} parent=11 // pred_check
        %p872 = pneg %p213
      $region26: #{get_forward.1} parent=11 // pred_check_branch
        %874 = sbr.rel (%p872) target = $region28
      $region27: #{get_forward.1} parent=11 // pred_region
        _
      $region28: #{get_forward.1} parent=11 // pred_fallthru
        _
      // Predicated region
      $region29: #{get_forward.1} parent=11 // pred_check
        %p875 = pneg %p234
      $region30: #{get_forward.1} parent=11 // pred_check_branch
        %877 = sbr.rel (%p875) target = $region32
      $region31: #{get_forward.1} parent=11 // pred_region
        _
      $region32: #{get_forward.1} parent=11 // pred_fallthru
        _
      // Predicated region
      $region33: #{get_forward.1} parent=11 // pred_check
        %p878 = pneg %p255
      $region34: #{get_forward.1} parent=11 // pred_check_branch
        %880 = sbr.rel (%p878) target = $region36
      $region35: #{get_forward.1} parent=11 // pred_region
        _
      $region36: #{get_forward.1} parent=11 // pred_fallthru
        _
      // Predicated region
      $region37: #{get_forward.1} parent=11 // pred_check
        %p881 = pneg %p276
      $region38: #{get_forward.1} parent=11 // pred_check_branch
        %883 = sbr.rel (%p881) target = $region40
      $region39: #{get_forward.1} parent=11 // pred_region
        _
      $region40: #{get_forward.1} parent=11 // pred_fallthru
        _
      // Predicated region
      $region41: #{get_forward.1} parent=11 // pred_check
        %p884 = pneg %p297
      $region42: #{get_forward.1} parent=11 // pred_check_branch
        %886 = sbr.rel (%p884) target = $region44
      $region43: #{get_forward.1} parent=11 // pred_region
        _
      $region44: #{get_forward.1} parent=11 // pred_fallthru
        _
      // Predicated region
      $region45: #{get_forward.1} parent=11 // pred_check
        %p887 = pneg %p318
      $region46: #{get_forward.1} parent=11 // pred_check_branch
        %889 = sbr.rel (%p887) target = $region48
      $region47: #{get_forward.1} parent=11 // pred_region
        _
      $region48: #{get_forward.1} parent=11 // pred_fallthru
        _
      // Predicated region
      $region49: #{get_forward.1} parent=11 // pred_check
        %p890 = pneg %p339
      $region50: #{get_forward.1} parent=11 // pred_check_branch
        %892 = sbr.rel (%p890) target = $region52
      $region51: #{get_forward.1} parent=11 // pred_region
        _
      $region52: #{get_forward.1} parent=11 // pred_fallthru
        _
      // Predicated region
      $region53: #{get_forward.1} parent=11 // pred_check
        %p893 = pneg %p360
      $region54: #{get_forward.1} parent=11 // pred_check_branch
        %895 = sbr.rel (%p893) target = $region56
      $region55: #{get_forward.1} parent=11 // pred_region
        _
      $region56: #{get_forward.1} parent=11 // pred_fallthru
        _
      // Predicated region
      $region57: #{get_forward.1} parent=11 // pred_check
        %p896 = pneg %p381
      $region58: #{get_forward.1} parent=11 // pred_check_branch
        %898 = sbr.rel (%p896) target = $region60
      $region59: #{get_forward.1} parent=11 // pred_region
        _
      $region60: #{get_forward.1} parent=11 // pred_fallthru
        _
      // Predicated region
      $region61: #{get_forward.1} parent=11 // pred_check
        %p899 = pneg %p402
      $region62: #{get_forward.1} parent=11 // pred_check_branch
        %901 = sbr.rel (%p899) target = $region64
      $region63: #{get_forward.1} parent=11 // pred_region
        _
      $region64: #{get_forward.1} parent=11 // pred_fallthru
        _
      // Predicated region
      $region65: #{get_forward.1} parent=11 // pred_check
        %p902 = pneg %p423
      $region66: #{get_forward.1} parent=11 // pred_check_branch
        %904 = sbr.rel (%p902) target = $region68
      $region67: #{get_forward.1} parent=11 // pred_region
        _
      $region68: #{get_forward.1} parent=11 // pred_fallthru
        _
      // Predicated region
      $region69: #{get_forward.1} parent=11 // pred_check
        %p905 = pneg %p444
      $region70: #{get_forward.1} parent=11 // pred_check_branch
        %907 = sbr.rel (%p905) target = $region72
      $region71: #{get_forward.1} parent=11 // pred_region
        _
      $region72: #{get_forward.1} parent=11 // pred_fallthru
        _
      // Predicated region
      $region73: #{get_forward.1} parent=11 // pred_check
        %p908 = pneg %p465
      $region74: #{get_forward.1} parent=11 // pred_check_branch
        %910 = sbr.rel (%p908) target = $region76
      $region75: #{get_forward.1} parent=11 // pred_region
        _
      $region76: #{get_forward.1} parent=11 // pred_fallthru
        _
      // Predicated region
      $region77: #{get_forward.1} parent=11 // pred_check
        %p911 = pneg %p486
      $region78: #{get_forward.1} parent=11 // pred_check_branch
        %913 = sbr.rel (%p911) target = $region80
      $region79: #{get_forward.1} parent=11 // pred_region
        _
      $region80: #{get_forward.1} parent=11 // pred_fallthru
        _
      // Predicated region
      $region81: #{get_forward.1} parent=11 // pred_check
        %p914 = pneg %p507
      $region82: #{get_forward.1} parent=11 // pred_check_branch
        %916 = sbr.rel (%p914) target = $region84
      $region83: #{get_forward.1} parent=11 // pred_region
        _
      $region84: #{get_forward.1} parent=11 // pred_fallthru
        _
      // Predicated region
      $region85: #{get_forward.1} parent=11 // pred_check
        %p917 = pneg %p528
      $region86: #{get_forward.1} parent=11 // pred_check_branch
        %919 = sbr.rel (%p917) target = $region88
      $region87: #{get_forward.1} parent=11 // pred_region
        _
      $region88: #{get_forward.1} parent=11 // pred_fallthru
        _
      // Predicated region
      $region89: #{get_forward.1} parent=11 // pred_check
        %p920 = pneg %p549
      $region90: #{get_forward.1} parent=11 // pred_check_branch
        %922 = sbr.rel (%p920) target = $region92
      $region91: #{get_forward.1} parent=11 // pred_region
        _
      $region92: #{get_forward.1} parent=11 // pred_fallthru
        _
      // Predicated region
      $region93: #{get_forward.1} parent=11 // pred_check
        %p923 = pneg %p570
      $region94: #{get_forward.1} parent=11 // pred_check_branch
        %925 = sbr.rel (%p923) target = $region96
      $region95: #{get_forward.1} parent=11 // pred_region
        _
      $region96: #{get_forward.1} parent=11 // pred_fallthru
        _
      // Predicated region
      $region97: #{get_forward.1} parent=11 // pred_check
        %p926 = pneg %p591
      $region98: #{get_forward.1} parent=11 // pred_check_branch
        %928 = sbr.rel (%p926) target = $region100
      $region99: #{get_forward.1} parent=11 // pred_region
        _
      $region100: #{get_forward.1} parent=11 // pred_fallthru
        _
      // Predicated region
      $region101: #{get_forward.1} parent=11 // pred_check
        %p929 = pneg %p612
      $region102: #{get_forward.1} parent=11 // pred_check_branch
        %931 = sbr.rel (%p929) target = $region104
      $region103: #{get_forward.1} parent=11 // pred_region
        _
      $region104: #{get_forward.1} parent=11 // pred_fallthru
        _
      // Predicated region
      $region105: #{get_forward.1} parent=11 // pred_check
        %p932 = pneg %p633
      $region106: #{get_forward.1} parent=11 // pred_check_branch
        %934 = sbr.rel (%p932) target = $region108
      $region107: #{get_forward.1} parent=11 // pred_region
        _
      $region108: #{get_forward.1} parent=11 // pred_fallthru
        _
      // Predicated region
      $region109: #{get_forward.1} parent=11 // pred_check
        %p935 = pneg %p654
      $region110: #{get_forward.1} parent=11 // pred_check_branch
        %937 = sbr.rel (%p935) target = $region112
      $region111: #{get_forward.1} parent=11 // pred_region
        _
      $region112: #{get_forward.1} parent=11 // pred_fallthru
        _
      // Predicated region
      $region113: #{get_forward.1} parent=11 // pred_check
        %p938 = pneg %p675
      $region114: #{get_forward.1} parent=11 // pred_check_branch
        %940 = sbr.rel (%p938) target = $region116
      $region115: #{get_forward.1} parent=11 // pred_region
        _
      $region116: #{get_forward.1} parent=11 // pred_fallthru
        _
      // Predicated region
      $region117: #{get_forward.1} parent=11 // pred_check
        %p941 = pneg %p696
      $region118: #{get_forward.1} parent=11 // pred_check_branch
        %943 = sbr.rel (%p941) target = $region120
      $region119: #{get_forward.1} parent=11 // pred_region
        _
      $region120: #{get_forward.1} parent=11 // pred_fallthru
        _
      // Predicated region
      $region121: #{get_forward.1} parent=11 // pred_check
        %p944 = pneg %p717
      $region122: #{get_forward.1} parent=11 // pred_check_branch
        %946 = sbr.rel (%p944) target = $region124
      $region123: #{get_forward.1} parent=11 // pred_region
        _
      $region124: #{get_forward.1} parent=11 // pred_fallthru
        _
      // Predicated region
      $region125: #{get_forward.1} parent=11 // pred_check
        %p947 = pneg %p738
      $region126: #{get_forward.1} parent=11 // pred_check_branch
        %949 = sbr.rel (%p947) target = $region128
      $region127: #{get_forward.1} parent=11 // pred_region
        _
      $region128: #{get_forward.1} parent=11 // pred_fallthru
        _
      // Predicated region
      $region129: #{get_forward.1} parent=11 // pred_check
        %p950 = pneg %p759
      $region130: #{get_forward.1} parent=11 // pred_check_branch
        %952 = sbr.rel (%p950) target = $region132
      $region131: #{get_forward.1} parent=11 // pred_region
        _
      $region132: #{get_forward.1} parent=11 // pred_fallthru
        _
      // Predicated region
      $region133: #{get_forward.1} parent=11 // pred_check
        %p953 = pneg %p780
      $region134: #{get_forward.1} parent=11 // pred_check_branch
        %955 = sbr.rel (%p953) target = $region136
      $region135: #{get_forward.1} parent=11 // pred_region
        _
      $region136: #{get_forward.1} parent=11 // pred_fallthru
        _
      // Predicated region
      $region137: #{get_forward.1} parent=11 // pred_check
        %p956 = pneg %p801
      $region138: #{get_forward.1} parent=11 // pred_check_branch
        %958 = sbr.rel (%p956) target = $region140
      $region139: #{get_forward.1} parent=11 // pred_region
        _
      $region140: #{get_forward.1} parent=11 // pred_fallthru
        _
      // Predicated region
      $region141: #{get_forward.1} parent=11 // pred_check
        %p959 = pneg %p822
      $region142: #{get_forward.1} parent=11 // pred_check_branch
        %961 = sbr.rel (%p959) target = $region144
      $region143: #{get_forward.1} parent=11 // pred_region
        _
      $region144: #{get_forward.1} parent=11 // pred_fallthru
        _
    $region12: #{get_forward.1} parent=5 // pred_fallthru
      _
    %p962 = scmp.lt.s32.totalorder %s77, 2
    // Predicated region
    $region145: #{get_forward.1} parent=5 // pred_check
      %p963 = pneg %p962
    $region146: #{get_forward.1} parent=5 // pred_check_branch
      %965 = sbr.rel (%p963) target = $region148
    $region147: #{get_forward.1} parent=5 // pred_region
      // Predicated region
      $region149: #{get_forward.1} parent=147 // pred_check
        %p966 = pneg %p97
      $region150: #{get_forward.1} parent=147 // pred_check_branch
        %968 = sbr.rel (%p966) target = $region152
      $region151: #{get_forward.1} parent=147 // pred_region
        %p969 = scmp.lt.s32.totalorder %s77, 1
        %s970 = scalar_select %p969, %s77, 1
        %s971 = smul.addr %s970, 2
        %s972 = smul.addr %s971, 8
        %s973 = scalar_lea.vmem %s1, %s972
      $region152: #{get_forward.1} parent=147 // pred_fallthru
        _
      // Predicated region
      $region153: #{get_forward.1} parent=147 // pred_check
        %p974 = pneg %p123
      $region154: #{get_forward.1} parent=147 // pred_check_branch
        %976 = sbr.rel (%p974) target = $region156
      $region155: #{get_forward.1} parent=147 // pred_region
        %p977 = scmp.lt.s32.totalorder %s77, 1
        %s978 = scalar_select %p977, %s77, 1
        %s979 = smul.addr %s978, 8
        %s980 = scalar_lea.vmem %s3, %s979
      $region156: #{get_forward.1} parent=147 // pred_fallthru
        _
    $region148: #{get_forward.1} parent=5 // pred_fallthru
      _
    %p981 = scmp.le.s32.totalorder 1, %s77
    %p982 = scmp.lt.s32.totalorder %s77, 3
    %p983 = pnand %p981, %p982
    %p984 = pneg %p983
    // Predicated region
    $region157: #{get_forward.1} parent=5 // pred_check
      _
    $region158: #{get_forward.1} parent=5 // pred_check_branch
      %986 = sbr.rel (%p983) target = $region160
    $region159: #{get_forward.1} parent=5 // pred_region
      %s987 = ssub.s32 %s77, 1
      %p988 = scmp.lt.s32.totalorder %s82, 1
      %s989 = scalar_select %p988, %s82, 1
      %s990 = smul.addr %s989, 2
      %s991 = smul.addr %s990, 8
      %s992 = scalar_lea.vmem %s1, %s991
      %p993 = pneg %p103
      %p994 = pneg %p100
      %p995 = scmp.lt.s32.totalorder %s82, 1
      %s996 = scalar_select %p995, %s82, 1
      %s997 = smul.addr %s996, 8
      %s998 = scalar_lea.vmem %s3, %s997
      %p999 = pneg %p129
      %p1000 = pneg %p126
      %p1001 = pneg %p150
      %p1002 = pneg %p147
      %p1003 = pneg %p171
      %p1004 = pneg %p168
      %p1005 = pneg %p192
      %p1006 = pneg %p189
      %p1007 = pneg %p213
      %p1008 = pneg %p210
      %p1009 = pneg %p234
      %p1010 = pneg %p231
      %p1011 = pneg %p255
      %p1012 = pneg %p252
      %p1013 = pneg %p276
      %p1014 = pneg %p273
      %p1015 = pneg %p297
      %p1016 = pneg %p294
      %p1017 = pneg %p318
      %p1018 = pneg %p315
      %p1019 = pneg %p339
      %p1020 = pneg %p336
      %p1021 = pneg %p360
      %p1022 = pneg %p357
      %p1023 = pneg %p381
      %p1024 = pneg %p378
      %p1025 = pneg %p402
      %p1026 = pneg %p399
      %p1027 = pneg %p423
      %p1028 = pneg %p420
      %p1029 = pneg %p444
      %p1030 = pneg %p441
      %p1031 = pneg %p465
      %p1032 = pneg %p462
      %p1033 = pneg %p486
      %p1034 = pneg %p483
      %p1035 = pneg %p507
      %p1036 = pneg %p504
      %p1037 = pneg %p528
      %p1038 = pneg %p525
      %p1039 = pneg %p549
      %p1040 = pneg %p546
      %p1041 = pneg %p570
      %p1042 = pneg %p567
      %p1043 = pneg %p591
      %p1044 = pneg %p588
      %p1045 = pneg %p612
      %p1046 = pneg %p609
      %p1047 = pneg %p633
      %p1048 = pneg %p630
      %p1049 = pneg %p654
      %p1050 = pneg %p651
      %p1051 = pneg %p675
      %p1052 = pneg %p672
      %p1053 = pneg %p696
      %p1054 = pneg %p693
      %p1055 = pneg %p717
      %p1056 = pneg %p714
      %p1057 = pneg %p738
      %p1058 = pneg %p735
      %p1059 = pneg %p759
      %p1060 = pneg %p756
      %p1061 = pneg %p780
      %p1062 = pneg %p777
      %p1063 = pneg %p801
      %p1064 = pneg %p798
      %p1065 = pneg %p822
      %p1066 = pneg %p819
      %p1067 = pneg %p848
      %p1068 = pneg %p845
      %p1069 = scmp.lt.s32.totalorder %s82, 1
      %s1070 = scalar_select %p1069, %s82, 1
      %s1071 = smul.addr %s1070, 8
      %s1072 = scalar_lea.vmem %s71, %s1071
      %p1073 = scmp.lt.s32.totalorder %s82, 1
      %s1074 = scalar_select %p1073, %s82, 1
      %s1075 = smul.addr %s1074, 2
      %s1076 = smul.addr %s1075, 8
      %s1077 = scalar_lea.vmem %s1, %s1076
      %p1078 = scmp.lt.s32.totalorder %s82, 1
      %s1079 = scalar_select %p1078, %s82, 1
      %s1080 = smul.addr %s1079, 8
      %s1081 = scalar_lea.vmem %s3, %s1080
      %p1082 = scmp.lt.s32.totalorder %s82, 1
      %s1083 = scalar_select %p1082, %s82, 1
      %s1084 = smul.addr %s1083, 8
      %s1085 = scalar_lea.vmem %s71, %s1084
      %v1087 = vld [vmem:[%s1077] sm:$0xff]
      %v1088 = vld [vmem:[%s1077 + $0x8] sm:$0x1]
      %v1089 = vpack.c.bf16 %v1088, %v1087
      %v1090 = vld [vmem:[%s5] sm:$0xf]
      %v1091 = vld [vmem:[%s5 + $0x4] sm:$0xf]
      %v1092 = vld [vmem:[%s5 + $0x8] sm:$0xf]
      %v1093 = vld [vmem:[%s5 + $0xc] sm:$0xf]
      %v1094 = vld [vmem:[%s7] sm:$0x1]
      %v1096 = vlaneseq
      %v1097 = vshrl.u32 %v1096, 7
      %v1098 = vsub.s32 0, %v1097
      %v1099 = vrot.slane %v1094, %v1098
      %v1105 = vunpack.c.l.b16 %v1090
      %v1106 = vunpack.c.l.b16 %v1091
      %v1107 = vunpack.c.l.b16 %v1092
      %v1108 = vunpack.c.l.b16 %v1093
      %v1109 = vpack.c.b16 %v1106, %v1105
      %v1110 = vpack.c.b16 %v1108, %v1107
      %vm1113 = vcmask 261120
      %v1115 = vsel %vm1113, %v1089, 0
      %1117 = vmatprep.subr.bf16.mxu0 0
      %1118 = vmatpush1.bf16.msra.mxu0 0
      %1119 = vmatprep.subr.bf16.mxu0 0
      %1120 = vmatpush1.bf16.msra.mxu0 0
      %1121 = vmatprep.subr.bf16.mxu0 0
      %1122 = vmatpush1.bf16.msra.mxu0 0
      %1123 = vmatprep.subr.bf16.mxu0 0
      %1124 = vmatpush1.bf16.msra.mxu0 0
      %1125 = vmatprep.subr.bf16.mxu0 0
      %1126 = vmatpush1.bf16.msra.mxu0 0
      %1127 = vmatprep.subr.bf16.mxu0 0
      %1128 = vmatpush1.bf16.msra.mxu0 0
      %1129 = vmatprep.subr.bf16.mxu0 0
      %1130 = vmatpush1.bf16.msra.mxu0 %v1110
      %1131 = vmatprep.subr.bf16.mxu0 0
      %1132 = vmatpush1.bf16.msra.mxu0 %v1109
      %1133 = vmatprep.subr.bf16.mxu0 0
      %1134 = vmatpush2.bf16.msra.mxu0 0
      %1135 = vmatprep.subr.bf16.mxu0 0
      %1136 = vmatpush2.bf16.msra.mxu0 0
      %1137 = vmatprep.subr.bf16.mxu0 0
      %1138 = vmatpush2.bf16.msra.mxu0 0
      %1139 = vmatprep.subr.bf16.mxu0 0
      %1140 = vmatpush2.bf16.msra.mxu0 0
      %1141 = vmatprep.subr.bf16.mxu0 0
      %1142 = vmatpush2.bf16.msra.mxu0 0
      %1143 = vmatprep.subr.bf16.mxu0 0
      %1144 = vmatpush2.bf16.msra.mxu0 0
      %1145 = vmatprep.subr.bf16.mxu0 0
      %1146 = vmatpush2.bf16.msra.mxu0 0
      %1147 = vmatprep.subr.bf16.mxu0 0
      %1148 = vmatpush2.bf16.msra.mxu0 0
      %1149 = vmatprep.mubr.bf16.mxu0 0
      %1150 = vmatmul.mubr.bf16.gmra.mxu0 %v1115
      %v1151 = vpop.f32.mrf.mxu0
      %v1152 = vadd.f32 %v1099, %v1151
      %v1153 = vpop.f32.mrf.mxu0
      %v1154 = vpop.f32.mrf.mxu0
      %v1155 = vadd.f32 %v1099, %v1154
      %v1156 = vpop.f32.mrf.mxu0
      %1157 = vdwg.mxu0
      %v1158 = vld [vmem:[%s17] sm:$0xf]
      %v1159 = vpack.c.bf16 %v1155, %v1152
      %v1160 = vld [vmem:[%s9] sm:$0xf]
      %v1161 = vld [vmem:[%s9 + $0x4] sm:$0xf]
      %v1162 = vld [vmem:[%s9 + $0x8] sm:$0xf]
      %v1163 = vld [vmem:[%s9 + $0xc] sm:$0xf]
      %v1164 = vld [vmem:[%s11] sm:$0x1]
      %v1165 = vld [vmem:[%s13] sm:$0xf]
      %v1166 = vld [vmem:[%s13 + $0x4] sm:$0xf]
      %v1167 = vld [vmem:[%s13 + $0x8] sm:$0xf]
      %v1168 = vld [vmem:[%s13 + $0xc] sm:$0xf]
      %v1169 = vld [vmem:[%s15] sm:$0x1]
      %v1171 = vlaneseq
      %v1172 = vshrl.u32 %v1171, 7
      %v1173 = vsub.s32 0, %v1172
      %v1174 = vrot.slane %v1164, %v1173
      %v1180 = vunpack.c.l.b16 %v1160
      %v1181 = vunpack.c.l.b16 %v1161
      %v1182 = vunpack.c.l.b16 %v1162
      %v1183 = vunpack.c.l.b16 %v1163
      %v1184 = vpack.c.b16 %v1181, %v1180
      %v1185 = vpack.c.b16 %v1183, %v1182
      %v1189 = vsel %vm1113, %v1159, 0
      %1191 = vmatprep.subr.bf16.mxu0 0
      %1192 = vmatpush1.bf16.msra.mxu0 0
      %1193 = vmatprep.subr.bf16.mxu0 0
      %1194 = vmatpush1.bf16.msra.mxu0 0
      %1195 = vmatprep.subr.bf16.mxu0 0
      %1196 = vmatpush1.bf16.msra.mxu0 0
      %1197 = vmatprep.subr.bf16.mxu0 0
      %1198 = vmatpush1.bf16.msra.mxu0 0
      %1199 = vmatprep.subr.bf16.mxu0 0
      %1200 = vmatpush1.bf16.msra.mxu0 0
      %1201 = vmatprep.subr.bf16.mxu0 0
      %1202 = vmatpush1.bf16.msra.mxu0 0
      %1203 = vmatprep.subr.bf16.mxu0 0
      %1204 = vmatpush1.bf16.msra.mxu0 %v1185
      %1205 = vmatprep.subr.bf16.mxu0 0
      %1206 = vmatpush1.bf16.msra.mxu0 %v1184
      %1207 = vmatprep.subr.bf16.mxu0 0
      %1208 = vmatpush2.bf16.msra.mxu0 0
      %1209 = vmatprep.subr.bf16.mxu0 0
      %1210 = vmatpush2.bf16.msra.mxu0 0
      %1211 = vmatprep.subr.bf16.mxu0 0
      %1212 = vmatpush2.bf16.msra.mxu0 0
      %1213 = vmatprep.subr.bf16.mxu0 0
      %1214 = vmatpush2.bf16.msra.mxu0 0
      %1215 = vmatprep.subr.bf16.mxu0 0
      %1216 = vmatpush2.bf16.msra.mxu0 0
      %1217 = vmatprep.subr.bf16.mxu0 0
      %1218 = vmatpush2.bf16.msra.mxu0 0
      %1219 = vmatprep.subr.bf16.mxu0 0
      %1220 = vmatpush2.bf16.msra.mxu0 0
      %1221 = vmatprep.subr.bf16.mxu0 0
      %1222 = vmatpush2.bf16.msra.mxu0 0
      %1223 = vmatprep.mubr.bf16.mxu0 0
      %1224 = vmatmul.mubr.bf16.gmra.mxu0 %v1189
      %v1225 = vpop.f32.mrf.mxu0
      %v1226 = vadd.f32 %v1174, %v1225
      %v1227 = vpop.f32.mrf.mxu0
      %v1228 = vpop.f32.mrf.mxu0
      %v1229 = vadd.f32 %v1174, %v1228
      %v1230 = vpop.f32.mrf.mxu0
      %1231 = vdwg.mxu0
      %v1232 = vpack.c.bf16 %v1229, %v1226
      %1234 = vrot.lane.b32.xlu0 %v1232, 96
      %v1235 = vpop.permute.xlu0 %1234
      %vm1236 = vcmask 64512
      %v1238 = vsel %vm1236, %v1232, 0
      %v1241 = vsel %vm1236, %v1235, 0
      %1243 = vmatprep.subr.bf16.mxu0 0
      %1244 = vmatpush1.bf16.xpose.msra.mxu0 0
      %1245 = vmatprep.subr.bf16.mxu0 0
      %1246 = vmatpush1.bf16.xpose.msra.mxu0 0
      %1247 = vmatprep.subr.bf16.mxu0 0
      %1248 = vmatpush1.bf16.xpose.msra.mxu0 0
      %1249 = vmatprep.subr.bf16.mxu0 0
      %1250 = vmatpush1.bf16.xpose.msra.mxu0 0
      %1251 = vmatprep.subr.bf16.mxu0 0
      %1252 = vmatpush1.bf16.xpose.msra.mxu0 0
      %1253 = vmatprep.subr.bf16.mxu0 0
      %1254 = vmatpush1.bf16.xpose.msra.mxu0 0
      %1255 = vmatprep.subr.bf16.mxu0 0
      %1256 = vmatpush1.bf16.xpose.msra.mxu0 0
      %1257 = vmatprep.subr.bf16.mxu0 0
      %1258 = vmatpush1.bf16.xpose.msra.mxu0 %v1241
      %1259 = vmatprep.subr.bf16.mxu0 0
      %1260 = vmatpush2.bf16.xpose.msra.mxu0 0
      %1261 = vmatprep.subr.bf16.mxu0 0
      %1262 = vmatpush2.bf16.xpose.msra.mxu0 0
      %1263 = vmatprep.subr.bf16.mxu0 0
      %1264 = vmatpush2.bf16.xpose.msra.mxu0 0
      %1265 = vmatprep.subr.bf16.mxu0 0
      %1266 = vmatpush2.bf16.xpose.msra.mxu0 0
      %1267 = vmatprep.subr.bf16.mxu0 0
      %1268 = vmatpush2.bf16.xpose.msra.mxu0 0
      %1269 = vmatprep.subr.bf16.mxu0 0
      %1270 = vmatpush2.bf16.xpose.msra.mxu0 0
      %1271 = vmatprep.subr.bf16.mxu0 0
      %1272 = vmatpush2.bf16.xpose.msra.mxu0 0
      %1273 = vmatprep.subr.bf16.mxu0 0
      %1274 = vmatpush2.bf16.xpose.msra.mxu0 0
      %1275 = vmatprep.mubr.bf16.mxu0 0
      %1276 = vmatmul.mubr.bf16.gmra.mxu0 %v1238
      %v1277 = vpop.f32.mrf.mxu0
      %v1278 = vadd.f32 0.0, %v1277
      %v1279 = vpop.f32.mrf.mxu0
      %v1280 = vpop.f32.mrf.mxu0
      %v1281 = vadd.f32 0.0, %v1280
      %v1282 = vpop.f32.mrf.mxu0
      %1283 = vdwg.mxu0
      %v1284 = vmul.f32 %v1278, 0.35355338
      %v1285 = vmul.f32 %v1281, 0.35355338
      %vm1286 = vcmask 72704
      %v1287 = vsel %vm1286, %v1284, -inf
      %1288 = vmax.xlane.f32.xlu0 %v1287
      %v1289 = vpop.xlane.xlu0 %1288
      %vm1290 = vcmask 65536
      %v1291 = vsel %vm1290, %v1285, -inf
      %1292 = vmax.xlane.f32.xlu0 %v1291
      %v1293 = vpop.xlane.xlu0 %1292
      %v1294 = vsub.f32 %v1284, %v1289
      %v1295 = vsub.f32 %v1285, %v1293
      %v1296 = vmul.f32 %v1294, 1.442695
      %v1297 = vpow.pop %v1296
      %v1298 = vmul.f32 %v1295, 1.442695
      %v1299 = vpow.pop %v1298
      %v1300 = vsel %vm1286, %v1297, 0.0
      %1301 = vadd.xlane.f32.xlu0 %v1300
      %v1302 = vpop.xlane.xlu0 %1301
      %v1303 = vsel %vm1290, %v1299, 0.0
      %1304 = vadd.xlane.f32.xlu0 %v1303
      %v1305 = vpop.xlane.xlu0 %1304
      %v1306 = vrcp.pop %v1302
      %v1307 = vrcp.pop %v1305
      %v1308 = vmul.f32 %v1297, %v1306
      %v1309 = vmul.f32 %v1299, %v1307
      %v1310 = vpack.c.bf16 %v1309, %v1308
      %1311 = vrot.lane.b32.xlu0 %v1232, 64
      %v1312 = vpop.permute.xlu0 %1311
      %v1314 = vsel %vm1286, %v1310, 0
      %vm1316 = vcmask 1043456
      %vm1317 = vcmask 1044480
      %v1318 = vsel %vm1316, 4294967295, 65535
      %v1319 = vsel %vm1317, %v1318, 0
      %v1321 = vand.u32 %v1312, %v1319
      %1323 = vmatprep.subr.bf16.mxu0 0
      %1324 = vmatpush1.bf16.msra.mxu0 0
      %1325 = vmatprep.subr.bf16.mxu0 0
      %1326 = vmatpush1.bf16.msra.mxu0 0
      %1327 = vmatprep.subr.bf16.mxu0 0
      %1328 = vmatpush1.bf16.msra.mxu0 0
      %1329 = vmatprep.subr.bf16.mxu0 0
      %1330 = vmatpush1.bf16.msra.mxu0 0
      %1331 = vmatprep.subr.bf16.mxu0 0
      %1332 = vmatpush1.bf16.msra.mxu0 0
      %1333 = vmatprep.subr.bf16.mxu0 0
      %1334 = vmatpush1.bf16.msra.mxu0 0
      %1335 = vmatprep.subr.bf16.mxu0 0
      %1336 = vmatpush1.bf16.msra.mxu0 0
      %1337 = vmatprep.subr.bf16.mxu0 0
      %1338 = vmatpush1.bf16.msra.mxu0 %v1321
      %1339 = vmatprep.subr.bf16.mxu0 0
      %1340 = vmatpush2.bf16.msra.mxu0 0
      %1341 = vmatprep.subr.bf16.mxu0 0
      %1342 = vmatpush2.bf16.msra.mxu0 0
      %1343 = vmatprep.subr.bf16.mxu0 0
      %1344 = vmatpush2.bf16.msra.mxu0 0
      %1345 = vmatprep.subr.bf16.mxu0 0
      %1346 = vmatpush2.bf16.msra.mxu0 0
      %1347 = vmatprep.subr.bf16.mxu0 0
      %1348 = vmatpush2.bf16.msra.mxu0 0
      %1349 = vmatprep.subr.bf16.mxu0 0
      %1350 = vmatpush2.bf16.msra.mxu0 0
      %1351 = vmatprep.subr.bf16.mxu0 0
      %1352 = vmatpush2.bf16.msra.mxu0 0
      %1353 = vmatprep.subr.bf16.mxu0 0
      %1354 = vmatpush2.bf16.msra.mxu0 0
      %1355 = vmatprep.mubr.bf16.mxu0 0
      %1356 = vmatmul.mubr.bf16.gmra.mxu0 %v1314
      %v1357 = vpop.f32.mrf.mxu0
      %v1358 = vadd.f32 0.0, %v1357
      %v1359 = vpop.f32.mrf.mxu0
      %v1360 = vpop.f32.mrf.mxu0
      %v1361 = vadd.f32 0.0, %v1360
      %v1362 = vpop.f32.mrf.mxu0
      %1363 = vdwg.mxu0
      %1364 = vrot.lane.b32.xlu0 %v1232, 120
      %v1365 = vpop.permute.xlu0 %1364
      %1366 = vrot.lane.b32.xlu0 %v1232, 88
      %v1367 = vpop.permute.xlu0 %1366
      %v1369 = vsel %vm1236, %v1365, 0
      %v1372 = vsel %vm1236, %v1367, 0
      %1374 = vmatprep.subr.bf16.mxu0 0
      %1375 = vmatpush1.bf16.xpose.msra.mxu0 0
      %1376 = vmatprep.subr.bf16.mxu0 0
      %1377 = vmatpush1.bf16.xpose.msra.mxu0 0
      %1378 = vmatprep.subr.bf16.mxu0 0
      %1379 = vmatpush1.bf16.xpose.msra.mxu0 0
      %1380 = vmatprep.subr.bf16.mxu0 0
      %1381 = vmatpush1.bf16.xpose.msra.mxu0 0
      %1382 = vmatprep.subr.bf16.mxu0 0
      %1383 = vmatpush1.bf16.xpose.msra.mxu0 0
      %1384 = vmatprep.subr.bf16.mxu0 0
      %1385 = vmatpush1.bf16.xpose.msra.mxu0 0
      %1386 = vmatprep.subr.bf16.mxu0 0
      %1387 = vmatpush1.bf16.xpose.msra.mxu0 0
      %1388 = vmatprep.subr.bf16.mxu0 0
      %1389 = vmatpush1.bf16.xpose.msra.mxu0 %v1372
      %1390 = vmatprep.subr.bf16.mxu0 0
      %1391 = vmatpush2.bf16.xpose.msra.mxu0 0
      %1392 = vmatprep.subr.bf16.mxu0 0
      %1393 = vmatpush2.bf16.xpose.msra.mxu0 0
      %1394 = vmatprep.subr.bf16.mxu0 0
      %1395 = vmatpush2.bf16.xpose.msra.mxu0 0
      %1396 = vmatprep.subr.bf16.mxu0 0
      %1397 = vmatpush2.bf16.xpose.msra.mxu0 0
      %1398 = vmatprep.subr.bf16.mxu0 0
      %1399 = vmatpush2.bf16.xpose.msra.mxu0 0
      %1400 = vmatprep.subr.bf16.mxu0 0
      %1401 = vmatpush2.bf16.xpose.msra.mxu0 0
      %1402 = vmatprep.subr.bf16.mxu0 0
      %1403 = vmatpush2.bf16.xpose.msra.mxu0 0
      %1404 = vmatprep.subr.bf16.mxu0 0
      %1405 = vmatpush2.bf16.xpose.msra.mxu0 0
      %1406 = vmatprep.mubr.bf16.mxu0 0
      %1407 = vmatmul.mubr.bf16.gmra.mxu0 %v1369
      %v1408 = vpop.f32.mrf.mxu0
      %v1409 = vadd.f32 0.0, %v1408
      %v1410 = vpop.f32.mrf.mxu0
      %v1411 = vpop.f32.mrf.mxu0
      %v1412 = vadd.f32 0.0, %v1411
      %v1413 = vpop.f32.mrf.mxu0
      %1414 = vdwg.mxu0
      %v1415 = vmul.f32 %v1409, 0.35355338
      %v1416 = vmul.f32 %v1412, 0.35355338
      %v1417 = vsel %vm1286, %v1415, -inf
      %1418 = vmax.xlane.f32.xlu0 %v1417
      %v1419 = vpop.xlane.xlu0 %1418
      %v1420 = vsel %vm1290, %v1416, -inf
      %1421 = vmax.xlane.f32.xlu0 %v1420
      %v1422 = vpop.xlane.xlu0 %1421
      %v1423 = vsub.f32 %v1415, %v1419
      %v1424 = vsub.f32 %v1416, %v1422
      %v1425 = vmul.f32 %v1423, 1.442695
      %v1426 = vpow.pop %v1425
      %v1427 = vmul.f32 %v1424, 1.442695
      %v1428 = vpow.pop %v1427
      %v1429 = vsel %vm1286, %v1426, 0.0
      %1430 = vadd.xlane.f32.xlu0 %v1429
      %v1431 = vpop.xlane.xlu0 %1430
      %v1432 = vsel %vm1290, %v1428, 0.0
      %1433 = vadd.xlane.f32.xlu0 %v1432
      %v1434 = vpop.xlane.xlu0 %1433
      %v1435 = vrcp.pop %v1431
      %v1436 = vrcp.pop %v1434
      %v1437 = vmul.f32 %v1426, %v1435
      %v1438 = vmul.f32 %v1428, %v1436
      %v1439 = vpack.c.bf16 %v1438, %v1437
      %1440 = vrot.lane.b32.xlu0 %v1232, 56
      %v1441 = vpop.permute.xlu0 %1440
      %v1443 = vsel %vm1286, %v1439, 0
      %v1446 = vand.u32 %v1441, %v1319
      %1448 = vmatprep.subr.bf16.mxu0 0
      %1449 = vmatpush1.bf16.msra.mxu0 0
      %1450 = vmatprep.subr.bf16.mxu0 0
      %1451 = vmatpush1.bf16.msra.mxu0 0
      %1452 = vmatprep.subr.bf16.mxu0 0
      %1453 = vmatpush1.bf16.msra.mxu0 0
      %1454 = vmatprep.subr.bf16.mxu0 0
      %1455 = vmatpush1.bf16.msra.mxu0 0
      %1456 = vmatprep.subr.bf16.mxu0 0
      %1457 = vmatpush1.bf16.msra.mxu0 0
      %1458 = vmatprep.subr.bf16.mxu0 0
      %1459 = vmatpush1.bf16.msra.mxu0 0
      %1460 = vmatprep.subr.bf16.mxu0 0
      %1461 = vmatpush1.bf16.msra.mxu0 0
      %1462 = vmatprep.subr.bf16.mxu0 0
      %1463 = vmatpush1.bf16.msra.mxu0 %v1446
      %1464 = vmatprep.subr.bf16.mxu0 0
      %1465 = vmatpush2.bf16.msra.mxu0 0
      %1466 = vmatprep.subr.bf16.mxu0 0
      %1467 = vmatpush2.bf16.msra.mxu0 0
      %1468 = vmatprep.subr.bf16.mxu0 0
      %1469 = vmatpush2.bf16.msra.mxu0 0
      %1470 = vmatprep.subr.bf16.mxu0 0
      %1471 = vmatpush2.bf16.msra.mxu0 0
      %1472 = vmatprep.subr.bf16.mxu0 0
      %1473 = vmatpush2.bf16.msra.mxu0 0
      %1474 = vmatprep.subr.bf16.mxu0 0
      %1475 = vmatpush2.bf16.msra.mxu0 0
      %1476 = vmatprep.subr.bf16.mxu0 0
      %1477 = vmatpush2.bf16.msra.mxu0 0
      %1478 = vmatprep.subr.bf16.mxu0 0
      %1479 = vmatpush2.bf16.msra.mxu0 0
      %1480 = vmatprep.mubr.bf16.mxu0 0
      %1481 = vmatmul.mubr.bf16.gmra.mxu0 %v1443
      %v1482 = vpop.f32.mrf.mxu0
      %v1483 = vadd.f32 0.0, %v1482
      %v1484 = vpop.f32.mrf.mxu0
      %v1485 = vpop.f32.mrf.mxu0
      %v1486 = vadd.f32 0.0, %v1485
      %v1487 = vpop.f32.mrf.mxu0
      %1488 = vdwg.mxu0
      %1489 = vrot.lane.b32.xlu0 %v1232, 112
      %v1490 = vpop.permute.xlu0 %1489
      %1491 = vrot.lane.b32.xlu0 %v1232, 80
      %v1492 = vpop.permute.xlu0 %1491
      %v1494 = vsel %vm1236, %v1490, 0
      %v1497 = vsel %vm1236, %v1492, 0
      %1499 = vmatprep.subr.bf16.mxu0 0
      %1500 = vmatpush1.bf16.xpose.msra.mxu0 0
      %1501 = vmatprep.subr.bf16.mxu0 0
      %1502 = vmatpush1.bf16.xpose.msra.mxu0 0
      %1503 = vmatprep.subr.bf16.mxu0 0
      %1504 = vmatpush1.bf16.xpose.msra.mxu0 0
      %1505 = vmatprep.subr.bf16.mxu0 0
      %1506 = vmatpush1.bf16.xpose.msra.mxu0 0
      %1507 = vmatprep.subr.bf16.mxu0 0
      %1508 = vmatpush1.bf16.xpose.msra.mxu0 0
      %1509 = vmatprep.subr.bf16.mxu0 0
      %1510 = vmatpush1.bf16.xpose.msra.mxu0 0
      %1511 = vmatprep.subr.bf16.mxu0 0
      %1512 = vmatpush1.bf16.xpose.msra.mxu0 0
      %1513 = vmatprep.subr.bf16.mxu0 0
      %1514 = vmatpush1.bf16.xpose.msra.mxu0 %v1497
      %1515 = vmatprep.subr.bf16.mxu0 0
      %1516 = vmatpush2.bf16.xpose.msra.mxu0 0
      %1517 = vmatprep.subr.bf16.mxu0 0
      %1518 = vmatpush2.bf16.xpose.msra.mxu0 0
      %1519 = vmatprep.subr.bf16.mxu0 0
      %1520 = vmatpush2.bf16.xpose.msra.mxu0 0
      %1521 = vmatprep.subr.bf16.mxu0 0
      %1522 = vmatpush2.bf16.xpose.msra.mxu0 0
      %1523 = vmatprep.subr.bf16.mxu0 0
      %1524 = vmatpush2.bf16.xpose.msra.mxu0 0
      %1525 = vmatprep.subr.bf16.mxu0 0
      %1526 = vmatpush2.bf16.xpose.msra.mxu0 0
      %1527 = vmatprep.subr.bf16.mxu0 0
      %1528 = vmatpush2.bf16.xpose.msra.mxu0 0
      %1529 = vmatprep.subr.bf16.mxu0 0
      %1530 = vmatpush2.bf16.xpose.msra.mxu0 0
      %1531 = vmatprep.mubr.bf16.mxu0 0
      %1532 = vmatmul.mubr.bf16.gmra.mxu0 %v1494
      %v1533 = vpop.f32.mrf.mxu0
      %v1534 = vadd.f32 0.0, %v1533
      %v1535 = vpop.f32.mrf.mxu0
      %v1536 = vpop.f32.mrf.mxu0
      %v1537 = vadd.f32 0.0, %v1536
      %v1538 = vpop.f32.mrf.mxu0
      %1539 = vdwg.mxu0
      %v1540 = vmul.f32 %v1534, 0.35355338
      %v1541 = vmul.f32 %v1537, 0.35355338
      %v1542 = vsel %vm1286, %v1540, -inf
      %1543 = vmax.xlane.f32.xlu0 %v1542
      %v1544 = vpop.xlane.xlu0 %1543
      %v1545 = vsel %vm1290, %v1541, -inf
      %1546 = vmax.xlane.f32.xlu0 %v1545
      %v1547 = vpop.xlane.xlu0 %1546
      %v1548 = vsub.f32 %v1540, %v1544
      %v1549 = vsub.f32 %v1541, %v1547
      %v1550 = vmul.f32 %v1548, 1.442695
      %v1551 = vpow.pop %v1550
      %v1552 = vmul.f32 %v1549, 1.442695
      %v1553 = vpow.pop %v1552
      %v1554 = vsel %vm1286, %v1551, 0.0
      %1555 = vadd.xlane.f32.xlu0 %v1554
      %v1556 = vpop.xlane.xlu0 %1555
      %v1557 = vsel %vm1290, %v1553, 0.0
      %1558 = vadd.xlane.f32.xlu0 %v1557
      %v1559 = vpop.xlane.xlu0 %1558
      %v1560 = vrcp.pop %v1556
      %v1561 = vrcp.pop %v1559
      %v1562 = vmul.f32 %v1551, %v1560
      %v1563 = vmul.f32 %v1553, %v1561
      %v1564 = vpack.c.bf16 %v1563, %v1562
      %1565 = vrot.lane.b32.xlu0 %v1232, 48
      %v1566 = vpop.permute.xlu0 %1565
      %v1568 = vsel %vm1286, %v1564, 0
      %v1571 = vand.u32 %v1566, %v1319
      %1573 = vmatprep.subr.bf16.mxu0 0
      %1574 = vmatpush1.bf16.msra.mxu0 0
      %1575 = vmatprep.subr.bf16.mxu0 0
      %1576 = vmatpush1.bf16.msra.mxu0 0
      %1577 = vmatprep.subr.bf16.mxu0 0
      %1578 = vmatpush1.bf16.msra.mxu0 0
      %1579 = vmatprep.subr.bf16.mxu0 0
      %1580 = vmatpush1.bf16.msra.mxu0 0
      %1581 = vmatprep.subr.bf16.mxu0 0
      %1582 = vmatpush1.bf16.msra.mxu0 0
      %1583 = vmatprep.subr.bf16.mxu0 0
      %1584 = vmatpush1.bf16.msra.mxu0 0
      %1585 = vmatprep.subr.bf16.mxu0 0
      %1586 = vmatpush1.bf16.msra.mxu0 0
      %1587 = vmatprep.subr.bf16.mxu0 0
      %1588 = vmatpush1.bf16.msra.mxu0 %v1571
      %1589 = vmatprep.subr.bf16.mxu0 0
      %1590 = vmatpush2.bf16.msra.mxu0 0
      %1591 = vmatprep.subr.bf16.mxu0 0
      %1592 = vmatpush2.bf16.msra.mxu0 0
      %1593 = vmatprep.subr.bf16.mxu0 0
      %1594 = vmatpush2.bf16.msra.mxu0 0
      %1595 = vmatprep.subr.bf16.mxu0 0
      %1596 = vmatpush2.bf16.msra.mxu0 0
      %1597 = vmatprep.subr.bf16.mxu0 0
      %1598 = vmatpush2.bf16.msra.mxu0 0
      %1599 = vmatprep.subr.bf16.mxu0 0
      %1600 = vmatpush2.bf16.msra.mxu0 0
      %1601 = vmatprep.subr.bf16.mxu0 0
      %1602 = vmatpush2.bf16.msra.mxu0 0
      %1603 = vmatprep.subr.bf16.mxu0 0
      %1604 = vmatpush2.bf16.msra.mxu0 0
      %1605 = vmatprep.mubr.bf16.mxu0 0
      %1606 = vmatmul.mubr.bf16.gmra.mxu0 %v1568
      %v1607 = vpop.f32.mrf.mxu0
      %v1608 = vadd.f32 0.0, %v1607
      %v1609 = vpop.f32.mrf.mxu0
      %v1610 = vpop.f32.mrf.mxu0
      %v1611 = vadd.f32 0.0, %v1610
      %v1612 = vpop.f32.mrf.mxu0
      %1613 = vdwg.mxu0
      %1614 = vrot.lane.b32.xlu0 %v1232, 104
      %v1615 = vpop.permute.xlu0 %1614
      %1616 = vrot.lane.b32.xlu0 %v1232, 72
      %v1617 = vpop.permute.xlu0 %1616
      %v1619 = vsel %vm1236, %v1615, 0
      %v1622 = vsel %vm1236, %v1617, 0
      %1624 = vmatprep.subr.bf16.mxu0 0
      %1625 = vmatpush1.bf16.xpose.msra.mxu0 0
      %1626 = vmatprep.subr.bf16.mxu0 0
      %1627 = vmatpush1.bf16.xpose.msra.mxu0 0
      %1628 = vmatprep.subr.bf16.mxu0 0
      %1629 = vmatpush1.bf16.xpose.msra.mxu0 0
      %1630 = vmatprep.subr.bf16.mxu0 0
      %1631 = vmatpush1.bf16.xpose.msra.mxu0 0
      %1632 = vmatprep.subr.bf16.mxu0 0
      %1633 = vmatpush1.bf16.xpose.msra.mxu0 0
      %1634 = vmatprep.subr.bf16.mxu0 0
      %1635 = vmatpush1.bf16.xpose.msra.mxu0 0
      %1636 = vmatprep.subr.bf16.mxu0 0
      %1637 = vmatpush1.bf16.xpose.msra.mxu0 0
      %1638 = vmatprep.subr.bf16.mxu0 0
      %1639 = vmatpush1.bf16.xpose.msra.mxu0 %v1622
      %1640 = vmatprep.subr.bf16.mxu0 0
      %1641 = vmatpush2.bf16.xpose.msra.mxu0 0
      %1642 = vmatprep.subr.bf16.mxu0 0
      %1643 = vmatpush2.bf16.xpose.msra.mxu0 0
      %1644 = vmatprep.subr.bf16.mxu0 0
      %1645 = vmatpush2.bf16.xpose.msra.mxu0 0
      %1646 = vmatprep.subr.bf16.mxu0 0
      %1647 = vmatpush2.bf16.xpose.msra.mxu0 0
      %1648 = vmatprep.subr.bf16.mxu0 0
      %1649 = vmatpush2.bf16.xpose.msra.mxu0 0
      %1650 = vmatprep.subr.bf16.mxu0 0
      %1651 = vmatpush2.bf16.xpose.msra.mxu0 0
      %1652 = vmatprep.subr.bf16.mxu0 0
      %1653 = vmatpush2.bf16.xpose.msra.mxu0 0
      %1654 = vmatprep.subr.bf16.mxu0 0
      %1655 = vmatpush2.bf16.xpose.msra.mxu0 0
      %1656 = vmatprep.mubr.bf16.mxu0 0
      %1657 = vmatmul.mubr.bf16.gmra.mxu0 %v1619
      %v1658 = vpop.f32.mrf.mxu0
      %v1659 = vadd.f32 0.0, %v1658
      %v1660 = vpop.f32.mrf.mxu0
      %v1661 = vpop.f32.mrf.mxu0
      %v1662 = vadd.f32 0.0, %v1661
      %v1663 = vpop.f32.mrf.mxu0
      %1664 = vdwg.mxu0
      %v1665 = vmul.f32 %v1659, 0.35355338
      %v1666 = vmul.f32 %v1662, 0.35355338
      %v1667 = vsel %vm1286, %v1665, -inf
      %1668 = vmax.xlane.f32.xlu0 %v1667
      %v1669 = vpop.xlane.xlu0 %1668
      %v1670 = vsel %vm1290, %v1666, -inf
      %1671 = vmax.xlane.f32.xlu0 %v1670
      %v1672 = vpop.xlane.xlu0 %1671
      %v1673 = vsub.f32 %v1665, %v1669
      %v1674 = vsub.f32 %v1666, %v1672
      %v1675 = vmul.f32 %v1673, 1.442695
      %v1676 = vpow.pop %v1675
      %v1677 = vmul.f32 %v1674, 1.442695
      %v1678 = vpow.pop %v1677
      %v1679 = vsel %vm1286, %v1676, 0.0
      %1680 = vadd.xlane.f32.xlu0 %v1679
      %v1681 = vpop.xlane.xlu0 %1680
      %v1682 = vsel %vm1290, %v1678, 0.0
      %1683 = vadd.xlane.f32.xlu0 %v1682
      %v1684 = vpop.xlane.xlu0 %1683
      %v1685 = vrcp.pop %v1681
      %v1686 = vrcp.pop %v1684
      %v1687 = vmul.f32 %v1676, %v1685
      %v1688 = vmul.f32 %v1678, %v1686
      %v1689 = vpack.c.bf16 %v1688, %v1687
      %1690 = vrot.lane.b32.xlu0 %v1232, 40
      %v1691 = vpop.permute.xlu0 %1690
      %v1693 = vsel %vm1286, %v1689, 0
      %v1696 = vand.u32 %v1691, %v1319
      %1698 = vmatprep.subr.bf16.mxu0 0
      %1699 = vmatpush1.bf16.msra.mxu0 0
      %1700 = vmatprep.subr.bf16.mxu0 0
      %1701 = vmatpush1.bf16.msra.mxu0 0
      %1702 = vmatprep.subr.bf16.mxu0 0
      %1703 = vmatpush1.bf16.msra.mxu0 0
      %1704 = vmatprep.subr.bf16.mxu0 0
      %1705 = vmatpush1.bf16.msra.mxu0 0
      %1706 = vmatprep.subr.bf16.mxu0 0
      %1707 = vmatpush1.bf16.msra.mxu0 0
      %1708 = vmatprep.subr.bf16.mxu0 0
      %1709 = vmatpush1.bf16.msra.mxu0 0
      %1710 = vmatprep.subr.bf16.mxu0 0
      %1711 = vmatpush1.bf16.msra.mxu0 0
      %1712 = vmatprep.subr.bf16.mxu0 0
      %1713 = vmatpush1.bf16.msra.mxu0 %v1696
      %1714 = vmatprep.subr.bf16.mxu0 0
      %1715 = vmatpush2.bf16.msra.mxu0 0
      %1716 = vmatprep.subr.bf16.mxu0 0
      %1717 = vmatpush2.bf16.msra.mxu0 0
      %1718 = vmatprep.subr.bf16.mxu0 0
      %1719 = vmatpush2.bf16.msra.mxu0 0
      %1720 = vmatprep.subr.bf16.mxu0 0
      %1721 = vmatpush2.bf16.msra.mxu0 0
      %1722 = vmatprep.subr.bf16.mxu0 0
      %1723 = vmatpush2.bf16.msra.mxu0 0
      %1724 = vmatprep.subr.bf16.mxu0 0
      %1725 = vmatpush2.bf16.msra.mxu0 0
      %1726 = vmatprep.subr.bf16.mxu0 0
      %1727 = vmatpush2.bf16.msra.mxu0 0
      %1728 = vmatprep.subr.bf16.mxu0 0
      %1729 = vmatpush2.bf16.msra.mxu0 0
      %1730 = vmatprep.mubr.bf16.mxu0 0
      %1731 = vmatmul.mubr.bf16.gmra.mxu0 %v1693
      %v1732 = vpop.f32.mrf.mxu0
      %v1733 = vadd.f32 0.0, %v1732
      %v1734 = vpop.f32.mrf.mxu0
      %v1735 = vpop.f32.mrf.mxu0
      %v1736 = vadd.f32 0.0, %v1735
      %v1737 = vpop.f32.mrf.mxu0
      %1738 = vdwg.mxu0
      %1741 = vrot.lane.b32.xlu0 %v1483, 8
      %v1742 = vpop.permute.xlu0 %1741
      %1743 = vrot.lane.b32.xlu0 %v1486, 8
      %v1744 = vpop.permute.xlu0 %1743
      %1749 = vrot.lane.b32.xlu0 %v1608, 16
      %v1750 = vpop.permute.xlu0 %1749
      %1751 = vrot.lane.b32.xlu0 %v1611, 16
      %v1752 = vpop.permute.xlu0 %1751
      %1757 = vrot.lane.b32.xlu0 %v1733, 24
      %v1758 = vpop.permute.xlu0 %1757
      %1759 = vrot.lane.b32.xlu0 %v1736, 24
      %v1760 = vpop.permute.xlu0 %1759
      %v1763 = vsel %vm1236, %v1358, %v1742
      %v1764 = vsel %vm1236, %v1361, %v1744
      %vm1765 = vcmask 130048
      %v1766 = vsel %vm1765, %v1763, %v1750
      %v1767 = vsel %vm1765, %v1764, %v1752
      %vm1768 = vcmask 195584
      %v1769 = vsel %vm1768, %v1766, %v1758
      %v1770 = vsel %vm1768, %v1767, %v1760
      %v1771 = vpack.c.bf16 %v1770, %v1769
      %v1773 = vlaneseq
      %v1774 = vshrl.u32 %v1773, 7
      %v1775 = vsub.s32 0, %v1774
      %v1776 = vrot.slane %v1169, %v1775
      %v1782 = vunpack.c.l.b16 %v1165
      %v1783 = vunpack.c.l.b16 %v1166
      %v1784 = vunpack.c.l.b16 %v1167
      %v1785 = vunpack.c.l.b16 %v1168
      %v1786 = vpack.c.b16 %v1783, %v1782
      %v1787 = vpack.c.b16 %v1785, %v1784
      %v1791 = vsel %vm1113, %v1771, 0
      %1793 = vmatprep.subr.bf16.mxu0 0
      %1794 = vmatpush1.bf16.msra.mxu0 0
      %1795 = vmatprep.subr.bf16.mxu0 0
      %1796 = vmatpush1.bf16.msra.mxu0 0
      %1797 = vmatprep.subr.bf16.mxu0 0
      %1798 = vmatpush1.bf16.msra.mxu0 0
      %1799 = vmatprep.subr.bf16.mxu0 0
      %1800 = vmatpush1.bf16.msra.mxu0 0
      %1801 = vmatprep.subr.bf16.mxu0 0
      %1802 = vmatpush1.bf16.msra.mxu0 0
      %1803 = vmatprep.subr.bf16.mxu0 0
      %1804 = vmatpush1.bf16.msra.mxu0 0
      %1805 = vmatprep.subr.bf16.mxu0 0
      %1806 = vmatpush1.bf16.msra.mxu0 %v1787
      %1807 = vmatprep.subr.bf16.mxu0 0
      %1808 = vmatpush1.bf16.msra.mxu0 %v1786
      %1809 = vmatprep.subr.bf16.mxu0 0
      %1810 = vmatpush2.bf16.msra.mxu0 0
      %1811 = vmatprep.subr.bf16.mxu0 0
      %1812 = vmatpush2.bf16.msra.mxu0 0
      %1813 = vmatprep.subr.bf16.mxu0 0
      %1814 = vmatpush2.bf16.msra.mxu0 0
      %1815 = vmatprep.subr.bf16.mxu0 0
      %1816 = vmatpush2.bf16.msra.mxu0 0
      %1817 = vmatprep.subr.bf16.mxu0 0
      %1818 = vmatpush2.bf16.msra.mxu0 0
      %1819 = vmatprep.subr.bf16.mxu0 0
      %1820 = vmatpush2.bf16.msra.mxu0 0
      %1821 = vmatprep.subr.bf16.mxu0 0
      %1822 = vmatpush2.bf16.msra.mxu0 0
      %1823 = vmatprep.subr.bf16.mxu0 0
      %1824 = vmatpush2.bf16.msra.mxu0 0
      %1825 = vmatprep.mubr.bf16.mxu0 0
      %1826 = vmatmul.mubr.bf16.gmra.mxu0 %v1791
      %v1827 = vpop.f32.mrf.mxu0
      %v1828 = vadd.f32 %v1776, %v1827
      %v1829 = vpop.f32.mrf.mxu0
      %v1830 = vpop.f32.mrf.mxu0
      %v1831 = vadd.f32 %v1776, %v1830
      %v1832 = vpop.f32.mrf.mxu0
      %1833 = vdwg.mxu0
      %v1834 = vadd.f32 %v1152, %v1828
      %v1835 = vadd.f32 %v1155, %v1831
      %v1836 = vsel %vm1113, %v1834, 0.0
      %1837 = vadd.xlane.f32.xlu0 %v1836
      %v1838 = vpop.xlane.xlu0 %1837
      %vm1839 = vcmask 253952
      %v1840 = vsel %vm1839, %v1835, 0.0
      %1841 = vadd.xlane.f32.xlu0 %v1840
      %v1842 = vpop.xlane.xlu0 %1841
      %v1843 = vrcp.pop 32.0
      %v1844 = vmul.f32 %v1838, %v1843
      %v1845 = vmul.f32 %v1842, %v1843
      %v1846 = vsub.f32 %v1834, %v1844
      %v1847 = vsub.f32 %v1835, %v1845
      %v1848 = vmul.f32 %v1846, %v1846
      %v1849 = vmul.f32 %v1847, %v1847
      %v1850 = vsel %vm1113, %v1848, 0.0
      %1851 = vadd.xlane.f32.xlu0 %v1850
      %v1852 = vpop.xlane.xlu0 %1851
      %v1853 = vsel %vm1839, %v1849, 0.0
      %1854 = vadd.xlane.f32.xlu0 %v1853
      %v1855 = vpop.xlane.xlu0 %1854
      %v1856 = vmul.f32 %v1852, %v1843
      %v1857 = vmul.f32 %v1855, %v1843
      %v1858 = vadd.f32 %v1856, 1e-05
      %v1859 = vadd.f32 %v1857, 1e-05
      %v1860 = vrsqrt.pop %v1858
      %v1861 = vrsqrt.pop %v1859
      %v1862 = vmul.f32 %v1846, %v1860
      %v1863 = vmul.f32 %v1847, %v1861
      %v1864 = vlaneseq
      %v1865 = vshrl.u32 %v1864, 7
      %v1866 = vsub.s32 0, %v1865
      %v1867 = vrot.slane %v1158, %v1866
      %v1868 = vmul.f32 %v1862, %v1867
      %v1869 = vmul.f32 %v1863, %v1867
      %v1870 = vlaneseq
      %v1871 = vshrl.u32 %v1870, 7
      %v1872 = vsub.s32 1, %v1871
      %v1873 = vrot.slane %v1158, %v1872
      %v1874 = vadd.f32 %v1868, %v1873
      %v1875 = vadd.f32 %v1869, %v1873
      %v1876 = vld [vmem:[%s19] sm:$0xf]
      %v1877 = vld [vmem:[%s19 + $0x4] sm:$0xf]
      %v1878 = vld [vmem:[%s19 + $0x8] sm:$0xf]
      %v1879 = vld [vmem:[%s19 + $0xc] sm:$0xf]
      %v1880 = vld [vmem:[%s21] sm:$0x1]
      %v1881 = vld [vmem:[%s23] sm:$0xf]
      %v1882 = vld [vmem:[%s23 + $0x4] sm:$0xf]
      %v1883 = vld [vmem:[%s23 + $0x8] sm:$0xf]
      %v1884 = vld [vmem:[%s23 + $0xc] sm:$0xf]
      %v1885 = vld [vmem:[%s23 + $0x10] sm:$0xf]
      %v1886 = vld [vmem:[%s23 + $0x14] sm:$0xf]
      %v1887 = vld [vmem:[%s23 + $0x18] sm:$0xf]
      %v1888 = vld [vmem:[%s23 + $0x1c] sm:$0xf]
      %v1889 = vld [vmem:[%s23 + $0x20] sm:$0xf]
      %v1890 = vld [vmem:[%s23 + $0x24] sm:$0xf]
      %v1891 = vld [vmem:[%s23 + $0x28] sm:$0xf]
      %v1892 = vld [vmem:[%s23 + $0x2c] sm:$0xf]
      %v1893 = vld [vmem:[%s23 + $0x30] sm:$0xf]
      %v1894 = vld [vmem:[%s23 + $0x34] sm:$0xf]
      %v1895 = vld [vmem:[%s23 + $0x38] sm:$0xf]
      %v1896 = vld [vmem:[%s23 + $0x3c] sm:$0xf]
      %v1897 = vld [vmem:[%s25] sm:$0x1]
      %v1898 = vpack.c.bf16 %v1875, %v1874
      %v1900 = vlaneseq
      %v1901 = vshrl.u32 %v1900, 7
      %v1902 = vsub.s32 0, %v1901
      %v1903 = vrot.slane %v1880, %v1902
      %v1909 = vunpack.c.l.b16 %v1876
      %v1910 = vunpack.c.l.b16 %v1877
      %v1911 = vunpack.c.l.b16 %v1878
      %v1912 = vunpack.c.l.b16 %v1879
      %v1913 = vpack.c.b16 %v1910, %v1909
      %v1914 = vpack.c.b16 %v1912, %v1911
      %v1918 = vsel %vm1113, %v1898, 0
      %1920 = vmatprep.subr.bf16.mxu0 0
      %1921 = vmatpush1.bf16.msra.mxu0 0
      %1922 = vmatprep.subr.bf16.mxu0 0
      %1923 = vmatpush1.bf16.msra.mxu0 0
      %1924 = vmatprep.subr.bf16.mxu0 0
      %1925 = vmatpush1.bf16.msra.mxu0 0
      %1926 = vmatprep.subr.bf16.mxu0 0
      %1927 = vmatpush1.bf16.msra.mxu0 0
      %1928 = vmatprep.subr.bf16.mxu0 0
      %1929 = vmatpush1.bf16.msra.mxu0 0
      %1930 = vmatprep.subr.bf16.mxu0 0
      %1931 = vmatpush1.bf16.msra.mxu0 0
      %1932 = vmatprep.subr.bf16.mxu0 0
      %1933 = vmatpush1.bf16.msra.mxu0 %v1914
      %1934 = vmatprep.subr.bf16.mxu0 0
      %1935 = vmatpush1.bf16.msra.mxu0 %v1913
      %1936 = vmatprep.subr.bf16.mxu0 0
      %1937 = vmatpush2.bf16.msra.mxu0 0
      %1938 = vmatprep.subr.bf16.mxu0 0
      %1939 = vmatpush2.bf16.msra.mxu0 0
      %1940 = vmatprep.subr.bf16.mxu0 0
      %1941 = vmatpush2.bf16.msra.mxu0 0
      %1942 = vmatprep.subr.bf16.mxu0 0
      %1943 = vmatpush2.bf16.msra.mxu0 0
      %1944 = vmatprep.subr.bf16.mxu0 0
      %1945 = vmatpush2.bf16.msra.mxu0 0
      %1946 = vmatprep.subr.bf16.mxu0 0
      %1947 = vmatpush2.bf16.msra.mxu0 0
      %1948 = vmatprep.subr.bf16.mxu0 0
      %1949 = vmatpush2.bf16.msra.mxu0 0
      %1950 = vmatprep.subr.bf16.mxu0 0
      %1951 = vmatpush2.bf16.msra.mxu0 0
      %1952 = vmatprep.mubr.bf16.mxu0 0
      %1953 = vmatmul.mubr.bf16.gmra.mxu0 %v1918
      %v1954 = vpop.f32.mrf.mxu0
      %v1955 = vadd.f32 %v1903, %v1954
      %v1956 = vpop.f32.mrf.mxu0
      %v1957 = vpop.f32.mrf.mxu0
      %v1958 = vadd.f32 %v1903, %v1957
      %v1959 = vpop.f32.mrf.mxu0
      %1960 = vdwg.mxu0
      %v1961 = vmax.f32 %v1955, 0.0
      %v1962 = vmax.f32 %v1958, 0.0
      %v1963 = vpack.c.bf16 %v1962, %v1961
      %v1965 = vlaneseq
      %v1966 = vshrl.u32 %v1965, 7
      %v1967 = vsub.s32 0, %v1966
      %v1968 = vrot.slane %v1897, %v1967
      %v1986 = vunpack.c.l.b16 %v1881
      %v1987 = vunpack.c.l.b16 %v1882
      %v1988 = vunpack.c.l.b16 %v1883
      %v1989 = vunpack.c.l.b16 %v1884
      %v1990 = vunpack.c.l.b16 %v1885
      %v1991 = vunpack.c.l.b16 %v1886
      %v1992 = vunpack.c.l.b16 %v1887
      %v1993 = vunpack.c.l.b16 %v1888
      %v1994 = vunpack.c.l.b16 %v1889
      %v1995 = vunpack.c.l.b16 %v1890
      %v1996 = vunpack.c.l.b16 %v1891
      %v1997 = vunpack.c.l.b16 %v1892
      %v1998 = vunpack.c.l.b16 %v1893
      %v1999 = vunpack.c.l.b16 %v1894
      %v2000 = vunpack.c.l.b16 %v1895
      %v2001 = vunpack.c.l.b16 %v1896
      %v2002 = vpack.c.b16 %v1987, %v1986
      %v2003 = vpack.c.b16 %v1989, %v1988
      %v2004 = vpack.c.b16 %v1991, %v1990
      %v2005 = vpack.c.b16 %v1993, %v1992
      %v2006 = vpack.c.b16 %v1995, %v1994
      %v2007 = vpack.c.b16 %v1997, %v1996
      %v2008 = vpack.c.b16 %v1999, %v1998
      %v2009 = vpack.c.b16 %v2001, %v2000
      %2018 = vmatprep.subr.bf16.mxu0 0
      %2019 = vmatpush1.bf16.msra.mxu0 %v2009
      %2020 = vmatprep.subr.bf16.mxu0 0
      %2021 = vmatpush1.bf16.msra.mxu0 %v2008
      %2022 = vmatprep.subr.bf16.mxu0 0
      %2023 = vmatpush1.bf16.msra.mxu0 %v2007
      %2024 = vmatprep.subr.bf16.mxu0 0
      %2025 = vmatpush1.bf16.msra.mxu0 %v2006
      %2026 = vmatprep.subr.bf16.mxu0 0
      %2027 = vmatpush1.bf16.msra.mxu0 %v2005
      %2028 = vmatprep.subr.bf16.mxu0 0
      %2029 = vmatpush1.bf16.msra.mxu0 %v2004
      %2030 = vmatprep.subr.bf16.mxu0 0
      %2031 = vmatpush1.bf16.msra.mxu0 %v2003
      %2032 = vmatprep.subr.bf16.mxu0 0
      %2033 = vmatpush1.bf16.msra.mxu0 %v2002
      %2034 = vmatprep.subr.bf16.mxu0 0
      %2035 = vmatpush2.bf16.msra.mxu0 0
      %2036 = vmatprep.subr.bf16.mxu0 0
      %2037 = vmatpush2.bf16.msra.mxu0 0
      %2038 = vmatprep.subr.bf16.mxu0 0
      %2039 = vmatpush2.bf16.msra.mxu0 0
      %2040 = vmatprep.subr.bf16.mxu0 0
      %2041 = vmatpush2.bf16.msra.mxu0 0
      %2042 = vmatprep.subr.bf16.mxu0 0
      %2043 = vmatpush2.bf16.msra.mxu0 0
      %2044 = vmatprep.subr.bf16.mxu0 0
      %2045 = vmatpush2.bf16.msra.mxu0 0
      %2046 = vmatprep.subr.bf16.mxu0 0
      %2047 = vmatpush2.bf16.msra.mxu0 0
      %2048 = vmatprep.subr.bf16.mxu0 0
      %2049 = vmatpush2.bf16.msra.mxu0 0
      %2050 = vmatprep.mubr.bf16.mxu0 0
      %2051 = vmatmul.mubr.bf16.gmra.mxu0 %v1963
      %v2052 = vpop.f32.mrf.mxu0
      %v2053 = vadd.f32 %v1968, %v2052
      %v2054 = vpop.f32.mrf.mxu0
      %v2055 = vpop.f32.mrf.mxu0
      %v2056 = vadd.f32 %v1968, %v2055
      %v2057 = vpop.f32.mrf.mxu0
      %2058 = vdwg.mxu0
      %v2059 = vadd.f32 %v1874, %v2053
      %v2060 = vadd.f32 %v1875, %v2056
      %v2061 = vsel %vm1113, %v2059, 0.0
      %2062 = vadd.xlane.f32.xlu0 %v2061
      %v2063 = vpop.xlane.xlu0 %2062
      %v2064 = vsel %vm1839, %v2060, 0.0
      %2065 = vadd.xlane.f32.xlu0 %v2064
      %v2066 = vpop.xlane.xlu0 %2065
      %v2067 = vmul.f32 %v2063, %v1843
      %v2068 = vmul.f32 %v2066, %v1843
      %v2069 = vsub.f32 %v2059, %v2067
      %v2070 = vsub.f32 %v2060, %v2068
      %v2071 = vmul.f32 %v2069, %v2069
      %v2072 = vmul.f32 %v2070, %v2070
      %v2073 = vsel %vm1113, %v2071, 0.0
      %2074 = vadd.xlane.f32.xlu0 %v2073
      %v2075 = vpop.xlane.xlu0 %2074
      %v2076 = vsel %vm1839, %v2072, 0.0
      %2077 = vadd.xlane.f32.xlu0 %v2076
      %v2078 = vpop.xlane.xlu0 %2077
      %v2079 = vmul.f32 %v2075, %v1843
      %v2080 = vmul.f32 %v2078, %v1843
      %v2081 = vadd.f32 %v2079, 1e-05
      %v2082 = vadd.f32 %v2080, 1e-05
      %v2083 = vrsqrt.pop %v2081
      %v2084 = vrsqrt.pop %v2082
      %v2085 = vmul.f32 %v2069, %v2083
      %v2086 = vmul.f32 %v2070, %v2084
      %v2087 = vlaneseq
      %v2088 = vshrl.u32 %v2087, 7
      %v2089 = vsub.s32 2, %v2088
      %v2090 = vrot.slane %v1158, %v2089
      %v2091 = vmul.f32 %v2085, %v2090
      %v2092 = vmul.f32 %v2086, %v2090
      %v2093 = vlaneseq
      %v2094 = vshrl.u32 %v2093, 7
      %v2095 = vsub.s32 3, %v2094
      %v2096 = vrot.slane %v1158, %v2095
      %v2097 = vadd.f32 %v2091, %v2096
      %v2098 = vadd.f32 %v2092, %v2096
      %s2099 = scalar_lea.vmem %s17, 4
      %v2100 = vld [vmem:[%s2099] sm:$0xf]
      %v2101 = vpack.c.bf16 %v2098, %v2097
      %s2102 = scalar_lea.vmem %s9, 16
      %v2103 = vld [vmem:[%s2102] sm:$0xf]
      %v2104 = vld [vmem:[%s2102 + $0x4] sm:$0xf]
      %v2105 = vld [vmem:[%s2102 + $0x8] sm:$0xf]
      %v2106 = vld [vmem:[%s2102 + $0xc] sm:$0xf]
      %s2107 = scalar_lea.vmem %s11, 1
      %v2108 = vld [vmem:[%s2107] sm:$0x1]
      %s2109 = scalar_lea.vmem %s13, 16
      %v2110 = vld [vmem:[%s2109] sm:$0xf]
      %v2111 = vld [vmem:[%s2109 + $0x4] sm:$0xf]
      %v2112 = vld [vmem:[%s2109 + $0x8] sm:$0xf]
      %v2113 = vld [vmem:[%s2109 + $0xc] sm:$0xf]
      %s2114 = scalar_lea.vmem %s15, 1
      %v2115 = vld [vmem:[%s2114] sm:$0x1]
      %v2117 = vlaneseq
      %v2118 = vshrl.u32 %v2117, 7
      %v2119 = vsub.s32 0, %v2118
      %v2120 = vrot.slane %v2108, %v2119
      %v2126 = vunpack.c.l.b16 %v2103
      %v2127 = vunpack.c.l.b16 %v2104
      %v2128 = vunpack.c.l.b16 %v2105
      %v2129 = vunpack.c.l.b16 %v2106
      %v2130 = vpack.c.b16 %v2127, %v2126
      %v2131 = vpack.c.b16 %v2129, %v2128
      %v2135 = vsel %vm1113, %v2101, 0
      %2137 = vmatprep.subr.bf16.mxu0 0
      %2138 = vmatpush1.bf16.msra.mxu0 0
      %2139 = vmatprep.subr.bf16.mxu0 0
      %2140 = vmatpush1.bf16.msra.mxu0 0
      %2141 = vmatprep.subr.bf16.mxu0 0
      %2142 = vmatpush1.bf16.msra.mxu0 0
      %2143 = vmatprep.subr.bf16.mxu0 0
      %2144 = vmatpush1.bf16.msra.mxu0 0
      %2145 = vmatprep.subr.bf16.mxu0 0
      %2146 = vmatpush1.bf16.msra.mxu0 0
      %2147 = vmatprep.subr.bf16.mxu0 0
      %2148 = vmatpush1.bf16.msra.mxu0 0
      %2149 = vmatprep.subr.bf16.mxu0 0
      %2150 = vmatpush1.bf16.msra.mxu0 %v2131
      %2151 = vmatprep.subr.bf16.mxu0 0
      %2152 = vmatpush1.bf16.msra.mxu0 %v2130
      %2153 = vmatprep.subr.bf16.mxu0 0
      %2154 = vmatpush2.bf16.msra.mxu0 0
      %2155 = vmatprep.subr.bf16.mxu0 0
      %2156 = vmatpush2.bf16.msra.mxu0 0
      %2157 = vmatprep.subr.bf16.mxu0 0
      %2158 = vmatpush2.bf16.msra.mxu0 0
      %2159 = vmatprep.subr.bf16.mxu0 0
      %2160 = vmatpush2.bf16.msra.mxu0 0
      %2161 = vmatprep.subr.bf16.mxu0 0
      %2162 = vmatpush2.bf16.msra.mxu0 0
      %2163 = vmatprep.subr.bf16.mxu0 0
      %2164 = vmatpush2.bf16.msra.mxu0 0
      %2165 = vmatprep.subr.bf16.mxu0 0
      %2166 = vmatpush2.bf16.msra.mxu0 0
      %2167 = vmatprep.subr.bf16.mxu0 0
      %2168 = vmatpush2.bf16.msra.mxu0 0
      %2169 = vmatprep.mubr.bf16.mxu0 0
      %2170 = vmatmul.mubr.bf16.gmra.mxu0 %v2135
      %v2171 = vpop.f32.mrf.mxu0
      %v2172 = vadd.f32 %v2120, %v2171
      %v2173 = vpop.f32.mrf.mxu0
      %v2174 = vpop.f32.mrf.mxu0
      %v2175 = vadd.f32 %v2120, %v2174
      %v2176 = vpop.f32.mrf.mxu0
      %2177 = vdwg.mxu0
      %v2178 = vpack.c.bf16 %v2175, %v2172
      %2180 = vrot.lane.b32.xlu0 %v2178, 96
      %v2181 = vpop.permute.xlu0 %2180
      %v2183 = vsel %vm1236, %v2178, 0
      %v2186 = vsel %vm1236, %v2181, 0
      %2188 = vmatprep.subr.bf16.mxu0 0
      %2189 = vmatpush1.bf16.xpose.msra.mxu0 0
      %2190 = vmatprep.subr.bf16.mxu0 0
      %2191 = vmatpush1.bf16.xpose.msra.mxu0 0
      %2192 = vmatprep.subr.bf16.mxu0 0
      %2193 = vmatpush1.bf16.xpose.msra.mxu0 0
      %2194 = vmatprep.subr.bf16.mxu0 0
      %2195 = vmatpush1.bf16.xpose.msra.mxu0 0
      %2196 = vmatprep.subr.bf16.mxu0 0
      %2197 = vmatpush1.bf16.xpose.msra.mxu0 0
      %2198 = vmatprep.subr.bf16.mxu0 0
      %2199 = vmatpush1.bf16.xpose.msra.mxu0 0
      %2200 = vmatprep.subr.bf16.mxu0 0
      %2201 = vmatpush1.bf16.xpose.msra.mxu0 0
      %2202 = vmatprep.subr.bf16.mxu0 0
      %2203 = vmatpush1.bf16.xpose.msra.mxu0 %v2186
      %2204 = vmatprep.subr.bf16.mxu0 0
      %2205 = vmatpush2.bf16.xpose.msra.mxu0 0
      %2206 = vmatprep.subr.bf16.mxu0 0
      %2207 = vmatpush2.bf16.xpose.msra.mxu0 0
      %2208 = vmatprep.subr.bf16.mxu0 0
      %2209 = vmatpush2.bf16.xpose.msra.mxu0 0
      %2210 = vmatprep.subr.bf16.mxu0 0
      %2211 = vmatpush2.bf16.xpose.msra.mxu0 0
      %2212 = vmatprep.subr.bf16.mxu0 0
      %2213 = vmatpush2.bf16.xpose.msra.mxu0 0
      %2214 = vmatprep.subr.bf16.mxu0 0
      %2215 = vmatpush2.bf16.xpose.msra.mxu0 0
      %2216 = vmatprep.subr.bf16.mxu0 0
      %2217 = vmatpush2.bf16.xpose.msra.mxu0 0
      %2218 = vmatprep.subr.bf16.mxu0 0
      %2219 = vmatpush2.bf16.xpose.msra.mxu0 0
      %2220 = vmatprep.mubr.bf16.mxu0 0
      %2221 = vmatmul.mubr.bf16.gmra.mxu0 %v2183
      %v2222 = vpop.f32.mrf.mxu0
      %v2223 = vadd.f32 0.0, %v2222
      %v2224 = vpop.f32.mrf.mxu0
      %v2225 = vpop.f32.mrf.mxu0
      %v2226 = vadd.f32 0.0, %v2225
      %v2227 = vpop.f32.mrf.mxu0
      %2228 = vdwg.mxu0
      %v2229 = vmul.f32 %v2223, 0.35355338
      %v2230 = vmul.f32 %v2226, 0.35355338
      %v2231 = vsel %vm1286, %v2229, -inf
      %2232 = vmax.xlane.f32.xlu0 %v2231
      %v2233 = vpop.xlane.xlu0 %2232
      %v2234 = vsel %vm1290, %v2230, -inf
      %2235 = vmax.xlane.f32.xlu0 %v2234
      %v2236 = vpop.xlane.xlu0 %2235
      %v2237 = vsub.f32 %v2229, %v2233
      %v2238 = vsub.f32 %v2230, %v2236
      %v2239 = vmul.f32 %v2237, 1.442695
      %v2240 = vpow.pop %v2239
      %v2241 = vmul.f32 %v2238, 1.442695
      %v2242 = vpow.pop %v2241
      %v2243 = vsel %vm1286, %v2240, 0.0
      %2244 = vadd.xlane.f32.xlu0 %v2243
      %v2245 = vpop.xlane.xlu0 %2244
      %v2246 = vsel %vm1290, %v2242, 0.0
      %2247 = vadd.xlane.f32.xlu0 %v2246
      %v2248 = vpop.xlane.xlu0 %2247
      %v2249 = vrcp.pop %v2245
      %v2250 = vrcp.pop %v2248
      %v2251 = vmul.f32 %v2240, %v2249
      %v2252 = vmul.f32 %v2242, %v2250
      %v2253 = vpack.c.bf16 %v2252, %v2251
      %2254 = vrot.lane.b32.xlu0 %v2178, 64
      %v2255 = vpop.permute.xlu0 %2254
      %v2257 = vsel %vm1286, %v2253, 0
      %v2260 = vand.u32 %v2255, %v1319
      %2262 = vmatprep.subr.bf16.mxu0 0
      %2263 = vmatpush1.bf16.msra.mxu0 0
      %2264 = vmatprep.subr.bf16.mxu0 0
      %2265 = vmatpush1.bf16.msra.mxu0 0
      %2266 = vmatprep.subr.bf16.mxu0 0
      %2267 = vmatpush1.bf16.msra.mxu0 0
      %2268 = vmatprep.subr.bf16.mxu0 0
      %2269 = vmatpush1.bf16.msra.mxu0 0
      %2270 = vmatprep.subr.bf16.mxu0 0
      %2271 = vmatpush1.bf16.msra.mxu0 0
      %2272 = vmatprep.subr.bf16.mxu0 0
      %2273 = vmatpush1.bf16.msra.mxu0 0
      %2274 = vmatprep.subr.bf16.mxu0 0
      %2275 = vmatpush1.bf16.msra.mxu0 0
      %2276 = vmatprep.subr.bf16.mxu0 0
      %2277 = vmatpush1.bf16.msra.mxu0 %v2260
      %2278 = vmatprep.subr.bf16.mxu0 0
      %2279 = vmatpush2.bf16.msra.mxu0 0
      %2280 = vmatprep.subr.bf16.mxu0 0
      %2281 = vmatpush2.bf16.msra.mxu0 0
      %2282 = vmatprep.subr.bf16.mxu0 0
      %2283 = vmatpush2.bf16.msra.mxu0 0
      %2284 = vmatprep.subr.bf16.mxu0 0
      %2285 = vmatpush2.bf16.msra.mxu0 0
      %2286 = vmatprep.subr.bf16.mxu0 0
      %2287 = vmatpush2.bf16.msra.mxu0 0
      %2288 = vmatprep.subr.bf16.mxu0 0
      %2289 = vmatpush2.bf16.msra.mxu0 0
      %2290 = vmatprep.subr.bf16.mxu0 0
      %2291 = vmatpush2.bf16.msra.mxu0 0
      %2292 = vmatprep.subr.bf16.mxu0 0
      %2293 = vmatpush2.bf16.msra.mxu0 0
      %2294 = vmatprep.mubr.bf16.mxu0 0
      %2295 = vmatmul.mubr.bf16.gmra.mxu0 %v2257
      %v2296 = vpop.f32.mrf.mxu0
      %v2297 = vadd.f32 0.0, %v2296
      %v2298 = vpop.f32.mrf.mxu0
      %v2299 = vpop.f32.mrf.mxu0
      %v2300 = vadd.f32 0.0, %v2299
      %v2301 = vpop.f32.mrf.mxu0
      %2302 = vdwg.mxu0
      %2303 = vrot.lane.b32.xlu0 %v2178, 120
      %v2304 = vpop.permute.xlu0 %2303
      %2305 = vrot.lane.b32.xlu0 %v2178, 88
      %v2306 = vpop.permute.xlu0 %2305
      %v2308 = vsel %vm1236, %v2304, 0
      %v2311 = vsel %vm1236, %v2306, 0
      %2313 = vmatprep.subr.bf16.mxu0 0
      %2314 = vmatpush1.bf16.xpose.msra.mxu0 0
      %2315 = vmatprep.subr.bf16.mxu0 0
      %2316 = vmatpush1.bf16.xpose.msra.mxu0 0
      %2317 = vmatprep.subr.bf16.mxu0 0
      %2318 = vmatpush1.bf16.xpose.msra.mxu0 0
      %2319 = vmatprep.subr.bf16.mxu0 0
      %2320 = vmatpush1.bf16.xpose.msra.mxu0 0
      %2321 = vmatprep.subr.bf16.mxu0 0
      %2322 = vmatpush1.bf16.xpose.msra.mxu0 0
      %2323 = vmatprep.subr.bf16.mxu0 0
      %2324 = vmatpush1.bf16.xpose.msra.mxu0 0
      %2325 = vmatprep.subr.bf16.mxu0 0
      %2326 = vmatpush1.bf16.xpose.msra.mxu0 0
      %2327 = vmatprep.subr.bf16.mxu0 0
      %2328 = vmatpush1.bf16.xpose.msra.mxu0 %v2311
      %2329 = vmatprep.subr.bf16.mxu0 0
      %2330 = vmatpush2.bf16.xpose.msra.mxu0 0
      %2331 = vmatprep.subr.bf16.mxu0 0
      %2332 = vmatpush2.bf16.xpose.msra.mxu0 0
      %2333 = vmatprep.subr.bf16.mxu0 0
      %2334 = vmatpush2.bf16.xpose.msra.mxu0 0
      %2335 = vmatprep.subr.bf16.mxu0 0
      %2336 = vmatpush2.bf16.xpose.msra.mxu0 0
      %2337 = vmatprep.subr.bf16.mxu0 0
      %2338 = vmatpush2.bf16.xpose.msra.mxu0 0
      %2339 = vmatprep.subr.bf16.mxu0 0
      %2340 = vmatpush2.bf16.xpose.msra.mxu0 0
      %2341 = vmatprep.subr.bf16.mxu0 0
      %2342 = vmatpush2.bf16.xpose.msra.mxu0 0
      %2343 = vmatprep.subr.bf16.mxu0 0
      %2344 = vmatpush2.bf16.xpose.msra.mxu0 0
      %2345 = vmatprep.mubr.bf16.mxu0 0
      %2346 = vmatmul.mubr.bf16.gmra.mxu0 %v2308
      %v2347 = vpop.f32.mrf.mxu0
      %v2348 = vadd.f32 0.0, %v2347
      %v2349 = vpop.f32.mrf.mxu0
      %v2350 = vpop.f32.mrf.mxu0
      %v2351 = vadd.f32 0.0, %v2350
      %v2352 = vpop.f32.mrf.mxu0
      %2353 = vdwg.mxu0
      %v2354 = vmul.f32 %v2348, 0.35355338
      %v2355 = vmul.f32 %v2351, 0.35355338
      %v2356 = vsel %vm1286, %v2354, -inf
      %2357 = vmax.xlane.f32.xlu0 %v2356
      %v2358 = vpop.xlane.xlu0 %2357
      %v2359 = vsel %vm1290, %v2355, -inf
      %2360 = vmax.xlane.f32.xlu0 %v2359
      %v2361 = vpop.xlane.xlu0 %2360
      %v2362 = vsub.f32 %v2354, %v2358
      %v2363 = vsub.f32 %v2355, %v2361
      %v2364 = vmul.f32 %v2362, 1.442695
      %v2365 = vpow.pop %v2364
      %v2366 = vmul.f32 %v2363, 1.442695
      %v2367 = vpow.pop %v2366
      %v2368 = vsel %vm1286, %v2365, 0.0
      %2369 = vadd.xlane.f32.xlu0 %v2368
      %v2370 = vpop.xlane.xlu0 %2369
      %v2371 = vsel %vm1290, %v2367, 0.0
      %2372 = vadd.xlane.f32.xlu0 %v2371
      %v2373 = vpop.xlane.xlu0 %2372
      %v2374 = vrcp.pop %v2370
      %v2375 = vrcp.pop %v2373
      %v2376 = vmul.f32 %v2365, %v2374
      %v2377 = vmul.f32 %v2367, %v2375
      %v2378 = vpack.c.bf16 %v2377, %v2376
      %2379 = vrot.lane.b32.xlu0 %v2178, 56
      %v2380 = vpop.permute.xlu0 %2379
      %v2382 = vsel %vm1286, %v2378, 0
      %v2385 = vand.u32 %v2380, %v1319
      %2387 = vmatprep.subr.bf16.mxu0 0
      %2388 = vmatpush1.bf16.msra.mxu0 0
      %2389 = vmatprep.subr.bf16.mxu0 0
      %2390 = vmatpush1.bf16.msra.mxu0 0
      %2391 = vmatprep.subr.bf16.mxu0 0
      %2392 = vmatpush1.bf16.msra.mxu0 0
      %2393 = vmatprep.subr.bf16.mxu0 0
      %2394 = vmatpush1.bf16.msra.mxu0 0
      %2395 = vmatprep.subr.bf16.mxu0 0
      %2396 = vmatpush1.bf16.msra.mxu0 0
      %2397 = vmatprep.subr.bf16.mxu0 0
      %2398 = vmatpush1.bf16.msra.mxu0 0
      %2399 = vmatprep.subr.bf16.mxu0 0
      %2400 = vmatpush1.bf16.msra.mxu0 0
      %2401 = vmatprep.subr.bf16.mxu0 0
      %2402 = vmatpush1.bf16.msra.mxu0 %v2385
      %2403 = vmatprep.subr.bf16.mxu0 0
      %2404 = vmatpush2.bf16.msra.mxu0 0
      %2405 = vmatprep.subr.bf16.mxu0 0
      %2406 = vmatpush2.bf16.msra.mxu0 0
      %2407 = vmatprep.subr.bf16.mxu0 0
      %2408 = vmatpush2.bf16.msra.mxu0 0
      %2409 = vmatprep.subr.bf16.mxu0 0
      %2410 = vmatpush2.bf16.msra.mxu0 0
      %2411 = vmatprep.subr.bf16.mxu0 0
      %2412 = vmatpush2.bf16.msra.mxu0 0
      %2413 = vmatprep.subr.bf16.mxu0 0
      %2414 = vmatpush2.bf16.msra.mxu0 0
      %2415 = vmatprep.subr.bf16.mxu0 0
      %2416 = vmatpush2.bf16.msra.mxu0 0
      %2417 = vmatprep.subr.bf16.mxu0 0
      %2418 = vmatpush2.bf16.msra.mxu0 0
      %2419 = vmatprep.mubr.bf16.mxu0 0
      %2420 = vmatmul.mubr.bf16.gmra.mxu0 %v2382
      %v2421 = vpop.f32.mrf.mxu0
      %v2422 = vadd.f32 0.0, %v2421
      %v2423 = vpop.f32.mrf.mxu0
      %v2424 = vpop.f32.mrf.mxu0
      %v2425 = vadd.f32 0.0, %v2424
      %v2426 = vpop.f32.mrf.mxu0
      %2427 = vdwg.mxu0
      %2428 = vrot.lane.b32.xlu0 %v2178, 112
      %v2429 = vpop.permute.xlu0 %2428
      %2430 = vrot.lane.b32.xlu0 %v2178, 80
      %v2431 = vpop.permute.xlu0 %2430
      %v2433 = vsel %vm1236, %v2429, 0
      %v2436 = vsel %vm1236, %v2431, 0
      %2438 = vmatprep.subr.bf16.mxu0 0
      %2439 = vmatpush1.bf16.xpose.msra.mxu0 0
      %2440 = vmatprep.subr.bf16.mxu0 0
      %2441 = vmatpush1.bf16.xpose.msra.mxu0 0
      %2442 = vmatprep.subr.bf16.mxu0 0
      %2443 = vmatpush1.bf16.xpose.msra.mxu0 0
      %2444 = vmatprep.subr.bf16.mxu0 0
      %2445 = vmatpush1.bf16.xpose.msra.mxu0 0
      %2446 = vmatprep.subr.bf16.mxu0 0
      %2447 = vmatpush1.bf16.xpose.msra.mxu0 0
      %2448 = vmatprep.subr.bf16.mxu0 0
      %2449 = vmatpush1.bf16.xpose.msra.mxu0 0
      %2450 = vmatprep.subr.bf16.mxu0 0
      %2451 = vmatpush1.bf16.xpose.msra.mxu0 0
      %2452 = vmatprep.subr.bf16.mxu0 0
      %2453 = vmatpush1.bf16.xpose.msra.mxu0 %v2436
      %2454 = vmatprep.subr.bf16.mxu0 0
      %2455 = vmatpush2.bf16.xpose.msra.mxu0 0
      %2456 = vmatprep.subr.bf16.mxu0 0
      %2457 = vmatpush2.bf16.xpose.msra.mxu0 0
      %2458 = vmatprep.subr.bf16.mxu0 0
      %2459 = vmatpush2.bf16.xpose.msra.mxu0 0
      %2460 = vmatprep.subr.bf16.mxu0 0
      %2461 = vmatpush2.bf16.xpose.msra.mxu0 0
      %2462 = vmatprep.subr.bf16.mxu0 0
      %2463 = vmatpush2.bf16.xpose.msra.mxu0 0
      %2464 = vmatprep.subr.bf16.mxu0 0
      %2465 = vmatpush2.bf16.xpose.msra.mxu0 0
      %2466 = vmatprep.subr.bf16.mxu0 0
      %2467 = vmatpush2.bf16.xpose.msra.mxu0 0
      %2468 = vmatprep.subr.bf16.mxu0 0
      %2469 = vmatpush2.bf16.xpose.msra.mxu0 0
      %2470 = vmatprep.mubr.bf16.mxu0 0
      %2471 = vmatmul.mubr.bf16.gmra.mxu0 %v2433
      %v2472 = vpop.f32.mrf.mxu0
      %v2473 = vadd.f32 0.0, %v2472
      %v2474 = vpop.f32.mrf.mxu0
      %v2475 = vpop.f32.mrf.mxu0
      %v2476 = vadd.f32 0.0, %v2475
      %v2477 = vpop.f32.mrf.mxu0
      %2478 = vdwg.mxu0
      %v2479 = vmul.f32 %v2473, 0.35355338
      %v2480 = vmul.f32 %v2476, 0.35355338
      %v2481 = vsel %vm1286, %v2479, -inf
      %2482 = vmax.xlane.f32.xlu0 %v2481
      %v2483 = vpop.xlane.xlu0 %2482
      %v2484 = vsel %vm1290, %v2480, -inf
      %2485 = vmax.xlane.f32.xlu0 %v2484
      %v2486 = vpop.xlane.xlu0 %2485
      %v2487 = vsub.f32 %v2479, %v2483
      %v2488 = vsub.f32 %v2480, %v2486
      %v2489 = vmul.f32 %v2487, 1.442695
      %v2490 = vpow.pop %v2489
      %v2491 = vmul.f32 %v2488, 1.442695
      %v2492 = vpow.pop %v2491
      %v2493 = vsel %vm1286, %v2490, 0.0
      %2494 = vadd.xlane.f32.xlu0 %v2493
      %v2495 = vpop.xlane.xlu0 %2494
      %v2496 = vsel %vm1290, %v2492, 0.0
      %2497 = vadd.xlane.f32.xlu0 %v2496
      %v2498 = vpop.xlane.xlu0 %2497
      %v2499 = vrcp.pop %v2495
      %v2500 = vrcp.pop %v2498
      %v2501 = vmul.f32 %v2490, %v2499
      %v2502 = vmul.f32 %v2492, %v2500
      %v2503 = vpack.c.bf16 %v2502, %v2501
      %2504 = vrot.lane.b32.xlu0 %v2178, 48
      %v2505 = vpop.permute.xlu0 %2504
      %v2507 = vsel %vm1286, %v2503, 0
      %v2510 = vand.u32 %v2505, %v1319
      %2512 = vmatprep.subr.bf16.mxu0 0
      %2513 = vmatpush1.bf16.msra.mxu0 0
      %2514 = vmatprep.subr.bf16.mxu0 0
      %2515 = vmatpush1.bf16.msra.mxu0 0
      %2516 = vmatprep.subr.bf16.mxu0 0
      %2517 = vmatpush1.bf16.msra.mxu0 0
      %2518 = vmatprep.subr.bf16.mxu0 0
      %2519 = vmatpush1.bf16.msra.mxu0 0
      %2520 = vmatprep.subr.bf16.mxu0 0
      %2521 = vmatpush1.bf16.msra.mxu0 0
      %2522 = vmatprep.subr.bf16.mxu0 0
      %2523 = vmatpush1.bf16.msra.mxu0 0
      %2524 = vmatprep.subr.bf16.mxu0 0
      %2525 = vmatpush1.bf16.msra.mxu0 0
      %2526 = vmatprep.subr.bf16.mxu0 0
      %2527 = vmatpush1.bf16.msra.mxu0 %v2510
      %2528 = vmatprep.subr.bf16.mxu0 0
      %2529 = vmatpush2.bf16.msra.mxu0 0
      %2530 = vmatprep.subr.bf16.mxu0 0
      %2531 = vmatpush2.bf16.msra.mxu0 0
      %2532 = vmatprep.subr.bf16.mxu0 0
      %2533 = vmatpush2.bf16.msra.mxu0 0
      %2534 = vmatprep.subr.bf16.mxu0 0
      %2535 = vmatpush2.bf16.msra.mxu0 0
      %2536 = vmatprep.subr.bf16.mxu0 0
      %2537 = vmatpush2.bf16.msra.mxu0 0
      %2538 = vmatprep.subr.bf16.mxu0 0
      %2539 = vmatpush2.bf16.msra.mxu0 0
      %2540 = vmatprep.subr.bf16.mxu0 0
      %2541 = vmatpush2.bf16.msra.mxu0 0
      %2542 = vmatprep.subr.bf16.mxu0 0
      %2543 = vmatpush2.bf16.msra.mxu0 0
      %2544 = vmatprep.mubr.bf16.mxu0 0
      %2545 = vmatmul.mubr.bf16.gmra.mxu0 %v2507
      %v2546 = vpop.f32.mrf.mxu0
      %v2547 = vadd.f32 0.0, %v2546
      %v2548 = vpop.f32.mrf.mxu0
      %v2549 = vpop.f32.mrf.mxu0
      %v2550 = vadd.f32 0.0, %v2549
      %v2551 = vpop.f32.mrf.mxu0
      %2552 = vdwg.mxu0
      %2553 = vrot.lane.b32.xlu0 %v2178, 104
      %v2554 = vpop.permute.xlu0 %2553
      %2555 = vrot.lane.b32.xlu0 %v2178, 72
      %v2556 = vpop.permute.xlu0 %2555
      %v2558 = vsel %vm1236, %v2554, 0
      %v2561 = vsel %vm1236, %v2556, 0
      %2563 = vmatprep.subr.bf16.mxu0 0
      %2564 = vmatpush1.bf16.xpose.msra.mxu0 0
      %2565 = vmatprep.subr.bf16.mxu0 0
      %2566 = vmatpush1.bf16.xpose.msra.mxu0 0
      %2567 = vmatprep.subr.bf16.mxu0 0
      %2568 = vmatpush1.bf16.xpose.msra.mxu0 0
      %2569 = vmatprep.subr.bf16.mxu0 0
      %2570 = vmatpush1.bf16.xpose.msra.mxu0 0
      %2571 = vmatprep.subr.bf16.mxu0 0
      %2572 = vmatpush1.bf16.xpose.msra.mxu0 0
      %2573 = vmatprep.subr.bf16.mxu0 0
      %2574 = vmatpush1.bf16.xpose.msra.mxu0 0
      %2575 = vmatprep.subr.bf16.mxu0 0
      %2576 = vmatpush1.bf16.xpose.msra.mxu0 0
      %2577 = vmatprep.subr.bf16.mxu0 0
      %2578 = vmatpush1.bf16.xpose.msra.mxu0 %v2561
      %2579 = vmatprep.subr.bf16.mxu0 0
      %2580 = vmatpush2.bf16.xpose.msra.mxu0 0
      %2581 = vmatprep.subr.bf16.mxu0 0
      %2582 = vmatpush2.bf16.xpose.msra.mxu0 0
      %2583 = vmatprep.subr.bf16.mxu0 0
      %2584 = vmatpush2.bf16.xpose.msra.mxu0 0
      %2585 = vmatprep.subr.bf16.mxu0 0
      %2586 = vmatpush2.bf16.xpose.msra.mxu0 0
      %2587 = vmatprep.subr.bf16.mxu0 0
      %2588 = vmatpush2.bf16.xpose.msra.mxu0 0
      %2589 = vmatprep.subr.bf16.mxu0 0
      %2590 = vmatpush2.bf16.xpose.msra.mxu0 0
      %2591 = vmatprep.subr.bf16.mxu0 0
      %2592 = vmatpush2.bf16.xpose.msra.mxu0 0
      %2593 = vmatprep.subr.bf16.mxu0 0
      %2594 = vmatpush2.bf16.xpose.msra.mxu0 0
      %2595 = vmatprep.mubr.bf16.mxu0 0
      %2596 = vmatmul.mubr.bf16.gmra.mxu0 %v2558
      %v2597 = vpop.f32.mrf.mxu0
      %v2598 = vadd.f32 0.0, %v2597
      %v2599 = vpop.f32.mrf.mxu0
      %v2600 = vpop.f32.mrf.mxu0
      %v2601 = vadd.f32 0.0, %v2600
      %v2602 = vpop.f32.mrf.mxu0
      %2603 = vdwg.mxu0
      %v2604 = vmul.f32 %v2598, 0.35355338
      %v2605 = vmul.f32 %v2601, 0.35355338
      %v2606 = vsel %vm1286, %v2604, -inf
      %2607 = vmax.xlane.f32.xlu0 %v2606
      %v2608 = vpop.xlane.xlu0 %2607
      %v2609 = vsel %vm1290, %v2605, -inf
      %2610 = vmax.xlane.f32.xlu0 %v2609
      %v2611 = vpop.xlane.xlu0 %2610
      %v2612 = vsub.f32 %v2604, %v2608
      %v2613 = vsub.f32 %v2605, %v2611
      %v2614 = vmul.f32 %v2612, 1.442695
      %v2615 = vpow.pop %v2614
      %v2616 = vmul.f32 %v2613, 1.442695
      %v2617 = vpow.pop %v2616
      %v2618 = vsel %vm1286, %v2615, 0.0
      %2619 = vadd.xlane.f32.xlu0 %v2618
      %v2620 = vpop.xlane.xlu0 %2619
      %v2621 = vsel %vm1290, %v2617, 0.0
      %2622 = vadd.xlane.f32.xlu0 %v2621
      %v2623 = vpop.xlane.xlu0 %2622
      %v2624 = vrcp.pop %v2620
      %v2625 = vrcp.pop %v2623
      %v2626 = vmul.f32 %v2615, %v2624
      %v2627 = vmul.f32 %v2617, %v2625
      %v2628 = vpack.c.bf16 %v2627, %v2626
      %2629 = vrot.lane.b32.xlu0 %v2178, 40
      %v2630 = vpop.permute.xlu0 %2629
      %v2632 = vsel %vm1286, %v2628, 0
      %v2635 = vand.u32 %v2630, %v1319
      %2637 = vmatprep.subr.bf16.mxu0 0
      %2638 = vmatpush1.bf16.msra.mxu0 0
      %2639 = vmatprep.subr.bf16.mxu0 0
      %2640 = vmatpush1.bf16.msra.mxu0 0
      %2641 = vmatprep.subr.bf16.mxu0 0
      %2642 = vmatpush1.bf16.msra.mxu0 0
      %2643 = vmatprep.subr.bf16.mxu0 0
      %2644 = vmatpush1.bf16.msra.mxu0 0
      %2645 = vmatprep.subr.bf16.mxu0 0
      %2646 = vmatpush1.bf16.msra.mxu0 0
      %2647 = vmatprep.subr.bf16.mxu0 0
      %2648 = vmatpush1.bf16.msra.mxu0 0
      %2649 = vmatprep.subr.bf16.mxu0 0
      %2650 = vmatpush1.bf16.msra.mxu0 0
      %2651 = vmatprep.subr.bf16.mxu0 0
      %2652 = vmatpush1.bf16.msra.mxu0 %v2635
      %2653 = vmatprep.subr.bf16.mxu0 0
      %2654 = vmatpush2.bf16.msra.mxu0 0
      %2655 = vmatprep.subr.bf16.mxu0 0
      %2656 = vmatpush2.bf16.msra.mxu0 0
      %2657 = vmatprep.subr.bf16.mxu0 0
      %2658 = vmatpush2.bf16.msra.mxu0 0
      %2659 = vmatprep.subr.bf16.mxu0 0
      %2660 = vmatpush2.bf16.msra.mxu0 0
      %2661 = vmatprep.subr.bf16.mxu0 0
      %2662 = vmatpush2.bf16.msra.mxu0 0
      %2663 = vmatprep.subr.bf16.mxu0 0
      %2664 = vmatpush2.bf16.msra.mxu0 0
      %2665 = vmatprep.subr.bf16.mxu0 0
      %2666 = vmatpush2.bf16.msra.mxu0 0
      %2667 = vmatprep.subr.bf16.mxu0 0
      %2668 = vmatpush2.bf16.msra.mxu0 0
      %2669 = vmatprep.mubr.bf16.mxu0 0
      %2670 = vmatmul.mubr.bf16.gmra.mxu0 %v2632
      %v2671 = vpop.f32.mrf.mxu0
      %v2672 = vadd.f32 0.0, %v2671
      %v2673 = vpop.f32.mrf.mxu0
      %v2674 = vpop.f32.mrf.mxu0
      %v2675 = vadd.f32 0.0, %v2674
      %v2676 = vpop.f32.mrf.mxu0
      %2677 = vdwg.mxu0
      %2680 = vrot.lane.b32.xlu0 %v2422, 8
      %v2681 = vpop.permute.xlu0 %2680
      %2682 = vrot.lane.b32.xlu0 %v2425, 8
      %v2683 = vpop.permute.xlu0 %2682
      %2688 = vrot.lane.b32.xlu0 %v2547, 16
      %v2689 = vpop.permute.xlu0 %2688
      %2690 = vrot.lane.b32.xlu0 %v2550, 16
      %v2691 = vpop.permute.xlu0 %2690
      %2696 = vrot.lane.b32.xlu0 %v2672, 24
      %v2697 = vpop.permute.xlu0 %2696
      %2698 = vrot.lane.b32.xlu0 %v2675, 24
      %v2699 = vpop.permute.xlu0 %2698
      %v2702 = vsel %vm1236, %v2297, %v2681
      %v2703 = vsel %vm1236, %v2300, %v2683
      %v2704 = vsel %vm1765, %v2702, %v2689
      %v2705 = vsel %vm1765, %v2703, %v2691
      %v2706 = vsel %vm1768, %v2704, %v2697
      %v2707 = vsel %vm1768, %v2705, %v2699
      %v2708 = vpack.c.bf16 %v2707, %v2706
      %v2710 = vlaneseq
      %v2711 = vshrl.u32 %v2710, 7
      %v2712 = vsub.s32 0, %v2711
      %v2713 = vrot.slane %v2115, %v2712
      %v2719 = vunpack.c.l.b16 %v2110
      %v2720 = vunpack.c.l.b16 %v2111
      %v2721 = vunpack.c.l.b16 %v2112
      %v2722 = vunpack.c.l.b16 %v2113
      %v2723 = vpack.c.b16 %v2720, %v2719
      %v2724 = vpack.c.b16 %v2722, %v2721
      %v2728 = vsel %vm1113, %v2708, 0
      %2730 = vmatprep.subr.bf16.mxu0 0
      %2731 = vmatpush1.bf16.msra.mxu0 0
      %2732 = vmatprep.subr.bf16.mxu0 0
      %2733 = vmatpush1.bf16.msra.mxu0 0
      %2734 = vmatprep.subr.bf16.mxu0 0
      %2735 = vmatpush1.bf16.msra.mxu0 0
      %2736 = vmatprep.subr.bf16.mxu0 0
      %2737 = vmatpush1.bf16.msra.mxu0 0
      %2738 = vmatprep.subr.bf16.mxu0 0
      %2739 = vmatpush1.bf16.msra.mxu0 0
      %2740 = vmatprep.subr.bf16.mxu0 0
      %2741 = vmatpush1.bf16.msra.mxu0 0
      %2742 = vmatprep.subr.bf16.mxu0 0
      %2743 = vmatpush1.bf16.msra.mxu0 %v2724
      %2744 = vmatprep.subr.bf16.mxu0 0
      %2745 = vmatpush1.bf16.msra.mxu0 %v2723
      %2746 = vmatprep.subr.bf16.mxu0 0
      %2747 = vmatpush2.bf16.msra.mxu0 0
      %2748 = vmatprep.subr.bf16.mxu0 0
      %2749 = vmatpush2.bf16.msra.mxu0 0
      %2750 = vmatprep.subr.bf16.mxu0 0
      %2751 = vmatpush2.bf16.msra.mxu0 0
      %2752 = vmatprep.subr.bf16.mxu0 0
      %2753 = vmatpush2.bf16.msra.mxu0 0
      %2754 = vmatprep.subr.bf16.mxu0 0
      %2755 = vmatpush2.bf16.msra.mxu0 0
      %2756 = vmatprep.subr.bf16.mxu0 0
      %2757 = vmatpush2.bf16.msra.mxu0 0
      %2758 = vmatprep.subr.bf16.mxu0 0
      %2759 = vmatpush2.bf16.msra.mxu0 0
      %2760 = vmatprep.subr.bf16.mxu0 0
      %2761 = vmatpush2.bf16.msra.mxu0 0
      %2762 = vmatprep.mubr.bf16.mxu0 0
      %2763 = vmatmul.mubr.bf16.gmra.mxu0 %v2728
      %v2764 = vpop.f32.mrf.mxu0
      %v2765 = vadd.f32 %v2713, %v2764
      %v2766 = vpop.f32.mrf.mxu0
      %v2767 = vpop.f32.mrf.mxu0
      %v2768 = vadd.f32 %v2713, %v2767
      %v2769 = vpop.f32.mrf.mxu0
      %2770 = vdwg.mxu0
      %v2771 = vadd.f32 %v2097, %v2765
      %v2772 = vadd.f32 %v2098, %v2768
      %v2773 = vsel %vm1113, %v2771, 0.0
      %2774 = vadd.xlane.f32.xlu0 %v2773
      %v2775 = vpop.xlane.xlu0 %2774
      %v2776 = vsel %vm1839, %v2772, 0.0
      %2777 = vadd.xlane.f32.xlu0 %v2776
      %v2778 = vpop.xlane.xlu0 %2777
      %v2779 = vmul.f32 %v2775, %v1843
      %v2780 = vmul.f32 %v2778, %v1843
      %v2781 = vsub.f32 %v2771, %v2779
      %v2782 = vsub.f32 %v2772, %v2780
      %v2783 = vmul.f32 %v2781, %v2781
      %v2784 = vmul.f32 %v2782, %v2782
      %v2785 = vsel %vm1113, %v2783, 0.0
      %2786 = vadd.xlane.f32.xlu0 %v2785
      %v2787 = vpop.xlane.xlu0 %2786
      %v2788 = vsel %vm1839, %v2784, 0.0
      %2789 = vadd.xlane.f32.xlu0 %v2788
      %v2790 = vpop.xlane.xlu0 %2789
      %v2791 = vmul.f32 %v2787, %v1843
      %v2792 = vmul.f32 %v2790, %v1843
      %v2793 = vadd.f32 %v2791, 1e-05
      %v2794 = vadd.f32 %v2792, 1e-05
      %v2795 = vrsqrt.pop %v2793
      %v2796 = vrsqrt.pop %v2794
      %v2797 = vmul.f32 %v2781, %v2795
      %v2798 = vmul.f32 %v2782, %v2796
      %v2799 = vlaneseq
      %v2800 = vshrl.u32 %v2799, 7
      %v2801 = vsub.s32 0, %v2800
      %v2802 = vrot.slane %v2100, %v2801
      %v2803 = vmul.f32 %v2797, %v2802
      %v2804 = vmul.f32 %v2798, %v2802
      %v2805 = vlaneseq
      %v2806 = vshrl.u32 %v2805, 7
      %v2807 = vsub.s32 1, %v2806
      %v2808 = vrot.slane %v2100, %v2807
      %v2809 = vadd.f32 %v2803, %v2808
      %v2810 = vadd.f32 %v2804, %v2808
      %s2811 = scalar_lea.vmem %s19, 16
      %v2812 = vld [vmem:[%s2811] sm:$0xf]
      %v2813 = vld [vmem:[%s2811 + $0x4] sm:$0xf]
      %v2814 = vld [vmem:[%s2811 + $0x8] sm:$0xf]
      %v2815 = vld [vmem:[%s2811 + $0xc] sm:$0xf]
      %s2816 = scalar_lea.vmem %s21, 1
      %v2817 = vld [vmem:[%s2816] sm:$0x1]
      %s2818 = scalar_lea.vmem %s23, 64
      %v2819 = vld [vmem:[%s2818] sm:$0xf]
      %v2820 = vld [vmem:[%s2818 + $0x4] sm:$0xf]
      %v2821 = vld [vmem:[%s2818 + $0x8] sm:$0xf]
      %v2822 = vld [vmem:[%s2818 + $0xc] sm:$0xf]
      %v2823 = vld [vmem:[%s2818 + $0x10] sm:$0xf]
      %v2824 = vld [vmem:[%s2818 + $0x14] sm:$0xf]
      %v2825 = vld [vmem:[%s2818 + $0x18] sm:$0xf]
      %v2826 = vld [vmem:[%s2818 + $0x1c] sm:$0xf]
      %v2827 = vld [vmem:[%s2818 + $0x20] sm:$0xf]
      %v2828 = vld [vmem:[%s2818 + $0x24] sm:$0xf]
      %v2829 = vld [vmem:[%s2818 + $0x28] sm:$0xf]
      %v2830 = vld [vmem:[%s2818 + $0x2c] sm:$0xf]
      %v2831 = vld [vmem:[%s2818 + $0x30] sm:$0xf]
      %v2832 = vld [vmem:[%s2818 + $0x34] sm:$0xf]
      %v2833 = vld [vmem:[%s2818 + $0x38] sm:$0xf]
      %v2834 = vld [vmem:[%s2818 + $0x3c] sm:$0xf]
      %s2835 = scalar_lea.vmem %s25, 1
      %v2836 = vld [vmem:[%s2835] sm:$0x1]
      %v2837 = vpack.c.bf16 %v2810, %v2809
      %v2839 = vlaneseq
      %v2840 = vshrl.u32 %v2839, 7
      %v2841 = vsub.s32 0, %v2840
      %v2842 = vrot.slane %v2817, %v2841
      %v2848 = vunpack.c.l.b16 %v2812
      %v2849 = vunpack.c.l.b16 %v2813
      %v2850 = vunpack.c.l.b16 %v2814
      %v2851 = vunpack.c.l.b16 %v2815
      %v2852 = vpack.c.b16 %v2849, %v2848
      %v2853 = vpack.c.b16 %v2851, %v2850
      %v2857 = vsel %vm1113, %v2837, 0
      %2859 = vmatprep.subr.bf16.mxu0 0
      %2860 = vmatpush1.bf16.msra.mxu0 0
      %2861 = vmatprep.subr.bf16.mxu0 0
      %2862 = vmatpush1.bf16.msra.mxu0 0
      %2863 = vmatprep.subr.bf16.mxu0 0
      %2864 = vmatpush1.bf16.msra.mxu0 0
      %2865 = vmatprep.subr.bf16.mxu0 0
      %2866 = vmatpush1.bf16.msra.mxu0 0
      %2867 = vmatprep.subr.bf16.mxu0 0
      %2868 = vmatpush1.bf16.msra.mxu0 0
      %2869 = vmatprep.subr.bf16.mxu0 0
      %2870 = vmatpush1.bf16.msra.mxu0 0
      %2871 = vmatprep.subr.bf16.mxu0 0
      %2872 = vmatpush1.bf16.msra.mxu0 %v2853
      %2873 = vmatprep.subr.bf16.mxu0 0
      %2874 = vmatpush1.bf16.msra.mxu0 %v2852
      %2875 = vmatprep.subr.bf16.mxu0 0
      %2876 = vmatpush2.bf16.msra.mxu0 0
      %2877 = vmatprep.subr.bf16.mxu0 0
      %2878 = vmatpush2.bf16.msra.mxu0 0
      %2879 = vmatprep.subr.bf16.mxu0 0
      %2880 = vmatpush2.bf16.msra.mxu0 0
      %2881 = vmatprep.subr.bf16.mxu0 0
      %2882 = vmatpush2.bf16.msra.mxu0 0
      %2883 = vmatprep.subr.bf16.mxu0 0
      %2884 = vmatpush2.bf16.msra.mxu0 0
      %2885 = vmatprep.subr.bf16.mxu0 0
      %2886 = vmatpush2.bf16.msra.mxu0 0
      %2887 = vmatprep.subr.bf16.mxu0 0
      %2888 = vmatpush2.bf16.msra.mxu0 0
      %2889 = vmatprep.subr.bf16.mxu0 0
      %2890 = vmatpush2.bf16.msra.mxu0 0
      %2891 = vmatprep.mubr.bf16.mxu0 0
      %2892 = vmatmul.mubr.bf16.gmra.mxu0 %v2857
      %v2893 = vpop.f32.mrf.mxu0
      %v2894 = vadd.f32 %v2842, %v2893
      %v2895 = vpop.f32.mrf.mxu0
      %v2896 = vpop.f32.mrf.mxu0
      %v2897 = vadd.f32 %v2842, %v2896
      %v2898 = vpop.f32.mrf.mxu0
      %2899 = vdwg.mxu0
      %v2900 = vmax.f32 %v2894, 0.0
      %v2901 = vmax.f32 %v2897, 0.0
      %v2902 = vpack.c.bf16 %v2901, %v2900
      %v2904 = vlaneseq
      %v2905 = vshrl.u32 %v2904, 7
      %v2906 = vsub.s32 0, %v2905
      %v2907 = vrot.slane %v2836, %v2906
      %v2925 = vunpack.c.l.b16 %v2819
      %v2926 = vunpack.c.l.b16 %v2820
      %v2927 = vunpack.c.l.b16 %v2821
      %v2928 = vunpack.c.l.b16 %v2822
      %v2929 = vunpack.c.l.b16 %v2823
      %v2930 = vunpack.c.l.b16 %v2824
      %v2931 = vunpack.c.l.b16 %v2825
      %v2932 = vunpack.c.l.b16 %v2826
      %v2933 = vunpack.c.l.b16 %v2827
      %v2934 = vunpack.c.l.b16 %v2828
      %v2935 = vunpack.c.l.b16 %v2829
      %v2936 = vunpack.c.l.b16 %v2830
      %v2937 = vunpack.c.l.b16 %v2831
      %v2938 = vunpack.c.l.b16 %v2832
      %v2939 = vunpack.c.l.b16 %v2833
      %v2940 = vunpack.c.l.b16 %v2834
      %v2941 = vpack.c.b16 %v2926, %v2925
      %v2942 = vpack.c.b16 %v2928, %v2927
      %v2943 = vpack.c.b16 %v2930, %v2929
      %v2944 = vpack.c.b16 %v2932, %v2931
      %v2945 = vpack.c.b16 %v2934, %v2933
      %v2946 = vpack.c.b16 %v2936, %v2935
      %v2947 = vpack.c.b16 %v2938, %v2937
      %v2948 = vpack.c.b16 %v2940, %v2939
      %2957 = vmatprep.subr.bf16.mxu0 0
      %2958 = vmatpush1.bf16.msra.mxu0 %v2948
      %2959 = vmatprep.subr.bf16.mxu0 0
      %2960 = vmatpush1.bf16.msra.mxu0 %v2947
      %2961 = vmatprep.subr.bf16.mxu0 0
      %2962 = vmatpush1.bf16.msra.mxu0 %v2946
      %2963 = vmatprep.subr.bf16.mxu0 0
      %2964 = vmatpush1.bf16.msra.mxu0 %v2945
      %2965 = vmatprep.subr.bf16.mxu0 0
      %2966 = vmatpush1.bf16.msra.mxu0 %v2944
      %2967 = vmatprep.subr.bf16.mxu0 0
      %2968 = vmatpush1.bf16.msra.mxu0 %v2943
      %2969 = vmatprep.subr.bf16.mxu0 0
      %2970 = vmatpush1.bf16.msra.mxu0 %v2942
      %2971 = vmatprep.subr.bf16.mxu0 0
      %2972 = vmatpush1.bf16.msra.mxu0 %v2941
      %2973 = vmatprep.subr.bf16.mxu0 0
      %2974 = vmatpush2.bf16.msra.mxu0 0
      %2975 = vmatprep.subr.bf16.mxu0 0
      %2976 = vmatpush2.bf16.msra.mxu0 0
      %2977 = vmatprep.subr.bf16.mxu0 0
      %2978 = vmatpush2.bf16.msra.mxu0 0
      %2979 = vmatprep.subr.bf16.mxu0 0
      %2980 = vmatpush2.bf16.msra.mxu0 0
      %2981 = vmatprep.subr.bf16.mxu0 0
      %2982 = vmatpush2.bf16.msra.mxu0 0
      %2983 = vmatprep.subr.bf16.mxu0 0
      %2984 = vmatpush2.bf16.msra.mxu0 0
      %2985 = vmatprep.subr.bf16.mxu0 0
      %2986 = vmatpush2.bf16.msra.mxu0 0
      %2987 = vmatprep.subr.bf16.mxu0 0
      %2988 = vmatpush2.bf16.msra.mxu0 0
      %2989 = vmatprep.mubr.bf16.mxu0 0
      %2990 = vmatmul.mubr.bf16.gmra.mxu0 %v2902
      %v2991 = vpop.f32.mrf.mxu0
      %v2992 = vadd.f32 %v2907, %v2991
      %v2993 = vpop.f32.mrf.mxu0
      %v2994 = vpop.f32.mrf.mxu0
      %v2995 = vadd.f32 %v2907, %v2994
      %v2996 = vpop.f32.mrf.mxu0
      %2997 = vdwg.mxu0
      %v2998 = vadd.f32 %v2809, %v2992
      %v2999 = vadd.f32 %v2810, %v2995
      %v3000 = vsel %vm1113, %v2998, 0.0
      %3001 = vadd.xlane.f32.xlu0 %v3000
      %v3002 = vpop.xlane.xlu0 %3001
      %v3003 = vsel %vm1839, %v2999, 0.0
      %3004 = vadd.xlane.f32.xlu0 %v3003
      %v3005 = vpop.xlane.xlu0 %3004
      %v3006 = vmul.f32 %v3002, %v1843
      %v3007 = vmul.f32 %v3005, %v1843
      %v3008 = vsub.f32 %v2998, %v3006
      %v3009 = vsub.f32 %v2999, %v3007
      %v3010 = vmul.f32 %v3008, %v3008
      %v3011 = vmul.f32 %v3009, %v3009
      %v3012 = vsel %vm1113, %v3010, 0.0
      %3013 = vadd.xlane.f32.xlu0 %v3012
      %v3014 = vpop.xlane.xlu0 %3013
      %v3015 = vsel %vm1839, %v3011, 0.0
      %3016 = vadd.xlane.f32.xlu0 %v3015
      %v3017 = vpop.xlane.xlu0 %3016
      %v3018 = vmul.f32 %v3014, %v1843
      %v3019 = vmul.f32 %v3017, %v1843
      %v3020 = vadd.f32 %v3018, 1e-05
      %v3021 = vadd.f32 %v3019, 1e-05
      %v3022 = vrsqrt.pop %v3020
      %v3023 = vrsqrt.pop %v3021
      %v3024 = vmul.f32 %v3008, %v3022
      %v3025 = vmul.f32 %v3009, %v3023
      %v3026 = vlaneseq
      %v3027 = vshrl.u32 %v3026, 7
      %v3028 = vsub.s32 2, %v3027
      %v3029 = vrot.slane %v2100, %v3028
      %v3030 = vmul.f32 %v3024, %v3029
      %v3031 = vmul.f32 %v3025, %v3029
      %v3032 = vlaneseq
      %v3033 = vshrl.u32 %v3032, 7
      %v3034 = vsub.s32 3, %v3033
      %v3035 = vrot.slane %v2100, %v3034
      %v3036 = vadd.f32 %v3030, %v3035
      %v3037 = vadd.f32 %v3031, %v3035
      %v3038 = vpack.c.bf16 %v3036, %v3036
      %v3039 = vpack.c.bf16 %v3037, %v3037
      %v3040 = vld [vmem:[%s1081] sm:$0x3f]
      %v3041 = vlaneseq
      %v3042 = vshrl.u32 %v3041, 7
      %v3043 = vlaneseq
      %v3044 = vand.u32 %v3043, 127
      %vm3045 = vcmp.le.s32.totalorder %v3044, %v3042
      %v3046 = vsel %vm3045, 0.0, -1e+09
      %v3047 = vld [vmem:[%s57] sm:$0x3f]
      %v3048 = vpack.c.bf16 %v3040, %v3040
      %v3049 = vld [vmem:[%s27] sm:$0xf]
      %v3050 = vld [vmem:[%s27 + $0x4] sm:$0xf]
      %v3051 = vld [vmem:[%s27 + $0x8] sm:$0xf]
      %v3052 = vld [vmem:[%s27 + $0xc] sm:$0xf]
      %v3053 = vld [vmem:[%s29] sm:$0x1]
      %v3054 = vld [vmem:[%s31] sm:$0xf]
      %v3055 = vld [vmem:[%s31 + $0x4] sm:$0xf]
      %v3056 = vld [vmem:[%s31 + $0x8] sm:$0xf]
      %v3057 = vld [vmem:[%s31 + $0xc] sm:$0xf]
      %v3058 = vld [vmem:[%s33] sm:$0x1]
      %v3060 = vlaneseq
      %v3061 = vshrl.u32 %v3060, 7
      %v3062 = vsub.s32 0, %v3061
      %v3063 = vrot.slane %v3053, %v3062
      %v3069 = vunpack.c.l.b16 %v3049
      %v3070 = vunpack.c.l.b16 %v3050
      %v3071 = vunpack.c.l.b16 %v3051
      %v3072 = vunpack.c.l.b16 %v3052
      %v3073 = vpack.c.b16 %v3070, %v3069
      %v3074 = vpack.c.b16 %v3072, %v3071
      %v3078 = vsel %vm1113, %v3048, 0
      %3080 = vmatprep.subr.bf16.mxu0 0
      %3081 = vmatpush1.bf16.msra.mxu0 0
      %3082 = vmatprep.subr.bf16.mxu0 0
      %3083 = vmatpush1.bf16.msra.mxu0 0
      %3084 = vmatprep.subr.bf16.mxu0 0
      %3085 = vmatpush1.bf16.msra.mxu0 0
      %3086 = vmatprep.subr.bf16.mxu0 0
      %3087 = vmatpush1.bf16.msra.mxu0 0
      %3088 = vmatprep.subr.bf16.mxu0 0
      %3089 = vmatpush1.bf16.msra.mxu0 0
      %3090 = vmatprep.subr.bf16.mxu0 0
      %3091 = vmatpush1.bf16.msra.mxu0 0
      %3092 = vmatprep.subr.bf16.mxu0 0
      %3093 = vmatpush1.bf16.msra.mxu0 %v3074
      %3094 = vmatprep.subr.bf16.mxu0 0
      %3095 = vmatpush1.bf16.msra.mxu0 %v3073
      %3096 = vmatprep.subr.bf16.mxu0 0
      %3097 = vmatpush2.bf16.msra.mxu0 0
      %3098 = vmatprep.subr.bf16.mxu0 0
      %3099 = vmatpush2.bf16.msra.mxu0 0
      %3100 = vmatprep.subr.bf16.mxu0 0
      %3101 = vmatpush2.bf16.msra.mxu0 0
      %3102 = vmatprep.subr.bf16.mxu0 0
      %3103 = vmatpush2.bf16.msra.mxu0 0
      %3104 = vmatprep.subr.bf16.mxu0 0
      %3105 = vmatpush2.bf16.msra.mxu0 0
      %3106 = vmatprep.subr.bf16.mxu0 0
      %3107 = vmatpush2.bf16.msra.mxu0 0
      %3108 = vmatprep.subr.bf16.mxu0 0
      %3109 = vmatpush2.bf16.msra.mxu0 0
      %3110 = vmatprep.subr.bf16.mxu0 0
      %3111 = vmatpush2.bf16.msra.mxu0 0
      %3112 = vmatprep.mubr.bf16.mxu0 0
      %3113 = vmatmul.mubr.bf16.gmra.mxu0 %v3078
      %v3114 = vpop.f32.mrf.mxu0
      %v3115 = vadd.f32 %v3063, %v3114
      %v3116 = vpop.f32.mrf.mxu0
      %v3117 = vpop.f32.mrf.mxu0
      %v3118 = vpop.f32.mrf.mxu0
      %3119 = vdwg.mxu0
      %v3120 = vpack.c.bf16 %v3115, %v3115
      %3122 = vrot.lane.b32.xlu0 %v3120, 96
      %v3123 = vpop.permute.xlu0 %3122
      %v3125 = vsel %vm1236, %v3120, 0
      %v3128 = vsel %vm1236, %v3123, 0
      %3130 = vmatprep.subr.bf16.mxu0 0
      %3131 = vmatpush1.bf16.xpose.msra.mxu0 0
      %3132 = vmatprep.subr.bf16.mxu0 0
      %3133 = vmatpush1.bf16.xpose.msra.mxu0 0
      %3134 = vmatprep.subr.bf16.mxu0 0
      %3135 = vmatpush1.bf16.xpose.msra.mxu0 0
      %3136 = vmatprep.subr.bf16.mxu0 0
      %3137 = vmatpush1.bf16.xpose.msra.mxu0 0
      %3138 = vmatprep.subr.bf16.mxu0 0
      %3139 = vmatpush1.bf16.xpose.msra.mxu0 0
      %3140 = vmatprep.subr.bf16.mxu0 0
      %3141 = vmatpush1.bf16.xpose.msra.mxu0 0
      %3142 = vmatprep.subr.bf16.mxu0 0
      %3143 = vmatpush1.bf16.xpose.msra.mxu0 0
      %3144 = vmatprep.subr.bf16.mxu0 0
      %3145 = vmatpush1.bf16.xpose.msra.mxu0 %v3128
      %3146 = vmatprep.subr.bf16.mxu0 0
      %3147 = vmatpush2.bf16.xpose.msra.mxu0 0
      %3148 = vmatprep.subr.bf16.mxu0 0
      %3149 = vmatpush2.bf16.xpose.msra.mxu0 0
      %3150 = vmatprep.subr.bf16.mxu0 0
      %3151 = vmatpush2.bf16.xpose.msra.mxu0 0
      %3152 = vmatprep.subr.bf16.mxu0 0
      %3153 = vmatpush2.bf16.xpose.msra.mxu0 0
      %3154 = vmatprep.subr.bf16.mxu0 0
      %3155 = vmatpush2.bf16.xpose.msra.mxu0 0
      %3156 = vmatprep.subr.bf16.mxu0 0
      %3157 = vmatpush2.bf16.xpose.msra.mxu0 0
      %3158 = vmatprep.subr.bf16.mxu0 0
      %3159 = vmatpush2.bf16.xpose.msra.mxu0 0
      %3160 = vmatprep.subr.bf16.mxu0 0
      %3161 = vmatpush2.bf16.xpose.msra.mxu0 0
      %3162 = vmatprep.mubr.bf16.mxu0 0
      %3163 = vmatmul.mubr.bf16.gmra.mxu0 %v3125
      %v3164 = vpop.f32.mrf.mxu0
      %v3165 = vadd.f32 0.0, %v3164
      %v3166 = vpop.f32.mrf.mxu0
      %v3167 = vpop.f32.mrf.mxu0
      %v3168 = vpop.f32.mrf.mxu0
      %3169 = vdwg.mxu0
      %v3170 = vmul.f32 %v3165, 0.35355338
      %v3171 = vadd.f32 %v3170, %v3046
      %vm3172 = vcmask 46080
      %v3173 = vsel %vm3172, %v3171, -inf
      %3174 = vmax.xlane.f32.xlu0 %v3173
      %v3175 = vpop.xlane.xlu0 %3174
      %v3176 = vsub.f32 %v3171, %v3175
      %v3177 = vmul.f32 %v3176, 1.442695
      %v3178 = vpow.pop %v3177
      %v3179 = vsel %vm3172, %v3178, 0.0
      %3180 = vadd.xlane.f32.xlu0 %v3179
      %v3181 = vpop.xlane.xlu0 %3180
      %v3182 = vrcp.pop %v3181
      %v3183 = vmul.f32 %v3178, %v3182
      %v3184 = vpack.c.bf16 %v3183, %v3183
      %3185 = vrot.lane.b32.xlu0 %v3120, 64
      %v3186 = vpop.permute.xlu0 %3185
      %vm3187 = vcmask 48128
      %v3189 = vsel %vm3187, %v3184, 0
      %vm3191 = vcmask 1042432
      %v3193 = vsel %vm3191, %v3186, 0
      %3195 = vmatprep.subr.bf16.mxu0 0
      %3196 = vmatpush1.bf16.msra.mxu0 0
      %3197 = vmatprep.subr.bf16.mxu0 0
      %3198 = vmatpush1.bf16.msra.mxu0 0
      %3199 = vmatprep.subr.bf16.mxu0 0
      %3200 = vmatpush1.bf16.msra.mxu0 0
      %3201 = vmatprep.subr.bf16.mxu0 0
      %3202 = vmatpush1.bf16.msra.mxu0 0
      %3203 = vmatprep.subr.bf16.mxu0 0
      %3204 = vmatpush1.bf16.msra.mxu0 0
      %3205 = vmatprep.subr.bf16.mxu0 0
      %3206 = vmatpush1.bf16.msra.mxu0 0
      %3207 = vmatprep.subr.bf16.mxu0 0
      %3208 = vmatpush1.bf16.msra.mxu0 0
      %3209 = vmatprep.subr.bf16.mxu0 0
      %3210 = vmatpush1.bf16.msra.mxu0 %v3193
      %3211 = vmatprep.subr.bf16.mxu0 0
      %3212 = vmatpush2.bf16.msra.mxu0 0
      %3213 = vmatprep.subr.bf16.mxu0 0
      %3214 = vmatpush2.bf16.msra.mxu0 0
      %3215 = vmatprep.subr.bf16.mxu0 0
      %3216 = vmatpush2.bf16.msra.mxu0 0
      %3217 = vmatprep.subr.bf16.mxu0 0
      %3218 = vmatpush2.bf16.msra.mxu0 0
      %3219 = vmatprep.subr.bf16.mxu0 0
      %3220 = vmatpush2.bf16.msra.mxu0 0
      %3221 = vmatprep.subr.bf16.mxu0 0
      %3222 = vmatpush2.bf16.msra.mxu0 0
      %3223 = vmatprep.subr.bf16.mxu0 0
      %3224 = vmatpush2.bf16.msra.mxu0 0
      %3225 = vmatprep.subr.bf16.mxu0 0
      %3226 = vmatpush2.bf16.msra.mxu0 0
      %3227 = vmatprep.mubr.bf16.mxu0 0
      %3228 = vmatmul.mubr.bf16.gmra.mxu0 %v3189
      %v3229 = vpop.f32.mrf.mxu0
      %v3230 = vadd.f32 0.0, %v3229
      %v3231 = vpop.f32.mrf.mxu0
      %v3232 = vpop.f32.mrf.mxu0
      %v3233 = vpop.f32.mrf.mxu0
      %3234 = vdwg.mxu0
      %3235 = vrot.lane.b32.xlu0 %v3120, 120
      %v3236 = vpop.permute.xlu0 %3235
      %3237 = vrot.lane.b32.xlu0 %v3120, 88
      %v3238 = vpop.permute.xlu0 %3237
      %v3240 = vsel %vm1236, %v3236, 0
      %v3243 = vsel %vm1236, %v3238, 0
      %3245 = vmatprep.subr.bf16.mxu0 0
      %3246 = vmatpush1.bf16.xpose.msra.mxu0 0
      %3247 = vmatprep.subr.bf16.mxu0 0
      %3248 = vmatpush1.bf16.xpose.msra.mxu0 0
      %3249 = vmatprep.subr.bf16.mxu0 0
      %3250 = vmatpush1.bf16.xpose.msra.mxu0 0
      %3251 = vmatprep.subr.bf16.mxu0 0
      %3252 = vmatpush1.bf16.xpose.msra.mxu0 0
      %3253 = vmatprep.subr.bf16.mxu0 0
      %3254 = vmatpush1.bf16.xpose.msra.mxu0 0
      %3255 = vmatprep.subr.bf16.mxu0 0
      %3256 = vmatpush1.bf16.xpose.msra.mxu0 0
      %3257 = vmatprep.subr.bf16.mxu0 0
      %3258 = vmatpush1.bf16.xpose.msra.mxu0 0
      %3259 = vmatprep.subr.bf16.mxu0 0
      %3260 = vmatpush1.bf16.xpose.msra.mxu0 %v3243
      %3261 = vmatprep.subr.bf16.mxu0 0
      %3262 = vmatpush2.bf16.xpose.msra.mxu0 0
      %3263 = vmatprep.subr.bf16.mxu0 0
      %3264 = vmatpush2.bf16.xpose.msra.mxu0 0
      %3265 = vmatprep.subr.bf16.mxu0 0
      %3266 = vmatpush2.bf16.xpose.msra.mxu0 0
      %3267 = vmatprep.subr.bf16.mxu0 0
      %3268 = vmatpush2.bf16.xpose.msra.mxu0 0
      %3269 = vmatprep.subr.bf16.mxu0 0
      %3270 = vmatpush2.bf16.xpose.msra.mxu0 0
      %3271 = vmatprep.subr.bf16.mxu0 0
      %3272 = vmatpush2.bf16.xpose.msra.mxu0 0
      %3273 = vmatprep.subr.bf16.mxu0 0
      %3274 = vmatpush2.bf16.xpose.msra.mxu0 0
      %3275 = vmatprep.subr.bf16.mxu0 0
      %3276 = vmatpush2.bf16.xpose.msra.mxu0 0
      %3277 = vmatprep.mubr.bf16.mxu0 0
      %3278 = vmatmul.mubr.bf16.gmra.mxu0 %v3240
      %v3279 = vpop.f32.mrf.mxu0
      %v3280 = vadd.f32 0.0, %v3279
      %v3281 = vpop.f32.mrf.mxu0
      %v3282 = vpop.f32.mrf.mxu0
      %v3283 = vpop.f32.mrf.mxu0
      %3284 = vdwg.mxu0
      %v3285 = vmul.f32 %v3280, 0.35355338
      %v3286 = vadd.f32 %v3285, %v3046
      %v3287 = vsel %vm3172, %v3286, -inf
      %3288 = vmax.xlane.f32.xlu0 %v3287
      %v3289 = vpop.xlane.xlu0 %3288
      %v3290 = vsub.f32 %v3286, %v3289
      %v3291 = vmul.f32 %v3290, 1.442695
      %v3292 = vpow.pop %v3291
      %v3293 = vsel %vm3172, %v3292, 0.0
      %3294 = vadd.xlane.f32.xlu0 %v3293
      %v3295 = vpop.xlane.xlu0 %3294
      %v3296 = vrcp.pop %v3295
      %v3297 = vmul.f32 %v3292, %v3296
      %v3298 = vpack.c.bf16 %v3297, %v3297
      %3299 = vrot.lane.b32.xlu0 %v3120, 56
      %v3300 = vpop.permute.xlu0 %3299
      %v3302 = vsel %vm3187, %v3298, 0
      %v3305 = vsel %vm3191, %v3300, 0
      %3307 = vmatprep.subr.bf16.mxu0 0
      %3308 = vmatpush1.bf16.msra.mxu0 0
      %3309 = vmatprep.subr.bf16.mxu0 0
      %3310 = vmatpush1.bf16.msra.mxu0 0
      %3311 = vmatprep.subr.bf16.mxu0 0
      %3312 = vmatpush1.bf16.msra.mxu0 0
      %3313 = vmatprep.subr.bf16.mxu0 0
      %3314 = vmatpush1.bf16.msra.mxu0 0
      %3315 = vmatprep.subr.bf16.mxu0 0
      %3316 = vmatpush1.bf16.msra.mxu0 0
      %3317 = vmatprep.subr.bf16.mxu0 0
      %3318 = vmatpush1.bf16.msra.mxu0 0
      %3319 = vmatprep.subr.bf16.mxu0 0
      %3320 = vmatpush1.bf16.msra.mxu0 0
      %3321 = vmatprep.subr.bf16.mxu0 0
      %3322 = vmatpush1.bf16.msra.mxu0 %v3305
      %3323 = vmatprep.subr.bf16.mxu0 0
      %3324 = vmatpush2.bf16.msra.mxu0 0
      %3325 = vmatprep.subr.bf16.mxu0 0
      %3326 = vmatpush2.bf16.msra.mxu0 0
      %3327 = vmatprep.subr.bf16.mxu0 0
      %3328 = vmatpush2.bf16.msra.mxu0 0
      %3329 = vmatprep.subr.bf16.mxu0 0
      %3330 = vmatpush2.bf16.msra.mxu0 0
      %3331 = vmatprep.subr.bf16.mxu0 0
      %3332 = vmatpush2.bf16.msra.mxu0 0
      %3333 = vmatprep.subr.bf16.mxu0 0
      %3334 = vmatpush2.bf16.msra.mxu0 0
      %3335 = vmatprep.subr.bf16.mxu0 0
      %3336 = vmatpush2.bf16.msra.mxu0 0
      %3337 = vmatprep.subr.bf16.mxu0 0
      %3338 = vmatpush2.bf16.msra.mxu0 0
      %3339 = vmatprep.mubr.bf16.mxu0 0
      %3340 = vmatmul.mubr.bf16.gmra.mxu0 %v3302
      %v3341 = vpop.f32.mrf.mxu0
      %v3342 = vadd.f32 0.0, %v3341
      %v3343 = vpop.f32.mrf.mxu0
      %v3344 = vpop.f32.mrf.mxu0
      %v3345 = vpop.f32.mrf.mxu0
      %3346 = vdwg.mxu0
      %3347 = vrot.lane.b32.xlu0 %v3120, 112
      %v3348 = vpop.permute.xlu0 %3347
      %3349 = vrot.lane.b32.xlu0 %v3120, 80
      %v3350 = vpop.permute.xlu0 %3349
      %v3352 = vsel %vm1236, %v3348, 0
      %v3355 = vsel %vm1236, %v3350, 0
      %3357 = vmatprep.subr.bf16.mxu0 0
      %3358 = vmatpush1.bf16.xpose.msra.mxu0 0
      %3359 = vmatprep.subr.bf16.mxu0 0
      %3360 = vmatpush1.bf16.xpose.msra.mxu0 0
      %3361 = vmatprep.subr.bf16.mxu0 0
      %3362 = vmatpush1.bf16.xpose.msra.mxu0 0
      %3363 = vmatprep.subr.bf16.mxu0 0
      %3364 = vmatpush1.bf16.xpose.msra.mxu0 0
      %3365 = vmatprep.subr.bf16.mxu0 0
      %3366 = vmatpush1.bf16.xpose.msra.mxu0 0
      %3367 = vmatprep.subr.bf16.mxu0 0
      %3368 = vmatpush1.bf16.xpose.msra.mxu0 0
      %3369 = vmatprep.subr.bf16.mxu0 0
      %3370 = vmatpush1.bf16.xpose.msra.mxu0 0
      %3371 = vmatprep.subr.bf16.mxu0 0
      %3372 = vmatpush1.bf16.xpose.msra.mxu0 %v3355
      %3373 = vmatprep.subr.bf16.mxu0 0
      %3374 = vmatpush2.bf16.xpose.msra.mxu0 0
      %3375 = vmatprep.subr.bf16.mxu0 0
      %3376 = vmatpush2.bf16.xpose.msra.mxu0 0
      %3377 = vmatprep.subr.bf16.mxu0 0
      %3378 = vmatpush2.bf16.xpose.msra.mxu0 0
      %3379 = vmatprep.subr.bf16.mxu0 0
      %3380 = vmatpush2.bf16.xpose.msra.mxu0 0
      %3381 = vmatprep.subr.bf16.mxu0 0
      %3382 = vmatpush2.bf16.xpose.msra.mxu0 0
      %3383 = vmatprep.subr.bf16.mxu0 0
      %3384 = vmatpush2.bf16.xpose.msra.mxu0 0
      %3385 = vmatprep.subr.bf16.mxu0 0
      %3386 = vmatpush2.bf16.xpose.msra.mxu0 0
      %3387 = vmatprep.subr.bf16.mxu0 0
      %3388 = vmatpush2.bf16.xpose.msra.mxu0 0
      %3389 = vmatprep.mubr.bf16.mxu0 0
      %3390 = vmatmul.mubr.bf16.gmra.mxu0 %v3352
      %v3391 = vpop.f32.mrf.mxu0
      %v3392 = vadd.f32 0.0, %v3391
      %v3393 = vpop.f32.mrf.mxu0
      %v3394 = vpop.f32.mrf.mxu0
      %v3395 = vpop.f32.mrf.mxu0
      %3396 = vdwg.mxu0
      %v3397 = vmul.f32 %v3392, 0.35355338
      %v3398 = vadd.f32 %v3397, %v3046
      %v3399 = vsel %vm3172, %v3398, -inf
      %3400 = vmax.xlane.f32.xlu0 %v3399
      %v3401 = vpop.xlane.xlu0 %3400
      %v3402 = vsub.f32 %v3398, %v3401
      %v3403 = vmul.f32 %v3402, 1.442695
      %v3404 = vpow.pop %v3403
      %v3405 = vsel %vm3172, %v3404, 0.0
      %3406 = vadd.xlane.f32.xlu0 %v3405
      %v3407 = vpop.xlane.xlu0 %3406
      %v3408 = vrcp.pop %v3407
      %v3409 = vmul.f32 %v3404, %v3408
      %v3410 = vpack.c.bf16 %v3409, %v3409
      %3411 = vrot.lane.b32.xlu0 %v3120, 48
      %v3412 = vpop.permute.xlu0 %3411
      %v3414 = vsel %vm3187, %v3410, 0
      %v3417 = vsel %vm3191, %v3412, 0
      %3419 = vmatprep.subr.bf16.mxu0 0
      %3420 = vmatpush1.bf16.msra.mxu0 0
      %3421 = vmatprep.subr.bf16.mxu0 0
      %3422 = vmatpush1.bf16.msra.mxu0 0
      %3423 = vmatprep.subr.bf16.mxu0 0
      %3424 = vmatpush1.bf16.msra.mxu0 0
      %3425 = vmatprep.subr.bf16.mxu0 0
      %3426 = vmatpush1.bf16.msra.mxu0 0
      %3427 = vmatprep.subr.bf16.mxu0 0
      %3428 = vmatpush1.bf16.msra.mxu0 0
      %3429 = vmatprep.subr.bf16.mxu0 0
      %3430 = vmatpush1.bf16.msra.mxu0 0
      %3431 = vmatprep.subr.bf16.mxu0 0
      %3432 = vmatpush1.bf16.msra.mxu0 0
      %3433 = vmatprep.subr.bf16.mxu0 0
      %3434 = vmatpush1.bf16.msra.mxu0 %v3417
      %3435 = vmatprep.subr.bf16.mxu0 0
      %3436 = vmatpush2.bf16.msra.mxu0 0
      %3437 = vmatprep.subr.bf16.mxu0 0
      %3438 = vmatpush2.bf16.msra.mxu0 0
      %3439 = vmatprep.subr.bf16.mxu0 0
      %3440 = vmatpush2.bf16.msra.mxu0 0
      %3441 = vmatprep.subr.bf16.mxu0 0
      %3442 = vmatpush2.bf16.msra.mxu0 0
      %3443 = vmatprep.subr.bf16.mxu0 0
      %3444 = vmatpush2.bf16.msra.mxu0 0
      %3445 = vmatprep.subr.bf16.mxu0 0
      %3446 = vmatpush2.bf16.msra.mxu0 0
      %3447 = vmatprep.subr.bf16.mxu0 0
      %3448 = vmatpush2.bf16.msra.mxu0 0
      %3449 = vmatprep.subr.bf16.mxu0 0
      %3450 = vmatpush2.bf16.msra.mxu0 0
      %3451 = vmatprep.mubr.bf16.mxu0 0
      %3452 = vmatmul.mubr.bf16.gmra.mxu0 %v3414
      %v3453 = vpop.f32.mrf.mxu0
      %v3454 = vadd.f32 0.0, %v3453
      %v3455 = vpop.f32.mrf.mxu0
      %v3456 = vpop.f32.mrf.mxu0
      %v3457 = vpop.f32.mrf.mxu0
      %3458 = vdwg.mxu0
      %3459 = vrot.lane.b32.xlu0 %v3120, 104
      %v3460 = vpop.permute.xlu0 %3459
      %3461 = vrot.lane.b32.xlu0 %v3120, 72
      %v3462 = vpop.permute.xlu0 %3461
      %v3464 = vsel %vm1236, %v3460, 0
      %v3467 = vsel %vm1236, %v3462, 0
      %3469 = vmatprep.subr.bf16.mxu0 0
      %3470 = vmatpush1.bf16.xpose.msra.mxu0 0
      %3471 = vmatprep.subr.bf16.mxu0 0
      %3472 = vmatpush1.bf16.xpose.msra.mxu0 0
      %3473 = vmatprep.subr.bf16.mxu0 0
      %3474 = vmatpush1.bf16.xpose.msra.mxu0 0
      %3475 = vmatprep.subr.bf16.mxu0 0
      %3476 = vmatpush1.bf16.xpose.msra.mxu0 0
      %3477 = vmatprep.subr.bf16.mxu0 0
      %3478 = vmatpush1.bf16.xpose.msra.mxu0 0
      %3479 = vmatprep.subr.bf16.mxu0 0
      %3480 = vmatpush1.bf16.xpose.msra.mxu0 0
      %3481 = vmatprep.subr.bf16.mxu0 0
      %3482 = vmatpush1.bf16.xpose.msra.mxu0 0
      %3483 = vmatprep.subr.bf16.mxu0 0
      %3484 = vmatpush1.bf16.xpose.msra.mxu0 %v3467
      %3485 = vmatprep.subr.bf16.mxu0 0
      %3486 = vmatpush2.bf16.xpose.msra.mxu0 0
      %3487 = vmatprep.subr.bf16.mxu0 0
      %3488 = vmatpush2.bf16.xpose.msra.mxu0 0
      %3489 = vmatprep.subr.bf16.mxu0 0
      %3490 = vmatpush2.bf16.xpose.msra.mxu0 0
      %3491 = vmatprep.subr.bf16.mxu0 0
      %3492 = vmatpush2.bf16.xpose.msra.mxu0 0
      %3493 = vmatprep.subr.bf16.mxu0 0
      %3494 = vmatpush2.bf16.xpose.msra.mxu0 0
      %3495 = vmatprep.subr.bf16.mxu0 0
      %3496 = vmatpush2.bf16.xpose.msra.mxu0 0
      %3497 = vmatprep.subr.bf16.mxu0 0
      %3498 = vmatpush2.bf16.xpose.msra.mxu0 0
      %3499 = vmatprep.subr.bf16.mxu0 0
      %3500 = vmatpush2.bf16.xpose.msra.mxu0 0
      %3501 = vmatprep.mubr.bf16.mxu0 0
      %3502 = vmatmul.mubr.bf16.gmra.mxu0 %v3464
      %v3503 = vpop.f32.mrf.mxu0
      %v3504 = vadd.f32 0.0, %v3503
      %v3505 = vpop.f32.mrf.mxu0
      %v3506 = vpop.f32.mrf.mxu0
      %v3507 = vpop.f32.mrf.mxu0
      %3508 = vdwg.mxu0
      %v3509 = vmul.f32 %v3504, 0.35355338
      %v3510 = vadd.f32 %v3509, %v3046
      %v3511 = vsel %vm3172, %v3510, -inf
      %3512 = vmax.xlane.f32.xlu0 %v3511
      %v3513 = vpop.xlane.xlu0 %3512
      %v3514 = vsub.f32 %v3510, %v3513
      %v3515 = vmul.f32 %v3514, 1.442695
      %v3516 = vpow.pop %v3515
      %v3517 = vsel %vm3172, %v3516, 0.0
      %3518 = vadd.xlane.f32.xlu0 %v3517
      %v3519 = vpop.xlane.xlu0 %3518
      %v3520 = vrcp.pop %v3519
      %v3521 = vmul.f32 %v3516, %v3520
      %v3522 = vpack.c.bf16 %v3521, %v3521
      %3523 = vrot.lane.b32.xlu0 %v3120, 40
      %v3524 = vpop.permute.xlu0 %3523
      %v3526 = vsel %vm3187, %v3522, 0
      %v3529 = vsel %vm3191, %v3524, 0
      %3531 = vmatprep.subr.bf16.mxu0 0
      %3532 = vmatpush1.bf16.msra.mxu0 0
      %3533 = vmatprep.subr.bf16.mxu0 0
      %3534 = vmatpush1.bf16.msra.mxu0 0
      %3535 = vmatprep.subr.bf16.mxu0 0
      %3536 = vmatpush1.bf16.msra.mxu0 0
      %3537 = vmatprep.subr.bf16.mxu0 0
      %3538 = vmatpush1.bf16.msra.mxu0 0
      %3539 = vmatprep.subr.bf16.mxu0 0
      %3540 = vmatpush1.bf16.msra.mxu0 0
      %3541 = vmatprep.subr.bf16.mxu0 0
      %3542 = vmatpush1.bf16.msra.mxu0 0
      %3543 = vmatprep.subr.bf16.mxu0 0
      %3544 = vmatpush1.bf16.msra.mxu0 0
      %3545 = vmatprep.subr.bf16.mxu0 0
      %3546 = vmatpush1.bf16.msra.mxu0 %v3529
      %3547 = vmatprep.subr.bf16.mxu0 0
      %3548 = vmatpush2.bf16.msra.mxu0 0
      %3549 = vmatprep.subr.bf16.mxu0 0
      %3550 = vmatpush2.bf16.msra.mxu0 0
      %3551 = vmatprep.subr.bf16.mxu0 0
      %3552 = vmatpush2.bf16.msra.mxu0 0
      %3553 = vmatprep.subr.bf16.mxu0 0
      %3554 = vmatpush2.bf16.msra.mxu0 0
      %3555 = vmatprep.subr.bf16.mxu0 0
      %3556 = vmatpush2.bf16.msra.mxu0 0
      %3557 = vmatprep.subr.bf16.mxu0 0
      %3558 = vmatpush2.bf16.msra.mxu0 0
      %3559 = vmatprep.subr.bf16.mxu0 0
      %3560 = vmatpush2.bf16.msra.mxu0 0
      %3561 = vmatprep.subr.bf16.mxu0 0
      %3562 = vmatpush2.bf16.msra.mxu0 0
      %3563 = vmatprep.mubr.bf16.mxu0 0
      %3564 = vmatmul.mubr.bf16.gmra.mxu0 %v3526
      %v3565 = vpop.f32.mrf.mxu0
      %v3566 = vadd.f32 0.0, %v3565
      %v3567 = vpop.f32.mrf.mxu0
      %v3568 = vpop.f32.mrf.mxu0
      %v3569 = vpop.f32.mrf.mxu0
      %3570 = vdwg.mxu0
      %3572 = vrot.lane.b32.xlu0 %v3342, 8
      %v3573 = vpop.permute.xlu0 %3572
      %3576 = vrot.lane.b32.xlu0 %v3454, 16
      %v3577 = vpop.permute.xlu0 %3576
      %3580 = vrot.lane.b32.xlu0 %v3566, 24
      %v3581 = vpop.permute.xlu0 %3580
      %v3583 = vsel %vm1236, %v3230, %v3573
      %v3584 = vsel %vm1765, %v3583, %v3577
      %v3585 = vsel %vm1768, %v3584, %v3581
      %v3586 = vpack.c.bf16 %v3585, %v3585
      %v3588 = vlaneseq
      %v3589 = vshrl.u32 %v3588, 7
      %v3590 = vsub.s32 0, %v3589
      %v3591 = vrot.slane %v3058, %v3590
      %v3597 = vunpack.c.l.b16 %v3054
      %v3598 = vunpack.c.l.b16 %v3055
      %v3599 = vunpack.c.l.b16 %v3056
      %v3600 = vunpack.c.l.b16 %v3057
      %v3601 = vpack.c.b16 %v3598, %v3597
      %v3602 = vpack.c.b16 %v3600, %v3599
      %v3606 = vsel %vm1113, %v3586, 0
      %3608 = vmatprep.subr.bf16.mxu0 0
      %3609 = vmatpush1.bf16.msra.mxu0 0
      %3610 = vmatprep.subr.bf16.mxu0 0
      %3611 = vmatpush1.bf16.msra.mxu0 0
      %3612 = vmatprep.subr.bf16.mxu0 0
      %3613 = vmatpush1.bf16.msra.mxu0 0
      %3614 = vmatprep.subr.bf16.mxu0 0
      %3615 = vmatpush1.bf16.msra.mxu0 0
      %3616 = vmatprep.subr.bf16.mxu0 0
      %3617 = vmatpush1.bf16.msra.mxu0 0
      %3618 = vmatprep.subr.bf16.mxu0 0
      %3619 = vmatpush1.bf16.msra.mxu0 0
      %3620 = vmatprep.subr.bf16.mxu0 0
      %3621 = vmatpush1.bf16.msra.mxu0 %v3602
      %3622 = vmatprep.subr.bf16.mxu0 0
      %3623 = vmatpush1.bf16.msra.mxu0 %v3601
      %3624 = vmatprep.subr.bf16.mxu0 0
      %3625 = vmatpush2.bf16.msra.mxu0 0
      %3626 = vmatprep.subr.bf16.mxu0 0
      %3627 = vmatpush2.bf16.msra.mxu0 0
      %3628 = vmatprep.subr.bf16.mxu0 0
      %3629 = vmatpush2.bf16.msra.mxu0 0
      %3630 = vmatprep.subr.bf16.mxu0 0
      %3631 = vmatpush2.bf16.msra.mxu0 0
      %3632 = vmatprep.subr.bf16.mxu0 0
      %3633 = vmatpush2.bf16.msra.mxu0 0
      %3634 = vmatprep.subr.bf16.mxu0 0
      %3635 = vmatpush2.bf16.msra.mxu0 0
      %3636 = vmatprep.subr.bf16.mxu0 0
      %3637 = vmatpush2.bf16.msra.mxu0 0
      %3638 = vmatprep.subr.bf16.mxu0 0
      %3639 = vmatpush2.bf16.msra.mxu0 0
      %3640 = vmatprep.mubr.bf16.mxu0 0
      %3641 = vmatmul.mubr.bf16.gmra.mxu0 %v3606
      %v3642 = vpop.f32.mrf.mxu0
      %v3643 = vadd.f32 %v3591, %v3642
      %v3644 = vpop.f32.mrf.mxu0
      %v3645 = vpop.f32.mrf.mxu0
      %v3646 = vpop.f32.mrf.mxu0
      %3647 = vdwg.mxu0
      %v3648 = vadd.f32 %v3040, %v3643
      %vm3649 = vcmask 259072
      %v3650 = vsel %vm3649, %v3648, 0.0
      %3651 = vadd.xlane.f32.xlu0 %v3650
      %v3652 = vpop.xlane.xlu0 %3651
      %v3653 = vmul.f32 %v3652, %v1843
      %v3654 = vsub.f32 %v3648, %v3653
      %v3655 = vmul.f32 %v3654, %v3654
      %v3656 = vsel %vm3649, %v3655, 0.0
      %3657 = vadd.xlane.f32.xlu0 %v3656
      %v3658 = vpop.xlane.xlu0 %3657
      %v3659 = vmul.f32 %v3658, %v1843
      %v3660 = vadd.f32 %v3659, 1e-05
      %v3661 = vrsqrt.pop %v3660
      %v3662 = vmul.f32 %v3654, %v3661
      %v3663 = vlaneseq
      %v3664 = vshrl.u32 %v3663, 7
      %v3665 = vsub.s32 0, %v3664
      %v3666 = vrot.slane %v3047, %v3665
      %v3667 = vmul.f32 %v3662, %v3666
      %v3668 = vlaneseq
      %v3669 = vshrl.u32 %v3668, 7
      %v3670 = vsub.s32 1, %v3669
      %v3671 = vrot.slane %v3047, %v3670
      %v3672 = vadd.f32 %v3667, %v3671
      %v3673 = vpack.c.bf16 %v3672, %v3672
      %v3674 = vld [vmem:[%s35] sm:$0xf]
      %v3675 = vld [vmem:[%s35 + $0x4] sm:$0xf]
      %v3676 = vld [vmem:[%s35 + $0x8] sm:$0xf]
      %v3677 = vld [vmem:[%s35 + $0xc] sm:$0xf]
      %v3678 = vld [vmem:[%s37] sm:$0x1]
      %v3679 = vld [vmem:[%s39] sm:$0xf]
      %v3680 = vld [vmem:[%s39 + $0x4] sm:$0xf]
      %v3681 = vld [vmem:[%s39 + $0x8] sm:$0xf]
      %v3682 = vld [vmem:[%s39 + $0xc] sm:$0xf]
      %v3683 = vld [vmem:[%s41] sm:$0x1]
      %v3684 = vld [vmem:[%s43] sm:$0xf]
      %v3685 = vld [vmem:[%s43 + $0x4] sm:$0xf]
      %v3686 = vld [vmem:[%s43 + $0x8] sm:$0xf]
      %v3687 = vld [vmem:[%s43 + $0xc] sm:$0xf]
      %v3688 = vld [vmem:[%s45] sm:$0x1]
      %v3690 = vlaneseq
      %v3691 = vshrl.u32 %v3690, 7
      %v3692 = vsub.s32 0, %v3691
      %v3693 = vrot.slane %v3678, %v3692
      %v3699 = vunpack.c.l.b16 %v3674
      %v3700 = vunpack.c.l.b16 %v3675
      %v3701 = vunpack.c.l.b16 %v3676
      %v3702 = vunpack.c.l.b16 %v3677
      %v3703 = vpack.c.b16 %v3700, %v3699
      %v3704 = vpack.c.b16 %v3702, %v3701
      %v3708 = vsel %vm1113, %v3673, 0
      %3710 = vmatprep.subr.bf16.mxu0 0
      %3711 = vmatpush1.bf16.msra.mxu0 0
      %3712 = vmatprep.subr.bf16.mxu0 0
      %3713 = vmatpush1.bf16.msra.mxu0 0
      %3714 = vmatprep.subr.bf16.mxu0 0
      %3715 = vmatpush1.bf16.msra.mxu0 0
      %3716 = vmatprep.subr.bf16.mxu0 0
      %3717 = vmatpush1.bf16.msra.mxu0 0
      %3718 = vmatprep.subr.bf16.mxu0 0
      %3719 = vmatpush1.bf16.msra.mxu0 0
      %3720 = vmatprep.subr.bf16.mxu0 0
      %3721 = vmatpush1.bf16.msra.mxu0 0
      %3722 = vmatprep.subr.bf16.mxu0 0
      %3723 = vmatpush1.bf16.msra.mxu0 %v3704
      %3724 = vmatprep.subr.bf16.mxu0 0
      %3725 = vmatpush1.bf16.msra.mxu0 %v3703
      %3726 = vmatprep.subr.bf16.mxu0 0
      %3727 = vmatpush2.bf16.msra.mxu0 0
      %3728 = vmatprep.subr.bf16.mxu0 0
      %3729 = vmatpush2.bf16.msra.mxu0 0
      %3730 = vmatprep.subr.bf16.mxu0 0
      %3731 = vmatpush2.bf16.msra.mxu0 0
      %3732 = vmatprep.subr.bf16.mxu0 0
      %3733 = vmatpush2.bf16.msra.mxu0 0
      %3734 = vmatprep.subr.bf16.mxu0 0
      %3735 = vmatpush2.bf16.msra.mxu0 0
      %3736 = vmatprep.subr.bf16.mxu0 0
      %3737 = vmatpush2.bf16.msra.mxu0 0
      %3738 = vmatprep.subr.bf16.mxu0 0
      %3739 = vmatpush2.bf16.msra.mxu0 0
      %3740 = vmatprep.subr.bf16.mxu0 0
      %3741 = vmatpush2.bf16.msra.mxu0 0
      %3742 = vmatprep.mubr.bf16.mxu0 0
      %3743 = vmatmul.mubr.bf16.gmra.mxu0 %v3708
      %v3744 = vpop.f32.mrf.mxu0
      %v3745 = vadd.f32 %v3693, %v3744
      %v3746 = vpop.f32.mrf.mxu0
      %v3747 = vpop.f32.mrf.mxu0
      %v3748 = vpop.f32.mrf.mxu0
      %3749 = vdwg.mxu0
      %v3751 = vlaneseq
      %v3752 = vshrl.u32 %v3751, 7
      %v3753 = vsub.s32 0, %v3752
      %v3754 = vrot.slane %v3683, %v3753
      %v3760 = vunpack.c.l.b16 %v3679
      %v3761 = vunpack.c.l.b16 %v3680
      %v3762 = vunpack.c.l.b16 %v3681
      %v3763 = vunpack.c.l.b16 %v3682
      %v3764 = vpack.c.b16 %v3761, %v3760
      %v3765 = vpack.c.b16 %v3763, %v3762
      %v3769 = vsel %vm1113, %v3038, 0
      %3771 = vmatprep.subr.bf16.mxu0 0
      %3772 = vmatpush1.bf16.msra.mxu0 0
      %3773 = vmatprep.subr.bf16.mxu0 0
      %3774 = vmatpush1.bf16.msra.mxu0 0
      %3775 = vmatprep.subr.bf16.mxu0 0
      %3776 = vmatpush1.bf16.msra.mxu0 0
      %3777 = vmatprep.subr.bf16.mxu0 0
      %3778 = vmatpush1.bf16.msra.mxu0 0
      %3779 = vmatprep.subr.bf16.mxu0 0
      %3780 = vmatpush1.bf16.msra.mxu0 0
      %3781 = vmatprep.subr.bf16.mxu0 0
      %3782 = vmatpush1.bf16.msra.mxu0 0
      %3783 = vmatprep.subr.bf16.mxu0 0
      %3784 = vmatpush1.bf16.msra.mxu0 %v3765
      %3785 = vmatprep.subr.bf16.mxu0 0
      %3786 = vmatpush1.bf16.msra.mxu0 %v3764
      %3787 = vmatprep.subr.bf16.mxu0 0
      %3788 = vmatpush2.bf16.msra.mxu0 0
      %3789 = vmatprep.subr.bf16.mxu0 0
      %3790 = vmatpush2.bf16.msra.mxu0 0
      %3791 = vmatprep.subr.bf16.mxu0 0
      %3792 = vmatpush2.bf16.msra.mxu0 0
      %3793 = vmatprep.subr.bf16.mxu0 0
      %3794 = vmatpush2.bf16.msra.mxu0 0
      %3795 = vmatprep.subr.bf16.mxu0 0
      %3796 = vmatpush2.bf16.msra.mxu0 0
      %3797 = vmatprep.subr.bf16.mxu0 0
      %3798 = vmatpush2.bf16.msra.mxu0 0
      %3799 = vmatprep.subr.bf16.mxu0 0
      %3800 = vmatpush2.bf16.msra.mxu0 0
      %3801 = vmatprep.subr.bf16.mxu0 0
      %3802 = vmatpush2.bf16.msra.mxu0 0
      %3803 = vmatprep.mubr.bf16.mxu0 0
      %3804 = vmatmul.mubr.bf16.gmra.mxu0 %v3769
      %v3805 = vpop.f32.mrf.mxu0
      %v3806 = vadd.f32 %v3754, %v3805
      %v3807 = vpop.f32.mrf.mxu0
      %v3808 = vpop.f32.mrf.mxu0
      %v3809 = vpop.f32.mrf.mxu0
      %3810 = vdwg.mxu0
      %v3811 = vpack.c.bf16 %v3745, %v3745
      %v3812 = vpack.c.bf16 %v3806, %v3806
      %v3814 = vsel %vm1236, %v3811, 0
      %v3817 = vsel %vm1236, %v3812, 0
      %3819 = vmatprep.subr.bf16.mxu0 0
      %3820 = vmatpush1.bf16.xpose.msra.mxu0 0
      %3821 = vmatprep.subr.bf16.mxu0 0
      %3822 = vmatpush1.bf16.xpose.msra.mxu0 0
      %3823 = vmatprep.subr.bf16.mxu0 0
      %3824 = vmatpush1.bf16.xpose.msra.mxu0 0
      %3825 = vmatprep.subr.bf16.mxu0 0
      %3826 = vmatpush1.bf16.xpose.msra.mxu0 0
      %3827 = vmatprep.subr.bf16.mxu0 0
      %3828 = vmatpush1.bf16.xpose.msra.mxu0 0
      %3829 = vmatprep.subr.bf16.mxu0 0
      %3830 = vmatpush1.bf16.xpose.msra.mxu0 0
      %3831 = vmatprep.subr.bf16.mxu0 0
      %3832 = vmatpush1.bf16.xpose.msra.mxu0 0
      %3833 = vmatprep.subr.bf16.mxu0 0
      %3834 = vmatpush1.bf16.xpose.msra.mxu0 %v3817
      %3835 = vmatprep.subr.bf16.mxu0 0
      %3836 = vmatpush2.bf16.xpose.msra.mxu0 0
      %3837 = vmatprep.subr.bf16.mxu0 0
      %3838 = vmatpush2.bf16.xpose.msra.mxu0 0
      %3839 = vmatprep.subr.bf16.mxu0 0
      %3840 = vmatpush2.bf16.xpose.msra.mxu0 0
      %3841 = vmatprep.subr.bf16.mxu0 0
      %3842 = vmatpush2.bf16.xpose.msra.mxu0 0
      %3843 = vmatprep.subr.bf16.mxu0 0
      %3844 = vmatpush2.bf16.xpose.msra.mxu0 0
      %3845 = vmatprep.subr.bf16.mxu0 0
      %3846 = vmatpush2.bf16.xpose.msra.mxu0 0
      %3847 = vmatprep.subr.bf16.mxu0 0
      %3848 = vmatpush2.bf16.xpose.msra.mxu0 0
      %3849 = vmatprep.subr.bf16.mxu0 0
      %3850 = vmatpush2.bf16.xpose.msra.mxu0 0
      %3851 = vmatprep.mubr.bf16.mxu0 0
      %3852 = vmatmul.mubr.bf16.gmra.mxu0 %v3814
      %v3853 = vpop.f32.mrf.mxu0
      %v3854 = vadd.f32 0.0, %v3853
      %v3855 = vpop.f32.mrf.mxu0
      %v3856 = vpop.f32.mrf.mxu0
      %v3857 = vpop.f32.mrf.mxu0
      %3858 = vdwg.mxu0
      %v3859 = vmul.f32 %v3854, 0.35355338
      %vm3860 = vcmask 62464
      %v3861 = vsel %vm3860, %v3859, -inf
      %3862 = vmax.xlane.f32.xlu0 %v3861
      %v3863 = vpop.xlane.xlu0 %3862
      %v3864 = vsub.f32 %v3859, %v3863
      %v3865 = vmul.f32 %v3864, 1.442695
      %v3866 = vpow.pop %v3865
      %v3867 = vsel %vm3860, %v3866, 0.0
      %3868 = vadd.xlane.f32.xlu0 %v3867
      %v3869 = vpop.xlane.xlu0 %3868
      %v3870 = vrcp.pop %v3869
      %v3871 = vmul.f32 %v3866, %v3870
      %v3872 = vpack.c.bf16 %v3871, %v3871
      %3874 = vrot.lane.b32.xlu0 %v3812, 96
      %v3875 = vpop.permute.xlu0 %3874
      %v3877 = vsel %vm1236, %v3872, 0
      %v3880 = vsel %vm1316, %v3875, 0
      %3882 = vmatprep.subr.bf16.mxu0 0
      %3883 = vmatpush1.bf16.msra.mxu0 0
      %3884 = vmatprep.subr.bf16.mxu0 0
      %3885 = vmatpush1.bf16.msra.mxu0 0
      %3886 = vmatprep.subr.bf16.mxu0 0
      %3887 = vmatpush1.bf16.msra.mxu0 0
      %3888 = vmatprep.subr.bf16.mxu0 0
      %3889 = vmatpush1.bf16.msra.mxu0 0
      %3890 = vmatprep.subr.bf16.mxu0 0
      %3891 = vmatpush1.bf16.msra.mxu0 0
      %3892 = vmatprep.subr.bf16.mxu0 0
      %3893 = vmatpush1.bf16.msra.mxu0 0
      %3894 = vmatprep.subr.bf16.mxu0 0
      %3895 = vmatpush1.bf16.msra.mxu0 0
      %3896 = vmatprep.subr.bf16.mxu0 0
      %3897 = vmatpush1.bf16.msra.mxu0 %v3880
      %3898 = vmatprep.subr.bf16.mxu0 0
      %3899 = vmatpush2.bf16.msra.mxu0 0
      %3900 = vmatprep.subr.bf16.mxu0 0
      %3901 = vmatpush2.bf16.msra.mxu0 0
      %3902 = vmatprep.subr.bf16.mxu0 0
      %3903 = vmatpush2.bf16.msra.mxu0 0
      %3904 = vmatprep.subr.bf16.mxu0 0
      %3905 = vmatpush2.bf16.msra.mxu0 0
      %3906 = vmatprep.subr.bf16.mxu0 0
      %3907 = vmatpush2.bf16.msra.mxu0 0
      %3908 = vmatprep.subr.bf16.mxu0 0
      %3909 = vmatpush2.bf16.msra.mxu0 0
      %3910 = vmatprep.subr.bf16.mxu0 0
      %3911 = vmatpush2.bf16.msra.mxu0 0
      %3912 = vmatprep.subr.bf16.mxu0 0
      %3913 = vmatpush2.bf16.msra.mxu0 0
      %3914 = vmatprep.mubr.bf16.mxu0 0
      %3915 = vmatmul.mubr.bf16.gmra.mxu0 %v3877
      %v3916 = vpop.f32.mrf.mxu0
      %v3917 = vadd.f32 0.0, %v3916
      %v3918 = vpop.f32.mrf.mxu0
      %v3919 = vpop.f32.mrf.mxu0
      %v3920 = vpop.f32.mrf.mxu0
      %3921 = vdwg.mxu0
      %3923 = vrot.lane.b32.xlu0 %v3811, 120
      %v3924 = vpop.permute.xlu0 %3923
      %3925 = vrot.lane.b32.xlu0 %v3812, 120
      %v3926 = vpop.permute.xlu0 %3925
      %v3928 = vsel %vm1236, %v3924, 0
      %v3931 = vsel %vm1236, %v3926, 0
      %3933 = vmatprep.subr.bf16.mxu0 0
      %3934 = vmatpush1.bf16.xpose.msra.mxu0 0
      %3935 = vmatprep.subr.bf16.mxu0 0
      %3936 = vmatpush1.bf16.xpose.msra.mxu0 0
      %3937 = vmatprep.subr.bf16.mxu0 0
      %3938 = vmatpush1.bf16.xpose.msra.mxu0 0
      %3939 = vmatprep.subr.bf16.mxu0 0
      %3940 = vmatpush1.bf16.xpose.msra.mxu0 0
      %3941 = vmatprep.subr.bf16.mxu0 0
      %3942 = vmatpush1.bf16.xpose.msra.mxu0 0
      %3943 = vmatprep.subr.bf16.mxu0 0
      %3944 = vmatpush1.bf16.xpose.msra.mxu0 0
      %3945 = vmatprep.subr.bf16.mxu0 0
      %3946 = vmatpush1.bf16.xpose.msra.mxu0 0
      %3947 = vmatprep.subr.bf16.mxu0 0
      %3948 = vmatpush1.bf16.xpose.msra.mxu0 %v3931
      %3949 = vmatprep.subr.bf16.mxu0 0
      %3950 = vmatpush2.bf16.xpose.msra.mxu0 0
      %3951 = vmatprep.subr.bf16.mxu0 0
      %3952 = vmatpush2.bf16.xpose.msra.mxu0 0
      %3953 = vmatprep.subr.bf16.mxu0 0
      %3954 = vmatpush2.bf16.xpose.msra.mxu0 0
      %3955 = vmatprep.subr.bf16.mxu0 0
      %3956 = vmatpush2.bf16.xpose.msra.mxu0 0
      %3957 = vmatprep.subr.bf16.mxu0 0
      %3958 = vmatpush2.bf16.xpose.msra.mxu0 0
      %3959 = vmatprep.subr.bf16.mxu0 0
      %3960 = vmatpush2.bf16.xpose.msra.mxu0 0
      %3961 = vmatprep.subr.bf16.mxu0 0
      %3962 = vmatpush2.bf16.xpose.msra.mxu0 0
      %3963 = vmatprep.subr.bf16.mxu0 0
      %3964 = vmatpush2.bf16.xpose.msra.mxu0 0
      %3965 = vmatprep.mubr.bf16.mxu0 0
      %3966 = vmatmul.mubr.bf16.gmra.mxu0 %v3928
      %v3967 = vpop.f32.mrf.mxu0
      %v3968 = vadd.f32 0.0, %v3967
      %v3969 = vpop.f32.mrf.mxu0
      %v3970 = vpop.f32.mrf.mxu0
      %v3971 = vpop.f32.mrf.mxu0
      %3972 = vdwg.mxu0
      %v3973 = vmul.f32 %v3968, 0.35355338
      %v3974 = vsel %vm3860, %v3973, -inf
      %3975 = vmax.xlane.f32.xlu0 %v3974
      %v3976 = vpop.xlane.xlu0 %3975
      %v3977 = vsub.f32 %v3973, %v3976
      %v3978 = vmul.f32 %v3977, 1.442695
      %v3979 = vpow.pop %v3978
      %v3980 = vsel %vm3860, %v3979, 0.0
      %3981 = vadd.xlane.f32.xlu0 %v3980
      %v3982 = vpop.xlane.xlu0 %3981
      %v3983 = vrcp.pop %v3982
      %v3984 = vmul.f32 %v3979, %v3983
      %v3985 = vpack.c.bf16 %v3984, %v3984
      %3986 = vrot.lane.b32.xlu0 %v3812, 88
      %v3987 = vpop.permute.xlu0 %3986
      %v3989 = vsel %vm1236, %v3985, 0
      %v3992 = vsel %vm1316, %v3987, 0
      %3994 = vmatprep.subr.bf16.mxu0 0
      %3995 = vmatpush1.bf16.msra.mxu0 0
      %3996 = vmatprep.subr.bf16.mxu0 0
      %3997 = vmatpush1.bf16.msra.mxu0 0
      %3998 = vmatprep.subr.bf16.mxu0 0
      %3999 = vmatpush1.bf16.msra.mxu0 0
      %4000 = vmatprep.subr.bf16.mxu0 0
      %4001 = vmatpush1.bf16.msra.mxu0 0
      %4002 = vmatprep.subr.bf16.mxu0 0
      %4003 = vmatpush1.bf16.msra.mxu0 0
      %4004 = vmatprep.subr.bf16.mxu0 0
      %4005 = vmatpush1.bf16.msra.mxu0 0
      %4006 = vmatprep.subr.bf16.mxu0 0
      %4007 = vmatpush1.bf16.msra.mxu0 0
      %4008 = vmatprep.subr.bf16.mxu0 0
      %4009 = vmatpush1.bf16.msra.mxu0 %v3992
      %4010 = vmatprep.subr.bf16.mxu0 0
      %4011 = vmatpush2.bf16.msra.mxu0 0
      %4012 = vmatprep.subr.bf16.mxu0 0
      %4013 = vmatpush2.bf16.msra.mxu0 0
      %4014 = vmatprep.subr.bf16.mxu0 0
      %4015 = vmatpush2.bf16.msra.mxu0 0
      %4016 = vmatprep.subr.bf16.mxu0 0
      %4017 = vmatpush2.bf16.msra.mxu0 0
      %4018 = vmatprep.subr.bf16.mxu0 0
      %4019 = vmatpush2.bf16.msra.mxu0 0
      %4020 = vmatprep.subr.bf16.mxu0 0
      %4021 = vmatpush2.bf16.msra.mxu0 0
      %4022 = vmatprep.subr.bf16.mxu0 0
      %4023 = vmatpush2.bf16.msra.mxu0 0
      %4024 = vmatprep.subr.bf16.mxu0 0
      %4025 = vmatpush2.bf16.msra.mxu0 0
      %4026 = vmatprep.mubr.bf16.mxu0 0
      %4027 = vmatmul.mubr.bf16.gmra.mxu0 %v3989
      %v4028 = vpop.f32.mrf.mxu0
      %v4029 = vadd.f32 0.0, %v4028
      %v4030 = vpop.f32.mrf.mxu0
      %v4031 = vpop.f32.mrf.mxu0
      %v4032 = vpop.f32.mrf.mxu0
      %4033 = vdwg.mxu0
      %4034 = vrot.lane.b32.xlu0 %v3811, 112
      %v4035 = vpop.permute.xlu0 %4034
      %4036 = vrot.lane.b32.xlu0 %v3812, 112
      %v4037 = vpop.permute.xlu0 %4036
      %v4039 = vsel %vm1236, %v4035, 0
      %v4042 = vsel %vm1236, %v4037, 0
      %4044 = vmatprep.subr.bf16.mxu0 0
      %4045 = vmatpush1.bf16.xpose.msra.mxu0 0
      %4046 = vmatprep.subr.bf16.mxu0 0
      %4047 = vmatpush1.bf16.xpose.msra.mxu0 0
      %4048 = vmatprep.subr.bf16.mxu0 0
      %4049 = vmatpush1.bf16.xpose.msra.mxu0 0
      %4050 = vmatprep.subr.bf16.mxu0 0
      %4051 = vmatpush1.bf16.xpose.msra.mxu0 0
      %4052 = vmatprep.subr.bf16.mxu0 0
      %4053 = vmatpush1.bf16.xpose.msra.mxu0 0
      %4054 = vmatprep.subr.bf16.mxu0 0
      %4055 = vmatpush1.bf16.xpose.msra.mxu0 0
      %4056 = vmatprep.subr.bf16.mxu0 0
      %4057 = vmatpush1.bf16.xpose.msra.mxu0 0
      %4058 = vmatprep.subr.bf16.mxu0 0
      %4059 = vmatpush1.bf16.xpose.msra.mxu0 %v4042
      %4060 = vmatprep.subr.bf16.mxu0 0
      %4061 = vmatpush2.bf16.xpose.msra.mxu0 0
      %4062 = vmatprep.subr.bf16.mxu0 0
      %4063 = vmatpush2.bf16.xpose.msra.mxu0 0
      %4064 = vmatprep.subr.bf16.mxu0 0
      %4065 = vmatpush2.bf16.xpose.msra.mxu0 0
      %4066 = vmatprep.subr.bf16.mxu0 0
      %4067 = vmatpush2.bf16.xpose.msra.mxu0 0
      %4068 = vmatprep.subr.bf16.mxu0 0
      %4069 = vmatpush2.bf16.xpose.msra.mxu0 0
      %4070 = vmatprep.subr.bf16.mxu0 0
      %4071 = vmatpush2.bf16.xpose.msra.mxu0 0
      %4072 = vmatprep.subr.bf16.mxu0 0
      %4073 = vmatpush2.bf16.xpose.msra.mxu0 0
      %4074 = vmatprep.subr.bf16.mxu0 0
      %4075 = vmatpush2.bf16.xpose.msra.mxu0 0
      %4076 = vmatprep.mubr.bf16.mxu0 0
      %4077 = vmatmul.mubr.bf16.gmra.mxu0 %v4039
      %v4078 = vpop.f32.mrf.mxu0
      %v4079 = vadd.f32 0.0, %v4078
      %v4080 = vpop.f32.mrf.mxu0
      %v4081 = vpop.f32.mrf.mxu0
      %v4082 = vpop.f32.mrf.mxu0
      %4083 = vdwg.mxu0
      %v4084 = vmul.f32 %v4079, 0.35355338
      %v4085 = vsel %vm3860, %v4084, -inf
      %4086 = vmax.xlane.f32.xlu0 %v4085
      %v4087 = vpop.xlane.xlu0 %4086
      %v4088 = vsub.f32 %v4084, %v4087
      %v4089 = vmul.f32 %v4088, 1.442695
      %v4090 = vpow.pop %v4089
      %v4091 = vsel %vm3860, %v4090, 0.0
      %4092 = vadd.xlane.f32.xlu0 %v4091
      %v4093 = vpop.xlane.xlu0 %4092
      %v4094 = vrcp.pop %v4093
      %v4095 = vmul.f32 %v4090, %v4094
      %v4096 = vpack.c.bf16 %v4095, %v4095
      %4097 = vrot.lane.b32.xlu0 %v3812, 80
      %v4098 = vpop.permute.xlu0 %4097
      %v4100 = vsel %vm1236, %v4096, 0
      %v4103 = vsel %vm1316, %v4098, 0
      %4105 = vmatprep.subr.bf16.mxu0 0
      %4106 = vmatpush1.bf16.msra.mxu0 0
      %4107 = vmatprep.subr.bf16.mxu0 0
      %4108 = vmatpush1.bf16.msra.mxu0 0
      %4109 = vmatprep.subr.bf16.mxu0 0
      %4110 = vmatpush1.bf16.msra.mxu0 0
      %4111 = vmatprep.subr.bf16.mxu0 0
      %4112 = vmatpush1.bf16.msra.mxu0 0
      %4113 = vmatprep.subr.bf16.mxu0 0
      %4114 = vmatpush1.bf16.msra.mxu0 0
      %4115 = vmatprep.subr.bf16.mxu0 0
      %4116 = vmatpush1.bf16.msra.mxu0 0
      %4117 = vmatprep.subr.bf16.mxu0 0
      %4118 = vmatpush1.bf16.msra.mxu0 0
      %4119 = vmatprep.subr.bf16.mxu0 0
      %4120 = vmatpush1.bf16.msra.mxu0 %v4103
      %4121 = vmatprep.subr.bf16.mxu0 0
      %4122 = vmatpush2.bf16.msra.mxu0 0
      %4123 = vmatprep.subr.bf16.mxu0 0
      %4124 = vmatpush2.bf16.msra.mxu0 0
      %4125 = vmatprep.subr.bf16.mxu0 0
      %4126 = vmatpush2.bf16.msra.mxu0 0
      %4127 = vmatprep.subr.bf16.mxu0 0
      %4128 = vmatpush2.bf16.msra.mxu0 0
      %4129 = vmatprep.subr.bf16.mxu0 0
      %4130 = vmatpush2.bf16.msra.mxu0 0
      %4131 = vmatprep.subr.bf16.mxu0 0
      %4132 = vmatpush2.bf16.msra.mxu0 0
      %4133 = vmatprep.subr.bf16.mxu0 0
      %4134 = vmatpush2.bf16.msra.mxu0 0
      %4135 = vmatprep.subr.bf16.mxu0 0
      %4136 = vmatpush2.bf16.msra.mxu0 0
      %4137 = vmatprep.mubr.bf16.mxu0 0
      %4138 = vmatmul.mubr.bf16.gmra.mxu0 %v4100
      %v4139 = vpop.f32.mrf.mxu0
      %v4140 = vadd.f32 0.0, %v4139
      %v4141 = vpop.f32.mrf.mxu0
      %v4142 = vpop.f32.mrf.mxu0
      %v4143 = vpop.f32.mrf.mxu0
      %4144 = vdwg.mxu0
      %4145 = vrot.lane.b32.xlu0 %v3811, 104
      %v4146 = vpop.permute.xlu0 %4145
      %4147 = vrot.lane.b32.xlu0 %v3812, 104
      %v4148 = vpop.permute.xlu0 %4147
      %v4150 = vsel %vm1236, %v4146, 0
      %v4153 = vsel %vm1236, %v4148, 0
      %4155 = vmatprep.subr.bf16.mxu0 0
      %4156 = vmatpush1.bf16.xpose.msra.mxu0 0
      %4157 = vmatprep.subr.bf16.mxu0 0
      %4158 = vmatpush1.bf16.xpose.msra.mxu0 0
      %4159 = vmatprep.subr.bf16.mxu0 0
      %4160 = vmatpush1.bf16.xpose.msra.mxu0 0
      %4161 = vmatprep.subr.bf16.mxu0 0
      %4162 = vmatpush1.bf16.xpose.msra.mxu0 0
      %4163 = vmatprep.subr.bf16.mxu0 0
      %4164 = vmatpush1.bf16.xpose.msra.mxu0 0
      %4165 = vmatprep.subr.bf16.mxu0 0
      %4166 = vmatpush1.bf16.xpose.msra.mxu0 0
      %4167 = vmatprep.subr.bf16.mxu0 0
      %4168 = vmatpush1.bf16.xpose.msra.mxu0 0
      %4169 = vmatprep.subr.bf16.mxu0 0
      %4170 = vmatpush1.bf16.xpose.msra.mxu0 %v4153
      %4171 = vmatprep.subr.bf16.mxu0 0
      %4172 = vmatpush2.bf16.xpose.msra.mxu0 0
      %4173 = vmatprep.subr.bf16.mxu0 0
      %4174 = vmatpush2.bf16.xpose.msra.mxu0 0
      %4175 = vmatprep.subr.bf16.mxu0 0
      %4176 = vmatpush2.bf16.xpose.msra.mxu0 0
      %4177 = vmatprep.subr.bf16.mxu0 0
      %4178 = vmatpush2.bf16.xpose.msra.mxu0 0
      %4179 = vmatprep.subr.bf16.mxu0 0
      %4180 = vmatpush2.bf16.xpose.msra.mxu0 0
      %4181 = vmatprep.subr.bf16.mxu0 0
      %4182 = vmatpush2.bf16.xpose.msra.mxu0 0
      %4183 = vmatprep.subr.bf16.mxu0 0
      %4184 = vmatpush2.bf16.xpose.msra.mxu0 0
      %4185 = vmatprep.subr.bf16.mxu0 0
      %4186 = vmatpush2.bf16.xpose.msra.mxu0 0
      %4187 = vmatprep.mubr.bf16.mxu0 0
      %4188 = vmatmul.mubr.bf16.gmra.mxu0 %v4150
      %v4189 = vpop.f32.mrf.mxu0
      %v4190 = vadd.f32 0.0, %v4189
      %v4191 = vpop.f32.mrf.mxu0
      %v4192 = vpop.f32.mrf.mxu0
      %v4193 = vpop.f32.mrf.mxu0
      %4194 = vdwg.mxu0
      %v4195 = vmul.f32 %v4190, 0.35355338
      %v4196 = vsel %vm3860, %v4195, -inf
      %4197 = vmax.xlane.f32.xlu0 %v4196
      %v4198 = vpop.xlane.xlu0 %4197
      %v4199 = vsub.f32 %v4195, %v4198
      %v4200 = vmul.f32 %v4199, 1.442695
      %v4201 = vpow.pop %v4200
      %v4202 = vsel %vm3860, %v4201, 0.0
      %4203 = vadd.xlane.f32.xlu0 %v4202
      %v4204 = vpop.xlane.xlu0 %4203
      %v4205 = vrcp.pop %v4204
      %v4206 = vmul.f32 %v4201, %v4205
      %v4207 = vpack.c.bf16 %v4206, %v4206
      %4208 = vrot.lane.b32.xlu0 %v3812, 72
      %v4209 = vpop.permute.xlu0 %4208
      %v4211 = vsel %vm1236, %v4207, 0
      %v4214 = vsel %vm1316, %v4209, 0
      %4216 = vmatprep.subr.bf16.mxu0 0
      %4217 = vmatpush1.bf16.msra.mxu0 0
      %4218 = vmatprep.subr.bf16.mxu0 0
      %4219 = vmatpush1.bf16.msra.mxu0 0
      %4220 = vmatprep.subr.bf16.mxu0 0
      %4221 = vmatpush1.bf16.msra.mxu0 0
      %4222 = vmatprep.subr.bf16.mxu0 0
      %4223 = vmatpush1.bf16.msra.mxu0 0
      %4224 = vmatprep.subr.bf16.mxu0 0
      %4225 = vmatpush1.bf16.msra.mxu0 0
      %4226 = vmatprep.subr.bf16.mxu0 0
      %4227 = vmatpush1.bf16.msra.mxu0 0
      %4228 = vmatprep.subr.bf16.mxu0 0
      %4229 = vmatpush1.bf16.msra.mxu0 0
      %4230 = vmatprep.subr.bf16.mxu0 0
      %4231 = vmatpush1.bf16.msra.mxu0 %v4214
      %4232 = vmatprep.subr.bf16.mxu0 0
      %4233 = vmatpush2.bf16.msra.mxu0 0
      %4234 = vmatprep.subr.bf16.mxu0 0
      %4235 = vmatpush2.bf16.msra.mxu0 0
      %4236 = vmatprep.subr.bf16.mxu0 0
      %4237 = vmatpush2.bf16.msra.mxu0 0
      %4238 = vmatprep.subr.bf16.mxu0 0
      %4239 = vmatpush2.bf16.msra.mxu0 0
      %4240 = vmatprep.subr.bf16.mxu0 0
      %4241 = vmatpush2.bf16.msra.mxu0 0
      %4242 = vmatprep.subr.bf16.mxu0 0
      %4243 = vmatpush2.bf16.msra.mxu0 0
      %4244 = vmatprep.subr.bf16.mxu0 0
      %4245 = vmatpush2.bf16.msra.mxu0 0
      %4246 = vmatprep.subr.bf16.mxu0 0
      %4247 = vmatpush2.bf16.msra.mxu0 0
      %4248 = vmatprep.mubr.bf16.mxu0 0
      %4249 = vmatmul.mubr.bf16.gmra.mxu0 %v4211
      %v4250 = vpop.f32.mrf.mxu0
      %v4251 = vadd.f32 0.0, %v4250
      %v4252 = vpop.f32.mrf.mxu0
      %v4253 = vpop.f32.mrf.mxu0
      %v4254 = vpop.f32.mrf.mxu0
      %4255 = vdwg.mxu0
      %4257 = vrot.lane.b32.xlu0 %v4029, 8
      %v4258 = vpop.permute.xlu0 %4257
      %4261 = vrot.lane.b32.xlu0 %v4140, 16
      %v4262 = vpop.permute.xlu0 %4261
      %4265 = vrot.lane.b32.xlu0 %v4251, 24
      %v4266 = vpop.permute.xlu0 %4265
      %v4268 = vsel %vm1236, %v3917, %v4258
      %v4269 = vsel %vm1765, %v4268, %v4262
      %v4270 = vsel %vm1768, %v4269, %v4266
      %v4271 = vpack.c.bf16 %v4270, %v4270
      %v4273 = vlaneseq
      %v4274 = vshrl.u32 %v4273, 7
      %v4275 = vsub.s32 0, %v4274
      %v4276 = vrot.slane %v3688, %v4275
      %v4282 = vunpack.c.l.b16 %v3684
      %v4283 = vunpack.c.l.b16 %v3685
      %v4284 = vunpack.c.l.b16 %v3686
      %v4285 = vunpack.c.l.b16 %v3687
      %v4286 = vpack.c.b16 %v4283, %v4282
      %v4287 = vpack.c.b16 %v4285, %v4284
      %v4291 = vsel %vm1113, %v4271, 0
      %4293 = vmatprep.subr.bf16.mxu0 0
      %4294 = vmatpush1.bf16.msra.mxu0 0
      %4295 = vmatprep.subr.bf16.mxu0 0
      %4296 = vmatpush1.bf16.msra.mxu0 0
      %4297 = vmatprep.subr.bf16.mxu0 0
      %4298 = vmatpush1.bf16.msra.mxu0 0
      %4299 = vmatprep.subr.bf16.mxu0 0
      %4300 = vmatpush1.bf16.msra.mxu0 0
      %4301 = vmatprep.subr.bf16.mxu0 0
      %4302 = vmatpush1.bf16.msra.mxu0 0
      %4303 = vmatprep.subr.bf16.mxu0 0
      %4304 = vmatpush1.bf16.msra.mxu0 0
      %4305 = vmatprep.subr.bf16.mxu0 0
      %4306 = vmatpush1.bf16.msra.mxu0 %v4287
      %4307 = vmatprep.subr.bf16.mxu0 0
      %4308 = vmatpush1.bf16.msra.mxu0 %v4286
      %4309 = vmatprep.subr.bf16.mxu0 0
      %4310 = vmatpush2.bf16.msra.mxu0 0
      %4311 = vmatprep.subr.bf16.mxu0 0
      %4312 = vmatpush2.bf16.msra.mxu0 0
      %4313 = vmatprep.subr.bf16.mxu0 0
      %4314 = vmatpush2.bf16.msra.mxu0 0
      %4315 = vmatprep.subr.bf16.mxu0 0
      %4316 = vmatpush2.bf16.msra.mxu0 0
      %4317 = vmatprep.subr.bf16.mxu0 0
      %4318 = vmatpush2.bf16.msra.mxu0 0
      %4319 = vmatprep.subr.bf16.mxu0 0
      %4320 = vmatpush2.bf16.msra.mxu0 0
      %4321 = vmatprep.subr.bf16.mxu0 0
      %4322 = vmatpush2.bf16.msra.mxu0 0
      %4323 = vmatprep.subr.bf16.mxu0 0
      %4324 = vmatpush2.bf16.msra.mxu0 0
      %4325 = vmatprep.mubr.bf16.mxu0 0
      %4326 = vmatmul.mubr.bf16.gmra.mxu0 %v4291
      %v4327 = vpop.f32.mrf.mxu0
      %v4328 = vadd.f32 %v4276, %v4327
      %v4329 = vpop.f32.mrf.mxu0
      %v4330 = vpop.f32.mrf.mxu0
      %v4331 = vpop.f32.mrf.mxu0
      %4332 = vdwg.mxu0
      %v4333 = vpack.c.bf16 %v4328, %v4328
      %v4334 = vld [vmem:[%s47] sm:$0xf]
      %v4335 = vld [vmem:[%s47 + $0x4] sm:$0xf]
      %v4336 = vld [vmem:[%s47 + $0x8] sm:$0xf]
      %v4337 = vld [vmem:[%s47 + $0xc] sm:$0xf]
      %v4338 = vld [vmem:[%s49] sm:$0xf]
      %v4339 = vld [vmem:[%s49 + $0x4] sm:$0xf]
      %v4340 = vld [vmem:[%s49 + $0x8] sm:$0xf]
      %v4341 = vld [vmem:[%s49 + $0xc] sm:$0xf]
      %v4346 = vunpack.c.l.b16 %v4338
      %v4347 = vunpack.c.l.b16 %v4339
      %v4348 = vunpack.c.l.b16 %v4340
      %v4349 = vunpack.c.l.b16 %v4341
      %v4350 = vpack.c.b16 %v4347, %v4346
      %v4351 = vpack.c.b16 %v4349, %v4348
      %v4355 = vsel %vm1113, %v3039, 0
      %4357 = vmatprep.subr.bf16.mxu0 0
      %4358 = vmatpush1.bf16.msra.mxu0 0
      %4359 = vmatprep.subr.bf16.mxu0 0
      %4360 = vmatpush1.bf16.msra.mxu0 0
      %4361 = vmatprep.subr.bf16.mxu0 0
      %4362 = vmatpush1.bf16.msra.mxu0 0
      %4363 = vmatprep.subr.bf16.mxu0 0
      %4364 = vmatpush1.bf16.msra.mxu0 0
      %4365 = vmatprep.subr.bf16.mxu0 0
      %4366 = vmatpush1.bf16.msra.mxu0 0
      %4367 = vmatprep.subr.bf16.mxu0 0
      %4368 = vmatpush1.bf16.msra.mxu0 0
      %4369 = vmatprep.subr.bf16.mxu0 0
      %4370 = vmatpush1.bf16.msra.mxu0 %v4351
      %4371 = vmatprep.subr.bf16.mxu0 0
      %4372 = vmatpush1.bf16.msra.mxu0 %v4350
      %4373 = vmatprep.subr.bf16.mxu0 0
      %4374 = vmatpush2.bf16.msra.mxu0 0
      %4375 = vmatprep.subr.bf16.mxu0 0
      %4376 = vmatpush2.bf16.msra.mxu0 0
      %4377 = vmatprep.subr.bf16.mxu0 0
      %4378 = vmatpush2.bf16.msra.mxu0 0
      %4379 = vmatprep.subr.bf16.mxu0 0
      %4380 = vmatpush2.bf16.msra.mxu0 0
      %4381 = vmatprep.subr.bf16.mxu0 0
      %4382 = vmatpush2.bf16.msra.mxu0 0
      %4383 = vmatprep.subr.bf16.mxu0 0
      %4384 = vmatpush2.bf16.msra.mxu0 0
      %4385 = vmatprep.subr.bf16.mxu0 0
      %4386 = vmatpush2.bf16.msra.mxu0 0
      %4387 = vmatprep.subr.bf16.mxu0 0
      %4388 = vmatpush2.bf16.msra.mxu0 0
      %4389 = vmatprep.mubr.bf16.mxu0 0
      %4390 = vmatmul.mubr.bf16.gmra.mxu0 %v4355
      %v4391 = vpop.f32.mrf.mxu0
      %v4392 = vadd.f32 0.0, %v4391
      %v4393 = vpop.f32.mrf.mxu0
      %v4394 = vpop.f32.mrf.mxu0
      %v4395 = vpop.f32.mrf.mxu0
      %4396 = vdwg.mxu0
      %v4397 = vlaneseq
      %v4398 = vshrl.u32 %v4397, 7
      %v4399 = vsub.s32 0, %v4398
      %v4400 = vrot.slane %v4392, %v4399
      %v4405 = vunpack.c.l.b16 %v4334
      %v4406 = vunpack.c.l.b16 %v4335
      %v4407 = vunpack.c.l.b16 %v4336
      %v4408 = vunpack.c.l.b16 %v4337
      %v4409 = vpack.c.b16 %v4406, %v4405
      %v4410 = vpack.c.b16 %v4408, %v4407
      %v4414 = vsel %vm1113, %v4333, 0
      %4416 = vmatprep.subr.bf16.mxu0 0
      %4417 = vmatpush1.bf16.msra.mxu0 0
      %4418 = vmatprep.subr.bf16.mxu0 0
      %4419 = vmatpush1.bf16.msra.mxu0 0
      %4420 = vmatprep.subr.bf16.mxu0 0
      %4421 = vmatpush1.bf16.msra.mxu0 0
      %4422 = vmatprep.subr.bf16.mxu0 0
      %4423 = vmatpush1.bf16.msra.mxu0 0
      %4424 = vmatprep.subr.bf16.mxu0 0
      %4425 = vmatpush1.bf16.msra.mxu0 0
      %4426 = vmatprep.subr.bf16.mxu0 0
      %4427 = vmatpush1.bf16.msra.mxu0 0
      %4428 = vmatprep.subr.bf16.mxu0 0
      %4429 = vmatpush1.bf16.msra.mxu0 %v4410
      %4430 = vmatprep.subr.bf16.mxu0 0
      %4431 = vmatpush1.bf16.msra.mxu0 %v4409
      %4432 = vmatprep.subr.bf16.mxu0 0
      %4433 = vmatpush2.bf16.msra.mxu0 0
      %4434 = vmatprep.subr.bf16.mxu0 0
      %4435 = vmatpush2.bf16.msra.mxu0 0
      %4436 = vmatprep.subr.bf16.mxu0 0
      %4437 = vmatpush2.bf16.msra.mxu0 0
      %4438 = vmatprep.subr.bf16.mxu0 0
      %4439 = vmatpush2.bf16.msra.mxu0 0
      %4440 = vmatprep.subr.bf16.mxu0 0
      %4441 = vmatpush2.bf16.msra.mxu0 0
      %4442 = vmatprep.subr.bf16.mxu0 0
      %4443 = vmatpush2.bf16.msra.mxu0 0
      %4444 = vmatprep.subr.bf16.mxu0 0
      %4445 = vmatpush2.bf16.msra.mxu0 0
      %4446 = vmatprep.subr.bf16.mxu0 0
      %4447 = vmatpush2.bf16.msra.mxu0 0
      %4448 = vmatprep.mubr.bf16.mxu0 0
      %4449 = vmatmul.mubr.bf16.gmra.mxu0 %v4414
      %v4450 = vpop.f32.mrf.mxu0
      %v4451 = vadd.f32 %v4400, %v4450
      %v4452 = vpop.f32.mrf.mxu0
      %v4453 = vpop.f32.mrf.mxu0
      %v4454 = vpop.f32.mrf.mxu0
      %4455 = vdwg.mxu0
      %v4456 = vld [vmem:[%s51] sm:$0x1]
      %v4458 = vlaneseq
      %v4459 = vshrl.u32 %v4458, 7
      %v4460 = vsub.s32 0, %v4459
      %v4461 = vrot.slane %v4456, %v4460
      %v4463 = vadd.f32 %v4451, %v4461
      %v4464 = vxor.u32 %v4463, 2147483648
      %v4465 = vmul.f32 %v4464, 1.442695
      %v4466 = vpow.pop %v4465
      %v4467 = vadd.f32 %v4466, 1.0
      %v4468 = vrcp.pop %v4467
      %v4469 = vmul.f32 1.0, %v4468
      %v4470 = vld [vmem:[%s53] sm:$0xf]
      %v4471 = vld [vmem:[%s53 + $0x4] sm:$0xf]
      %v4472 = vld [vmem:[%s53 + $0x8] sm:$0xf]
      %v4473 = vld [vmem:[%s53 + $0xc] sm:$0xf]
      %v4474 = vld [vmem:[%s55] sm:$0x1]
      %v4479 = vunpack.c.l.b16 %v4470
      %v4480 = vunpack.c.l.b16 %v4471
      %v4481 = vunpack.c.l.b16 %v4472
      %v4482 = vunpack.c.l.b16 %v4473
      %v4483 = vpack.c.b16 %v4480, %v4479
      %v4484 = vpack.c.b16 %v4482, %v4481
      %4487 = vmatprep.subr.bf16.mxu0 0
      %4488 = vmatpush1.bf16.msra.mxu0 0
      %4489 = vmatprep.subr.bf16.mxu0 0
      %4490 = vmatpush1.bf16.msra.mxu0 0
      %4491 = vmatprep.subr.bf16.mxu0 0
      %4492 = vmatpush1.bf16.msra.mxu0 0
      %4493 = vmatprep.subr.bf16.mxu0 0
      %4494 = vmatpush1.bf16.msra.mxu0 0
      %4495 = vmatprep.subr.bf16.mxu0 0
      %4496 = vmatpush1.bf16.msra.mxu0 0
      %4497 = vmatprep.subr.bf16.mxu0 0
      %4498 = vmatpush1.bf16.msra.mxu0 0
      %4499 = vmatprep.subr.bf16.mxu0 0
      %4500 = vmatpush1.bf16.msra.mxu0 %v4484
      %4501 = vmatprep.subr.bf16.mxu0 0
      %4502 = vmatpush1.bf16.msra.mxu0 %v4483
      %4503 = vmatprep.subr.bf16.mxu0 0
      %4504 = vmatpush2.bf16.msra.mxu0 0
      %4505 = vmatprep.subr.bf16.mxu0 0
      %4506 = vmatpush2.bf16.msra.mxu0 0
      %4507 = vmatprep.subr.bf16.mxu0 0
      %4508 = vmatpush2.bf16.msra.mxu0 0
      %4509 = vmatprep.subr.bf16.mxu0 0
      %4510 = vmatpush2.bf16.msra.mxu0 0
      %4511 = vmatprep.subr.bf16.mxu0 0
      %4512 = vmatpush2.bf16.msra.mxu0 0
      %4513 = vmatprep.subr.bf16.mxu0 0
      %4514 = vmatpush2.bf16.msra.mxu0 0
      %4515 = vmatprep.subr.bf16.mxu0 0
      %4516 = vmatpush2.bf16.msra.mxu0 0
      %4517 = vmatprep.subr.bf16.mxu0 0
      %4518 = vmatpush2.bf16.msra.mxu0 0
      %4519 = vmatprep.mubr.bf16.mxu0 0
      %4520 = vmatmul.mubr.bf16.gmra.mxu0 %v4355
      %v4521 = vpop.f32.mrf.mxu0
      %v4522 = vadd.f32 %v4474, %v4521
      %v4523 = vpop.f32.mrf.mxu0
      %v4524 = vpop.f32.mrf.mxu0
      %v4525 = vpop.f32.mrf.mxu0
      %4526 = vdwg.mxu0
      %v4527 = vmul.f32 %v4469, %v4328
      %v4528 = vsub.f32 1.0, %v4469
      %v4529 = vlaneseq
      %v4530 = vshrl.u32 %v4529, 7
      %v4531 = vsub.s32 0, %v4530
      %v4532 = vrot.slane %v4522, %v4531
      %v4533 = vmul.f32 %v4528, %v4532
      %v4534 = vadd.f32 %v4527, %v4533
      %v4535 = vadd.f32 %v3672, %v4534
      %v4536 = vsel %vm3649, %v4535, 0.0
      %4537 = vadd.xlane.f32.xlu0 %v4536
      %v4538 = vpop.xlane.xlu0 %4537
      %v4539 = vmul.f32 %v4538, %v1843
      %v4540 = vsub.f32 %v4535, %v4539
      %v4541 = vmul.f32 %v4540, %v4540
      %v4542 = vsel %vm3649, %v4541, 0.0
      %4543 = vadd.xlane.f32.xlu0 %v4542
      %v4544 = vpop.xlane.xlu0 %4543
      %v4545 = vmul.f32 %v4544, %v1843
      %v4546 = vadd.f32 %v4545, 1e-05
      %v4547 = vrsqrt.pop %v4546
      %v4548 = vmul.f32 %v4540, %v4547
      %v4549 = vlaneseq
      %v4550 = vshrl.u32 %v4549, 7
      %v4551 = vsub.s32 2, %v4550
      %v4552 = vrot.slane %v3047, %v4551
      %v4553 = vmul.f32 %v4548, %v4552
      %v4554 = vlaneseq
      %v4555 = vshrl.u32 %v4554, 7
      %v4556 = vsub.s32 3, %v4555
      %v4557 = vrot.slane %v3047, %v4556
      %v4558 = vadd.f32 %v4553, %v4557
      %v4559 = vld [vmem:[%s59] sm:$0xf]
      %v4560 = vld [vmem:[%s59 + $0x4] sm:$0xf]
      %v4561 = vld [vmem:[%s59 + $0x8] sm:$0xf]
      %v4562 = vld [vmem:[%s59 + $0xc] sm:$0xf]
      %v4563 = vld [vmem:[%s61] sm:$0x1]
      %v4564 = vld [vmem:[%s63] sm:$0xf]
      %v4565 = vld [vmem:[%s63 + $0x4] sm:$0xf]
      %v4566 = vld [vmem:[%s63 + $0x8] sm:$0xf]
      %v4567 = vld [vmem:[%s63 + $0xc] sm:$0xf]
      %v4568 = vld [vmem:[%s63 + $0x10] sm:$0xf]
      %v4569 = vld [vmem:[%s63 + $0x14] sm:$0xf]
      %v4570 = vld [vmem:[%s63 + $0x18] sm:$0xf]
      %v4571 = vld [vmem:[%s63 + $0x1c] sm:$0xf]
      %v4572 = vld [vmem:[%s63 + $0x20] sm:$0xf]
      %v4573 = vld [vmem:[%s63 + $0x24] sm:$0xf]
      %v4574 = vld [vmem:[%s63 + $0x28] sm:$0xf]
      %v4575 = vld [vmem:[%s63 + $0x2c] sm:$0xf]
      %v4576 = vld [vmem:[%s63 + $0x30] sm:$0xf]
      %v4577 = vld [vmem:[%s63 + $0x34] sm:$0xf]
      %v4578 = vld [vmem:[%s63 + $0x38] sm:$0xf]
      %v4579 = vld [vmem:[%s63 + $0x3c] sm:$0xf]
      %v4580 = vld [vmem:[%s65] sm:$0x1]
      %v4581 = vpack.c.bf16 %v4558, %v4558
      %v4583 = vlaneseq
      %v4584 = vshrl.u32 %v4583, 7
      %v4585 = vsub.s32 0, %v4584
      %v4586 = vrot.slane %v4563, %v4585
      %v4592 = vunpack.c.l.b16 %v4559
      %v4593 = vunpack.c.l.b16 %v4560
      %v4594 = vunpack.c.l.b16 %v4561
      %v4595 = vunpack.c.l.b16 %v4562
      %v4596 = vpack.c.b16 %v4593, %v4592
      %v4597 = vpack.c.b16 %v4595, %v4594
      %v4601 = vsel %vm1113, %v4581, 0
      %4603 = vmatprep.subr.bf16.mxu0 0
      %4604 = vmatpush1.bf16.msra.mxu0 0
      %4605 = vmatprep.subr.bf16.mxu0 0
      %4606 = vmatpush1.bf16.msra.mxu0 0
      %4607 = vmatprep.subr.bf16.mxu0 0
      %4608 = vmatpush1.bf16.msra.mxu0 0
      %4609 = vmatprep.subr.bf16.mxu0 0
      %4610 = vmatpush1.bf16.msra.mxu0 0
      %4611 = vmatprep.subr.bf16.mxu0 0
      %4612 = vmatpush1.bf16.msra.mxu0 0
      %4613 = vmatprep.subr.bf16.mxu0 0
      %4614 = vmatpush1.bf16.msra.mxu0 0
      %4615 = vmatprep.subr.bf16.mxu0 0
      %4616 = vmatpush1.bf16.msra.mxu0 %v4597
      %4617 = vmatprep.subr.bf16.mxu0 0
      %4618 = vmatpush1.bf16.msra.mxu0 %v4596
      %4619 = vmatprep.subr.bf16.mxu0 0
      %4620 = vmatpush2.bf16.msra.mxu0 0
      %4621 = vmatprep.subr.bf16.mxu0 0
      %4622 = vmatpush2.bf16.msra.mxu0 0
      %4623 = vmatprep.subr.bf16.mxu0 0
      %4624 = vmatpush2.bf16.msra.mxu0 0
      %4625 = vmatprep.subr.bf16.mxu0 0
      %4626 = vmatpush2.bf16.msra.mxu0 0
      %4627 = vmatprep.subr.bf16.mxu0 0
      %4628 = vmatpush2.bf16.msra.mxu0 0
      %4629 = vmatprep.subr.bf16.mxu0 0
      %4630 = vmatpush2.bf16.msra.mxu0 0
      %4631 = vmatprep.subr.bf16.mxu0 0
      %4632 = vmatpush2.bf16.msra.mxu0 0
      %4633 = vmatprep.subr.bf16.mxu0 0
      %4634 = vmatpush2.bf16.msra.mxu0 0
      %4635 = vmatprep.mubr.bf16.mxu0 0
      %4636 = vmatmul.mubr.bf16.gmra.mxu0 %v4601
      %v4637 = vpop.f32.mrf.mxu0
      %v4638 = vadd.f32 %v4586, %v4637
      %v4639 = vpop.f32.mrf.mxu0
      %v4640 = vpop.f32.mrf.mxu0
      %v4641 = vpop.f32.mrf.mxu0
      %4642 = vdwg.mxu0
      %v4643 = vmax.f32 %v4638, 0.0
      %v4644 = vpack.c.bf16 %v4643, %v4643
      %v4646 = vlaneseq
      %v4647 = vshrl.u32 %v4646, 7
      %v4648 = vsub.s32 0, %v4647
      %v4649 = vrot.slane %v4580, %v4648
      %v4667 = vunpack.c.l.b16 %v4564
      %v4668 = vunpack.c.l.b16 %v4565
      %v4669 = vunpack.c.l.b16 %v4566
      %v4670 = vunpack.c.l.b16 %v4567
      %v4671 = vunpack.c.l.b16 %v4568
      %v4672 = vunpack.c.l.b16 %v4569
      %v4673 = vunpack.c.l.b16 %v4570
      %v4674 = vunpack.c.l.b16 %v4571
      %v4675 = vunpack.c.l.b16 %v4572
      %v4676 = vunpack.c.l.b16 %v4573
      %v4677 = vunpack.c.l.b16 %v4574
      %v4678 = vunpack.c.l.b16 %v4575
      %v4679 = vunpack.c.l.b16 %v4576
      %v4680 = vunpack.c.l.b16 %v4577
      %v4681 = vunpack.c.l.b16 %v4578
      %v4682 = vunpack.c.l.b16 %v4579
      %v4683 = vpack.c.b16 %v4668, %v4667
      %v4684 = vpack.c.b16 %v4670, %v4669
      %v4685 = vpack.c.b16 %v4672, %v4671
      %v4686 = vpack.c.b16 %v4674, %v4673
      %v4687 = vpack.c.b16 %v4676, %v4675
      %v4688 = vpack.c.b16 %v4678, %v4677
      %v4689 = vpack.c.b16 %v4680, %v4679
      %v4690 = vpack.c.b16 %v4682, %v4681
      %4699 = vmatprep.subr.bf16.mxu0 0
      %4700 = vmatpush1.bf16.msra.mxu0 %v4690
      %4701 = vmatprep.subr.bf16.mxu0 0
      %4702 = vmatpush1.bf16.msra.mxu0 %v4689
      %4703 = vmatprep.subr.bf16.mxu0 0
      %4704 = vmatpush1.bf16.msra.mxu0 %v4688
      %4705 = vmatprep.subr.bf16.mxu0 0
      %4706 = vmatpush1.bf16.msra.mxu0 %v4687
      %4707 = vmatprep.subr.bf16.mxu0 0
      %4708 = vmatpush1.bf16.msra.mxu0 %v4686
      %4709 = vmatprep.subr.bf16.mxu0 0
      %4710 = vmatpush1.bf16.msra.mxu0 %v4685
      %4711 = vmatprep.subr.bf16.mxu0 0
      %4712 = vmatpush1.bf16.msra.mxu0 %v4684
      %4713 = vmatprep.subr.bf16.mxu0 0
      %4714 = vmatpush1.bf16.msra.mxu0 %v4683
      %4715 = vmatprep.subr.bf16.mxu0 0
      %4716 = vmatpush2.bf16.msra.mxu0 0
      %4717 = vmatprep.subr.bf16.mxu0 0
      %4718 = vmatpush2.bf16.msra.mxu0 0
      %4719 = vmatprep.subr.bf16.mxu0 0
      %4720 = vmatpush2.bf16.msra.mxu0 0
      %4721 = vmatprep.subr.bf16.mxu0 0
      %4722 = vmatpush2.bf16.msra.mxu0 0
      %4723 = vmatprep.subr.bf16.mxu0 0
      %4724 = vmatpush2.bf16.msra.mxu0 0
      %4725 = vmatprep.subr.bf16.mxu0 0
      %4726 = vmatpush2.bf16.msra.mxu0 0
      %4727 = vmatprep.subr.bf16.mxu0 0
      %4728 = vmatpush2.bf16.msra.mxu0 0
      %4729 = vmatprep.subr.bf16.mxu0 0
      %4730 = vmatpush2.bf16.msra.mxu0 0
      %4731 = vmatprep.mubr.bf16.mxu0 0
      %4732 = vmatmul.mubr.bf16.gmra.mxu0 %v4644
      %v4733 = vpop.f32.mrf.mxu0
      %v4734 = vadd.f32 %v4649, %v4733
      %v4735 = vpop.f32.mrf.mxu0
      %v4736 = vpop.f32.mrf.mxu0
      %v4737 = vpop.f32.mrf.mxu0
      %4738 = vdwg.mxu0
      %v4739 = vadd.f32 %v4558, %v4734
      %v4740 = vsel %vm3649, %v4739, 0.0
      %4741 = vadd.xlane.f32.xlu0 %v4740
      %v4742 = vpop.xlane.xlu0 %4741
      %v4743 = vmul.f32 %v4742, %v1843
      %v4744 = vsub.f32 %v4739, %v4743
      %v4745 = vmul.f32 %v4744, %v4744
      %v4746 = vsel %vm3649, %v4745, 0.0
      %4747 = vadd.xlane.f32.xlu0 %v4746
      %v4748 = vpop.xlane.xlu0 %4747
      %v4749 = vmul.f32 %v4748, %v1843
      %v4750 = vadd.f32 %v4749, 1e-05
      %v4751 = vrsqrt.pop %v4750
      %v4752 = vmul.f32 %v4744, %v4751
      %v4753 = vlaneseq
      %v4754 = vshrl.u32 %v4753, 7
      %v4755 = vsub.s32 4, %v4754
      %v4756 = vrot.slane %v3047, %v4755
      %v4757 = vmul.f32 %v4752, %v4756
      %v4758 = vlaneseq
      %v4759 = vshrl.u32 %v4758, 7
      %v4760 = vsub.s32 5, %v4759
      %v4761 = vrot.slane %v3047, %v4760
      %v4762 = vadd.f32 %v4757, %v4761
      %s4763 = scalar_lea.vmem %s57, 8
      %v4764 = vld [vmem:[%s4763] sm:$0x3f]
      %v4765 = vpack.c.bf16 %v4762, %v4762
      %s4766 = scalar_lea.vmem %s27, 16
      %v4767 = vld [vmem:[%s4766] sm:$0xf]
      %v4768 = vld [vmem:[%s4766 + $0x4] sm:$0xf]
      %v4769 = vld [vmem:[%s4766 + $0x8] sm:$0xf]
      %v4770 = vld [vmem:[%s4766 + $0xc] sm:$0xf]
      %s4771 = scalar_lea.vmem %s29, 1
      %v4772 = vld [vmem:[%s4771] sm:$0x1]
      %s4773 = scalar_lea.vmem %s31, 16
      %v4774 = vld [vmem:[%s4773] sm:$0xf]
      %v4775 = vld [vmem:[%s4773 + $0x4] sm:$0xf]
      %v4776 = vld [vmem:[%s4773 + $0x8] sm:$0xf]
      %v4777 = vld [vmem:[%s4773 + $0xc] sm:$0xf]
      %s4778 = scalar_lea.vmem %s33, 1
      %v4779 = vld [vmem:[%s4778] sm:$0x1]
      %v4781 = vlaneseq
      %v4782 = vshrl.u32 %v4781, 7
      %v4783 = vsub.s32 0, %v4782
      %v4784 = vrot.slane %v4772, %v4783
      %v4790 = vunpack.c.l.b16 %v4767
      %v4791 = vunpack.c.l.b16 %v4768
      %v4792 = vunpack.c.l.b16 %v4769
      %v4793 = vunpack.c.l.b16 %v4770
      %v4794 = vpack.c.b16 %v4791, %v4790
      %v4795 = vpack.c.b16 %v4793, %v4792
      %v4799 = vsel %vm1113, %v4765, 0
      %4801 = vmatprep.subr.bf16.mxu0 0
      %4802 = vmatpush1.bf16.msra.mxu0 0
      %4803 = vmatprep.subr.bf16.mxu0 0
      %4804 = vmatpush1.bf16.msra.mxu0 0
      %4805 = vmatprep.subr.bf16.mxu0 0
      %4806 = vmatpush1.bf16.msra.mxu0 0
      %4807 = vmatprep.subr.bf16.mxu0 0
      %4808 = vmatpush1.bf16.msra.mxu0 0
      %4809 = vmatprep.subr.bf16.mxu0 0
      %4810 = vmatpush1.bf16.msra.mxu0 0
      %4811 = vmatprep.subr.bf16.mxu0 0
      %4812 = vmatpush1.bf16.msra.mxu0 0
      %4813 = vmatprep.subr.bf16.mxu0 0
      %4814 = vmatpush1.bf16.msra.mxu0 %v4795
      %4815 = vmatprep.subr.bf16.mxu0 0
      %4816 = vmatpush1.bf16.msra.mxu0 %v4794
      %4817 = vmatprep.subr.bf16.mxu0 0
      %4818 = vmatpush2.bf16.msra.mxu0 0
      %4819 = vmatprep.subr.bf16.mxu0 0
      %4820 = vmatpush2.bf16.msra.mxu0 0
      %4821 = vmatprep.subr.bf16.mxu0 0
      %4822 = vmatpush2.bf16.msra.mxu0 0
      %4823 = vmatprep.subr.bf16.mxu0 0
      %4824 = vmatpush2.bf16.msra.mxu0 0
      %4825 = vmatprep.subr.bf16.mxu0 0
      %4826 = vmatpush2.bf16.msra.mxu0 0
      %4827 = vmatprep.subr.bf16.mxu0 0
      %4828 = vmatpush2.bf16.msra.mxu0 0
      %4829 = vmatprep.subr.bf16.mxu0 0
      %4830 = vmatpush2.bf16.msra.mxu0 0
      %4831 = vmatprep.subr.bf16.mxu0 0
      %4832 = vmatpush2.bf16.msra.mxu0 0
      %4833 = vmatprep.mubr.bf16.mxu0 0
      %4834 = vmatmul.mubr.bf16.gmra.mxu0 %v4799
      %v4835 = vpop.f32.mrf.mxu0
      %v4836 = vadd.f32 %v4784, %v4835
      %v4837 = vpop.f32.mrf.mxu0
      %v4838 = vpop.f32.mrf.mxu0
      %v4839 = vpop.f32.mrf.mxu0
      %4840 = vdwg.mxu0
      %v4841 = vpack.c.bf16 %v4836, %v4836
      %4843 = vrot.lane.b32.xlu0 %v4841, 96
      %v4844 = vpop.permute.xlu0 %4843
      %v4846 = vsel %vm1236, %v4841, 0
      %v4849 = vsel %vm1236, %v4844, 0
      %4851 = vmatprep.subr.bf16.mxu0 0
      %4852 = vmatpush1.bf16.xpose.msra.mxu0 0
      %4853 = vmatprep.subr.bf16.mxu0 0
      %4854 = vmatpush1.bf16.xpose.msra.mxu0 0
      %4855 = vmatprep.subr.bf16.mxu0 0
      %4856 = vmatpush1.bf16.xpose.msra.mxu0 0
      %4857 = vmatprep.subr.bf16.mxu0 0
      %4858 = vmatpush1.bf16.xpose.msra.mxu0 0
      %4859 = vmatprep.subr.bf16.mxu0 0
      %4860 = vmatpush1.bf16.xpose.msra.mxu0 0
      %4861 = vmatprep.subr.bf16.mxu0 0
      %4862 = vmatpush1.bf16.xpose.msra.mxu0 0
      %4863 = vmatprep.subr.bf16.mxu0 0
      %4864 = vmatpush1.bf16.xpose.msra.mxu0 0
      %4865 = vmatprep.subr.bf16.mxu0 0
      %4866 = vmatpush1.bf16.xpose.msra.mxu0 %v4849
      %4867 = vmatprep.subr.bf16.mxu0 0
      %4868 = vmatpush2.bf16.xpose.msra.mxu0 0
      %4869 = vmatprep.subr.bf16.mxu0 0
      %4870 = vmatpush2.bf16.xpose.msra.mxu0 0
      %4871 = vmatprep.subr.bf16.mxu0 0
      %4872 = vmatpush2.bf16.xpose.msra.mxu0 0
      %4873 = vmatprep.subr.bf16.mxu0 0
      %4874 = vmatpush2.bf16.xpose.msra.mxu0 0
      %4875 = vmatprep.subr.bf16.mxu0 0
      %4876 = vmatpush2.bf16.xpose.msra.mxu0 0
      %4877 = vmatprep.subr.bf16.mxu0 0
      %4878 = vmatpush2.bf16.xpose.msra.mxu0 0
      %4879 = vmatprep.subr.bf16.mxu0 0
      %4880 = vmatpush2.bf16.xpose.msra.mxu0 0
      %4881 = vmatprep.subr.bf16.mxu0 0
      %4882 = vmatpush2.bf16.xpose.msra.mxu0 0
      %4883 = vmatprep.mubr.bf16.mxu0 0
      %4884 = vmatmul.mubr.bf16.gmra.mxu0 %v4846
      %v4885 = vpop.f32.mrf.mxu0
      %v4886 = vadd.f32 0.0, %v4885
      %v4887 = vpop.f32.mrf.mxu0
      %v4888 = vpop.f32.mrf.mxu0
      %v4889 = vpop.f32.mrf.mxu0
      %4890 = vdwg.mxu0
      %v4891 = vmul.f32 %v4886, 0.35355338
      %v4892 = vadd.f32 %v4891, %v3046
      %v4893 = vsel %vm3172, %v4892, -inf
      %4894 = vmax.xlane.f32.xlu0 %v4893
      %v4895 = vpop.xlane.xlu0 %4894
      %v4896 = vsub.f32 %v4892, %v4895
      %v4897 = vmul.f32 %v4896, 1.442695
      %v4898 = vpow.pop %v4897
      %v4899 = vsel %vm3172, %v4898, 0.0
      %4900 = vadd.xlane.f32.xlu0 %v4899
      %v4901 = vpop.xlane.xlu0 %4900
      %v4902 = vrcp.pop %v4901
      %v4903 = vmul.f32 %v4898, %v4902
      %v4904 = vpack.c.bf16 %v4903, %v4903
      %4905 = vrot.lane.b32.xlu0 %v4841, 64
      %v4906 = vpop.permute.xlu0 %4905
      %v4908 = vsel %vm3187, %v4904, 0
      %v4911 = vsel %vm3191, %v4906, 0
      %4913 = vmatprep.subr.bf16.mxu0 0
      %4914 = vmatpush1.bf16.msra.mxu0 0
      %4915 = vmatprep.subr.bf16.mxu0 0
      %4916 = vmatpush1.bf16.msra.mxu0 0
      %4917 = vmatprep.subr.bf16.mxu0 0
      %4918 = vmatpush1.bf16.msra.mxu0 0
      %4919 = vmatprep.subr.bf16.mxu0 0
      %4920 = vmatpush1.bf16.msra.mxu0 0
      %4921 = vmatprep.subr.bf16.mxu0 0
      %4922 = vmatpush1.bf16.msra.mxu0 0
      %4923 = vmatprep.subr.bf16.mxu0 0
      %4924 = vmatpush1.bf16.msra.mxu0 0
      %4925 = vmatprep.subr.bf16.mxu0 0
      %4926 = vmatpush1.bf16.msra.mxu0 0
      %4927 = vmatprep.subr.bf16.mxu0 0
      %4928 = vmatpush1.bf16.msra.mxu0 %v4911
      %4929 = vmatprep.subr.bf16.mxu0 0
      %4930 = vmatpush2.bf16.msra.mxu0 0
      %4931 = vmatprep.subr.bf16.mxu0 0
      %4932 = vmatpush2.bf16.msra.mxu0 0
      %4933 = vmatprep.subr.bf16.mxu0 0
      %4934 = vmatpush2.bf16.msra.mxu0 0
      %4935 = vmatprep.subr.bf16.mxu0 0
      %4936 = vmatpush2.bf16.msra.mxu0 0
      %4937 = vmatprep.subr.bf16.mxu0 0
      %4938 = vmatpush2.bf16.msra.mxu0 0
      %4939 = vmatprep.subr.bf16.mxu0 0
      %4940 = vmatpush2.bf16.msra.mxu0 0
      %4941 = vmatprep.subr.bf16.mxu0 0
      %4942 = vmatpush2.bf16.msra.mxu0 0
      %4943 = vmatprep.subr.bf16.mxu0 0
      %4944 = vmatpush2.bf16.msra.mxu0 0
      %4945 = vmatprep.mubr.bf16.mxu0 0
      %4946 = vmatmul.mubr.bf16.gmra.mxu0 %v4908
      %v4947 = vpop.f32.mrf.mxu0
      %v4948 = vadd.f32 0.0, %v4947
      %v4949 = vpop.f32.mrf.mxu0
      %v4950 = vpop.f32.mrf.mxu0
      %v4951 = vpop.f32.mrf.mxu0
      %4952 = vdwg.mxu0
      %4953 = vrot.lane.b32.xlu0 %v4841, 120
      %v4954 = vpop.permute.xlu0 %4953
      %4955 = vrot.lane.b32.xlu0 %v4841, 88
      %v4956 = vpop.permute.xlu0 %4955
      %v4958 = vsel %vm1236, %v4954, 0
      %v4961 = vsel %vm1236, %v4956, 0
      %4963 = vmatprep.subr.bf16.mxu0 0
      %4964 = vmatpush1.bf16.xpose.msra.mxu0 0
      %4965 = vmatprep.subr.bf16.mxu0 0
      %4966 = vmatpush1.bf16.xpose.msra.mxu0 0
      %4967 = vmatprep.subr.bf16.mxu0 0
      %4968 = vmatpush1.bf16.xpose.msra.mxu0 0
      %4969 = vmatprep.subr.bf16.mxu0 0
      %4970 = vmatpush1.bf16.xpose.msra.mxu0 0
      %4971 = vmatprep.subr.bf16.mxu0 0
      %4972 = vmatpush1.bf16.xpose.msra.mxu0 0
      %4973 = vmatprep.subr.bf16.mxu0 0
      %4974 = vmatpush1.bf16.xpose.msra.mxu0 0
      %4975 = vmatprep.subr.bf16.mxu0 0
      %4976 = vmatpush1.bf16.xpose.msra.mxu0 0
      %4977 = vmatprep.subr.bf16.mxu0 0
      %4978 = vmatpush1.bf16.xpose.msra.mxu0 %v4961
      %4979 = vmatprep.subr.bf16.mxu0 0
      %4980 = vmatpush2.bf16.xpose.msra.mxu0 0
      %4981 = vmatprep.subr.bf16.mxu0 0
      %4982 = vmatpush2.bf16.xpose.msra.mxu0 0
      %4983 = vmatprep.subr.bf16.mxu0 0
      %4984 = vmatpush2.bf16.xpose.msra.mxu0 0
      %4985 = vmatprep.subr.bf16.mxu0 0
      %4986 = vmatpush2.bf16.xpose.msra.mxu0 0
      %4987 = vmatprep.subr.bf16.mxu0 0
      %4988 = vmatpush2.bf16.xpose.msra.mxu0 0
      %4989 = vmatprep.subr.bf16.mxu0 0
      %4990 = vmatpush2.bf16.xpose.msra.mxu0 0
      %4991 = vmatprep.subr.bf16.mxu0 0
      %4992 = vmatpush2.bf16.xpose.msra.mxu0 0
      %4993 = vmatprep.subr.bf16.mxu0 0
      %4994 = vmatpush2.bf16.xpose.msra.mxu0 0
      %4995 = vmatprep.mubr.bf16.mxu0 0
      %4996 = vmatmul.mubr.bf16.gmra.mxu0 %v4958
      %v4997 = vpop.f32.mrf.mxu0
      %v4998 = vadd.f32 0.0, %v4997
      %v4999 = vpop.f32.mrf.mxu0
      %v5000 = vpop.f32.mrf.mxu0
      %v5001 = vpop.f32.mrf.mxu0
      %5002 = vdwg.mxu0
      %v5003 = vmul.f32 %v4998, 0.35355338
      %v5004 = vadd.f32 %v5003, %v3046
      %v5005 = vsel %vm3172, %v5004, -inf
      %5006 = vmax.xlane.f32.xlu0 %v5005
      %v5007 = vpop.xlane.xlu0 %5006
      %v5008 = vsub.f32 %v5004, %v5007
      %v5009 = vmul.f32 %v5008, 1.442695
      %v5010 = vpow.pop %v5009
      %v5011 = vsel %vm3172, %v5010, 0.0
      %5012 = vadd.xlane.f32.xlu0 %v5011
      %v5013 = vpop.xlane.xlu0 %5012
      %v5014 = vrcp.pop %v5013
      %v5015 = vmul.f32 %v5010, %v5014
      %v5016 = vpack.c.bf16 %v5015, %v5015
      %5017 = vrot.lane.b32.xlu0 %v4841, 56
      %v5018 = vpop.permute.xlu0 %5017
      %v5020 = vsel %vm3187, %v5016, 0
      %v5023 = vsel %vm3191, %v5018, 0
      %5025 = vmatprep.subr.bf16.mxu0 0
      %5026 = vmatpush1.bf16.msra.mxu0 0
      %5027 = vmatprep.subr.bf16.mxu0 0
      %5028 = vmatpush1.bf16.msra.mxu0 0
      %5029 = vmatprep.subr.bf16.mxu0 0
      %5030 = vmatpush1.bf16.msra.mxu0 0
      %5031 = vmatprep.subr.bf16.mxu0 0
      %5032 = vmatpush1.bf16.msra.mxu0 0
      %5033 = vmatprep.subr.bf16.mxu0 0
      %5034 = vmatpush1.bf16.msra.mxu0 0
      %5035 = vmatprep.subr.bf16.mxu0 0
      %5036 = vmatpush1.bf16.msra.mxu0 0
      %5037 = vmatprep.subr.bf16.mxu0 0
      %5038 = vmatpush1.bf16.msra.mxu0 0
      %5039 = vmatprep.subr.bf16.mxu0 0
      %5040 = vmatpush1.bf16.msra.mxu0 %v5023
      %5041 = vmatprep.subr.bf16.mxu0 0
      %5042 = vmatpush2.bf16.msra.mxu0 0
      %5043 = vmatprep.subr.bf16.mxu0 0
      %5044 = vmatpush2.bf16.msra.mxu0 0
      %5045 = vmatprep.subr.bf16.mxu0 0
      %5046 = vmatpush2.bf16.msra.mxu0 0
      %5047 = vmatprep.subr.bf16.mxu0 0
      %5048 = vmatpush2.bf16.msra.mxu0 0
      %5049 = vmatprep.subr.bf16.mxu0 0
      %5050 = vmatpush2.bf16.msra.mxu0 0
      %5051 = vmatprep.subr.bf16.mxu0 0
      %5052 = vmatpush2.bf16.msra.mxu0 0
      %5053 = vmatprep.subr.bf16.mxu0 0
      %5054 = vmatpush2.bf16.msra.mxu0 0
      %5055 = vmatprep.subr.bf16.mxu0 0
      %5056 = vmatpush2.bf16.msra.mxu0 0
      %5057 = vmatprep.mubr.bf16.mxu0 0
      %5058 = vmatmul.mubr.bf16.gmra.mxu0 %v5020
      %v5059 = vpop.f32.mrf.mxu0
      %v5060 = vadd.f32 0.0, %v5059
      %v5061 = vpop.f32.mrf.mxu0
      %v5062 = vpop.f32.mrf.mxu0
      %v5063 = vpop.f32.mrf.mxu0
      %5064 = vdwg.mxu0
      %5065 = vrot.lane.b32.xlu0 %v4841, 112
      %v5066 = vpop.permute.xlu0 %5065
      %5067 = vrot.lane.b32.xlu0 %v4841, 80
      %v5068 = vpop.permute.xlu0 %5067
      %v5070 = vsel %vm1236, %v5066, 0
      %v5073 = vsel %vm1236, %v5068, 0
      %5075 = vmatprep.subr.bf16.mxu0 0
      %5076 = vmatpush1.bf16.xpose.msra.mxu0 0
      %5077 = vmatprep.subr.bf16.mxu0 0
      %5078 = vmatpush1.bf16.xpose.msra.mxu0 0
      %5079 = vmatprep.subr.bf16.mxu0 0
      %5080 = vmatpush1.bf16.xpose.msra.mxu0 0
      %5081 = vmatprep.subr.bf16.mxu0 0
      %5082 = vmatpush1.bf16.xpose.msra.mxu0 0
      %5083 = vmatprep.subr.bf16.mxu0 0
      %5084 = vmatpush1.bf16.xpose.msra.mxu0 0
      %5085 = vmatprep.subr.bf16.mxu0 0
      %5086 = vmatpush1.bf16.xpose.msra.mxu0 0
      %5087 = vmatprep.subr.bf16.mxu0 0
      %5088 = vmatpush1.bf16.xpose.msra.mxu0 0
      %5089 = vmatprep.subr.bf16.mxu0 0
      %5090 = vmatpush1.bf16.xpose.msra.mxu0 %v5073
      %5091 = vmatprep.subr.bf16.mxu0 0
      %5092 = vmatpush2.bf16.xpose.msra.mxu0 0
      %5093 = vmatprep.subr.bf16.mxu0 0
      %5094 = vmatpush2.bf16.xpose.msra.mxu0 0
      %5095 = vmatprep.subr.bf16.mxu0 0
      %5096 = vmatpush2.bf16.xpose.msra.mxu0 0
      %5097 = vmatprep.subr.bf16.mxu0 0
      %5098 = vmatpush2.bf16.xpose.msra.mxu0 0
      %5099 = vmatprep.subr.bf16.mxu0 0
      %5100 = vmatpush2.bf16.xpose.msra.mxu0 0
      %5101 = vmatprep.subr.bf16.mxu0 0
      %5102 = vmatpush2.bf16.xpose.msra.mxu0 0
      %5103 = vmatprep.subr.bf16.mxu0 0
      %5104 = vmatpush2.bf16.xpose.msra.mxu0 0
      %5105 = vmatprep.subr.bf16.mxu0 0
      %5106 = vmatpush2.bf16.xpose.msra.mxu0 0
      %5107 = vmatprep.mubr.bf16.mxu0 0
      %5108 = vmatmul.mubr.bf16.gmra.mxu0 %v5070
      %v5109 = vpop.f32.mrf.mxu0
      %v5110 = vadd.f32 0.0, %v5109
      %v5111 = vpop.f32.mrf.mxu0
      %v5112 = vpop.f32.mrf.mxu0
      %v5113 = vpop.f32.mrf.mxu0
      %5114 = vdwg.mxu0
      %v5115 = vmul.f32 %v5110, 0.35355338
      %v5116 = vadd.f32 %v5115, %v3046
      %v5117 = vsel %vm3172, %v5116, -inf
      %5118 = vmax.xlane.f32.xlu0 %v5117
      %v5119 = vpop.xlane.xlu0 %5118
      %v5120 = vsub.f32 %v5116, %v5119
      %v5121 = vmul.f32 %v5120, 1.442695
      %v5122 = vpow.pop %v5121
      %v5123 = vsel %vm3172, %v5122, 0.0
      %5124 = vadd.xlane.f32.xlu0 %v5123
      %v5125 = vpop.xlane.xlu0 %5124
      %v5126 = vrcp.pop %v5125
      %v5127 = vmul.f32 %v5122, %v5126
      %v5128 = vpack.c.bf16 %v5127, %v5127
      %5129 = vrot.lane.b32.xlu0 %v4841, 48
      %v5130 = vpop.permute.xlu0 %5129
      %v5132 = vsel %vm3187, %v5128, 0
      %v5135 = vsel %vm3191, %v5130, 0
      %5137 = vmatprep.subr.bf16.mxu0 0
      %5138 = vmatpush1.bf16.msra.mxu0 0
      %5139 = vmatprep.subr.bf16.mxu0 0
      %5140 = vmatpush1.bf16.msra.mxu0 0
      %5141 = vmatprep.subr.bf16.mxu0 0
      %5142 = vmatpush1.bf16.msra.mxu0 0
      %5143 = vmatprep.subr.bf16.mxu0 0
      %5144 = vmatpush1.bf16.msra.mxu0 0
      %5145 = vmatprep.subr.bf16.mxu0 0
      %5146 = vmatpush1.bf16.msra.mxu0 0
      %5147 = vmatprep.subr.bf16.mxu0 0
      %5148 = vmatpush1.bf16.msra.mxu0 0
      %5149 = vmatprep.subr.bf16.mxu0 0
      %5150 = vmatpush1.bf16.msra.mxu0 0
      %5151 = vmatprep.subr.bf16.mxu0 0
      %5152 = vmatpush1.bf16.msra.mxu0 %v5135
      %5153 = vmatprep.subr.bf16.mxu0 0
      %5154 = vmatpush2.bf16.msra.mxu0 0
      %5155 = vmatprep.subr.bf16.mxu0 0
      %5156 = vmatpush2.bf16.msra.mxu0 0
      %5157 = vmatprep.subr.bf16.mxu0 0
      %5158 = vmatpush2.bf16.msra.mxu0 0
      %5159 = vmatprep.subr.bf16.mxu0 0
      %5160 = vmatpush2.bf16.msra.mxu0 0
      %5161 = vmatprep.subr.bf16.mxu0 0
      %5162 = vmatpush2.bf16.msra.mxu0 0
      %5163 = vmatprep.subr.bf16.mxu0 0
      %5164 = vmatpush2.bf16.msra.mxu0 0
      %5165 = vmatprep.subr.bf16.mxu0 0
      %5166 = vmatpush2.bf16.msra.mxu0 0
      %5167 = vmatprep.subr.bf16.mxu0 0
      %5168 = vmatpush2.bf16.msra.mxu0 0
      %5169 = vmatprep.mubr.bf16.mxu0 0
      %5170 = vmatmul.mubr.bf16.gmra.mxu0 %v5132
      %v5171 = vpop.f32.mrf.mxu0
      %v5172 = vadd.f32 0.0, %v5171
      %v5173 = vpop.f32.mrf.mxu0
      %v5174 = vpop.f32.mrf.mxu0
      %v5175 = vpop.f32.mrf.mxu0
      %5176 = vdwg.mxu0
      %5177 = vrot.lane.b32.xlu0 %v4841, 104
      %v5178 = vpop.permute.xlu0 %5177
      %5179 = vrot.lane.b32.xlu0 %v4841, 72
      %v5180 = vpop.permute.xlu0 %5179
      %v5182 = vsel %vm1236, %v5178, 0
      %v5185 = vsel %vm1236, %v5180, 0
      %5187 = vmatprep.subr.bf16.mxu0 0
      %5188 = vmatpush1.bf16.xpose.msra.mxu0 0
      %5189 = vmatprep.subr.bf16.mxu0 0
      %5190 = vmatpush1.bf16.xpose.msra.mxu0 0
      %5191 = vmatprep.subr.bf16.mxu0 0
      %5192 = vmatpush1.bf16.xpose.msra.mxu0 0
      %5193 = vmatprep.subr.bf16.mxu0 0
      %5194 = vmatpush1.bf16.xpose.msra.mxu0 0
      %5195 = vmatprep.subr.bf16.mxu0 0
      %5196 = vmatpush1.bf16.xpose.msra.mxu0 0
      %5197 = vmatprep.subr.bf16.mxu0 0
      %5198 = vmatpush1.bf16.xpose.msra.mxu0 0
      %5199 = vmatprep.subr.bf16.mxu0 0
      %5200 = vmatpush1.bf16.xpose.msra.mxu0 0
      %5201 = vmatprep.subr.bf16.mxu0 0
      %5202 = vmatpush1.bf16.xpose.msra.mxu0 %v5185
      %5203 = vmatprep.subr.bf16.mxu0 0
      %5204 = vmatpush2.bf16.xpose.msra.mxu0 0
      %5205 = vmatprep.subr.bf16.mxu0 0
      %5206 = vmatpush2.bf16.xpose.msra.mxu0 0
      %5207 = vmatprep.subr.bf16.mxu0 0
      %5208 = vmatpush2.bf16.xpose.msra.mxu0 0
      %5209 = vmatprep.subr.bf16.mxu0 0
      %5210 = vmatpush2.bf16.xpose.msra.mxu0 0
      %5211 = vmatprep.subr.bf16.mxu0 0
      %5212 = vmatpush2.bf16.xpose.msra.mxu0 0
      %5213 = vmatprep.subr.bf16.mxu0 0
      %5214 = vmatpush2.bf16.xpose.msra.mxu0 0
      %5215 = vmatprep.subr.bf16.mxu0 0
      %5216 = vmatpush2.bf16.xpose.msra.mxu0 0
      %5217 = vmatprep.subr.bf16.mxu0 0
      %5218 = vmatpush2.bf16.xpose.msra.mxu0 0
      %5219 = vmatprep.mubr.bf16.mxu0 0
      %5220 = vmatmul.mubr.bf16.gmra.mxu0 %v5182
      %v5221 = vpop.f32.mrf.mxu0
      %v5222 = vadd.f32 0.0, %v5221
      %v5223 = vpop.f32.mrf.mxu0
      %v5224 = vpop.f32.mrf.mxu0
      %v5225 = vpop.f32.mrf.mxu0
      %5226 = vdwg.mxu0
      %v5227 = vmul.f32 %v5222, 0.35355338
      %v5228 = vadd.f32 %v5227, %v3046
      %v5229 = vsel %vm3172, %v5228, -inf
      %5230 = vmax.xlane.f32.xlu0 %v5229
      %v5231 = vpop.xlane.xlu0 %5230
      %v5232 = vsub.f32 %v5228, %v5231
      %v5233 = vmul.f32 %v5232, 1.442695
      %v5234 = vpow.pop %v5233
      %v5235 = vsel %vm3172, %v5234, 0.0
      %5236 = vadd.xlane.f32.xlu0 %v5235
      %v5237 = vpop.xlane.xlu0 %5236
      %v5238 = vrcp.pop %v5237
      %v5239 = vmul.f32 %v5234, %v5238
      %v5240 = vpack.c.bf16 %v5239, %v5239
      %5241 = vrot.lane.b32.xlu0 %v4841, 40
      %v5242 = vpop.permute.xlu0 %5241
      %v5244 = vsel %vm3187, %v5240, 0
      %v5247 = vsel %vm3191, %v5242, 0
      %5249 = vmatprep.subr.bf16.mxu0 0
      %5250 = vmatpush1.bf16.msra.mxu0 0
      %5251 = vmatprep.subr.bf16.mxu0 0
      %5252 = vmatpush1.bf16.msra.mxu0 0
      %5253 = vmatprep.subr.bf16.mxu0 0
      %5254 = vmatpush1.bf16.msra.mxu0 0
      %5255 = vmatprep.subr.bf16.mxu0 0
      %5256 = vmatpush1.bf16.msra.mxu0 0
      %5257 = vmatprep.subr.bf16.mxu0 0
      %5258 = vmatpush1.bf16.msra.mxu0 0
      %5259 = vmatprep.subr.bf16.mxu0 0
      %5260 = vmatpush1.bf16.msra.mxu0 0
      %5261 = vmatprep.subr.bf16.mxu0 0
      %5262 = vmatpush1.bf16.msra.mxu0 0
      %5263 = vmatprep.subr.bf16.mxu0 0
      %5264 = vmatpush1.bf16.msra.mxu0 %v5247
      %5265 = vmatprep.subr.bf16.mxu0 0
      %5266 = vmatpush2.bf16.msra.mxu0 0
      %5267 = vmatprep.subr.bf16.mxu0 0
      %5268 = vmatpush2.bf16.msra.mxu0 0
      %5269 = vmatprep.subr.bf16.mxu0 0
      %5270 = vmatpush2.bf16.msra.mxu0 0
      %5271 = vmatprep.subr.bf16.mxu0 0
      %5272 = vmatpush2.bf16.msra.mxu0 0
      %5273 = vmatprep.subr.bf16.mxu0 0
      %5274 = vmatpush2.bf16.msra.mxu0 0
      %5275 = vmatprep.subr.bf16.mxu0 0
      %5276 = vmatpush2.bf16.msra.mxu0 0
      %5277 = vmatprep.subr.bf16.mxu0 0
      %5278 = vmatpush2.bf16.msra.mxu0 0
      %5279 = vmatprep.subr.bf16.mxu0 0
      %5280 = vmatpush2.bf16.msra.mxu0 0
      %5281 = vmatprep.mubr.bf16.mxu0 0
      %5282 = vmatmul.mubr.bf16.gmra.mxu0 %v5244
      %v5283 = vpop.f32.mrf.mxu0
      %v5284 = vadd.f32 0.0, %v5283
      %v5285 = vpop.f32.mrf.mxu0
      %v5286 = vpop.f32.mrf.mxu0
      %v5287 = vpop.f32.mrf.mxu0
      %5288 = vdwg.mxu0
      %5290 = vrot.lane.b32.xlu0 %v5060, 8
      %v5291 = vpop.permute.xlu0 %5290
      %5294 = vrot.lane.b32.xlu0 %v5172, 16
      %v5295 = vpop.permute.xlu0 %5294
      %5298 = vrot.lane.b32.xlu0 %v5284, 24
      %v5299 = vpop.permute.xlu0 %5298
      %v5301 = vsel %vm1236, %v4948, %v5291
      %v5302 = vsel %vm1765, %v5301, %v5295
      %v5303 = vsel %vm1768, %v5302, %v5299
      %v5304 = vpack.c.bf16 %v5303, %v5303
      %v5306 = vlaneseq
      %v5307 = vshrl.u32 %v5306, 7
      %v5308 = vsub.s32 0, %v5307
      %v5309 = vrot.slane %v4779, %v5308
      %v5315 = vunpack.c.l.b16 %v4774
      %v5316 = vunpack.c.l.b16 %v4775
      %v5317 = vunpack.c.l.b16 %v4776
      %v5318 = vunpack.c.l.b16 %v4777
      %v5319 = vpack.c.b16 %v5316, %v5315
      %v5320 = vpack.c.b16 %v5318, %v5317
      %v5324 = vsel %vm1113, %v5304, 0
      %5326 = vmatprep.subr.bf16.mxu0 0
      %5327 = vmatpush1.bf16.msra.mxu0 0
      %5328 = vmatprep.subr.bf16.mxu0 0
      %5329 = vmatpush1.bf16.msra.mxu0 0
      %5330 = vmatprep.subr.bf16.mxu0 0
      %5331 = vmatpush1.bf16.msra.mxu0 0
      %5332 = vmatprep.subr.bf16.mxu0 0
      %5333 = vmatpush1.bf16.msra.mxu0 0
      %5334 = vmatprep.subr.bf16.mxu0 0
      %5335 = vmatpush1.bf16.msra.mxu0 0
      %5336 = vmatprep.subr.bf16.mxu0 0
      %5337 = vmatpush1.bf16.msra.mxu0 0
      %5338 = vmatprep.subr.bf16.mxu0 0
      %5339 = vmatpush1.bf16.msra.mxu0 %v5320
      %5340 = vmatprep.subr.bf16.mxu0 0
      %5341 = vmatpush1.bf16.msra.mxu0 %v5319
      %5342 = vmatprep.subr.bf16.mxu0 0
      %5343 = vmatpush2.bf16.msra.mxu0 0
      %5344 = vmatprep.subr.bf16.mxu0 0
      %5345 = vmatpush2.bf16.msra.mxu0 0
      %5346 = vmatprep.subr.bf16.mxu0 0
      %5347 = vmatpush2.bf16.msra.mxu0 0
      %5348 = vmatprep.subr.bf16.mxu0 0
      %5349 = vmatpush2.bf16.msra.mxu0 0
      %5350 = vmatprep.subr.bf16.mxu0 0
      %5351 = vmatpush2.bf16.msra.mxu0 0
      %5352 = vmatprep.subr.bf16.mxu0 0
      %5353 = vmatpush2.bf16.msra.mxu0 0
      %5354 = vmatprep.subr.bf16.mxu0 0
      %5355 = vmatpush2.bf16.msra.mxu0 0
      %5356 = vmatprep.subr.bf16.mxu0 0
      %5357 = vmatpush2.bf16.msra.mxu0 0
      %5358 = vmatprep.mubr.bf16.mxu0 0
      %5359 = vmatmul.mubr.bf16.gmra.mxu0 %v5324
      %v5360 = vpop.f32.mrf.mxu0
      %v5361 = vadd.f32 %v5309, %v5360
      %v5362 = vpop.f32.mrf.mxu0
      %v5363 = vpop.f32.mrf.mxu0
      %v5364 = vpop.f32.mrf.mxu0
      %5365 = vdwg.mxu0
      %v5366 = vadd.f32 %v4762, %v5361
      %v5367 = vsel %vm3649, %v5366, 0.0
      %5368 = vadd.xlane.f32.xlu0 %v5367
      %v5369 = vpop.xlane.xlu0 %5368
      %v5370 = vmul.f32 %v5369, %v1843
      %v5371 = vsub.f32 %v5366, %v5370
      %v5372 = vmul.f32 %v5371, %v5371
      %v5373 = vsel %vm3649, %v5372, 0.0
      %5374 = vadd.xlane.f32.xlu0 %v5373
      %v5375 = vpop.xlane.xlu0 %5374
      %v5376 = vmul.f32 %v5375, %v1843
      %v5377 = vadd.f32 %v5376, 1e-05
      %v5378 = vrsqrt.pop %v5377
      %v5379 = vmul.f32 %v5371, %v5378
      %v5380 = vlaneseq
      %v5381 = vshrl.u32 %v5380, 7
      %v5382 = vsub.s32 0, %v5381
      %v5383 = vrot.slane %v4764, %v5382
      %v5384 = vmul.f32 %v5379, %v5383
      %v5385 = vlaneseq
      %v5386 = vshrl.u32 %v5385, 7
      %v5387 = vsub.s32 1, %v5386
      %v5388 = vrot.slane %v4764, %v5387
      %v5389 = vadd.f32 %v5384, %v5388
      %v5390 = vpack.c.bf16 %v5389, %v5389
      %s5391 = scalar_lea.vmem %s35, 16
      %v5392 = vld [vmem:[%s5391] sm:$0xf]
      %v5393 = vld [vmem:[%s5391 + $0x4] sm:$0xf]
      %v5394 = vld [vmem:[%s5391 + $0x8] sm:$0xf]
      %v5395 = vld [vmem:[%s5391 + $0xc] sm:$0xf]
      %s5396 = scalar_lea.vmem %s37, 1
      %v5397 = vld [vmem:[%s5396] sm:$0x1]
      %s5398 = scalar_lea.vmem %s39, 16
      %v5399 = vld [vmem:[%s5398] sm:$0xf]
      %v5400 = vld [vmem:[%s5398 + $0x4] sm:$0xf]
      %v5401 = vld [vmem:[%s5398 + $0x8] sm:$0xf]
      %v5402 = vld [vmem:[%s5398 + $0xc] sm:$0xf]
      %s5403 = scalar_lea.vmem %s41, 1
      %v5404 = vld [vmem:[%s5403] sm:$0x1]
      %s5405 = scalar_lea.vmem %s43, 16
      %v5406 = vld [vmem:[%s5405] sm:$0xf]
      %v5407 = vld [vmem:[%s5405 + $0x4] sm:$0xf]
      %v5408 = vld [vmem:[%s5405 + $0x8] sm:$0xf]
      %v5409 = vld [vmem:[%s5405 + $0xc] sm:$0xf]
      %s5410 = scalar_lea.vmem %s45, 1
      %v5411 = vld [vmem:[%s5410] sm:$0x1]
      %v5413 = vlaneseq
      %v5414 = vshrl.u32 %v5413, 7
      %v5415 = vsub.s32 0, %v5414
      %v5416 = vrot.slane %v5397, %v5415
      %v5422 = vunpack.c.l.b16 %v5392
      %v5423 = vunpack.c.l.b16 %v5393
      %v5424 = vunpack.c.l.b16 %v5394
      %v5425 = vunpack.c.l.b16 %v5395
      %v5426 = vpack.c.b16 %v5423, %v5422
      %v5427 = vpack.c.b16 %v5425, %v5424
      %v5431 = vsel %vm1113, %v5390, 0
      %5433 = vmatprep.subr.bf16.mxu0 0
      %5434 = vmatpush1.bf16.msra.mxu0 0
      %5435 = vmatprep.subr.bf16.mxu0 0
      %5436 = vmatpush1.bf16.msra.mxu0 0
      %5437 = vmatprep.subr.bf16.mxu0 0
      %5438 = vmatpush1.bf16.msra.mxu0 0
      %5439 = vmatprep.subr.bf16.mxu0 0
      %5440 = vmatpush1.bf16.msra.mxu0 0
      %5441 = vmatprep.subr.bf16.mxu0 0
      %5442 = vmatpush1.bf16.msra.mxu0 0
      %5443 = vmatprep.subr.bf16.mxu0 0
      %5444 = vmatpush1.bf16.msra.mxu0 0
      %5445 = vmatprep.subr.bf16.mxu0 0
      %5446 = vmatpush1.bf16.msra.mxu0 %v5427
      %5447 = vmatprep.subr.bf16.mxu0 0
      %5448 = vmatpush1.bf16.msra.mxu0 %v5426
      %5449 = vmatprep.subr.bf16.mxu0 0
      %5450 = vmatpush2.bf16.msra.mxu0 0
      %5451 = vmatprep.subr.bf16.mxu0 0
      %5452 = vmatpush2.bf16.msra.mxu0 0
      %5453 = vmatprep.subr.bf16.mxu0 0
      %5454 = vmatpush2.bf16.msra.mxu0 0
      %5455 = vmatprep.subr.bf16.mxu0 0
      %5456 = vmatpush2.bf16.msra.mxu0 0
      %5457 = vmatprep.subr.bf16.mxu0 0
      %5458 = vmatpush2.bf16.msra.mxu0 0
      %5459 = vmatprep.subr.bf16.mxu0 0
      %5460 = vmatpush2.bf16.msra.mxu0 0
      %5461 = vmatprep.subr.bf16.mxu0 0
      %5462 = vmatpush2.bf16.msra.mxu0 0
      %5463 = vmatprep.subr.bf16.mxu0 0
      %5464 = vmatpush2.bf16.msra.mxu0 0
      %5465 = vmatprep.mubr.bf16.mxu0 0
      %5466 = vmatmul.mubr.bf16.gmra.mxu0 %v5431
      %v5467 = vpop.f32.mrf.mxu0
      %v5468 = vadd.f32 %v5416, %v5467
      %v5469 = vpop.f32.mrf.mxu0
      %v5470 = vpop.f32.mrf.mxu0
      %v5471 = vpop.f32.mrf.mxu0
      %5472 = vdwg.mxu0
      %v5474 = vlaneseq
      %v5475 = vshrl.u32 %v5474, 7
      %v5476 = vsub.s32 0, %v5475
      %v5477 = vrot.slane %v5404, %v5476
      %v5483 = vunpack.c.l.b16 %v5399
      %v5484 = vunpack.c.l.b16 %v5400
      %v5485 = vunpack.c.l.b16 %v5401
      %v5486 = vunpack.c.l.b16 %v5402
      %v5487 = vpack.c.b16 %v5484, %v5483
      %v5488 = vpack.c.b16 %v5486, %v5485
      %5491 = vmatprep.subr.bf16.mxu0 0
      %5492 = vmatpush1.bf16.msra.mxu0 0
      %5493 = vmatprep.subr.bf16.mxu0 0
      %5494 = vmatpush1.bf16.msra.mxu0 0
      %5495 = vmatprep.subr.bf16.mxu0 0
      %5496 = vmatpush1.bf16.msra.mxu0 0
      %5497 = vmatprep.subr.bf16.mxu0 0
      %5498 = vmatpush1.bf16.msra.mxu0 0
      %5499 = vmatprep.subr.bf16.mxu0 0
      %5500 = vmatpush1.bf16.msra.mxu0 0
      %5501 = vmatprep.subr.bf16.mxu0 0
      %5502 = vmatpush1.bf16.msra.mxu0 0
      %5503 = vmatprep.subr.bf16.mxu0 0
      %5504 = vmatpush1.bf16.msra.mxu0 %v5488
      %5505 = vmatprep.subr.bf16.mxu0 0
      %5506 = vmatpush1.bf16.msra.mxu0 %v5487
      %5507 = vmatprep.subr.bf16.mxu0 0
      %5508 = vmatpush2.bf16.msra.mxu0 0
      %5509 = vmatprep.subr.bf16.mxu0 0
      %5510 = vmatpush2.bf16.msra.mxu0 0
      %5511 = vmatprep.subr.bf16.mxu0 0
      %5512 = vmatpush2.bf16.msra.mxu0 0
      %5513 = vmatprep.subr.bf16.mxu0 0
      %5514 = vmatpush2.bf16.msra.mxu0 0
      %5515 = vmatprep.subr.bf16.mxu0 0
      %5516 = vmatpush2.bf16.msra.mxu0 0
      %5517 = vmatprep.subr.bf16.mxu0 0
      %5518 = vmatpush2.bf16.msra.mxu0 0
      %5519 = vmatprep.subr.bf16.mxu0 0
      %5520 = vmatpush2.bf16.msra.mxu0 0
      %5521 = vmatprep.subr.bf16.mxu0 0
      %5522 = vmatpush2.bf16.msra.mxu0 0
      %5523 = vmatprep.mubr.bf16.mxu0 0
      %5524 = vmatmul.mubr.bf16.gmra.mxu0 %v3769
      %v5525 = vpop.f32.mrf.mxu0
      %v5526 = vadd.f32 %v5477, %v5525
      %v5527 = vpop.f32.mrf.mxu0
      %v5528 = vpop.f32.mrf.mxu0
      %v5529 = vpop.f32.mrf.mxu0
      %5530 = vdwg.mxu0
      %v5531 = vpack.c.bf16 %v5468, %v5468
      %v5532 = vpack.c.bf16 %v5526, %v5526
      %v5534 = vsel %vm1236, %v5531, 0
      %v5537 = vsel %vm1236, %v5532, 0
      %5539 = vmatprep.subr.bf16.mxu0 0
      %5540 = vmatpush1.bf16.xpose.msra.mxu0 0
      %5541 = vmatprep.subr.bf16.mxu0 0
      %5542 = vmatpush1.bf16.xpose.msra.mxu0 0
      %5543 = vmatprep.subr.bf16.mxu0 0
      %5544 = vmatpush1.bf16.xpose.msra.mxu0 0
      %5545 = vmatprep.subr.bf16.mxu0 0
      %5546 = vmatpush1.bf16.xpose.msra.mxu0 0
      %5547 = vmatprep.subr.bf16.mxu0 0
      %5548 = vmatpush1.bf16.xpose.msra.mxu0 0
      %5549 = vmatprep.subr.bf16.mxu0 0
      %5550 = vmatpush1.bf16.xpose.msra.mxu0 0
      %5551 = vmatprep.subr.bf16.mxu0 0
      %5552 = vmatpush1.bf16.xpose.msra.mxu0 0
      %5553 = vmatprep.subr.bf16.mxu0 0
      %5554 = vmatpush1.bf16.xpose.msra.mxu0 %v5537
      %5555 = vmatprep.subr.bf16.mxu0 0
      %5556 = vmatpush2.bf16.xpose.msra.mxu0 0
      %5557 = vmatprep.subr.bf16.mxu0 0
      %5558 = vmatpush2.bf16.xpose.msra.mxu0 0
      %5559 = vmatprep.subr.bf16.mxu0 0
      %5560 = vmatpush2.bf16.xpose.msra.mxu0 0
      %5561 = vmatprep.subr.bf16.mxu0 0
      %5562 = vmatpush2.bf16.xpose.msra.mxu0 0
      %5563 = vmatprep.subr.bf16.mxu0 0
      %5564 = vmatpush2.bf16.xpose.msra.mxu0 0
      %5565 = vmatprep.subr.bf16.mxu0 0
      %5566 = vmatpush2.bf16.xpose.msra.mxu0 0
      %5567 = vmatprep.subr.bf16.mxu0 0
      %5568 = vmatpush2.bf16.xpose.msra.mxu0 0
      %5569 = vmatprep.subr.bf16.mxu0 0
      %5570 = vmatpush2.bf16.xpose.msra.mxu0 0
      %5571 = vmatprep.mubr.bf16.mxu0 0
      %5572 = vmatmul.mubr.bf16.gmra.mxu0 %v5534
      %v5573 = vpop.f32.mrf.mxu0
      %v5574 = vadd.f32 0.0, %v5573
      %v5575 = vpop.f32.mrf.mxu0
      %v5576 = vpop.f32.mrf.mxu0
      %v5577 = vpop.f32.mrf.mxu0
      %5578 = vdwg.mxu0
      %v5579 = vmul.f32 %v5574, 0.35355338
      %v5580 = vsel %vm3860, %v5579, -inf
      %5581 = vmax.xlane.f32.xlu0 %v5580
      %v5582 = vpop.xlane.xlu0 %5581
      %v5583 = vsub.f32 %v5579, %v5582
      %v5584 = vmul.f32 %v5583, 1.442695
      %v5585 = vpow.pop %v5584
      %v5586 = vsel %vm3860, %v5585, 0.0
      %5587 = vadd.xlane.f32.xlu0 %v5586
      %v5588 = vpop.xlane.xlu0 %5587
      %v5589 = vrcp.pop %v5588
      %v5590 = vmul.f32 %v5585, %v5589
      %v5591 = vpack.c.bf16 %v5590, %v5590
      %5593 = vrot.lane.b32.xlu0 %v5532, 96
      %v5594 = vpop.permute.xlu0 %5593
      %v5596 = vsel %vm1236, %v5591, 0
      %v5599 = vsel %vm1316, %v5594, 0
      %5601 = vmatprep.subr.bf16.mxu0 0
      %5602 = vmatpush1.bf16.msra.mxu0 0
      %5603 = vmatprep.subr.bf16.mxu0 0
      %5604 = vmatpush1.bf16.msra.mxu0 0
      %5605 = vmatprep.subr.bf16.mxu0 0
      %5606 = vmatpush1.bf16.msra.mxu0 0
      %5607 = vmatprep.subr.bf16.mxu0 0
      %5608 = vmatpush1.bf16.msra.mxu0 0
      %5609 = vmatprep.subr.bf16.mxu0 0
      %5610 = vmatpush1.bf16.msra.mxu0 0
      %5611 = vmatprep.subr.bf16.mxu0 0
      %5612 = vmatpush1.bf16.msra.mxu0 0
      %5613 = vmatprep.subr.bf16.mxu0 0
      %5614 = vmatpush1.bf16.msra.mxu0 0
      %5615 = vmatprep.subr.bf16.mxu0 0
      %5616 = vmatpush1.bf16.msra.mxu0 %v5599
      %5617 = vmatprep.subr.bf16.mxu0 0
      %5618 = vmatpush2.bf16.msra.mxu0 0
      %5619 = vmatprep.subr.bf16.mxu0 0
      %5620 = vmatpush2.bf16.msra.mxu0 0
      %5621 = vmatprep.subr.bf16.mxu0 0
      %5622 = vmatpush2.bf16.msra.mxu0 0
      %5623 = vmatprep.subr.bf16.mxu0 0
      %5624 = vmatpush2.bf16.msra.mxu0 0
      %5625 = vmatprep.subr.bf16.mxu0 0
      %5626 = vmatpush2.bf16.msra.mxu0 0
      %5627 = vmatprep.subr.bf16.mxu0 0
      %5628 = vmatpush2.bf16.msra.mxu0 0
      %5629 = vmatprep.subr.bf16.mxu0 0
      %5630 = vmatpush2.bf16.msra.mxu0 0
      %5631 = vmatprep.subr.bf16.mxu0 0
      %5632 = vmatpush2.bf16.msra.mxu0 0
      %5633 = vmatprep.mubr.bf16.mxu0 0
      %5634 = vmatmul.mubr.bf16.gmra.mxu0 %v5596
      %v5635 = vpop.f32.mrf.mxu0
      %v5636 = vadd.f32 0.0, %v5635
      %v5637 = vpop.f32.mrf.mxu0
      %v5638 = vpop.f32.mrf.mxu0
      %v5639 = vpop.f32.mrf.mxu0
      %5640 = vdwg.mxu0
      %5642 = vrot.lane.b32.xlu0 %v5531, 120
      %v5643 = vpop.permute.xlu0 %5642
      %5644 = vrot.lane.b32.xlu0 %v5532, 120
      %v5645 = vpop.permute.xlu0 %5644
      %v5647 = vsel %vm1236, %v5643, 0
      %v5650 = vsel %vm1236, %v5645, 0
      %5652 = vmatprep.subr.bf16.mxu0 0
      %5653 = vmatpush1.bf16.xpose.msra.mxu0 0
      %5654 = vmatprep.subr.bf16.mxu0 0
      %5655 = vmatpush1.bf16.xpose.msra.mxu0 0
      %5656 = vmatprep.subr.bf16.mxu0 0
      %5657 = vmatpush1.bf16.xpose.msra.mxu0 0
      %5658 = vmatprep.subr.bf16.mxu0 0
      %5659 = vmatpush1.bf16.xpose.msra.mxu0 0
      %5660 = vmatprep.subr.bf16.mxu0 0
      %5661 = vmatpush1.bf16.xpose.msra.mxu0 0
      %5662 = vmatprep.subr.bf16.mxu0 0
      %5663 = vmatpush1.bf16.xpose.msra.mxu0 0
      %5664 = vmatprep.subr.bf16.mxu0 0
      %5665 = vmatpush1.bf16.xpose.msra.mxu0 0
      %5666 = vmatprep.subr.bf16.mxu0 0
      %5667 = vmatpush1.bf16.xpose.msra.mxu0 %v5650
      %5668 = vmatprep.subr.bf16.mxu0 0
      %5669 = vmatpush2.bf16.xpose.msra.mxu0 0
      %5670 = vmatprep.subr.bf16.mxu0 0
      %5671 = vmatpush2.bf16.xpose.msra.mxu0 0
      %5672 = vmatprep.subr.bf16.mxu0 0
      %5673 = vmatpush2.bf16.xpose.msra.mxu0 0
      %5674 = vmatprep.subr.bf16.mxu0 0
      %5675 = vmatpush2.bf16.xpose.msra.mxu0 0
      %5676 = vmatprep.subr.bf16.mxu0 0
      %5677 = vmatpush2.bf16.xpose.msra.mxu0 0
      %5678 = vmatprep.subr.bf16.mxu0 0
      %5679 = vmatpush2.bf16.xpose.msra.mxu0 0
      %5680 = vmatprep.subr.bf16.mxu0 0
      %5681 = vmatpush2.bf16.xpose.msra.mxu0 0
      %5682 = vmatprep.subr.bf16.mxu0 0
      %5683 = vmatpush2.bf16.xpose.msra.mxu0 0
      %5684 = vmatprep.mubr.bf16.mxu0 0
      %5685 = vmatmul.mubr.bf16.gmra.mxu0 %v5647
      %v5686 = vpop.f32.mrf.mxu0
      %v5687 = vadd.f32 0.0, %v5686
      %v5688 = vpop.f32.mrf.mxu0
      %v5689 = vpop.f32.mrf.mxu0
      %v5690 = vpop.f32.mrf.mxu0
      %5691 = vdwg.mxu0
      %v5692 = vmul.f32 %v5687, 0.35355338
      %v5693 = vsel %vm3860, %v5692, -inf
      %5694 = vmax.xlane.f32.xlu0 %v5693
      %v5695 = vpop.xlane.xlu0 %5694
      %v5696 = vsub.f32 %v5692, %v5695
      %v5697 = vmul.f32 %v5696, 1.442695
      %v5698 = vpow.pop %v5697
      %v5699 = vsel %vm3860, %v5698, 0.0
      %5700 = vadd.xlane.f32.xlu0 %v5699
      %v5701 = vpop.xlane.xlu0 %5700
      %v5702 = vrcp.pop %v5701
      %v5703 = vmul.f32 %v5698, %v5702
      %v5704 = vpack.c.bf16 %v5703, %v5703
      %5705 = vrot.lane.b32.xlu0 %v5532, 88
      %v5706 = vpop.permute.xlu0 %5705
      %v5708 = vsel %vm1236, %v5704, 0
      %v5711 = vsel %vm1316, %v5706, 0
      %5713 = vmatprep.subr.bf16.mxu0 0
      %5714 = vmatpush1.bf16.msra.mxu0 0
      %5715 = vmatprep.subr.bf16.mxu0 0
      %5716 = vmatpush1.bf16.msra.mxu0 0
      %5717 = vmatprep.subr.bf16.mxu0 0
      %5718 = vmatpush1.bf16.msra.mxu0 0
      %5719 = vmatprep.subr.bf16.mxu0 0
      %5720 = vmatpush1.bf16.msra.mxu0 0
      %5721 = vmatprep.subr.bf16.mxu0 0
      %5722 = vmatpush1.bf16.msra.mxu0 0
      %5723 = vmatprep.subr.bf16.mxu0 0
      %5724 = vmatpush1.bf16.msra.mxu0 0
      %5725 = vmatprep.subr.bf16.mxu0 0
      %5726 = vmatpush1.bf16.msra.mxu0 0
      %5727 = vmatprep.subr.bf16.mxu0 0
      %5728 = vmatpush1.bf16.msra.mxu0 %v5711
      %5729 = vmatprep.subr.bf16.mxu0 0
      %5730 = vmatpush2.bf16.msra.mxu0 0
      %5731 = vmatprep.subr.bf16.mxu0 0
      %5732 = vmatpush2.bf16.msra.mxu0 0
      %5733 = vmatprep.subr.bf16.mxu0 0
      %5734 = vmatpush2.bf16.msra.mxu0 0
      %5735 = vmatprep.subr.bf16.mxu0 0
      %5736 = vmatpush2.bf16.msra.mxu0 0
      %5737 = vmatprep.subr.bf16.mxu0 0
      %5738 = vmatpush2.bf16.msra.mxu0 0
      %5739 = vmatprep.subr.bf16.mxu0 0
      %5740 = vmatpush2.bf16.msra.mxu0 0
      %5741 = vmatprep.subr.bf16.mxu0 0
      %5742 = vmatpush2.bf16.msra.mxu0 0
      %5743 = vmatprep.subr.bf16.mxu0 0
      %5744 = vmatpush2.bf16.msra.mxu0 0
      %5745 = vmatprep.mubr.bf16.mxu0 0
      %5746 = vmatmul.mubr.bf16.gmra.mxu0 %v5708
      %v5747 = vpop.f32.mrf.mxu0
      %v5748 = vadd.f32 0.0, %v5747
      %v5749 = vpop.f32.mrf.mxu0
      %v5750 = vpop.f32.mrf.mxu0
      %v5751 = vpop.f32.mrf.mxu0
      %5752 = vdwg.mxu0
      %5753 = vrot.lane.b32.xlu0 %v5531, 112
      %v5754 = vpop.permute.xlu0 %5753
      %5755 = vrot.lane.b32.xlu0 %v5532, 112
      %v5756 = vpop.permute.xlu0 %5755
      %v5758 = vsel %vm1236, %v5754, 0
      %v5761 = vsel %vm1236, %v5756, 0
      %5763 = vmatprep.subr.bf16.mxu0 0
      %5764 = vmatpush1.bf16.xpose.msra.mxu0 0
      %5765 = vmatprep.subr.bf16.mxu0 0
      %5766 = vmatpush1.bf16.xpose.msra.mxu0 0
      %5767 = vmatprep.subr.bf16.mxu0 0
      %5768 = vmatpush1.bf16.xpose.msra.mxu0 0
      %5769 = vmatprep.subr.bf16.mxu0 0
      %5770 = vmatpush1.bf16.xpose.msra.mxu0 0
      %5771 = vmatprep.subr.bf16.mxu0 0
      %5772 = vmatpush1.bf16.xpose.msra.mxu0 0
      %5773 = vmatprep.subr.bf16.mxu0 0
      %5774 = vmatpush1.bf16.xpose.msra.mxu0 0
      %5775 = vmatprep.subr.bf16.mxu0 0
      %5776 = vmatpush1.bf16.xpose.msra.mxu0 0
      %5777 = vmatprep.subr.bf16.mxu0 0
      %5778 = vmatpush1.bf16.xpose.msra.mxu0 %v5761
      %5779 = vmatprep.subr.bf16.mxu0 0
      %5780 = vmatpush2.bf16.xpose.msra.mxu0 0
      %5781 = vmatprep.subr.bf16.mxu0 0
      %5782 = vmatpush2.bf16.xpose.msra.mxu0 0
      %5783 = vmatprep.subr.bf16.mxu0 0
      %5784 = vmatpush2.bf16.xpose.msra.mxu0 0
      %5785 = vmatprep.subr.bf16.mxu0 0
      %5786 = vmatpush2.bf16.xpose.msra.mxu0 0
      %5787 = vmatprep.subr.bf16.mxu0 0
      %5788 = vmatpush2.bf16.xpose.msra.mxu0 0
      %5789 = vmatprep.subr.bf16.mxu0 0
      %5790 = vmatpush2.bf16.xpose.msra.mxu0 0
      %5791 = vmatprep.subr.bf16.mxu0 0
      %5792 = vmatpush2.bf16.xpose.msra.mxu0 0
      %5793 = vmatprep.subr.bf16.mxu0 0
      %5794 = vmatpush2.bf16.xpose.msra.mxu0 0
      %5795 = vmatprep.mubr.bf16.mxu0 0
      %5796 = vmatmul.mubr.bf16.gmra.mxu0 %v5758
      %v5797 = vpop.f32.mrf.mxu0
      %v5798 = vadd.f32 0.0, %v5797
      %v5799 = vpop.f32.mrf.mxu0
      %v5800 = vpop.f32.mrf.mxu0
      %v5801 = vpop.f32.mrf.mxu0
      %5802 = vdwg.mxu0
      %v5803 = vmul.f32 %v5798, 0.35355338
      %v5804 = vsel %vm3860, %v5803, -inf
      %5805 = vmax.xlane.f32.xlu0 %v5804
      %v5806 = vpop.xlane.xlu0 %5805
      %v5807 = vsub.f32 %v5803, %v5806
      %v5808 = vmul.f32 %v5807, 1.442695
      %v5809 = vpow.pop %v5808
      %v5810 = vsel %vm3860, %v5809, 0.0
      %5811 = vadd.xlane.f32.xlu0 %v5810
      %v5812 = vpop.xlane.xlu0 %5811
      %v5813 = vrcp.pop %v5812
      %v5814 = vmul.f32 %v5809, %v5813
      %v5815 = vpack.c.bf16 %v5814, %v5814
      %5816 = vrot.lane.b32.xlu0 %v5532, 80
      %v5817 = vpop.permute.xlu0 %5816
      %v5819 = vsel %vm1236, %v5815, 0
      %v5822 = vsel %vm1316, %v5817, 0
      %5824 = vmatprep.subr.bf16.mxu0 0
      %5825 = vmatpush1.bf16.msra.mxu0 0
      %5826 = vmatprep.subr.bf16.mxu0 0
      %5827 = vmatpush1.bf16.msra.mxu0 0
      %5828 = vmatprep.subr.bf16.mxu0 0
      %5829 = vmatpush1.bf16.msra.mxu0 0
      %5830 = vmatprep.subr.bf16.mxu0 0
      %5831 = vmatpush1.bf16.msra.mxu0 0
      %5832 = vmatprep.subr.bf16.mxu0 0
      %5833 = vmatpush1.bf16.msra.mxu0 0
      %5834 = vmatprep.subr.bf16.mxu0 0
      %5835 = vmatpush1.bf16.msra.mxu0 0
      %5836 = vmatprep.subr.bf16.mxu0 0
      %5837 = vmatpush1.bf16.msra.mxu0 0
      %5838 = vmatprep.subr.bf16.mxu0 0
      %5839 = vmatpush1.bf16.msra.mxu0 %v5822
      %5840 = vmatprep.subr.bf16.mxu0 0
      %5841 = vmatpush2.bf16.msra.mxu0 0
      %5842 = vmatprep.subr.bf16.mxu0 0
      %5843 = vmatpush2.bf16.msra.mxu0 0
      %5844 = vmatprep.subr.bf16.mxu0 0
      %5845 = vmatpush2.bf16.msra.mxu0 0
      %5846 = vmatprep.subr.bf16.mxu0 0
      %5847 = vmatpush2.bf16.msra.mxu0 0
      %5848 = vmatprep.subr.bf16.mxu0 0
      %5849 = vmatpush2.bf16.msra.mxu0 0
      %5850 = vmatprep.subr.bf16.mxu0 0
      %5851 = vmatpush2.bf16.msra.mxu0 0
      %5852 = vmatprep.subr.bf16.mxu0 0
      %5853 = vmatpush2.bf16.msra.mxu0 0
      %5854 = vmatprep.subr.bf16.mxu0 0
      %5855 = vmatpush2.bf16.msra.mxu0 0
      %5856 = vmatprep.mubr.bf16.mxu0 0
      %5857 = vmatmul.mubr.bf16.gmra.mxu0 %v5819
      %v5858 = vpop.f32.mrf.mxu0
      %v5859 = vadd.f32 0.0, %v5858
      %v5860 = vpop.f32.mrf.mxu0
      %v5861 = vpop.f32.mrf.mxu0
      %v5862 = vpop.f32.mrf.mxu0
      %5863 = vdwg.mxu0
      %5864 = vrot.lane.b32.xlu0 %v5531, 104
      %v5865 = vpop.permute.xlu0 %5864
      %5866 = vrot.lane.b32.xlu0 %v5532, 104
      %v5867 = vpop.permute.xlu0 %5866
      %v5869 = vsel %vm1236, %v5865, 0
      %v5872 = vsel %vm1236, %v5867, 0
      %5874 = vmatprep.subr.bf16.mxu0 0
      %5875 = vmatpush1.bf16.xpose.msra.mxu0 0
      %5876 = vmatprep.subr.bf16.mxu0 0
      %5877 = vmatpush1.bf16.xpose.msra.mxu0 0
      %5878 = vmatprep.subr.bf16.mxu0 0
      %5879 = vmatpush1.bf16.xpose.msra.mxu0 0
      %5880 = vmatprep.subr.bf16.mxu0 0
      %5881 = vmatpush1.bf16.xpose.msra.mxu0 0
      %5882 = vmatprep.subr.bf16.mxu0 0
      %5883 = vmatpush1.bf16.xpose.msra.mxu0 0
      %5884 = vmatprep.subr.bf16.mxu0 0
      %5885 = vmatpush1.bf16.xpose.msra.mxu0 0
      %5886 = vmatprep.subr.bf16.mxu0 0
      %5887 = vmatpush1.bf16.xpose.msra.mxu0 0
      %5888 = vmatprep.subr.bf16.mxu0 0
      %5889 = vmatpush1.bf16.xpose.msra.mxu0 %v5872
      %5890 = vmatprep.subr.bf16.mxu0 0
      %5891 = vmatpush2.bf16.xpose.msra.mxu0 0
      %5892 = vmatprep.subr.bf16.mxu0 0
      %5893 = vmatpush2.bf16.xpose.msra.mxu0 0
      %5894 = vmatprep.subr.bf16.mxu0 0
      %5895 = vmatpush2.bf16.xpose.msra.mxu0 0
      %5896 = vmatprep.subr.bf16.mxu0 0
      %5897 = vmatpush2.bf16.xpose.msra.mxu0 0
      %5898 = vmatprep.subr.bf16.mxu0 0
      %5899 = vmatpush2.bf16.xpose.msra.mxu0 0
      %5900 = vmatprep.subr.bf16.mxu0 0
      %5901 = vmatpush2.bf16.xpose.msra.mxu0 0
      %5902 = vmatprep.subr.bf16.mxu0 0
      %5903 = vmatpush2.bf16.xpose.msra.mxu0 0
      %5904 = vmatprep.subr.bf16.mxu0 0
      %5905 = vmatpush2.bf16.xpose.msra.mxu0 0
      %5906 = vmatprep.mubr.bf16.mxu0 0
      %5907 = vmatmul.mubr.bf16.gmra.mxu0 %v5869
      %v5908 = vpop.f32.mrf.mxu0
      %v5909 = vadd.f32 0.0, %v5908
      %v5910 = vpop.f32.mrf.mxu0
      %v5911 = vpop.f32.mrf.mxu0
      %v5912 = vpop.f32.mrf.mxu0
      %5913 = vdwg.mxu0
      %v5914 = vmul.f32 %v5909, 0.35355338
      %v5915 = vsel %vm3860, %v5914, -inf
      %5916 = vmax.xlane.f32.xlu0 %v5915
      %v5917 = vpop.xlane.xlu0 %5916
      %v5918 = vsub.f32 %v5914, %v5917
      %v5919 = vmul.f32 %v5918, 1.442695
      %v5920 = vpow.pop %v5919
      %v5921 = vsel %vm3860, %v5920, 0.0
      %5922 = vadd.xlane.f32.xlu0 %v5921
      %v5923 = vpop.xlane.xlu0 %5922
      %v5924 = vrcp.pop %v5923
      %v5925 = vmul.f32 %v5920, %v5924
      %v5926 = vpack.c.bf16 %v5925, %v5925
      %5927 = vrot.lane.b32.xlu0 %v5532, 72
      %v5928 = vpop.permute.xlu0 %5927
      %v5930 = vsel %vm1236, %v5926, 0
      %v5933 = vsel %vm1316, %v5928, 0
      %5935 = vmatprep.subr.bf16.mxu0 0
      %5936 = vmatpush1.bf16.msra.mxu0 0
      %5937 = vmatprep.subr.bf16.mxu0 0
      %5938 = vmatpush1.bf16.msra.mxu0 0
      %5939 = vmatprep.subr.bf16.mxu0 0
      %5940 = vmatpush1.bf16.msra.mxu0 0
      %5941 = vmatprep.subr.bf16.mxu0 0
      %5942 = vmatpush1.bf16.msra.mxu0 0
      %5943 = vmatprep.subr.bf16.mxu0 0
      %5944 = vmatpush1.bf16.msra.mxu0 0
      %5945 = vmatprep.subr.bf16.mxu0 0
      %5946 = vmatpush1.bf16.msra.mxu0 0
      %5947 = vmatprep.subr.bf16.mxu0 0
      %5948 = vmatpush1.bf16.msra.mxu0 0
      %5949 = vmatprep.subr.bf16.mxu0 0
      %5950 = vmatpush1.bf16.msra.mxu0 %v5933
      %5951 = vmatprep.subr.bf16.mxu0 0
      %5952 = vmatpush2.bf16.msra.mxu0 0
      %5953 = vmatprep.subr.bf16.mxu0 0
      %5954 = vmatpush2.bf16.msra.mxu0 0
      %5955 = vmatprep.subr.bf16.mxu0 0
      %5956 = vmatpush2.bf16.msra.mxu0 0
      %5957 = vmatprep.subr.bf16.mxu0 0
      %5958 = vmatpush2.bf16.msra.mxu0 0
      %5959 = vmatprep.subr.bf16.mxu0 0
      %5960 = vmatpush2.bf16.msra.mxu0 0
      %5961 = vmatprep.subr.bf16.mxu0 0
      %5962 = vmatpush2.bf16.msra.mxu0 0
      %5963 = vmatprep.subr.bf16.mxu0 0
      %5964 = vmatpush2.bf16.msra.mxu0 0
      %5965 = vmatprep.subr.bf16.mxu0 0
      %5966 = vmatpush2.bf16.msra.mxu0 0
      %5967 = vmatprep.mubr.bf16.mxu0 0
      %5968 = vmatmul.mubr.bf16.gmra.mxu0 %v5930
      %v5969 = vpop.f32.mrf.mxu0
      %v5970 = vadd.f32 0.0, %v5969
      %v5971 = vpop.f32.mrf.mxu0
      %v5972 = vpop.f32.mrf.mxu0
      %v5973 = vpop.f32.mrf.mxu0
      %5974 = vdwg.mxu0
      %5976 = vrot.lane.b32.xlu0 %v5748, 8
      %v5977 = vpop.permute.xlu0 %5976
      %5980 = vrot.lane.b32.xlu0 %v5859, 16
      %v5981 = vpop.permute.xlu0 %5980
      %5984 = vrot.lane.b32.xlu0 %v5970, 24
      %v5985 = vpop.permute.xlu0 %5984
      %v5987 = vsel %vm1236, %v5636, %v5977
      %v5988 = vsel %vm1765, %v5987, %v5981
      %v5989 = vsel %vm1768, %v5988, %v5985
      %v5990 = vpack.c.bf16 %v5989, %v5989
      %v5992 = vlaneseq
      %v5993 = vshrl.u32 %v5992, 7
      %v5994 = vsub.s32 0, %v5993
      %v5995 = vrot.slane %v5411, %v5994
      %v6001 = vunpack.c.l.b16 %v5406
      %v6002 = vunpack.c.l.b16 %v5407
      %v6003 = vunpack.c.l.b16 %v5408
      %v6004 = vunpack.c.l.b16 %v5409
      %v6005 = vpack.c.b16 %v6002, %v6001
      %v6006 = vpack.c.b16 %v6004, %v6003
      %v6010 = vsel %vm1113, %v5990, 0
      %6012 = vmatprep.subr.bf16.mxu0 0
      %6013 = vmatpush1.bf16.msra.mxu0 0
      %6014 = vmatprep.subr.bf16.mxu0 0
      %6015 = vmatpush1.bf16.msra.mxu0 0
      %6016 = vmatprep.subr.bf16.mxu0 0
      %6017 = vmatpush1.bf16.msra.mxu0 0
      %6018 = vmatprep.subr.bf16.mxu0 0
      %6019 = vmatpush1.bf16.msra.mxu0 0
      %6020 = vmatprep.subr.bf16.mxu0 0
      %6021 = vmatpush1.bf16.msra.mxu0 0
      %6022 = vmatprep.subr.bf16.mxu0 0
      %6023 = vmatpush1.bf16.msra.mxu0 0
      %6024 = vmatprep.subr.bf16.mxu0 0
      %6025 = vmatpush1.bf16.msra.mxu0 %v6006
      %6026 = vmatprep.subr.bf16.mxu0 0
      %6027 = vmatpush1.bf16.msra.mxu0 %v6005
      %6028 = vmatprep.subr.bf16.mxu0 0
      %6029 = vmatpush2.bf16.msra.mxu0 0
      %6030 = vmatprep.subr.bf16.mxu0 0
      %6031 = vmatpush2.bf16.msra.mxu0 0
      %6032 = vmatprep.subr.bf16.mxu0 0
      %6033 = vmatpush2.bf16.msra.mxu0 0
      %6034 = vmatprep.subr.bf16.mxu0 0
      %6035 = vmatpush2.bf16.msra.mxu0 0
      %6036 = vmatprep.subr.bf16.mxu0 0
      %6037 = vmatpush2.bf16.msra.mxu0 0
      %6038 = vmatprep.subr.bf16.mxu0 0
      %6039 = vmatpush2.bf16.msra.mxu0 0
      %6040 = vmatprep.subr.bf16.mxu0 0
      %6041 = vmatpush2.bf16.msra.mxu0 0
      %6042 = vmatprep.subr.bf16.mxu0 0
      %6043 = vmatpush2.bf16.msra.mxu0 0
      %6044 = vmatprep.mubr.bf16.mxu0 0
      %6045 = vmatmul.mubr.bf16.gmra.mxu0 %v6010
      %v6046 = vpop.f32.mrf.mxu0
      %v6047 = vadd.f32 %v5995, %v6046
      %v6048 = vpop.f32.mrf.mxu0
      %v6049 = vpop.f32.mrf.mxu0
      %v6050 = vpop.f32.mrf.mxu0
      %6051 = vdwg.mxu0
      %v6052 = vpack.c.bf16 %v6047, %v6047
      %s6053 = scalar_lea.vmem %s47, 16
      %v6054 = vld [vmem:[%s6053] sm:$0xf]
      %v6055 = vld [vmem:[%s6053 + $0x4] sm:$0xf]
      %v6056 = vld [vmem:[%s6053 + $0x8] sm:$0xf]
      %v6057 = vld [vmem:[%s6053 + $0xc] sm:$0xf]
      %s6058 = scalar_lea.vmem %s49, 16
      %v6059 = vld [vmem:[%s6058] sm:$0xf]
      %v6060 = vld [vmem:[%s6058 + $0x4] sm:$0xf]
      %v6061 = vld [vmem:[%s6058 + $0x8] sm:$0xf]
      %v6062 = vld [vmem:[%s6058 + $0xc] sm:$0xf]
      %v6067 = vunpack.c.l.b16 %v6059
      %v6068 = vunpack.c.l.b16 %v6060
      %v6069 = vunpack.c.l.b16 %v6061
      %v6070 = vunpack.c.l.b16 %v6062
      %v6071 = vpack.c.b16 %v6068, %v6067
      %v6072 = vpack.c.b16 %v6070, %v6069
      %6075 = vmatprep.subr.bf16.mxu0 0
      %6076 = vmatpush1.bf16.msra.mxu0 0
      %6077 = vmatprep.subr.bf16.mxu0 0
      %6078 = vmatpush1.bf16.msra.mxu0 0
      %6079 = vmatprep.subr.bf16.mxu0 0
      %6080 = vmatpush1.bf16.msra.mxu0 0
      %6081 = vmatprep.subr.bf16.mxu0 0
      %6082 = vmatpush1.bf16.msra.mxu0 0
      %6083 = vmatprep.subr.bf16.mxu0 0
      %6084 = vmatpush1.bf16.msra.mxu0 0
      %6085 = vmatprep.subr.bf16.mxu0 0
      %6086 = vmatpush1.bf16.msra.mxu0 0
      %6087 = vmatprep.subr.bf16.mxu0 0
      %6088 = vmatpush1.bf16.msra.mxu0 %v6072
      %6089 = vmatprep.subr.bf16.mxu0 0
      %6090 = vmatpush1.bf16.msra.mxu0 %v6071
      %6091 = vmatprep.subr.bf16.mxu0 0
      %6092 = vmatpush2.bf16.msra.mxu0 0
      %6093 = vmatprep.subr.bf16.mxu0 0
      %6094 = vmatpush2.bf16.msra.mxu0 0
      %6095 = vmatprep.subr.bf16.mxu0 0
      %6096 = vmatpush2.bf16.msra.mxu0 0
      %6097 = vmatprep.subr.bf16.mxu0 0
      %6098 = vmatpush2.bf16.msra.mxu0 0
      %6099 = vmatprep.subr.bf16.mxu0 0
      %6100 = vmatpush2.bf16.msra.mxu0 0
      %6101 = vmatprep.subr.bf16.mxu0 0
      %6102 = vmatpush2.bf16.msra.mxu0 0
      %6103 = vmatprep.subr.bf16.mxu0 0
      %6104 = vmatpush2.bf16.msra.mxu0 0
      %6105 = vmatprep.subr.bf16.mxu0 0
      %6106 = vmatpush2.bf16.msra.mxu0 0
      %6107 = vmatprep.mubr.bf16.mxu0 0
      %6108 = vmatmul.mubr.bf16.gmra.mxu0 %v4355
      %v6109 = vpop.f32.mrf.mxu0
      %v6110 = vadd.f32 0.0, %v6109
      %v6111 = vpop.f32.mrf.mxu0
      %v6112 = vpop.f32.mrf.mxu0
      %v6113 = vpop.f32.mrf.mxu0
      %6114 = vdwg.mxu0
      %v6115 = vlaneseq
      %v6116 = vshrl.u32 %v6115, 7
      %v6117 = vsub.s32 0, %v6116
      %v6118 = vrot.slane %v6110, %v6117
      %v6123 = vunpack.c.l.b16 %v6054
      %v6124 = vunpack.c.l.b16 %v6055
      %v6125 = vunpack.c.l.b16 %v6056
      %v6126 = vunpack.c.l.b16 %v6057
      %v6127 = vpack.c.b16 %v6124, %v6123
      %v6128 = vpack.c.b16 %v6126, %v6125
      %v6132 = vsel %vm1113, %v6052, 0
      %6134 = vmatprep.subr.bf16.mxu0 0
      %6135 = vmatpush1.bf16.msra.mxu0 0
      %6136 = vmatprep.subr.bf16.mxu0 0
      %6137 = vmatpush1.bf16.msra.mxu0 0
      %6138 = vmatprep.subr.bf16.mxu0 0
      %6139 = vmatpush1.bf16.msra.mxu0 0
      %6140 = vmatprep.subr.bf16.mxu0 0
      %6141 = vmatpush1.bf16.msra.mxu0 0
      %6142 = vmatprep.subr.bf16.mxu0 0
      %6143 = vmatpush1.bf16.msra.mxu0 0
      %6144 = vmatprep.subr.bf16.mxu0 0
      %6145 = vmatpush1.bf16.msra.mxu0 0
      %6146 = vmatprep.subr.bf16.mxu0 0
      %6147 = vmatpush1.bf16.msra.mxu0 %v6128
      %6148 = vmatprep.subr.bf16.mxu0 0
      %6149 = vmatpush1.bf16.msra.mxu0 %v6127
      %6150 = vmatprep.subr.bf16.mxu0 0
      %6151 = vmatpush2.bf16.msra.mxu0 0
      %6152 = vmatprep.subr.bf16.mxu0 0
      %6153 = vmatpush2.bf16.msra.mxu0 0
      %6154 = vmatprep.subr.bf16.mxu0 0
      %6155 = vmatpush2.bf16.msra.mxu0 0
      %6156 = vmatprep.subr.bf16.mxu0 0
      %6157 = vmatpush2.bf16.msra.mxu0 0
      %6158 = vmatprep.subr.bf16.mxu0 0
      %6159 = vmatpush2.bf16.msra.mxu0 0
      %6160 = vmatprep.subr.bf16.mxu0 0
      %6161 = vmatpush2.bf16.msra.mxu0 0
      %6162 = vmatprep.subr.bf16.mxu0 0
      %6163 = vmatpush2.bf16.msra.mxu0 0
      %6164 = vmatprep.subr.bf16.mxu0 0
      %6165 = vmatpush2.bf16.msra.mxu0 0
      %6166 = vmatprep.mubr.bf16.mxu0 0
      %6167 = vmatmul.mubr.bf16.gmra.mxu0 %v6132
      %v6168 = vpop.f32.mrf.mxu0
      %v6169 = vadd.f32 %v6118, %v6168
      %v6170 = vpop.f32.mrf.mxu0
      %v6171 = vpop.f32.mrf.mxu0
      %v6172 = vpop.f32.mrf.mxu0
      %6173 = vdwg.mxu0
      %s6174 = scalar_lea.vmem %s51, 1
      %v6175 = vld [vmem:[%s6174] sm:$0x1]
      %v6177 = vlaneseq
      %v6178 = vshrl.u32 %v6177, 7
      %v6179 = vsub.s32 0, %v6178
      %v6180 = vrot.slane %v6175, %v6179
      %v6182 = vadd.f32 %v6169, %v6180
      %v6183 = vxor.u32 %v6182, 2147483648
      %v6184 = vmul.f32 %v6183, 1.442695
      %v6185 = vpow.pop %v6184
      %v6186 = vadd.f32 %v6185, 1.0
      %v6187 = vrcp.pop %v6186
      %v6188 = vmul.f32 1.0, %v6187
      %s6189 = scalar_lea.vmem %s53, 16
      %v6190 = vld [vmem:[%s6189] sm:$0xf]
      %v6191 = vld [vmem:[%s6189 + $0x4] sm:$0xf]
      %v6192 = vld [vmem:[%s6189 + $0x8] sm:$0xf]
      %v6193 = vld [vmem:[%s6189 + $0xc] sm:$0xf]
      %s6194 = scalar_lea.vmem %s55, 1
      %v6195 = vld [vmem:[%s6194] sm:$0x1]
      %v6200 = vunpack.c.l.b16 %v6190
      %v6201 = vunpack.c.l.b16 %v6191
      %v6202 = vunpack.c.l.b16 %v6192
      %v6203 = vunpack.c.l.b16 %v6193
      %v6204 = vpack.c.b16 %v6201, %v6200
      %v6205 = vpack.c.b16 %v6203, %v6202
      %6208 = vmatprep.subr.bf16.mxu0 0
      %6209 = vmatpush1.bf16.msra.mxu0 0
      %6210 = vmatprep.subr.bf16.mxu0 0
      %6211 = vmatpush1.bf16.msra.mxu0 0
      %6212 = vmatprep.subr.bf16.mxu0 0
      %6213 = vmatpush1.bf16.msra.mxu0 0
      %6214 = vmatprep.subr.bf16.mxu0 0
      %6215 = vmatpush1.bf16.msra.mxu0 0
      %6216 = vmatprep.subr.bf16.mxu0 0
      %6217 = vmatpush1.bf16.msra.mxu0 0
      %6218 = vmatprep.subr.bf16.mxu0 0
      %6219 = vmatpush1.bf16.msra.mxu0 0
      %6220 = vmatprep.subr.bf16.mxu0 0
      %6221 = vmatpush1.bf16.msra.mxu0 %v6205
      %6222 = vmatprep.subr.bf16.mxu0 0
      %6223 = vmatpush1.bf16.msra.mxu0 %v6204
      %6224 = vmatprep.subr.bf16.mxu0 0
      %6225 = vmatpush2.bf16.msra.mxu0 0
      %6226 = vmatprep.subr.bf16.mxu0 0
      %6227 = vmatpush2.bf16.msra.mxu0 0
      %6228 = vmatprep.subr.bf16.mxu0 0
      %6229 = vmatpush2.bf16.msra.mxu0 0
      %6230 = vmatprep.subr.bf16.mxu0 0
      %6231 = vmatpush2.bf16.msra.mxu0 0
      %6232 = vmatprep.subr.bf16.mxu0 0
      %6233 = vmatpush2.bf16.msra.mxu0 0
      %6234 = vmatprep.subr.bf16.mxu0 0
      %6235 = vmatpush2.bf16.msra.mxu0 0
      %6236 = vmatprep.subr.bf16.mxu0 0
      %6237 = vmatpush2.bf16.msra.mxu0 0
      %6238 = vmatprep.subr.bf16.mxu0 0
      %6239 = vmatpush2.bf16.msra.mxu0 0
      %6240 = vmatprep.mubr.bf16.mxu0 0
      %6241 = vmatmul.mubr.bf16.gmra.mxu0 %v4355
      %v6242 = vpop.f32.mrf.mxu0
      %v6243 = vadd.f32 %v6195, %v6242
      %v6244 = vpop.f32.mrf.mxu0
      %v6245 = vpop.f32.mrf.mxu0
      %v6246 = vpop.f32.mrf.mxu0
      %6247 = vdwg.mxu0
      %v6248 = vmul.f32 %v6188, %v6047
      %v6249 = vsub.f32 1.0, %v6188
      %v6250 = vlaneseq
      %v6251 = vshrl.u32 %v6250, 7
      %v6252 = vsub.s32 0, %v6251
      %v6253 = vrot.slane %v6243, %v6252
      %v6254 = vmul.f32 %v6249, %v6253
      %v6255 = vadd.f32 %v6248, %v6254
      %v6256 = vadd.f32 %v5389, %v6255
      %v6257 = vsel %vm3649, %v6256, 0.0
      %6258 = vadd.xlane.f32.xlu0 %v6257
      %v6259 = vpop.xlane.xlu0 %6258
      %v6260 = vmul.f32 %v6259, %v1843
      %v6261 = vsub.f32 %v6256, %v6260
      %v6262 = vmul.f32 %v6261, %v6261
      %v6263 = vsel %vm3649, %v6262, 0.0
      %6264 = vadd.xlane.f32.xlu0 %v6263
      %v6265 = vpop.xlane.xlu0 %6264
      %v6266 = vmul.f32 %v6265, %v1843
      %v6267 = vadd.f32 %v6266, 1e-05
      %v6268 = vrsqrt.pop %v6267
      %v6269 = vmul.f32 %v6261, %v6268
      %v6270 = vlaneseq
      %v6271 = vshrl.u32 %v6270, 7
      %v6272 = vsub.s32 2, %v6271
      %v6273 = vrot.slane %v4764, %v6272
      %v6274 = vmul.f32 %v6269, %v6273
      %v6275 = vlaneseq
      %v6276 = vshrl.u32 %v6275, 7
      %v6277 = vsub.s32 3, %v6276
      %v6278 = vrot.slane %v4764, %v6277
      %v6279 = vadd.f32 %v6274, %v6278
      %s6280 = scalar_lea.vmem %s59, 16
      %v6281 = vld [vmem:[%s6280] sm:$0xf]
      %v6282 = vld [vmem:[%s6280 + $0x4] sm:$0xf]
      %v6283 = vld [vmem:[%s6280 + $0x8] sm:$0xf]
      %v6284 = vld [vmem:[%s6280 + $0xc] sm:$0xf]
      %s6285 = scalar_lea.vmem %s61, 1
      %v6286 = vld [vmem:[%s6285] sm:$0x1]
      %s6287 = scalar_lea.vmem %s63, 64
      %v6288 = vld [vmem:[%s6287] sm:$0xf]
      %v6289 = vld [vmem:[%s6287 + $0x4] sm:$0xf]
      %v6290 = vld [vmem:[%s6287 + $0x8] sm:$0xf]
      %v6291 = vld [vmem:[%s6287 + $0xc] sm:$0xf]
      %v6292 = vld [vmem:[%s6287 + $0x10] sm:$0xf]
      %v6293 = vld [vmem:[%s6287 + $0x14] sm:$0xf]
      %v6294 = vld [vmem:[%s6287 + $0x18] sm:$0xf]
      %v6295 = vld [vmem:[%s6287 + $0x1c] sm:$0xf]
      %v6296 = vld [vmem:[%s6287 + $0x20] sm:$0xf]
      %v6297 = vld [vmem:[%s6287 + $0x24] sm:$0xf]
      %v6298 = vld [vmem:[%s6287 + $0x28] sm:$0xf]
      %v6299 = vld [vmem:[%s6287 + $0x2c] sm:$0xf]
      %v6300 = vld [vmem:[%s6287 + $0x30] sm:$0xf]
      %v6301 = vld [vmem:[%s6287 + $0x34] sm:$0xf]
      %v6302 = vld [vmem:[%s6287 + $0x38] sm:$0xf]
      %v6303 = vld [vmem:[%s6287 + $0x3c] sm:$0xf]
      %s6304 = scalar_lea.vmem %s65, 1
      %v6305 = vld [vmem:[%s6304] sm:$0x1]
      %v6306 = vpack.c.bf16 %v6279, %v6279
      %v6308 = vlaneseq
      %v6309 = vshrl.u32 %v6308, 7
      %v6310 = vsub.s32 0, %v6309
      %v6311 = vrot.slane %v6286, %v6310
      %v6317 = vunpack.c.l.b16 %v6281
      %v6318 = vunpack.c.l.b16 %v6282
      %v6319 = vunpack.c.l.b16 %v6283
      %v6320 = vunpack.c.l.b16 %v6284
      %v6321 = vpack.c.b16 %v6318, %v6317
      %v6322 = vpack.c.b16 %v6320, %v6319
      %v6326 = vsel %vm1113, %v6306, 0
      %6328 = vmatprep.subr.bf16.mxu0 0
      %6329 = vmatpush1.bf16.msra.mxu0 0
      %6330 = vmatprep.subr.bf16.mxu0 0
      %6331 = vmatpush1.bf16.msra.mxu0 0
      %6332 = vmatprep.subr.bf16.mxu0 0
      %6333 = vmatpush1.bf16.msra.mxu0 0
      %6334 = vmatprep.subr.bf16.mxu0 0
      %6335 = vmatpush1.bf16.msra.mxu0 0
      %6336 = vmatprep.subr.bf16.mxu0 0
      %6337 = vmatpush1.bf16.msra.mxu0 0
      %6338 = vmatprep.subr.bf16.mxu0 0
      %6339 = vmatpush1.bf16.msra.mxu0 0
      %6340 = vmatprep.subr.bf16.mxu0 0
      %6341 = vmatpush1.bf16.msra.mxu0 %v6322
      %6342 = vmatprep.subr.bf16.mxu0 0
      %6343 = vmatpush1.bf16.msra.mxu0 %v6321
      %6344 = vmatprep.subr.bf16.mxu0 0
      %6345 = vmatpush2.bf16.msra.mxu0 0
      %6346 = vmatprep.subr.bf16.mxu0 0
      %6347 = vmatpush2.bf16.msra.mxu0 0
      %6348 = vmatprep.subr.bf16.mxu0 0
      %6349 = vmatpush2.bf16.msra.mxu0 0
      %6350 = vmatprep.subr.bf16.mxu0 0
      %6351 = vmatpush2.bf16.msra.mxu0 0
      %6352 = vmatprep.subr.bf16.mxu0 0
      %6353 = vmatpush2.bf16.msra.mxu0 0
      %6354 = vmatprep.subr.bf16.mxu0 0
      %6355 = vmatpush2.bf16.msra.mxu0 0
      %6356 = vmatprep.subr.bf16.mxu0 0
      %6357 = vmatpush2.bf16.msra.mxu0 0
      %6358 = vmatprep.subr.bf16.mxu0 0
      %6359 = vmatpush2.bf16.msra.mxu0 0
      %6360 = vmatprep.mubr.bf16.mxu0 0
      %6361 = vmatmul.mubr.bf16.gmra.mxu0 %v6326
      %v6362 = vpop.f32.mrf.mxu0
      %v6363 = vadd.f32 %v6311, %v6362
      %v6364 = vpop.f32.mrf.mxu0
      %v6365 = vpop.f32.mrf.mxu0
      %v6366 = vpop.f32.mrf.mxu0
      %6367 = vdwg.mxu0
      %v6368 = vmax.f32 %v6363, 0.0
      %v6369 = vpack.c.bf16 %v6368, %v6368
      %v6371 = vlaneseq
      %v6372 = vshrl.u32 %v6371, 7
      %v6373 = vsub.s32 0, %v6372
      %v6374 = vrot.slane %v6305, %v6373
      %v6392 = vunpack.c.l.b16 %v6288
      %v6393 = vunpack.c.l.b16 %v6289
      %v6394 = vunpack.c.l.b16 %v6290
      %v6395 = vunpack.c.l.b16 %v6291
      %v6396 = vunpack.c.l.b16 %v6292
      %v6397 = vunpack.c.l.b16 %v6293
      %v6398 = vunpack.c.l.b16 %v6294
      %v6399 = vunpack.c.l.b16 %v6295
      %v6400 = vunpack.c.l.b16 %v6296
      %v6401 = vunpack.c.l.b16 %v6297
      %v6402 = vunpack.c.l.b16 %v6298
      %v6403 = vunpack.c.l.b16 %v6299
      %v6404 = vunpack.c.l.b16 %v6300
      %v6405 = vunpack.c.l.b16 %v6301
      %v6406 = vunpack.c.l.b16 %v6302
      %v6407 = vunpack.c.l.b16 %v6303
      %v6408 = vpack.c.b16 %v6393, %v6392
      %v6409 = vpack.c.b16 %v6395, %v6394
      %v6410 = vpack.c.b16 %v6397, %v6396
      %v6411 = vpack.c.b16 %v6399, %v6398
      %v6412 = vpack.c.b16 %v6401, %v6400
      %v6413 = vpack.c.b16 %v6403, %v6402
      %v6414 = vpack.c.b16 %v6405, %v6404
      %v6415 = vpack.c.b16 %v6407, %v6406
      %6424 = vmatprep.subr.bf16.mxu0 0
      %6425 = vmatpush1.bf16.msra.mxu0 %v6415
      %6426 = vmatprep.subr.bf16.mxu0 0
      %6427 = vmatpush1.bf16.msra.mxu0 %v6414
      %6428 = vmatprep.subr.bf16.mxu0 0
      %6429 = vmatpush1.bf16.msra.mxu0 %v6413
      %6430 = vmatprep.subr.bf16.mxu0 0
      %6431 = vmatpush1.bf16.msra.mxu0 %v6412
      %6432 = vmatprep.subr.bf16.mxu0 0
      %6433 = vmatpush1.bf16.msra.mxu0 %v6411
      %6434 = vmatprep.subr.bf16.mxu0 0
      %6435 = vmatpush1.bf16.msra.mxu0 %v6410
      %6436 = vmatprep.subr.bf16.mxu0 0
      %6437 = vmatpush1.bf16.msra.mxu0 %v6409
      %6438 = vmatprep.subr.bf16.mxu0 0
      %6439 = vmatpush1.bf16.msra.mxu0 %v6408
      %6440 = vmatprep.subr.bf16.mxu0 0
      %6441 = vmatpush2.bf16.msra.mxu0 0
      %6442 = vmatprep.subr.bf16.mxu0 0
      %6443 = vmatpush2.bf16.msra.mxu0 0
      %6444 = vmatprep.subr.bf16.mxu0 0
      %6445 = vmatpush2.bf16.msra.mxu0 0
      %6446 = vmatprep.subr.bf16.mxu0 0
      %6447 = vmatpush2.bf16.msra.mxu0 0
      %6448 = vmatprep.subr.bf16.mxu0 0
      %6449 = vmatpush2.bf16.msra.mxu0 0
      %6450 = vmatprep.subr.bf16.mxu0 0
      %6451 = vmatpush2.bf16.msra.mxu0 0
      %6452 = vmatprep.subr.bf16.mxu0 0
      %6453 = vmatpush2.bf16.msra.mxu0 0
      %6454 = vmatprep.subr.bf16.mxu0 0
      %6455 = vmatpush2.bf16.msra.mxu0 0
      %6456 = vmatprep.mubr.bf16.mxu0 0
      %6457 = vmatmul.mubr.bf16.gmra.mxu0 %v6369
      %v6458 = vpop.f32.mrf.mxu0
      %v6459 = vadd.f32 %v6374, %v6458
      %v6460 = vpop.f32.mrf.mxu0
      %v6461 = vpop.f32.mrf.mxu0
      %v6462 = vpop.f32.mrf.mxu0
      %6463 = vdwg.mxu0
      %v6464 = vadd.f32 %v6279, %v6459
      %v6465 = vsel %vm3649, %v6464, 0.0
      %6466 = vadd.xlane.f32.xlu0 %v6465
      %v6467 = vpop.xlane.xlu0 %6466
      %v6468 = vmul.f32 %v6467, %v1843
      %v6469 = vsub.f32 %v6464, %v6468
      %v6470 = vmul.f32 %v6469, %v6469
      %v6471 = vsel %vm3649, %v6470, 0.0
      %6472 = vadd.xlane.f32.xlu0 %v6471
      %v6473 = vpop.xlane.xlu0 %6472
      %v6474 = vmul.f32 %v6473, %v1843
      %v6475 = vadd.f32 %v6474, 1e-05
      %v6476 = vrsqrt.pop %v6475
      %v6477 = vmul.f32 %v6469, %v6476
      %v6478 = vlaneseq
      %v6479 = vshrl.u32 %v6478, 7
      %v6480 = vsub.s32 4, %v6479
      %v6481 = vrot.slane %v4764, %v6480
      %v6482 = vmul.f32 %v6477, %v6481
      %v6483 = vlaneseq
      %v6484 = vshrl.u32 %v6483, 7
      %v6485 = vsub.s32 5, %v6484
      %v6486 = vrot.slane %v4764, %v6485
      %v6487 = vadd.f32 %v6482, %v6486
      %v6488 = vpack.c.bf16 %v6487, %v6487
      %v6489 = vld [vmem:[%s67] sm:$0xf]
      %v6490 = vld [vmem:[%s67 + $0x4] sm:$0xf]
      %v6491 = vld [vmem:[%s67 + $0x8] sm:$0xf]
      %v6492 = vld [vmem:[%s67 + $0xc] sm:$0xf]
      %v6493 = vld [vmem:[%s69] sm:$0x1]
      %v6495 = vlaneseq
      %v6496 = vshrl.u32 %v6495, 7
      %v6497 = vsub.s32 0, %v6496
      %v6498 = vrot.slane %v6493, %v6497
      %v6504 = vunpack.c.l.b16 %v6489
      %v6505 = vunpack.c.l.b16 %v6490
      %v6506 = vunpack.c.l.b16 %v6491
      %v6507 = vunpack.c.l.b16 %v6492
      %v6508 = vpack.c.b16 %v6505, %v6504
      %v6509 = vpack.c.b16 %v6507, %v6506
      %v6513 = vsel %vm1113, %v6488, 0
      %6515 = vmatprep.subr.bf16.mxu0 0
      %6516 = vmatpush1.bf16.msra.mxu0 0
      %6517 = vmatprep.subr.bf16.mxu0 0
      %6518 = vmatpush1.bf16.msra.mxu0 0
      %6519 = vmatprep.subr.bf16.mxu0 0
      %6520 = vmatpush1.bf16.msra.mxu0 0
      %6521 = vmatprep.subr.bf16.mxu0 0
      %6522 = vmatpush1.bf16.msra.mxu0 0
      %6523 = vmatprep.subr.bf16.mxu0 0
      %6524 = vmatpush1.bf16.msra.mxu0 0
      %6525 = vmatprep.subr.bf16.mxu0 0
      %6526 = vmatpush1.bf16.msra.mxu0 0
      %6527 = vmatprep.subr.bf16.mxu0 0
      %6528 = vmatpush1.bf16.msra.mxu0 %v6509
      %6529 = vmatprep.subr.bf16.mxu0 0
      %6530 = vmatpush1.bf16.msra.mxu0 %v6508
      %6531 = vmatprep.subr.bf16.mxu0 0
      %6532 = vmatpush2.bf16.msra.mxu0 0
      %6533 = vmatprep.subr.bf16.mxu0 0
      %6534 = vmatpush2.bf16.msra.mxu0 0
      %6535 = vmatprep.subr.bf16.mxu0 0
      %6536 = vmatpush2.bf16.msra.mxu0 0
      %6537 = vmatprep.subr.bf16.mxu0 0
      %6538 = vmatpush2.bf16.msra.mxu0 0
      %6539 = vmatprep.subr.bf16.mxu0 0
      %6540 = vmatpush2.bf16.msra.mxu0 0
      %6541 = vmatprep.subr.bf16.mxu0 0
      %6542 = vmatpush2.bf16.msra.mxu0 0
      %6543 = vmatprep.subr.bf16.mxu0 0
      %6544 = vmatpush2.bf16.msra.mxu0 0
      %6545 = vmatprep.subr.bf16.mxu0 0
      %6546 = vmatpush2.bf16.msra.mxu0 0
      %6547 = vmatprep.mubr.bf16.mxu0 0
      %6548 = vmatmul.mubr.bf16.gmra.mxu0 %v6513
      %v6549 = vpop.f32.mrf.mxu0
      %v6550 = vadd.f32 %v6498, %v6549
      %v6551 = vpop.f32.mrf.mxu0
      %v6552 = vpop.f32.mrf.mxu0
      %v6553 = vpop.f32.mrf.mxu0
      %6554 = vdwg.mxu0
      %vm6555 = vcmask 406528
      %v6556 = vsel %vm6555, %v6550, -inf
      %6557 = vmax.xlane.f32.xlu0 %v6556
      %v6558 = vpop.xlane.xlu0 %6557
      %v6559 = vsub.f32 %v6550, %v6558
      %v6560 = vmul.f32 %v6559, 1.442695
      %v6561 = vpow.pop %v6560
      %v6562 = vsel %vm6555, %v6561, 0.0
      %6563 = vadd.xlane.f32.xlu0 %v6562
      %v6564 = vpop.xlane.xlu0 %6563
      %v6565 = vlog2.pop %v6564
      %v6566 = vmul.f32 %v6565, 0.6931472
      %v6567 = vadd.f32 %v6566, %v6558
      %v6568 = vsub.f32 %v6550, %v6567
      %6569 = vst.msk [vmem:[%s1085] sm:$0x3f] %vm6555, %v6568
      %p6570 = scmp.lt.s32.totalorder %s82, 1
      %s6571 = scalar_select %p6570, %s82, 1
      %s6572 = smul.addr %s6571, 8
      %s6573 = scalar_lea.vmem %s71, %s6572
      // Predicated region
      $region161: #{get_forward.1} parent=159 // pred_check
        %p6574 = pneg %p845
      $region162: #{get_forward.1} parent=159 // pred_check_branch
        %6576 = sbr.rel (%p6574) target = $region164
      $region163: #{get_forward.1} parent=159 // pred_region
        _
      $region164: #{get_forward.1} parent=159 // pred_fallthru
        _
    $region160: #{get_forward.1} parent=5 // pred_fallthru
      _
    %p6577 = scmp.le.s32.totalorder 2, %s77
    // Predicated region
    $region165: #{get_forward.1} parent=5 // pred_check
      %p6578 = pneg %p6577
    $region166: #{get_forward.1} parent=5 // pred_check_branch
      %6580 = sbr.rel (%p6578) target = $region168
    $region167: #{get_forward.1} parent=5 // pred_region
      %s6581 = ssub.s32 %s77, 2
      // Predicated region
      $region169: #{get_forward.1} parent=167 // pred_check
        %p6582 = pneg %p851
      $region170: #{get_forward.1} parent=167 // pred_check_branch
        %6584 = sbr.rel (%p6582) target = $region172
      $region171: #{get_forward.1} parent=167 // pred_region
        %p6585 = scmp.lt.s32.totalorder %s83, 1
        %s6586 = scalar_select %p6585, %s83, 1
        %s6587 = smul.addr %s6586, 8
        %s6588 = scalar_lea.vmem %s71, %s6587
      $region172: #{get_forward.1} parent=167 // pred_fallthru
        _
    $region168: #{get_forward.1} parent=5 // pred_fallthru
      _
  $region6: #{get_forward.1} parent=0 // loop_footer
    %s81 = sadd.s32 1, %s77
  $region7: #{get_forward.1} parent=0 // loop_footer_branch
    %76 = sbr.rel target = $region3
  $region8: #{get_forward.1} parent=0 // loop_exit
    _

</llo_original>
